<compile_context>
chip_gen: v6e
topology: v6e:2x2x1
jax: 0.10.0
libtpu: 0.0.40
codegen_flags: <defaults>
</compile_context>

<pallas_src>
import jax
import jax.numpy as jnp
from jax.experimental import pallas as pl
from jax.experimental.pallas import tpu as pltpu

NEG_SLOPE = 0.01      # nn.LeakyReLU() default
BN_EPS = 1e-5         # nn.BatchNorm2d default
KSIZE, STRIDE, PAD = 4, 2, 1
LANES = 128


def _rup(n, m=LANES):
    return ((n + m - 1) // m) * m


# -----------------------------------------------------------------------------
# Fused Pallas kernel: 3 x (conv4x4 s2 p1 -> LeakyReLU -> BN) + final 1x1 conv
# -----------------------------------------------------------------------------

def _make_kernel(N, H, W, cin, c1, c2):
    H1, W1 = H // 2, W // 2          # after down block 1
    H2, W2 = H1 // 2, W1 // 2        # after down block 2
    H3, W3 = H2 // 2, W2 // 2        # after down block 3

    def im2col_to_patch(src_ref, dst_ref, HP, WP, C, Ho, Wo):
        # src_ref: (N*HP*WP, C) zero-halo padded activation (rows = pixels)
        # dst_ref: (N*Ho*Wo, 16*C) patch matrix (K laid out tap-major, then channel)
        # Pure data movement: strided VMEM loads + contiguous stores, no matmuls.
        for ki in range(KSIZE):
            for kj in range(KSIZE):
                t = ki * KSIZE + kj
                for n in range(N):
                    for ho in range(Ho):
                        src = n * HP * WP + (2 * ho + ki) * WP + kj
                        dst = (n * Ho + ho) * Wo
                        dst_ref[dst:dst + Wo, t * C:(t + 1) * C] = (
                            src_ref[pl.ds(src, Wo, stride=2), :])

    def conv_lrelu_bn(patch_ref, w_ref, bn_ref):
        # One long-K matmul (K = 16*Cin_true) + bias + LeakyReLU + batch-stat BN.
        y = jnp.dot(patch_ref[...].astype(jnp.bfloat16), w_ref[...],
                    preferred_element_type=jnp.float32)          # (M, Cout_pad) f32
        bias, gamma, beta = bn_ref[0:1, :], bn_ref[1:2, :], bn_ref[2:3, :]
        y = y + bias
        y = jnp.where(y >= 0.0, y, NEG_SLOPE * y)                # LeakyReLU
        inv_m = 1.0 / y.shape[0]
        mean = jnp.sum(y, axis=0, keepdims=True) * inv_m
        d = y - mean
        var = jnp.sum(d * d, axis=0, keepdims=True) * inv_m      # two-pass, biased
        scale = gamma * jax.lax.rsqrt(var + BN_EPS)              # fused BN epilogue
        shift = beta - mean * scale
        return y * scale + shift

    def store_into_halo(y, act_ref, Ho, Wo, C):
        # y: (N*Ho*Wo, Cout_pad) f32 -> interior of act_ref (N*(Ho+2)*(Wo+2), C).
        # Only the true C channels are copied, so padded lanes never propagate.
        HP, WP = Ho + 2, Wo + 2
        for n in range(N):
            for ho in range(Ho):
                src = (n * Ho + ho) * Wo
                dst = n * HP * WP + (ho + 1) * WP + 1
                act_ref[dst:dst + Wo, :] = y[src:src + Wo, 0:C]

    def kernel(xpad_ref, w1_ref, bn1_ref, w2_ref, bn2_ref, w3_ref, bn3_ref,
               wf_ref, bf_ref, o_ref,
               patch1_ref, patch2_ref, patch3_ref, act2_ref, act3_ref):
        # Zero the halo buffers once (their interiors are fully overwritten below).
        act2_ref[...] = jnp.zeros_like(act2_ref)
        act3_ref[...] = jnp.zeros_like(act3_ref)

        # ---- down block 1 ----
        im2col_to_patch(xpad_ref, patch1_ref, H + 2, W + 2, cin, H1, W1)
        y1 = conv_lrelu_bn(patch1_ref, w1_ref, bn1_ref)
        store_into_halo(y1, act2_ref, H1, W1, c1)

        # ---- down block 2 ----
        im2col_to_patch(act2_ref, patch2_ref, H1 + 2, W1 + 2, c1, H2, W2)
        y2 = conv_lrelu_bn(patch2_ref, w2_ref, bn2_ref)
        store_into_halo(y2, act3_ref, H2, W2, c2)

        # ---- down block 3 ----
        im2col_to_patch(act3_ref, patch3_ref, H2 + 2, W2 + 2, c2, H3, W3)
        y3 = conv_lrelu_bn(patch3_ref, w3_ref, bn3_ref)

        # ---- final 1x1 conv (lane-padded output; wrapper slices the true pred_dim)
        o_ref[...] = (jnp.dot(y3.astype(jnp.bfloat16), wf_ref[...],
                              preferred_element_type=jnp.float32)
                      + bf_ref[...])

    return kernel


def _full_spec(shape):
    return pl.BlockSpec(shape, lambda *_: (0,) * len(shape))


def fused_encoder_pallas(kernel, args, out_rows, out_cols, scratch_shapes):
    return pl.pallas_call(
        kernel,
        out_shape=jax.ShapeDtypeStruct((out_rows, out_cols), jnp.float32),
        grid=(1,),
        in_specs=[_full_spec(a.shape) for a in args],
        out_specs=_full_spec((out_rows, out_cols)),
        scratch_shapes=scratch_shapes,
        compiler_params=pltpu.CompilerParams(dimension_semantics=("arbitrary",)),
    )(*args)


# -----------------------------------------------------------------------------
# Host-side packing (no im2col, no gather matrices — just layout/pad/cast)
# -----------------------------------------------------------------------------

def conv_weight_matrix(w, cout_pad):
    """PyTorch conv weight (Cout,Cin,kh,kw) -> (kh*kw*Cin, cout_pad) bf16,
    K laid out tap-major then channel to match the in-kernel patch layout."""
    co, ci, kh, kw = w.shape
    m = jnp.transpose(w, (2, 3, 1, 0)).reshape(kh * kw * ci, co)
    return jnp.pad(m, ((0, 0), (0, cout_pad - co))).astype(jnp.bfloat16)


def bn_table(bias, gamma, beta, cpad):
    def pad1(v, fill):
        return jnp.pad(v.astype(jnp.float32), (0, cpad - v.shape[0]),
                       constant_values=fill)
    return jnp.stack([pad1(bias, 0.0), pad1(gamma, 1.0), pad1(beta, 0.0)])


# -----------------------------------------------------------------------------
# Parameter construction (deterministic, PyTorch-shaped)
# -----------------------------------------------------------------------------

def init_params(key, in_channel, pred_dim, chans):
    down_in = [in_channel, chans, 2 * chans]
    down_out = [chans, 2 * chans, 4 * chans]
    params = {"down": [], "final": None}
    for ci, co in zip(down_in, down_out):
        key, kw_, kb_ = jax.random.split(key, 3)
        bound = 1.0 / jnp.sqrt(ci * 4 * 4)
        w = jax.random.uniform(kw_, (co, ci, 4, 4), jnp.float32, -bound, bound)
        b = jax.random.uniform(kb_, (co,), jnp.float32, -bound, bound)
        params["down"].append((w, b, jnp.ones((co,), jnp.float32),
                               jnp.zeros((co,), jnp.float32)))
    key, kw_, kb_ = jax.random.split(key, 3)
    cf_in = 4 * chans
    bound = 1.0 / jnp.sqrt(cf_in)
    wf = jax.random.uniform(kw_, (pred_dim, cf_in, 1, 1), jnp.float32, -bound, bound)
    bf = jax.random.uniform(kb_, (pred_dim,), jnp.float32, -bound, bound)
    params["final"] = (wf, bf)
    return params


# -----------------------------------------------------------------------------
# Forward pass (matches SimpleEncoder2D.forward, do_bn=True, training-mode BN)
# -----------------------------------------------------------------------------

@jax.jit
def simple_encoder2d_forward(x_nchw, params):
    N, cin, H, W = x_nchw.shape
    assert H % 8 == 0 and W % 8 == 0, "three stride-2 blocks need H,W % 8 == 0"

    (w1, b1, g1, be1), (w2, b2, g2, be2), (w3, b3, g3, be3) = params["down"]
    wf, bfin = params["final"]
    pred_dim = wf.shape[0]
    c1, c2, c3 = w1.shape[0], w2.shape[0], w3.shape[0]
    c1p, c2p, c3p, cfp = _rup(c1), _rup(c2), _rup(c3), _rup(pred_dim)
    H1, W1, H2, W2, H3, W3 = H // 2, W // 2, H // 4, W // 4, H // 8, W // 8

    # Only a spatial zero-pad of the input (no k*k im2col expansion in HBM).
    x_nhwc = jnp.transpose(x_nchw, (0, 2, 3, 1)).astype(jnp.float32)
    xpad = jnp.pad(x_nhwc, ((0, 0), (1, 1), (1, 1), (0, 0)))
    xpad2d = xpad.reshape(N * (H + 2) * (W + 2), cin)

    w1m = conv_weight_matrix(w1, c1p)            # (16*cin,  c1p) bf16
    w2m = conv_weight_matrix(w2, c2p)            # (16*c1,   c2p) bf16
    w3m = conv_weight_matrix(w3, c3p)            # (16*c2,   c3p) bf16
    bn1 = bn_table(b1, g1, be1, c1p)
    bn2 = bn_table(b2, g2, be2, c2p)
    bn3 = bn_table(b3, g3, be3, c3p)

    wfm = wf.reshape(pred_dim, c3).T             # (c3, pred_dim)
    wfm = jnp.pad(wfm, ((0, c3p - c3), (0, cfp - pred_dim))).astype(jnp.bfloat16)
    bf_row = jnp.pad(bfin, (0, cfp - pred_dim)).reshape(1, cfp).astype(jnp.float32)

    kernel = _make_kernel(N, H, W, cin, c1, c2)
    scratch = [
        pltpu.VMEM((N * H1 * W1, 16 * cin), jnp.float32),          # patch1
        pltpu.VMEM((N * H2 * W2, 16 * c1), jnp.float32),           # patch2
        pltpu.VMEM((N * H3 * W3, 16 * c2), jnp.float32),           # patch3
        pltpu.VMEM((N * (H1 + 2) * (W1 + 2), c1), jnp.float32),    # act2 (+halo)
        pltpu.VMEM((N * (H2 + 2) * (W2 + 2), c2), jnp.float32),    # act3 (+halo)
    ]

    out = fused_encoder_pallas(
        kernel,
        (xpad2d, w1m, bn1, w2m, bn2, w3m, bn3, wfm, bf_row),
        out_rows=N * H3 * W3, out_cols=cfp, scratch_shapes=scratch)

    out = out[:, :pred_dim].reshape(N, H3, W3, pred_dim)
    return jnp.transpose(out, (0, 3, 1, 2))                        # back to NCHW


# -----------------------------------------------------------------------------

if __name__ == "__main__":
    in_channel, pred_dim, chans = 4, 8, 32
    key = jax.random.PRNGKey(0)
    kx, kp = jax.random.split(key)
    x = jax.random.normal(kx, (2, in_channel, 16, 16), jnp.float32)   # NCHW
    params = init_params(kp, in_channel, pred_dim, chans)

    y = simple_encoder2d_forward(x, params)
    y = jax.block_until_ready(y)

    assert y.shape == (2, pred_dim, 2, 2), y.shape
    assert bool(jnp.all(jnp.isfinite(y)))
    print("KERNEL_OK")
</pallas_src>

<mosaic_0001>
module attributes {stable_mosaic.version = 11 : i64} {
  func.func @kernel(%arg0: i32, %arg1: memref<648x4xf32, #tpu.memory_space<vmem>>, %arg2: memref<64x128xbf16, #tpu.memory_space<vmem>>, %arg3: memref<3x128xf32, #tpu.memory_space<vmem>>, %arg4: memref<512x128xbf16, #tpu.memory_space<vmem>>, %arg5: memref<3x128xf32, #tpu.memory_space<vmem>>, %arg6: memref<1024x128xbf16, #tpu.memory_space<vmem>>, %arg7: memref<3x128xf32, #tpu.memory_space<vmem>>, %arg8: memref<128x128xbf16, #tpu.memory_space<vmem>>, %arg9: memref<1x128xf32, #tpu.memory_space<vmem>>, %arg10: memref<8x128xf32, #tpu.memory_space<vmem>>, %arg11: memref<128x64xf32, #tpu.memory_space<vmem>>, %arg12: memref<32x512xf32, #tpu.memory_space<vmem>>, %arg13: memref<8x1024xf32, #tpu.memory_space<vmem>>, %arg14: memref<200x32xf32, #tpu.memory_space<vmem>>, %arg15: memref<72x64xf32, #tpu.memory_space<vmem>>) attributes {dimension_semantics = [#tpu.dimension_semantics<arbitrary>], iteration_bounds = array<i64: 1>, scalar_prefetch = 0 : i64, scratch_operands = 5 : i64, tpu.core_type = #tpu.core_type<tc>, window_params = [{pipeline_mode = #tpu.pipeline_mode<synchronous>, transform_indices = @transform_0, window_bounds = array<i64: 648, 4>}, {pipeline_mode = #tpu.pipeline_mode<synchronous>, transform_indices = @transform_1, window_bounds = array<i64: 64, 128>}, {pipeline_mode = #tpu.pipeline_mode<synchronous>, transform_indices = @transform_2, window_bounds = array<i64: 3, 128>}, {pipeline_mode = #tpu.pipeline_mode<synchronous>, transform_indices = @transform_3, window_bounds = array<i64: 512, 128>}, {pipeline_mode = #tpu.pipeline_mode<synchronous>, transform_indices = @transform_4, window_bounds = array<i64: 3, 128>}, {pipeline_mode = #tpu.pipeline_mode<synchronous>, transform_indices = @transform_5, window_bounds = array<i64: 1024, 128>}, {pipeline_mode = #tpu.pipeline_mode<synchronous>, transform_indices = @transform_6, window_bounds = array<i64: 3, 128>}, {pipeline_mode = #tpu.pipeline_mode<synchronous>, transform_indices = @transform_7, window_bounds = array<i64: 128, 128>}, {pipeline_mode = #tpu.pipeline_mode<synchronous>, transform_indices = @transform_8, window_bounds = array<i64: 1, 128>}, {pipeline_mode = #tpu.pipeline_mode<synchronous>, transform_indices = @transform_9, window_bounds = array<i64: 8, 128>}]} {
    %cst = arith.constant 0.000000e+00 : f32
    %0 = vector.broadcast %cst : f32 to vector<200x32xf32>
    %c0 = arith.constant 0 : index
    %c0_0 = arith.constant 0 : index
    %1 = vector.load %arg14[%c0, %c0_0] : memref<200x32xf32, #tpu.memory_space<vmem>>, vector<200x32xf32>
    tpu.vector_store %arg14[%c0, %c0_0], %0 {strides = array<i32>} : memref<200x32xf32, #tpu.memory_space<vmem>>, vector<200x32xf32>,
    %cst_1 = arith.constant 0.000000e+00 : f32
    %2 = vector.broadcast %cst_1 : f32 to vector<72x64xf32>
    %c0_2 = arith.constant 0 : index
    %c0_3 = arith.constant 0 : index
    %3 = vector.load %arg15[%c0_2, %c0_3] : memref<72x64xf32, #tpu.memory_space<vmem>>, vector<72x64xf32>
    tpu.vector_store %arg15[%c0_2, %c0_3], %2 {strides = array<i32>} : memref<72x64xf32, #tpu.memory_space<vmem>>, vector<72x64xf32>,
    %c0_4 = arith.constant 0 : index
    %c0_5 = arith.constant 0 : index
    %4 = tpu.strided_load %arg1[%c0_4, %c0_5] {strides = array<i32: 2, 1>} : memref<648x4xf32, #tpu.memory_space<vmem>>, vector<8x4xf32>
    %c0_6 = arith.constant 0 : index
    %c0_7 = arith.constant 0 : index
    %5 = vector.load %arg11[%c0_6, %c0_7] : memref<128x64xf32, #tpu.memory_space<vmem>>, vector<8x4xf32>
    tpu.vector_store %arg11[%c0_6, %c0_7], %4 {strides = array<i32>} : memref<128x64xf32, #tpu.memory_space<vmem>>, vector<8x4xf32>,
    %c36 = arith.constant 36 : index
    %c0_8 = arith.constant 0 : index
    %6 = tpu.strided_load %arg1[%c36, %c0_8] {strides = array<i32: 2, 1>} : memref<648x4xf32, #tpu.memory_space<vmem>>, vector<8x4xf32>
    %c8 = arith.constant 8 : index
    %c0_9 = arith.constant 0 : index
    %7 = vector.load %arg11[%c8, %c0_9] : memref<128x64xf32, #tpu.memory_space<vmem>>, vector<8x4xf32>
    tpu.vector_store %arg11[%c8, %c0_9], %6 {strides = array<i32>} : memref<128x64xf32, #tpu.memory_space<vmem>>, vector<8x4xf32>,
    %c72 = arith.constant 72 : index
    %c0_10 = arith.constant 0 : index
    %8 = tpu.strided_load %arg1[%c72, %c0_10] {strides = array<i32: 2, 1>} : memref<648x4xf32, #tpu.memory_space<vmem>>, vector<8x4xf32>
    %c16 = arith.constant 16 : index
    %c0_11 = arith.constant 0 : index
    %9 = vector.load %arg11[%c16, %c0_11] : memref<128x64xf32, #tpu.memory_space<vmem>>, vector<8x4xf32>
    tpu.vector_store %arg11[%c16, %c0_11], %8 {strides = array<i32>} : memref<128x64xf32, #tpu.memory_space<vmem>>, vector<8x4xf32>,
    %c108 = arith.constant 108 : index
    %c0_12 = arith.constant 0 : index
    %10 = tpu.strided_load %arg1[%c108, %c0_12] {strides = array<i32: 2, 1>} : memref<648x4xf32, #tpu.memory_space<vmem>>, vector<8x4xf32>
    %c24 = arith.constant 24 : index
    %c0_13 = arith.constant 0 : index
    %11 = vector.load %arg11[%c24, %c0_13] : memref<128x64xf32, #tpu.memory_space<vmem>>, vector<8x4xf32>
    tpu.vector_store %arg11[%c24, %c0_13], %10 {strides = array<i32>} : memref<128x64xf32, #tpu.memory_space<vmem>>, vector<8x4xf32>,
    %c144 = arith.constant 144 : index
    %c0_14 = arith.constant 0 : index
    %12 = tpu.strided_load %arg1[%c144, %c0_14] {strides = array<i32: 2, 1>} : memref<648x4xf32, #tpu.memory_space<vmem>>, vector<8x4xf32>
    %c32 = arith.constant 32 : index
    %c0_15 = arith.constant 0 : index
    %13 = vector.load %arg11[%c32, %c0_15] : memref<128x64xf32, #tpu.memory_space<vmem>>, vector<8x4xf32>
    tpu.vector_store %arg11[%c32, %c0_15], %12 {strides = array<i32>} : memref<128x64xf32, #tpu.memory_space<vmem>>, vector<8x4xf32>,
    %c180 = arith.constant 180 : index
    %c0_16 = arith.constant 0 : index
    %14 = tpu.strided_load %arg1[%c180, %c0_16] {strides = array<i32: 2, 1>} : memref<648x4xf32, #tpu.memory_space<vmem>>, vector<8x4xf32>
    %c40 = arith.constant 40 : index
    %c0_17 = arith.constant 0 : index
    %15 = vector.load %arg11[%c40, %c0_17] : memref<128x64xf32, #tpu.memory_space<vmem>>, vector<8x4xf32>
    tpu.vector_store %arg11[%c40, %c0_17], %14 {strides = array<i32>} : memref<128x64xf32, #tpu.memory_space<vmem>>, vector<8x4xf32>,
    %c216 = arith.constant 216 : index
    %c0_18 = arith.constant 0 : index
    %16 = tpu.strided_load %arg1[%c216, %c0_18] {strides = array<i32: 2, 1>} : memref<648x4xf32, #tpu.memory_space<vmem>>, vector<8x4xf32>
    %c48 = arith.constant 48 : index
    %c0_19 = arith.constant 0 : index
    %17 = vector.load %arg11[%c48, %c0_19] : memref<128x64xf32, #tpu.memory_space<vmem>>, vector<8x4xf32>
    tpu.vector_store %arg11[%c48, %c0_19], %16 {strides = array<i32>} : memref<128x64xf32, #tpu.memory_space<vmem>>, vector<8x4xf32>,
    %c252 = arith.constant 252 : index
    %c0_20 = arith.constant 0 : index
    %18 = tpu.strided_load %arg1[%c252, %c0_20] {strides = array<i32: 2, 1>} : memref<648x4xf32, #tpu.memory_space<vmem>>, vector<8x4xf32>
    %c56 = arith.constant 56 : index
    %c0_21 = arith.constant 0 : index
    %19 = vector.load %arg11[%c56, %c0_21] : memref<128x64xf32, #tpu.memory_space<vmem>>, vector<8x4xf32>
    tpu.vector_store %arg11[%c56, %c0_21], %18 {strides = array<i32>} : memref<128x64xf32, #tpu.memory_space<vmem>>, vector<8x4xf32>,
    %c324 = arith.constant 324 : index
    %c0_22 = arith.constant 0 : index
    %20 = tpu.strided_load %arg1[%c324, %c0_22] {strides = array<i32: 2, 1>} : memref<648x4xf32, #tpu.memory_space<vmem>>, vector<8x4xf32>
    %c64 = arith.constant 64 : index
    %c0_23 = arith.constant 0 : index
    %21 = vector.load %arg11[%c64, %c0_23] : memref<128x64xf32, #tpu.memory_space<vmem>>, vector<8x4xf32>
    tpu.vector_store %arg11[%c64, %c0_23], %20 {strides = array<i32>} : memref<128x64xf32, #tpu.memory_space<vmem>>, vector<8x4xf32>,
    %c360 = arith.constant 360 : index
    %c0_24 = arith.constant 0 : index
    %22 = tpu.strided_load %arg1[%c360, %c0_24] {strides = array<i32: 2, 1>} : memref<648x4xf32, #tpu.memory_space<vmem>>, vector<8x4xf32>
    %c72_25 = arith.constant 72 : index
    %c0_26 = arith.constant 0 : index
    %23 = vector.load %arg11[%c72_25, %c0_26] : memref<128x64xf32, #tpu.memory_space<vmem>>, vector<8x4xf32>
    tpu.vector_store %arg11[%c72_25, %c0_26], %22 {strides = array<i32>} : memref<128x64xf32, #tpu.memory_space<vmem>>, vector<8x4xf32>,
    %c396 = arith.constant 396 : index
    %c0_27 = arith.constant 0 : index
    %24 = tpu.strided_load %arg1[%c396, %c0_27] {strides = array<i32: 2, 1>} : memref<648x4xf32, #tpu.memory_space<vmem>>, vector<8x4xf32>
    %c80 = arith.constant 80 : index
    %c0_28 = arith.constant 0 : index
    %25 = vector.load %arg11[%c80, %c0_28] : memref<128x64xf32, #tpu.memory_space<vmem>>, vector<8x4xf32>
    tpu.vector_store %arg11[%c80, %c0_28], %24 {strides = array<i32>} : memref<128x64xf32, #tpu.memory_space<vmem>>, vector<8x4xf32>,
    %c432 = arith.constant 432 : index
    %c0_29 = arith.constant 0 : index
    %26 = tpu.strided_load %arg1[%c432, %c0_29] {strides = array<i32: 2, 1>} : memref<648x4xf32, #tpu.memory_space<vmem>>, vector<8x4xf32>
    %c88 = arith.constant 88 : index
    %c0_30 = arith.constant 0 : index
    %27 = vector.load %arg11[%c88, %c0_30] : memref<128x64xf32, #tpu.memory_space<vmem>>, vector<8x4xf32>
    tpu.vector_store %arg11[%c88, %c0_30], %26 {strides = array<i32>} : memref<128x64xf32, #tpu.memory_space<vmem>>, vector<8x4xf32>,
    %c468 = arith.constant 468 : index
    %c0_31 = arith.constant 0 : index
    %28 = tpu.strided_load %arg1[%c468, %c0_31] {strides = array<i32: 2, 1>} : memref<648x4xf32, #tpu.memory_space<vmem>>, vector<8x4xf32>
    %c96 = arith.constant 96 : index
    %c0_32 = arith.constant 0 : index
    %29 = vector.load %arg11[%c96, %c0_32] : memref<128x64xf32, #tpu.memory_space<vmem>>, vector<8x4xf32>
    tpu.vector_store %arg11[%c96, %c0_32], %28 {strides = array<i32>} : memref<128x64xf32, #tpu.memory_space<vmem>>, vector<8x4xf32>,
    %c504 = arith.constant 504 : index
    %c0_33 = arith.constant 0 : index
    %30 = tpu.strided_load %arg1[%c504, %c0_33] {strides = array<i32: 2, 1>} : memref<648x4xf32, #tpu.memory_space<vmem>>, vector<8x4xf32>
    %c104 = arith.constant 104 : index
    %c0_34 = arith.constant 0 : index
    %31 = vector.load %arg11[%c104, %c0_34] : memref<128x64xf32, #tpu.memory_space<vmem>>, vector<8x4xf32>
    tpu.vector_store %arg11[%c104, %c0_34], %30 {strides = array<i32>} : memref<128x64xf32, #tpu.memory_space<vmem>>, vector<8x4xf32>,
    %c540 = arith.constant 540 : index
    %c0_35 = arith.constant 0 : index
    %32 = tpu.strided_load %arg1[%c540, %c0_35] {strides = array<i32: 2, 1>} : memref<648x4xf32, #tpu.memory_space<vmem>>, vector<8x4xf32>
    %c112 = arith.constant 112 : index
    %c0_36 = arith.constant 0 : index
    %33 = vector.load %arg11[%c112, %c0_36] : memref<128x64xf32, #tpu.memory_space<vmem>>, vector<8x4xf32>
    tpu.vector_store %arg11[%c112, %c0_36], %32 {strides = array<i32>} : memref<128x64xf32, #tpu.memory_space<vmem>>, vector<8x4xf32>,
    %c576 = arith.constant 576 : index
    %c0_37 = arith.constant 0 : index
    %34 = tpu.strided_load %arg1[%c576, %c0_37] {strides = array<i32: 2, 1>} : memref<648x4xf32, #tpu.memory_space<vmem>>, vector<8x4xf32>
    %c120 = arith.constant 120 : index
    %c0_38 = arith.constant 0 : index
    %35 = vector.load %arg11[%c120, %c0_38] : memref<128x64xf32, #tpu.memory_space<vmem>>, vector<8x4xf32>
    tpu.vector_store %arg11[%c120, %c0_38], %34 {strides = array<i32>} : memref<128x64xf32, #tpu.memory_space<vmem>>, vector<8x4xf32>,
    %c1 = arith.constant 1 : index
    %c0_39 = arith.constant 0 : index
    %36 = tpu.strided_load %arg1[%c1, %c0_39] {strides = array<i32: 2, 1>} : memref<648x4xf32, #tpu.memory_space<vmem>>, vector<8x4xf32>
    %c0_40 = arith.constant 0 : index
    %c4 = arith.constant 4 : index
    %37 = vector.load %arg11[%c0_40, %c4] : memref<128x64xf32, #tpu.memory_space<vmem>>, vector<8x4xf32>
    tpu.vector_store %arg11[%c0_40, %c4], %36 {strides = array<i32>} : memref<128x64xf32, #tpu.memory_space<vmem>>, vector<8x4xf32>,
    %c37 = arith.constant 37 : index
    %c0_41 = arith.constant 0 : index
    %38 = tpu.strided_load %arg1[%c37, %c0_41] {strides = array<i32: 2, 1>} : memref<648x4xf32, #tpu.memory_space<vmem>>, vector<8x4xf32>
    %c8_42 = arith.constant 8 : index
    %c4_43 = arith.constant 4 : index
    %39 = vector.load %arg11[%c8_42, %c4_43] : memref<128x64xf32, #tpu.memory_space<vmem>>, vector<8x4xf32>
    tpu.vector_store %arg11[%c8_42, %c4_43], %38 {strides = array<i32>} : memref<128x64xf32, #tpu.memory_space<vmem>>, vector<8x4xf32>,
    %c73 = arith.constant 73 : index
    %c0_44 = arith.constant 0 : index
    %40 = tpu.strided_load %arg1[%c73, %c0_44] {strides = array<i32: 2, 1>} : memref<648x4xf32, #tpu.memory_space<vmem>>, vector<8x4xf32>
    %c16_45 = arith.constant 16 : index
    %c4_46 = arith.constant 4 : index
    %41 = vector.load %arg11[%c16_45, %c4_46] : memref<128x64xf32, #tpu.memory_space<vmem>>, vector<8x4xf32>
    tpu.vector_store %arg11[%c16_45, %c4_46], %40 {strides = array<i32>} : memref<128x64xf32, #tpu.memory_space<vmem>>, vector<8x4xf32>,
    %c109 = arith.constant 109 : index
    %c0_47 = arith.constant 0 : index
    %42 = tpu.strided_load %arg1[%c109, %c0_47] {strides = array<i32: 2, 1>} : memref<648x4xf32, #tpu.memory_space<vmem>>, vector<8x4xf32>
    %c24_48 = arith.constant 24 : index
    %c4_49 = arith.constant 4 : index
    %43 = vector.load %arg11[%c24_48, %c4_49] : memref<128x64xf32, #tpu.memory_space<vmem>>, vector<8x4xf32>
    tpu.vector_store %arg11[%c24_48, %c4_49], %42 {strides = array<i32>} : memref<128x64xf32, #tpu.memory_space<vmem>>, vector<8x4xf32>,
    %c145 = arith.constant 145 : index
    %c0_50 = arith.constant 0 : index
    %44 = tpu.strided_load %arg1[%c145, %c0_50] {strides = array<i32: 2, 1>} : memref<648x4xf32, #tpu.memory_space<vmem>>, vector<8x4xf32>
    %c32_51 = arith.constant 32 : index
    %c4_52 = arith.constant 4 : index
    %45 = vector.load %arg11[%c32_51, %c4_52] : memref<128x64xf32, #tpu.memory_space<vmem>>, vector<8x4xf32>
    tpu.vector_store %arg11[%c32_51, %c4_52], %44 {strides = array<i32>} : memref<128x64xf32, #tpu.memory_space<vmem>>, vector<8x4xf32>,
    %c181 = arith.constant 181 : index
    %c0_53 = arith.constant 0 : index
    %46 = tpu.strided_load %arg1[%c181, %c0_53] {strides = array<i32: 2, 1>} : memref<648x4xf32, #tpu.memory_space<vmem>>, vector<8x4xf32>
    %c40_54 = arith.constant 40 : index
    %c4_55 = arith.constant 4 : index
    %47 = vector.load %arg11[%c40_54, %c4_55] : memref<128x64xf32, #tpu.memory_space<vmem>>, vector<8x4xf32>
    tpu.vector_store %arg11[%c40_54, %c4_55], %46 {strides = array<i32>} : memref<128x64xf32, #tpu.memory_space<vmem>>, vector<8x4xf32>,
    %c217 = arith.constant 217 : index
    %c0_56 = arith.constant 0 : index
    %48 = tpu.strided_load %arg1[%c217, %c0_56] {strides = array<i32: 2, 1>} : memref<648x4xf32, #tpu.memory_space<vmem>>, vector<8x4xf32>
    %c48_57 = arith.constant 48 : index
    %c4_58 = arith.constant 4 : index
    %49 = vector.load %arg11[%c48_57, %c4_58] : memref<128x64xf32, #tpu.memory_space<vmem>>, vector<8x4xf32>
    tpu.vector_store %arg11[%c48_57, %c4_58], %48 {strides = array<i32>} : memref<128x64xf32, #tpu.memory_space<vmem>>, vector<8x4xf32>,
    %c253 = arith.constant 253 : index
    %c0_59 = arith.constant 0 : index
    %50 = tpu.strided_load %arg1[%c253, %c0_59] {strides = array<i32: 2, 1>} : memref<648x4xf32, #tpu.memory_space<vmem>>, vector<8x4xf32>
    %c56_60 = arith.constant 56 : index
    %c4_61 = arith.constant 4 : index
    %51 = vector.load %arg11[%c56_60, %c4_61] : memref<128x64xf32, #tpu.memory_space<vmem>>, vector<8x4xf32>
    tpu.vector_store %arg11[%c56_60, %c4_61], %50 {strides = array<i32>} : memref<128x64xf32, #tpu.memory_space<vmem>>, vector<8x4xf32>,
    %c325 = arith.constant 325 : index
    %c0_62 = arith.constant 0 : index
    %52 = tpu.strided_load %arg1[%c325, %c0_62] {strides = array<i32: 2, 1>} : memref<648x4xf32, #tpu.memory_space<vmem>>, vector<8x4xf32>
    %c64_63 = arith.constant 64 : index
    %c4_64 = arith.constant 4 : index
    %53 = vector.load %arg11[%c64_63, %c4_64] : memref<128x64xf32, #tpu.memory_space<vmem>>, vector<8x4xf32>
    tpu.vector_store %arg11[%c64_63, %c4_64], %52 {strides = array<i32>} : memref<128x64xf32, #tpu.memory_space<vmem>>, vector<8x4xf32>,
    %c361 = arith.constant 361 : index
    %c0_65 = arith.constant 0 : index
    %54 = tpu.strided_load %arg1[%c361, %c0_65] {strides = array<i32: 2, 1>} : memref<648x4xf32, #tpu.memory_space<vmem>>, vector<8x4xf32>
    %c72_66 = arith.constant 72 : index
    %c4_67 = arith.constant 4 : index
    %55 = vector.load %arg11[%c72_66, %c4_67] : memref<128x64xf32, #tpu.memory_space<vmem>>, vector<8x4xf32>
    tpu.vector_store %arg11[%c72_66, %c4_67], %54 {strides = array<i32>} : memref<128x64xf32, #tpu.memory_space<vmem>>, vector<8x4xf32>,
    %c397 = arith.constant 397 : index
    %c0_68 = arith.constant 0 : index
    %56 = tpu.strided_load %arg1[%c397, %c0_68] {strides = array<i32: 2, 1>} : memref<648x4xf32, #tpu.memory_space<vmem>>, vector<8x4xf32>
    %c80_69 = arith.constant 80 : index
    %c4_70 = arith.constant 4 : index
    %57 = vector.load %arg11[%c80_69, %c4_70] : memref<128x64xf32, #tpu.memory_space<vmem>>, vector<8x4xf32>
    tpu.vector_store %arg11[%c80_69, %c4_70], %56 {strides = array<i32>} : memref<128x64xf32, #tpu.memory_space<vmem>>, vector<8x4xf32>,
    %c433 = arith.constant 433 : index
    %c0_71 = arith.constant 0 : index
    %58 = tpu.strided_load %arg1[%c433, %c0_71] {strides = array<i32: 2, 1>} : memref<648x4xf32, #tpu.memory_space<vmem>>, vector<8x4xf32>
    %c88_72 = arith.constant 88 : index
    %c4_73 = arith.constant 4 : index
    %59 = vector.load %arg11[%c88_72, %c4_73] : memref<128x64xf32, #tpu.memory_space<vmem>>, vector<8x4xf32>
    tpu.vector_store %arg11[%c88_72, %c4_73], %58 {strides = array<i32>} : memref<128x64xf32, #tpu.memory_space<vmem>>, vector<8x4xf32>,
    %c469 = arith.constant 469 : index
    %c0_74 = arith.constant 0 : index
    %60 = tpu.strided_load %arg1[%c469, %c0_74] {strides = array<i32: 2, 1>} : memref<648x4xf32, #tpu.memory_space<vmem>>, vector<8x4xf32>
    %c96_75 = arith.constant 96 : index
    %c4_76 = arith.constant 4 : index
    %61 = vector.load %arg11[%c96_75, %c4_76] : memref<128x64xf32, #tpu.memory_space<vmem>>, vector<8x4xf32>
    tpu.vector_store %arg11[%c96_75, %c4_76], %60 {strides = array<i32>} : memref<128x64xf32, #tpu.memory_space<vmem>>, vector<8x4xf32>,
    %c505 = arith.constant 505 : index
    %c0_77 = arith.constant 0 : index
    %62 = tpu.strided_load %arg1[%c505, %c0_77] {strides = array<i32: 2, 1>} : memref<648x4xf32, #tpu.memory_space<vmem>>, vector<8x4xf32>
    %c104_78 = arith.constant 104 : index
    %c4_79 = arith.constant 4 : index
    %63 = vector.load %arg11[%c104_78, %c4_79] : memref<128x64xf32, #tpu.memory_space<vmem>>, vector<8x4xf32>
    tpu.vector_store %arg11[%c104_78, %c4_79], %62 {strides = array<i32>} : memref<128x64xf32, #tpu.memory_space<vmem>>, vector<8x4xf32>,
    %c541 = arith.constant 541 : index
    %c0_80 = arith.constant 0 : index
    %64 = tpu.strided_load %arg1[%c541, %c0_80] {strides = array<i32: 2, 1>} : memref<648x4xf32, #tpu.memory_space<vmem>>, vector<8x4xf32>
    %c112_81 = arith.constant 112 : index
    %c4_82 = arith.constant 4 : index
    %65 = vector.load %arg11[%c112_81, %c4_82] : memref<128x64xf32, #tpu.memory_space<vmem>>, vector<8x4xf32>
    tpu.vector_store %arg11[%c112_81, %c4_82], %64 {strides = array<i32>} : memref<128x64xf32, #tpu.memory_space<vmem>>, vector<8x4xf32>,
    %c577 = arith.constant 577 : index
    %c0_83 = arith.constant 0 : index
    %66 = tpu.strided_load %arg1[%c577, %c0_83] {strides = array<i32: 2, 1>} : memref<648x4xf32, #tpu.memory_space<vmem>>, vector<8x4xf32>
    %c120_84 = arith.constant 120 : index
    %c4_85 = arith.constant 4 : index
    %67 = vector.load %arg11[%c120_84, %c4_85] : memref<128x64xf32, #tpu.memory_space<vmem>>, vector<8x4xf32>
    tpu.vector_store %arg11[%c120_84, %c4_85], %66 {strides = array<i32>} : memref<128x64xf32, #tpu.memory_space<vmem>>, vector<8x4xf32>,
    %c2 = arith.constant 2 : index
    %c0_86 = arith.constant 0 : index
    %68 = tpu.strided_load %arg1[%c2, %c0_86] {strides = array<i32: 2, 1>} : memref<648x4xf32, #tpu.memory_space<vmem>>, vector<8x4xf32>
    %c0_87 = arith.constant 0 : index
    %c8_88 = arith.constant 8 : index
    %69 = vector.load %arg11[%c0_87, %c8_88] : memref<128x64xf32, #tpu.memory_space<vmem>>, vector<8x4xf32>
    tpu.vector_store %arg11[%c0_87, %c8_88], %68 {strides = array<i32>} : memref<128x64xf32, #tpu.memory_space<vmem>>, vector<8x4xf32>,
    %c38 = arith.constant 38 : index
    %c0_89 = arith.constant 0 : index
    %70 = tpu.strided_load %arg1[%c38, %c0_89] {strides = array<i32: 2, 1>} : memref<648x4xf32, #tpu.memory_space<vmem>>, vector<8x4xf32>
    %c8_90 = arith.constant 8 : index
    %c8_91 = arith.constant 8 : index
    %71 = vector.load %arg11[%c8_90, %c8_91] : memref<128x64xf32, #tpu.memory_space<vmem>>, vector<8x4xf32>
    tpu.vector_store %arg11[%c8_90, %c8_91], %70 {strides = array<i32>} : memref<128x64xf32, #tpu.memory_space<vmem>>, vector<8x4xf32>,
    %c74 = arith.constant 74 : index
    %c0_92 = arith.constant 0 : index
    %72 = tpu.strided_load %arg1[%c74, %c0_92] {strides = array<i32: 2, 1>} : memref<648x4xf32, #tpu.memory_space<vmem>>, vector<8x4xf32>
    %c16_93 = arith.constant 16 : index
    %c8_94 = arith.constant 8 : index
    %73 = vector.load %arg11[%c16_93, %c8_94] : memref<128x64xf32, #tpu.memory_space<vmem>>, vector<8x4xf32>
    tpu.vector_store %arg11[%c16_93, %c8_94], %72 {strides = array<i32>} : memref<128x64xf32, #tpu.memory_space<vmem>>, vector<8x4xf32>,
    %c110 = arith.constant 110 : index
    %c0_95 = arith.constant 0 : index
    %74 = tpu.strided_load %arg1[%c110, %c0_95] {strides = array<i32: 2, 1>} : memref<648x4xf32, #tpu.memory_space<vmem>>, vector<8x4xf32>
    %c24_96 = arith.constant 24 : index
    %c8_97 = arith.constant 8 : index
    %75 = vector.load %arg11[%c24_96, %c8_97] : memref<128x64xf32, #tpu.memory_space<vmem>>, vector<8x4xf32>
    tpu.vector_store %arg11[%c24_96, %c8_97], %74 {strides = array<i32>} : memref<128x64xf32, #tpu.memory_space<vmem>>, vector<8x4xf32>,
    %c146 = arith.constant 146 : index
    %c0_98 = arith.constant 0 : index
    %76 = tpu.strided_load %arg1[%c146, %c0_98] {strides = array<i32: 2, 1>} : memref<648x4xf32, #tpu.memory_space<vmem>>, vector<8x4xf32>
    %c32_99 = arith.constant 32 : index
    %c8_100 = arith.constant 8 : index
    %77 = vector.load %arg11[%c32_99, %c8_100] : memref<128x64xf32, #tpu.memory_space<vmem>>, vector<8x4xf32>
    tpu.vector_store %arg11[%c32_99, %c8_100], %76 {strides = array<i32>} : memref<128x64xf32, #tpu.memory_space<vmem>>, vector<8x4xf32>,
    %c182 = arith.constant 182 : index
    %c0_101 = arith.constant 0 : index
    %78 = tpu.strided_load %arg1[%c182, %c0_101] {strides = array<i32: 2, 1>} : memref<648x4xf32, #tpu.memory_space<vmem>>, vector<8x4xf32>
    %c40_102 = arith.constant 40 : index
    %c8_103 = arith.constant 8 : index
    %79 = vector.load %arg11[%c40_102, %c8_103] : memref<128x64xf32, #tpu.memory_space<vmem>>, vector<8x4xf32>
    tpu.vector_store %arg11[%c40_102, %c8_103], %78 {strides = array<i32>} : memref<128x64xf32, #tpu.memory_space<vmem>>, vector<8x4xf32>,
    %c218 = arith.constant 218 : index
    %c0_104 = arith.constant 0 : index
    %80 = tpu.strided_load %arg1[%c218, %c0_104] {strides = array<i32: 2, 1>} : memref<648x4xf32, #tpu.memory_space<vmem>>, vector<8x4xf32>
    %c48_105 = arith.constant 48 : index
    %c8_106 = arith.constant 8 : index
    %81 = vector.load %arg11[%c48_105, %c8_106] : memref<128x64xf32, #tpu.memory_space<vmem>>, vector<8x4xf32>
    tpu.vector_store %arg11[%c48_105, %c8_106], %80 {strides = array<i32>} : memref<128x64xf32, #tpu.memory_space<vmem>>, vector<8x4xf32>,
    %c254 = arith.constant 254 : index
    %c0_107 = arith.constant 0 : index
    %82 = tpu.strided_load %arg1[%c254, %c0_107] {strides = array<i32: 2, 1>} : memref<648x4xf32, #tpu.memory_space<vmem>>, vector<8x4xf32>
    %c56_108 = arith.constant 56 : index
    %c8_109 = arith.constant 8 : index
    %83 = vector.load %arg11[%c56_108, %c8_109] : memref<128x64xf32, #tpu.memory_space<vmem>>, vector<8x4xf32>
    tpu.vector_store %arg11[%c56_108, %c8_109], %82 {strides = array<i32>} : memref<128x64xf32, #tpu.memory_space<vmem>>, vector<8x4xf32>,
    %c326 = arith.constant 326 : index
    %c0_110 = arith.constant 0 : index
    %84 = tpu.strided_load %arg1[%c326, %c0_110] {strides = array<i32: 2, 1>} : memref<648x4xf32, #tpu.memory_space<vmem>>, vector<8x4xf32>
    %c64_111 = arith.constant 64 : index
    %c8_112 = arith.constant 8 : index
    %85 = vector.load %arg11[%c64_111, %c8_112] : memref<128x64xf32, #tpu.memory_space<vmem>>, vector<8x4xf32>
    tpu.vector_store %arg11[%c64_111, %c8_112], %84 {strides = array<i32>} : memref<128x64xf32, #tpu.memory_space<vmem>>, vector<8x4xf32>,
    %c362 = arith.constant 362 : index
    %c0_113 = arith.constant 0 : index
    %86 = tpu.strided_load %arg1[%c362, %c0_113] {strides = array<i32: 2, 1>} : memref<648x4xf32, #tpu.memory_space<vmem>>, vector<8x4xf32>
    %c72_114 = arith.constant 72 : index
    %c8_115 = arith.constant 8 : index
    %87 = vector.load %arg11[%c72_114, %c8_115] : memref<128x64xf32, #tpu.memory_space<vmem>>, vector<8x4xf32>
    tpu.vector_store %arg11[%c72_114, %c8_115], %86 {strides = array<i32>} : memref<128x64xf32, #tpu.memory_space<vmem>>, vector<8x4xf32>,
    %c398 = arith.constant 398 : index
    %c0_116 = arith.constant 0 : index
    %88 = tpu.strided_load %arg1[%c398, %c0_116] {strides = array<i32: 2, 1>} : memref<648x4xf32, #tpu.memory_space<vmem>>, vector<8x4xf32>
    %c80_117 = arith.constant 80 : index
    %c8_118 = arith.constant 8 : index
    %89 = vector.load %arg11[%c80_117, %c8_118] : memref<128x64xf32, #tpu.memory_space<vmem>>, vector<8x4xf32>
    tpu.vector_store %arg11[%c80_117, %c8_118], %88 {strides = array<i32>} : memref<128x64xf32, #tpu.memory_space<vmem>>, vector<8x4xf32>,
    %c434 = arith.constant 434 : index
    %c0_119 = arith.constant 0 : index
    %90 = tpu.strided_load %arg1[%c434, %c0_119] {strides = array<i32: 2, 1>} : memref<648x4xf32, #tpu.memory_space<vmem>>, vector<8x4xf32>
    %c88_120 = arith.constant 88 : index
    %c8_121 = arith.constant 8 : index
    %91 = vector.load %arg11[%c88_120, %c8_121] : memref<128x64xf32, #tpu.memory_space<vmem>>, vector<8x4xf32>
    tpu.vector_store %arg11[%c88_120, %c8_121], %90 {strides = array<i32>} : memref<128x64xf32, #tpu.memory_space<vmem>>, vector<8x4xf32>,
    %c470 = arith.constant 470 : index
    %c0_122 = arith.constant 0 : index
    %92 = tpu.strided_load %arg1[%c470, %c0_122] {strides = array<i32: 2, 1>} : memref<648x4xf32, #tpu.memory_space<vmem>>, vector<8x4xf32>
    %c96_123 = arith.constant 96 : index
    %c8_124 = arith.constant 8 : index
    %93 = vector.load %arg11[%c96_123, %c8_124] : memref<128x64xf32, #tpu.memory_space<vmem>>, vector<8x4xf32>
    tpu.vector_store %arg11[%c96_123, %c8_124], %92 {strides = array<i32>} : memref<128x64xf32, #tpu.memory_space<vmem>>, vector<8x4xf32>,
    %c506 = arith.constant 506 : index
    %c0_125 = arith.constant 0 : index
    %94 = tpu.strided_load %arg1[%c506, %c0_125] {strides = array<i32: 2, 1>} : memref<648x4xf32, #tpu.memory_space<vmem>>, vector<8x4xf32>
    %c104_126 = arith.constant 104 : index
    %c8_127 = arith.constant 8 : index
    %95 = vector.load %arg11[%c104_126, %c8_127] : memref<128x64xf32, #tpu.memory_space<vmem>>, vector<8x4xf32>
    tpu.vector_store %arg11[%c104_126, %c8_127], %94 {strides = array<i32>} : memref<128x64xf32, #tpu.memory_space<vmem>>, vector<8x4xf32>,
    %c542 = arith.constant 542 : index
    %c0_128 = arith.constant 0 : index
    %96 = tpu.strided_load %arg1[%c542, %c0_128] {strides = array<i32: 2, 1>} : memref<648x4xf32, #tpu.memory_space<vmem>>, vector<8x4xf32>
    %c112_129 = arith.constant 112 : index
    %c8_130 = arith.constant 8 : index
    %97 = vector.load %arg11[%c112_129, %c8_130] : memref<128x64xf32, #tpu.memory_space<vmem>>, vector<8x4xf32>
    tpu.vector_store %arg11[%c112_129, %c8_130], %96 {strides = array<i32>} : memref<128x64xf32, #tpu.memory_space<vmem>>, vector<8x4xf32>,
    %c578 = arith.constant 578 : index
    %c0_131 = arith.constant 0 : index
    %98 = tpu.strided_load %arg1[%c578, %c0_131] {strides = array<i32: 2, 1>} : memref<648x4xf32, #tpu.memory_space<vmem>>, vector<8x4xf32>
    %c120_132 = arith.constant 120 : index
    %c8_133 = arith.constant 8 : index
    %99 = vector.load %arg11[%c120_132, %c8_133] : memref<128x64xf32, #tpu.memory_space<vmem>>, vector<8x4xf32>
    tpu.vector_store %arg11[%c120_132, %c8_133], %98 {strides = array<i32>} : memref<128x64xf32, #tpu.memory_space<vmem>>, vector<8x4xf32>,
    %c3 = arith.constant 3 : index
    %c0_134 = arith.constant 0 : index
    %100 = tpu.strided_load %arg1[%c3, %c0_134] {strides = array<i32: 2, 1>} : memref<648x4xf32, #tpu.memory_space<vmem>>, vector<8x4xf32>
    %c0_135 = arith.constant 0 : index
    %c12 = arith.constant 12 : index
    %101 = vector.load %arg11[%c0_135, %c12] : memref<128x64xf32, #tpu.memory_space<vmem>>, vector<8x4xf32>
    tpu.vector_store %arg11[%c0_135, %c12], %100 {strides = array<i32>} : memref<128x64xf32, #tpu.memory_space<vmem>>, vector<8x4xf32>,
    %c39 = arith.constant 39 : index
    %c0_136 = arith.constant 0 : index
    %102 = tpu.strided_load %arg1[%c39, %c0_136] {strides = array<i32: 2, 1>} : memref<648x4xf32, #tpu.memory_space<vmem>>, vector<8x4xf32>
    %c8_137 = arith.constant 8 : index
    %c12_138 = arith.constant 12 : index
    %103 = vector.load %arg11[%c8_137, %c12_138] : memref<128x64xf32, #tpu.memory_space<vmem>>, vector<8x4xf32>
    tpu.vector_store %arg11[%c8_137, %c12_138], %102 {strides = array<i32>} : memref<128x64xf32, #tpu.memory_space<vmem>>, vector<8x4xf32>,
    %c75 = arith.constant 75 : index
    %c0_139 = arith.constant 0 : index
    %104 = tpu.strided_load %arg1[%c75, %c0_139] {strides = array<i32: 2, 1>} : memref<648x4xf32, #tpu.memory_space<vmem>>, vector<8x4xf32>
    %c16_140 = arith.constant 16 : index
    %c12_141 = arith.constant 12 : index
    %105 = vector.load %arg11[%c16_140, %c12_141] : memref<128x64xf32, #tpu.memory_space<vmem>>, vector<8x4xf32>
    tpu.vector_store %arg11[%c16_140, %c12_141], %104 {strides = array<i32>} : memref<128x64xf32, #tpu.memory_space<vmem>>, vector<8x4xf32>,
    %c111 = arith.constant 111 : index
    %c0_142 = arith.constant 0 : index
    %106 = tpu.strided_load %arg1[%c111, %c0_142] {strides = array<i32: 2, 1>} : memref<648x4xf32, #tpu.memory_space<vmem>>, vector<8x4xf32>
    %c24_143 = arith.constant 24 : index
    %c12_144 = arith.constant 12 : index
    %107 = vector.load %arg11[%c24_143, %c12_144] : memref<128x64xf32, #tpu.memory_space<vmem>>, vector<8x4xf32>
    tpu.vector_store %arg11[%c24_143, %c12_144], %106 {strides = array<i32>} : memref<128x64xf32, #tpu.memory_space<vmem>>, vector<8x4xf32>,
    %c147 = arith.constant 147 : index
    %c0_145 = arith.constant 0 : index
    %108 = tpu.strided_load %arg1[%c147, %c0_145] {strides = array<i32: 2, 1>} : memref<648x4xf32, #tpu.memory_space<vmem>>, vector<8x4xf32>
    %c32_146 = arith.constant 32 : index
    %c12_147 = arith.constant 12 : index
    %109 = vector.load %arg11[%c32_146, %c12_147] : memref<128x64xf32, #tpu.memory_space<vmem>>, vector<8x4xf32>
    tpu.vector_store %arg11[%c32_146, %c12_147], %108 {strides = array<i32>} : memref<128x64xf32, #tpu.memory_space<vmem>>, vector<8x4xf32>,
    %c183 = arith.constant 183 : index
    %c0_148 = arith.constant 0 : index
    %110 = tpu.strided_load %arg1[%c183, %c0_148] {strides = array<i32: 2, 1>} : memref<648x4xf32, #tpu.memory_space<vmem>>, vector<8x4xf32>
    %c40_149 = arith.constant 40 : index
    %c12_150 = arith.constant 12 : index
    %111 = vector.load %arg11[%c40_149, %c12_150] : memref<128x64xf32, #tpu.memory_space<vmem>>, vector<8x4xf32>
    tpu.vector_store %arg11[%c40_149, %c12_150], %110 {strides = array<i32>} : memref<128x64xf32, #tpu.memory_space<vmem>>, vector<8x4xf32>,
    %c219 = arith.constant 219 : index
    %c0_151 = arith.constant 0 : index
    %112 = tpu.strided_load %arg1[%c219, %c0_151] {strides = array<i32: 2, 1>} : memref<648x4xf32, #tpu.memory_space<vmem>>, vector<8x4xf32>
    %c48_152 = arith.constant 48 : index
    %c12_153 = arith.constant 12 : index
    %113 = vector.load %arg11[%c48_152, %c12_153] : memref<128x64xf32, #tpu.memory_space<vmem>>, vector<8x4xf32>
    tpu.vector_store %arg11[%c48_152, %c12_153], %112 {strides = array<i32>} : memref<128x64xf32, #tpu.memory_space<vmem>>, vector<8x4xf32>,
    %c255 = arith.constant 255 : index
    %c0_154 = arith.constant 0 : index
    %114 = tpu.strided_load %arg1[%c255, %c0_154] {strides = array<i32: 2, 1>} : memref<648x4xf32, #tpu.memory_space<vmem>>, vector<8x4xf32>
    %c56_155 = arith.constant 56 : index
    %c12_156 = arith.constant 12 : index
    %115 = vector.load %arg11[%c56_155, %c12_156] : memref<128x64xf32, #tpu.memory_space<vmem>>, vector<8x4xf32>
    tpu.vector_store %arg11[%c56_155, %c12_156], %114 {strides = array<i32>} : memref<128x64xf32, #tpu.memory_space<vmem>>, vector<8x4xf32>,
    %c327 = arith.constant 327 : index
    %c0_157 = arith.constant 0 : index
    %116 = tpu.strided_load %arg1[%c327, %c0_157] {strides = array<i32: 2, 1>} : memref<648x4xf32, #tpu.memory_space<vmem>>, vector<8x4xf32>
    %c64_158 = arith.constant 64 : index
    %c12_159 = arith.constant 12 : index
    %117 = vector.load %arg11[%c64_158, %c12_159] : memref<128x64xf32, #tpu.memory_space<vmem>>, vector<8x4xf32>
    tpu.vector_store %arg11[%c64_158, %c12_159], %116 {strides = array<i32>} : memref<128x64xf32, #tpu.memory_space<vmem>>, vector<8x4xf32>,
    %c363 = arith.constant 363 : index
    %c0_160 = arith.constant 0 : index
    %118 = tpu.strided_load %arg1[%c363, %c0_160] {strides = array<i32: 2, 1>} : memref<648x4xf32, #tpu.memory_space<vmem>>, vector<8x4xf32>
    %c72_161 = arith.constant 72 : index
    %c12_162 = arith.constant 12 : index
    %119 = vector.load %arg11[%c72_161, %c12_162] : memref<128x64xf32, #tpu.memory_space<vmem>>, vector<8x4xf32>
    tpu.vector_store %arg11[%c72_161, %c12_162], %118 {strides = array<i32>} : memref<128x64xf32, #tpu.memory_space<vmem>>, vector<8x4xf32>,
    %c399 = arith.constant 399 : index
    %c0_163 = arith.constant 0 : index
    %120 = tpu.strided_load %arg1[%c399, %c0_163] {strides = array<i32: 2, 1>} : memref<648x4xf32, #tpu.memory_space<vmem>>, vector<8x4xf32>
    %c80_164 = arith.constant 80 : index
    %c12_165 = arith.constant 12 : index
    %121 = vector.load %arg11[%c80_164, %c12_165] : memref<128x64xf32, #tpu.memory_space<vmem>>, vector<8x4xf32>
    tpu.vector_store %arg11[%c80_164, %c12_165], %120 {strides = array<i32>} : memref<128x64xf32, #tpu.memory_space<vmem>>, vector<8x4xf32>,
    %c435 = arith.constant 435 : index
    %c0_166 = arith.constant 0 : index
    %122 = tpu.strided_load %arg1[%c435, %c0_166] {strides = array<i32: 2, 1>} : memref<648x4xf32, #tpu.memory_space<vmem>>, vector<8x4xf32>
    %c88_167 = arith.constant 88 : index
    %c12_168 = arith.constant 12 : index
    %123 = vector.load %arg11[%c88_167, %c12_168] : memref<128x64xf32, #tpu.memory_space<vmem>>, vector<8x4xf32>
    tpu.vector_store %arg11[%c88_167, %c12_168], %122 {strides = array<i32>} : memref<128x64xf32, #tpu.memory_space<vmem>>, vector<8x4xf32>,
    %c471 = arith.constant 471 : index
    %c0_169 = arith.constant 0 : index
    %124 = tpu.strided_load %arg1[%c471, %c0_169] {strides = array<i32: 2, 1>} : memref<648x4xf32, #tpu.memory_space<vmem>>, vector<8x4xf32>
    %c96_170 = arith.constant 96 : index
    %c12_171 = arith.constant 12 : index
    %125 = vector.load %arg11[%c96_170, %c12_171] : memref<128x64xf32, #tpu.memory_space<vmem>>, vector<8x4xf32>
    tpu.vector_store %arg11[%c96_170, %c12_171], %124 {strides = array<i32>} : memref<128x64xf32, #tpu.memory_space<vmem>>, vector<8x4xf32>,
    %c507 = arith.constant 507 : index
    %c0_172 = arith.constant 0 : index
    %126 = tpu.strided_load %arg1[%c507, %c0_172] {strides = array<i32: 2, 1>} : memref<648x4xf32, #tpu.memory_space<vmem>>, vector<8x4xf32>
    %c104_173 = arith.constant 104 : index
    %c12_174 = arith.constant 12 : index
    %127 = vector.load %arg11[%c104_173, %c12_174] : memref<128x64xf32, #tpu.memory_space<vmem>>, vector<8x4xf32>
    tpu.vector_store %arg11[%c104_173, %c12_174], %126 {strides = array<i32>} : memref<128x64xf32, #tpu.memory_space<vmem>>, vector<8x4xf32>,
    %c543 = arith.constant 543 : index
    %c0_175 = arith.constant 0 : index
    %128 = tpu.strided_load %arg1[%c543, %c0_175] {strides = array<i32: 2, 1>} : memref<648x4xf32, #tpu.memory_space<vmem>>, vector<8x4xf32>
    %c112_176 = arith.constant 112 : index
    %c12_177 = arith.constant 12 : index
    %129 = vector.load %arg11[%c112_176, %c12_177] : memref<128x64xf32, #tpu.memory_space<vmem>>, vector<8x4xf32>
    tpu.vector_store %arg11[%c112_176, %c12_177], %128 {strides = array<i32>} : memref<128x64xf32, #tpu.memory_space<vmem>>, vector<8x4xf32>,
    %c579 = arith.constant 579 : index
    %c0_178 = arith.constant 0 : index
    %130 = tpu.strided_load %arg1[%c579, %c0_178] {strides = array<i32: 2, 1>} : memref<648x4xf32, #tpu.memory_space<vmem>>, vector<8x4xf32>
    %c120_179 = arith.constant 120 : index
    %c12_180 = arith.constant 12 : index
    %131 = vector.load %arg11[%c120_179, %c12_180] : memref<128x64xf32, #tpu.memory_space<vmem>>, vector<8x4xf32>
    tpu.vector_store %arg11[%c120_179, %c12_180], %130 {strides = array<i32>} : memref<128x64xf32, #tpu.memory_space<vmem>>, vector<8x4xf32>,
    %c18 = arith.constant 18 : index
    %c0_181 = arith.constant 0 : index
    %132 = tpu.strided_load %arg1[%c18, %c0_181] {strides = array<i32: 2, 1>} : memref<648x4xf32, #tpu.memory_space<vmem>>, vector<8x4xf32>
    %c0_182 = arith.constant 0 : index
    %c16_183 = arith.constant 16 : index
    %133 = vector.load %arg11[%c0_182, %c16_183] : memref<128x64xf32, #tpu.memory_space<vmem>>, vector<8x4xf32>
    tpu.vector_store %arg11[%c0_182, %c16_183], %132 {strides = array<i32>} : memref<128x64xf32, #tpu.memory_space<vmem>>, vector<8x4xf32>,
    %c54 = arith.constant 54 : index
    %c0_184 = arith.constant 0 : index
    %134 = tpu.strided_load %arg1[%c54, %c0_184] {strides = array<i32: 2, 1>} : memref<648x4xf32, #tpu.memory_space<vmem>>, vector<8x4xf32>
    %c8_185 = arith.constant 8 : index
    %c16_186 = arith.constant 16 : index
    %135 = vector.load %arg11[%c8_185, %c16_186] : memref<128x64xf32, #tpu.memory_space<vmem>>, vector<8x4xf32>
    tpu.vector_store %arg11[%c8_185, %c16_186], %134 {strides = array<i32>} : memref<128x64xf32, #tpu.memory_space<vmem>>, vector<8x4xf32>,
    %c90 = arith.constant 90 : index
    %c0_187 = arith.constant 0 : index
    %136 = tpu.strided_load %arg1[%c90, %c0_187] {strides = array<i32: 2, 1>} : memref<648x4xf32, #tpu.memory_space<vmem>>, vector<8x4xf32>
    %c16_188 = arith.constant 16 : index
    %c16_189 = arith.constant 16 : index
    %137 = vector.load %arg11[%c16_188, %c16_189] : memref<128x64xf32, #tpu.memory_space<vmem>>, vector<8x4xf32>
    tpu.vector_store %arg11[%c16_188, %c16_189], %136 {strides = array<i32>} : memref<128x64xf32, #tpu.memory_space<vmem>>, vector<8x4xf32>,
    %c126 = arith.constant 126 : index
    %c0_190 = arith.constant 0 : index
    %138 = tpu.strided_load %arg1[%c126, %c0_190] {strides = array<i32: 2, 1>} : memref<648x4xf32, #tpu.memory_space<vmem>>, vector<8x4xf32>
    %c24_191 = arith.constant 24 : index
    %c16_192 = arith.constant 16 : index
    %139 = vector.load %arg11[%c24_191, %c16_192] : memref<128x64xf32, #tpu.memory_space<vmem>>, vector<8x4xf32>
    tpu.vector_store %arg11[%c24_191, %c16_192], %138 {strides = array<i32>} : memref<128x64xf32, #tpu.memory_space<vmem>>, vector<8x4xf32>,
    %c162 = arith.constant 162 : index
    %c0_193 = arith.constant 0 : index
    %140 = tpu.strided_load %arg1[%c162, %c0_193] {strides = array<i32: 2, 1>} : memref<648x4xf32, #tpu.memory_space<vmem>>, vector<8x4xf32>
    %c32_194 = arith.constant 32 : index
    %c16_195 = arith.constant 16 : index
    %141 = vector.load %arg11[%c32_194, %c16_195] : memref<128x64xf32, #tpu.memory_space<vmem>>, vector<8x4xf32>
    tpu.vector_store %arg11[%c32_194, %c16_195], %140 {strides = array<i32>} : memref<128x64xf32, #tpu.memory_space<vmem>>, vector<8x4xf32>,
    %c198 = arith.constant 198 : index
    %c0_196 = arith.constant 0 : index
    %142 = tpu.strided_load %arg1[%c198, %c0_196] {strides = array<i32: 2, 1>} : memref<648x4xf32, #tpu.memory_space<vmem>>, vector<8x4xf32>
    %c40_197 = arith.constant 40 : index
    %c16_198 = arith.constant 16 : index
    %143 = vector.load %arg11[%c40_197, %c16_198] : memref<128x64xf32, #tpu.memory_space<vmem>>, vector<8x4xf32>
    tpu.vector_store %arg11[%c40_197, %c16_198], %142 {strides = array<i32>} : memref<128x64xf32, #tpu.memory_space<vmem>>, vector<8x4xf32>,
    %c234 = arith.constant 234 : index
    %c0_199 = arith.constant 0 : index
    %144 = tpu.strided_load %arg1[%c234, %c0_199] {strides = array<i32: 2, 1>} : memref<648x4xf32, #tpu.memory_space<vmem>>, vector<8x4xf32>
    %c48_200 = arith.constant 48 : index
    %c16_201 = arith.constant 16 : index
    %145 = vector.load %arg11[%c48_200, %c16_201] : memref<128x64xf32, #tpu.memory_space<vmem>>, vector<8x4xf32>
    tpu.vector_store %arg11[%c48_200, %c16_201], %144 {strides = array<i32>} : memref<128x64xf32, #tpu.memory_space<vmem>>, vector<8x4xf32>,
    %c270 = arith.constant 270 : index
    %c0_202 = arith.constant 0 : index
    %146 = tpu.strided_load %arg1[%c270, %c0_202] {strides = array<i32: 2, 1>} : memref<648x4xf32, #tpu.memory_space<vmem>>, vector<8x4xf32>
    %c56_203 = arith.constant 56 : index
    %c16_204 = arith.constant 16 : index
    %147 = vector.load %arg11[%c56_203, %c16_204] : memref<128x64xf32, #tpu.memory_space<vmem>>, vector<8x4xf32>
    tpu.vector_store %arg11[%c56_203, %c16_204], %146 {strides = array<i32>} : memref<128x64xf32, #tpu.memory_space<vmem>>, vector<8x4xf32>,
    %c342 = arith.constant 342 : index
    %c0_205 = arith.constant 0 : index
    %148 = tpu.strided_load %arg1[%c342, %c0_205] {strides = array<i32: 2, 1>} : memref<648x4xf32, #tpu.memory_space<vmem>>, vector<8x4xf32>
    %c64_206 = arith.constant 64 : index
    %c16_207 = arith.constant 16 : index
    %149 = vector.load %arg11[%c64_206, %c16_207] : memref<128x64xf32, #tpu.memory_space<vmem>>, vector<8x4xf32>
    tpu.vector_store %arg11[%c64_206, %c16_207], %148 {strides = array<i32>} : memref<128x64xf32, #tpu.memory_space<vmem>>, vector<8x4xf32>,
    %c378 = arith.constant 378 : index
    %c0_208 = arith.constant 0 : index
    %150 = tpu.strided_load %arg1[%c378, %c0_208] {strides = array<i32: 2, 1>} : memref<648x4xf32, #tpu.memory_space<vmem>>, vector<8x4xf32>
    %c72_209 = arith.constant 72 : index
    %c16_210 = arith.constant 16 : index
    %151 = vector.load %arg11[%c72_209, %c16_210] : memref<128x64xf32, #tpu.memory_space<vmem>>, vector<8x4xf32>
    tpu.vector_store %arg11[%c72_209, %c16_210], %150 {strides = array<i32>} : memref<128x64xf32, #tpu.memory_space<vmem>>, vector<8x4xf32>,
    %c414 = arith.constant 414 : index
    %c0_211 = arith.constant 0 : index
    %152 = tpu.strided_load %arg1[%c414, %c0_211] {strides = array<i32: 2, 1>} : memref<648x4xf32, #tpu.memory_space<vmem>>, vector<8x4xf32>
    %c80_212 = arith.constant 80 : index
    %c16_213 = arith.constant 16 : index
    %153 = vector.load %arg11[%c80_212, %c16_213] : memref<128x64xf32, #tpu.memory_space<vmem>>, vector<8x4xf32>
    tpu.vector_store %arg11[%c80_212, %c16_213], %152 {strides = array<i32>} : memref<128x64xf32, #tpu.memory_space<vmem>>, vector<8x4xf32>,
    %c450 = arith.constant 450 : index
    %c0_214 = arith.constant 0 : index
    %154 = tpu.strided_load %arg1[%c450, %c0_214] {strides = array<i32: 2, 1>} : memref<648x4xf32, #tpu.memory_space<vmem>>, vector<8x4xf32>
    %c88_215 = arith.constant 88 : index
    %c16_216 = arith.constant 16 : index
    %155 = vector.load %arg11[%c88_215, %c16_216] : memref<128x64xf32, #tpu.memory_space<vmem>>, vector<8x4xf32>
    tpu.vector_store %arg11[%c88_215, %c16_216], %154 {strides = array<i32>} : memref<128x64xf32, #tpu.memory_space<vmem>>, vector<8x4xf32>,
    %c486 = arith.constant 486 : index
    %c0_217 = arith.constant 0 : index
    %156 = tpu.strided_load %arg1[%c486, %c0_217] {strides = array<i32: 2, 1>} : memref<648x4xf32, #tpu.memory_space<vmem>>, vector<8x4xf32>
    %c96_218 = arith.constant 96 : index
    %c16_219 = arith.constant 16 : index
    %157 = vector.load %arg11[%c96_218, %c16_219] : memref<128x64xf32, #tpu.memory_space<vmem>>, vector<8x4xf32>
    tpu.vector_store %arg11[%c96_218, %c16_219], %156 {strides = array<i32>} : memref<128x64xf32, #tpu.memory_space<vmem>>, vector<8x4xf32>,
    %c522 = arith.constant 522 : index
    %c0_220 = arith.constant 0 : index
    %158 = tpu.strided_load %arg1[%c522, %c0_220] {strides = array<i32: 2, 1>} : memref<648x4xf32, #tpu.memory_space<vmem>>, vector<8x4xf32>
    %c104_221 = arith.constant 104 : index
    %c16_222 = arith.constant 16 : index
    %159 = vector.load %arg11[%c104_221, %c16_222] : memref<128x64xf32, #tpu.memory_space<vmem>>, vector<8x4xf32>
    tpu.vector_store %arg11[%c104_221, %c16_222], %158 {strides = array<i32>} : memref<128x64xf32, #tpu.memory_space<vmem>>, vector<8x4xf32>,
    %c558 = arith.constant 558 : index
    %c0_223 = arith.constant 0 : index
    %160 = tpu.strided_load %arg1[%c558, %c0_223] {strides = array<i32: 2, 1>} : memref<648x4xf32, #tpu.memory_space<vmem>>, vector<8x4xf32>
    %c112_224 = arith.constant 112 : index
    %c16_225 = arith.constant 16 : index
    %161 = vector.load %arg11[%c112_224, %c16_225] : memref<128x64xf32, #tpu.memory_space<vmem>>, vector<8x4xf32>
    tpu.vector_store %arg11[%c112_224, %c16_225], %160 {strides = array<i32>} : memref<128x64xf32, #tpu.memory_space<vmem>>, vector<8x4xf32>,
    %c594 = arith.constant 594 : index
    %c0_226 = arith.constant 0 : index
    %162 = tpu.strided_load %arg1[%c594, %c0_226] {strides = array<i32: 2, 1>} : memref<648x4xf32, #tpu.memory_space<vmem>>, vector<8x4xf32>
    %c120_227 = arith.constant 120 : index
    %c16_228 = arith.constant 16 : index
    %163 = vector.load %arg11[%c120_227, %c16_228] : memref<128x64xf32, #tpu.memory_space<vmem>>, vector<8x4xf32>
    tpu.vector_store %arg11[%c120_227, %c16_228], %162 {strides = array<i32>} : memref<128x64xf32, #tpu.memory_space<vmem>>, vector<8x4xf32>,
    %c19 = arith.constant 19 : index
    %c0_229 = arith.constant 0 : index
    %164 = tpu.strided_load %arg1[%c19, %c0_229] {strides = array<i32: 2, 1>} : memref<648x4xf32, #tpu.memory_space<vmem>>, vector<8x4xf32>
    %c0_230 = arith.constant 0 : index
    %c20 = arith.constant 20 : index
    %165 = vector.load %arg11[%c0_230, %c20] : memref<128x64xf32, #tpu.memory_space<vmem>>, vector<8x4xf32>
    tpu.vector_store %arg11[%c0_230, %c20], %164 {strides = array<i32>} : memref<128x64xf32, #tpu.memory_space<vmem>>, vector<8x4xf32>,
    %c55 = arith.constant 55 : index
    %c0_231 = arith.constant 0 : index
    %166 = tpu.strided_load %arg1[%c55, %c0_231] {strides = array<i32: 2, 1>} : memref<648x4xf32, #tpu.memory_space<vmem>>, vector<8x4xf32>
    %c8_232 = arith.constant 8 : index
    %c20_233 = arith.constant 20 : index
    %167 = vector.load %arg11[%c8_232, %c20_233] : memref<128x64xf32, #tpu.memory_space<vmem>>, vector<8x4xf32>
    tpu.vector_store %arg11[%c8_232, %c20_233], %166 {strides = array<i32>} : memref<128x64xf32, #tpu.memory_space<vmem>>, vector<8x4xf32>,
    %c91 = arith.constant 91 : index
    %c0_234 = arith.constant 0 : index
    %168 = tpu.strided_load %arg1[%c91, %c0_234] {strides = array<i32: 2, 1>} : memref<648x4xf32, #tpu.memory_space<vmem>>, vector<8x4xf32>
    %c16_235 = arith.constant 16 : index
    %c20_236 = arith.constant 20 : index
    %169 = vector.load %arg11[%c16_235, %c20_236] : memref<128x64xf32, #tpu.memory_space<vmem>>, vector<8x4xf32>
    tpu.vector_store %arg11[%c16_235, %c20_236], %168 {strides = array<i32>} : memref<128x64xf32, #tpu.memory_space<vmem>>, vector<8x4xf32>,
    %c127 = arith.constant 127 : index
    %c0_237 = arith.constant 0 : index
    %170 = tpu.strided_load %arg1[%c127, %c0_237] {strides = array<i32: 2, 1>} : memref<648x4xf32, #tpu.memory_space<vmem>>, vector<8x4xf32>
    %c24_238 = arith.constant 24 : index
    %c20_239 = arith.constant 20 : index
    %171 = vector.load %arg11[%c24_238, %c20_239] : memref<128x64xf32, #tpu.memory_space<vmem>>, vector<8x4xf32>
    tpu.vector_store %arg11[%c24_238, %c20_239], %170 {strides = array<i32>} : memref<128x64xf32, #tpu.memory_space<vmem>>, vector<8x4xf32>,
    %c163 = arith.constant 163 : index
    %c0_240 = arith.constant 0 : index
    %172 = tpu.strided_load %arg1[%c163, %c0_240] {strides = array<i32: 2, 1>} : memref<648x4xf32, #tpu.memory_space<vmem>>, vector<8x4xf32>
    %c32_241 = arith.constant 32 : index
    %c20_242 = arith.constant 20 : index
    %173 = vector.load %arg11[%c32_241, %c20_242] : memref<128x64xf32, #tpu.memory_space<vmem>>, vector<8x4xf32>
    tpu.vector_store %arg11[%c32_241, %c20_242], %172 {strides = array<i32>} : memref<128x64xf32, #tpu.memory_space<vmem>>, vector<8x4xf32>,
    %c199 = arith.constant 199 : index
    %c0_243 = arith.constant 0 : index
    %174 = tpu.strided_load %arg1[%c199, %c0_243] {strides = array<i32: 2, 1>} : memref<648x4xf32, #tpu.memory_space<vmem>>, vector<8x4xf32>
    %c40_244 = arith.constant 40 : index
    %c20_245 = arith.constant 20 : index
    %175 = vector.load %arg11[%c40_244, %c20_245] : memref<128x64xf32, #tpu.memory_space<vmem>>, vector<8x4xf32>
    tpu.vector_store %arg11[%c40_244, %c20_245], %174 {strides = array<i32>} : memref<128x64xf32, #tpu.memory_space<vmem>>, vector<8x4xf32>,
    %c235 = arith.constant 235 : index
    %c0_246 = arith.constant 0 : index
    %176 = tpu.strided_load %arg1[%c235, %c0_246] {strides = array<i32: 2, 1>} : memref<648x4xf32, #tpu.memory_space<vmem>>, vector<8x4xf32>
    %c48_247 = arith.constant 48 : index
    %c20_248 = arith.constant 20 : index
    %177 = vector.load %arg11[%c48_247, %c20_248] : memref<128x64xf32, #tpu.memory_space<vmem>>, vector<8x4xf32>
    tpu.vector_store %arg11[%c48_247, %c20_248], %176 {strides = array<i32>} : memref<128x64xf32, #tpu.memory_space<vmem>>, vector<8x4xf32>,
    %c271 = arith.constant 271 : index
    %c0_249 = arith.constant 0 : index
    %178 = tpu.strided_load %arg1[%c271, %c0_249] {strides = array<i32: 2, 1>} : memref<648x4xf32, #tpu.memory_space<vmem>>, vector<8x4xf32>
    %c56_250 = arith.constant 56 : index
    %c20_251 = arith.constant 20 : index
    %179 = vector.load %arg11[%c56_250, %c20_251] : memref<128x64xf32, #tpu.memory_space<vmem>>, vector<8x4xf32>
    tpu.vector_store %arg11[%c56_250, %c20_251], %178 {strides = array<i32>} : memref<128x64xf32, #tpu.memory_space<vmem>>, vector<8x4xf32>,
    %c343 = arith.constant 343 : index
    %c0_252 = arith.constant 0 : index
    %180 = tpu.strided_load %arg1[%c343, %c0_252] {strides = array<i32: 2, 1>} : memref<648x4xf32, #tpu.memory_space<vmem>>, vector<8x4xf32>
    %c64_253 = arith.constant 64 : index
    %c20_254 = arith.constant 20 : index
    %181 = vector.load %arg11[%c64_253, %c20_254] : memref<128x64xf32, #tpu.memory_space<vmem>>, vector<8x4xf32>
    tpu.vector_store %arg11[%c64_253, %c20_254], %180 {strides = array<i32>} : memref<128x64xf32, #tpu.memory_space<vmem>>, vector<8x4xf32>,
    %c379 = arith.constant 379 : index
    %c0_255 = arith.constant 0 : index
    %182 = tpu.strided_load %arg1[%c379, %c0_255] {strides = array<i32: 2, 1>} : memref<648x4xf32, #tpu.memory_space<vmem>>, vector<8x4xf32>
    %c72_256 = arith.constant 72 : index
    %c20_257 = arith.constant 20 : index
    %183 = vector.load %arg11[%c72_256, %c20_257] : memref<128x64xf32, #tpu.memory_space<vmem>>, vector<8x4xf32>
    tpu.vector_store %arg11[%c72_256, %c20_257], %182 {strides = array<i32>} : memref<128x64xf32, #tpu.memory_space<vmem>>, vector<8x4xf32>,
    %c415 = arith.constant 415 : index
    %c0_258 = arith.constant 0 : index
    %184 = tpu.strided_load %arg1[%c415, %c0_258] {strides = array<i32: 2, 1>} : memref<648x4xf32, #tpu.memory_space<vmem>>, vector<8x4xf32>
    %c80_259 = arith.constant 80 : index
    %c20_260 = arith.constant 20 : index
    %185 = vector.load %arg11[%c80_259, %c20_260] : memref<128x64xf32, #tpu.memory_space<vmem>>, vector<8x4xf32>
    tpu.vector_store %arg11[%c80_259, %c20_260], %184 {strides = array<i32>} : memref<128x64xf32, #tpu.memory_space<vmem>>, vector<8x4xf32>,
    %c451 = arith.constant 451 : index
    %c0_261 = arith.constant 0 : index
    %186 = tpu.strided_load %arg1[%c451, %c0_261] {strides = array<i32: 2, 1>} : memref<648x4xf32, #tpu.memory_space<vmem>>, vector<8x4xf32>
    %c88_262 = arith.constant 88 : index
    %c20_263 = arith.constant 20 : index
    %187 = vector.load %arg11[%c88_262, %c20_263] : memref<128x64xf32, #tpu.memory_space<vmem>>, vector<8x4xf32>
    tpu.vector_store %arg11[%c88_262, %c20_263], %186 {strides = array<i32>} : memref<128x64xf32, #tpu.memory_space<vmem>>, vector<8x4xf32>,
    %c487 = arith.constant 487 : index
    %c0_264 = arith.constant 0 : index
    %188 = tpu.strided_load %arg1[%c487, %c0_264] {strides = array<i32: 2, 1>} : memref<648x4xf32, #tpu.memory_space<vmem>>, vector<8x4xf32>
    %c96_265 = arith.constant 96 : index
    %c20_266 = arith.constant 20 : index
    %189 = vector.load %arg11[%c96_265, %c20_266] : memref<128x64xf32, #tpu.memory_space<vmem>>, vector<8x4xf32>
    tpu.vector_store %arg11[%c96_265, %c20_266], %188 {strides = array<i32>} : memref<128x64xf32, #tpu.memory_space<vmem>>, vector<8x4xf32>,
    %c523 = arith.constant 523 : index
    %c0_267 = arith.constant 0 : index
    %190 = tpu.strided_load %arg1[%c523, %c0_267] {strides = array<i32: 2, 1>} : memref<648x4xf32, #tpu.memory_space<vmem>>, vector<8x4xf32>
    %c104_268 = arith.constant 104 : index
    %c20_269 = arith.constant 20 : index
    %191 = vector.load %arg11[%c104_268, %c20_269] : memref<128x64xf32, #tpu.memory_space<vmem>>, vector<8x4xf32>
    tpu.vector_store %arg11[%c104_268, %c20_269], %190 {strides = array<i32>} : memref<128x64xf32, #tpu.memory_space<vmem>>, vector<8x4xf32>,
    %c559 = arith.constant 559 : index
    %c0_270 = arith.constant 0 : index
    %192 = tpu.strided_load %arg1[%c559, %c0_270] {strides = array<i32: 2, 1>} : memref<648x4xf32, #tpu.memory_space<vmem>>, vector<8x4xf32>
    %c112_271 = arith.constant 112 : index
    %c20_272 = arith.constant 20 : index
    %193 = vector.load %arg11[%c112_271, %c20_272] : memref<128x64xf32, #tpu.memory_space<vmem>>, vector<8x4xf32>
    tpu.vector_store %arg11[%c112_271, %c20_272], %192 {strides = array<i32>} : memref<128x64xf32, #tpu.memory_space<vmem>>, vector<8x4xf32>,
    %c595 = arith.constant 595 : index
    %c0_273 = arith.constant 0 : index
    %194 = tpu.strided_load %arg1[%c595, %c0_273] {strides = array<i32: 2, 1>} : memref<648x4xf32, #tpu.memory_space<vmem>>, vector<8x4xf32>
    %c120_274 = arith.constant 120 : index
    %c20_275 = arith.constant 20 : index
    %195 = vector.load %arg11[%c120_274, %c20_275] : memref<128x64xf32, #tpu.memory_space<vmem>>, vector<8x4xf32>
    tpu.vector_store %arg11[%c120_274, %c20_275], %194 {strides = array<i32>} : memref<128x64xf32, #tpu.memory_space<vmem>>, vector<8x4xf32>,
    %c20_276 = arith.constant 20 : index
    %c0_277 = arith.constant 0 : index
    %196 = tpu.strided_load %arg1[%c20_276, %c0_277] {strides = array<i32: 2, 1>} : memref<648x4xf32, #tpu.memory_space<vmem>>, vector<8x4xf32>
    %c0_278 = arith.constant 0 : index
    %c24_279 = arith.constant 24 : index
    %197 = vector.load %arg11[%c0_278, %c24_279] : memref<128x64xf32, #tpu.memory_space<vmem>>, vector<8x4xf32>
    tpu.vector_store %arg11[%c0_278, %c24_279], %196 {strides = array<i32>} : memref<128x64xf32, #tpu.memory_space<vmem>>, vector<8x4xf32>,
    %c56_280 = arith.constant 56 : index
    %c0_281 = arith.constant 0 : index
    %198 = tpu.strided_load %arg1[%c56_280, %c0_281] {strides = array<i32: 2, 1>} : memref<648x4xf32, #tpu.memory_space<vmem>>, vector<8x4xf32>
    %c8_282 = arith.constant 8 : index
    %c24_283 = arith.constant 24 : index
    %199 = vector.load %arg11[%c8_282, %c24_283] : memref<128x64xf32, #tpu.memory_space<vmem>>, vector<8x4xf32>
    tpu.vector_store %arg11[%c8_282, %c24_283], %198 {strides = array<i32>} : memref<128x64xf32, #tpu.memory_space<vmem>>, vector<8x4xf32>,
    %c92 = arith.constant 92 : index
    %c0_284 = arith.constant 0 : index
    %200 = tpu.strided_load %arg1[%c92, %c0_284] {strides = array<i32: 2, 1>} : memref<648x4xf32, #tpu.memory_space<vmem>>, vector<8x4xf32>
    %c16_285 = arith.constant 16 : index
    %c24_286 = arith.constant 24 : index
    %201 = vector.load %arg11[%c16_285, %c24_286] : memref<128x64xf32, #tpu.memory_space<vmem>>, vector<8x4xf32>
    tpu.vector_store %arg11[%c16_285, %c24_286], %200 {strides = array<i32>} : memref<128x64xf32, #tpu.memory_space<vmem>>, vector<8x4xf32>,
    %c128 = arith.constant 128 : index
    %c0_287 = arith.constant 0 : index
    %202 = tpu.strided_load %arg1[%c128, %c0_287] {strides = array<i32: 2, 1>} : memref<648x4xf32, #tpu.memory_space<vmem>>, vector<8x4xf32>
    %c24_288 = arith.constant 24 : index
    %c24_289 = arith.constant 24 : index
    %203 = vector.load %arg11[%c24_288, %c24_289] : memref<128x64xf32, #tpu.memory_space<vmem>>, vector<8x4xf32>
    tpu.vector_store %arg11[%c24_288, %c24_289], %202 {strides = array<i32>} : memref<128x64xf32, #tpu.memory_space<vmem>>, vector<8x4xf32>,
    %c164 = arith.constant 164 : index
    %c0_290 = arith.constant 0 : index
    %204 = tpu.strided_load %arg1[%c164, %c0_290] {strides = array<i32: 2, 1>} : memref<648x4xf32, #tpu.memory_space<vmem>>, vector<8x4xf32>
    %c32_291 = arith.constant 32 : index
    %c24_292 = arith.constant 24 : index
    %205 = vector.load %arg11[%c32_291, %c24_292] : memref<128x64xf32, #tpu.memory_space<vmem>>, vector<8x4xf32>
    tpu.vector_store %arg11[%c32_291, %c24_292], %204 {strides = array<i32>} : memref<128x64xf32, #tpu.memory_space<vmem>>, vector<8x4xf32>,
    %c200 = arith.constant 200 : index
    %c0_293 = arith.constant 0 : index
    %206 = tpu.strided_load %arg1[%c200, %c0_293] {strides = array<i32: 2, 1>} : memref<648x4xf32, #tpu.memory_space<vmem>>, vector<8x4xf32>
    %c40_294 = arith.constant 40 : index
    %c24_295 = arith.constant 24 : index
    %207 = vector.load %arg11[%c40_294, %c24_295] : memref<128x64xf32, #tpu.memory_space<vmem>>, vector<8x4xf32>
    tpu.vector_store %arg11[%c40_294, %c24_295], %206 {strides = array<i32>} : memref<128x64xf32, #tpu.memory_space<vmem>>, vector<8x4xf32>,
    %c236 = arith.constant 236 : index
    %c0_296 = arith.constant 0 : index
    %208 = tpu.strided_load %arg1[%c236, %c0_296] {strides = array<i32: 2, 1>} : memref<648x4xf32, #tpu.memory_space<vmem>>, vector<8x4xf32>
    %c48_297 = arith.constant 48 : index
    %c24_298 = arith.constant 24 : index
    %209 = vector.load %arg11[%c48_297, %c24_298] : memref<128x64xf32, #tpu.memory_space<vmem>>, vector<8x4xf32>
    tpu.vector_store %arg11[%c48_297, %c24_298], %208 {strides = array<i32>} : memref<128x64xf32, #tpu.memory_space<vmem>>, vector<8x4xf32>,
    %c272 = arith.constant 272 : index
    %c0_299 = arith.constant 0 : index
    %210 = tpu.strided_load %arg1[%c272, %c0_299] {strides = array<i32: 2, 1>} : memref<648x4xf32, #tpu.memory_space<vmem>>, vector<8x4xf32>
    %c56_300 = arith.constant 56 : index
    %c24_301 = arith.constant 24 : index
    %211 = vector.load %arg11[%c56_300, %c24_301] : memref<128x64xf32, #tpu.memory_space<vmem>>, vector<8x4xf32>
    tpu.vector_store %arg11[%c56_300, %c24_301], %210 {strides = array<i32>} : memref<128x64xf32, #tpu.memory_space<vmem>>, vector<8x4xf32>,
    %c344 = arith.constant 344 : index
    %c0_302 = arith.constant 0 : index
    %212 = tpu.strided_load %arg1[%c344, %c0_302] {strides = array<i32: 2, 1>} : memref<648x4xf32, #tpu.memory_space<vmem>>, vector<8x4xf32>
    %c64_303 = arith.constant 64 : index
    %c24_304 = arith.constant 24 : index
    %213 = vector.load %arg11[%c64_303, %c24_304] : memref<128x64xf32, #tpu.memory_space<vmem>>, vector<8x4xf32>
    tpu.vector_store %arg11[%c64_303, %c24_304], %212 {strides = array<i32>} : memref<128x64xf32, #tpu.memory_space<vmem>>, vector<8x4xf32>,
    %c380 = arith.constant 380 : index
    %c0_305 = arith.constant 0 : index
    %214 = tpu.strided_load %arg1[%c380, %c0_305] {strides = array<i32: 2, 1>} : memref<648x4xf32, #tpu.memory_space<vmem>>, vector<8x4xf32>
    %c72_306 = arith.constant 72 : index
    %c24_307 = arith.constant 24 : index
    %215 = vector.load %arg11[%c72_306, %c24_307] : memref<128x64xf32, #tpu.memory_space<vmem>>, vector<8x4xf32>
    tpu.vector_store %arg11[%c72_306, %c24_307], %214 {strides = array<i32>} : memref<128x64xf32, #tpu.memory_space<vmem>>, vector<8x4xf32>,
    %c416 = arith.constant 416 : index
    %c0_308 = arith.constant 0 : index
    %216 = tpu.strided_load %arg1[%c416, %c0_308] {strides = array<i32: 2, 1>} : memref<648x4xf32, #tpu.memory_space<vmem>>, vector<8x4xf32>
    %c80_309 = arith.constant 80 : index
    %c24_310 = arith.constant 24 : index
    %217 = vector.load %arg11[%c80_309, %c24_310] : memref<128x64xf32, #tpu.memory_space<vmem>>, vector<8x4xf32>
    tpu.vector_store %arg11[%c80_309, %c24_310], %216 {strides = array<i32>} : memref<128x64xf32, #tpu.memory_space<vmem>>, vector<8x4xf32>,
    %c452 = arith.constant 452 : index
    %c0_311 = arith.constant 0 : index
    %218 = tpu.strided_load %arg1[%c452, %c0_311] {strides = array<i32: 2, 1>} : memref<648x4xf32, #tpu.memory_space<vmem>>, vector<8x4xf32>
    %c88_312 = arith.constant 88 : index
    %c24_313 = arith.constant 24 : index
    %219 = vector.load %arg11[%c88_312, %c24_313] : memref<128x64xf32, #tpu.memory_space<vmem>>, vector<8x4xf32>
    tpu.vector_store %arg11[%c88_312, %c24_313], %218 {strides = array<i32>} : memref<128x64xf32, #tpu.memory_space<vmem>>, vector<8x4xf32>,
    %c488 = arith.constant 488 : index
    %c0_314 = arith.constant 0 : index
    %220 = tpu.strided_load %arg1[%c488, %c0_314] {strides = array<i32: 2, 1>} : memref<648x4xf32, #tpu.memory_space<vmem>>, vector<8x4xf32>
    %c96_315 = arith.constant 96 : index
    %c24_316 = arith.constant 24 : index
    %221 = vector.load %arg11[%c96_315, %c24_316] : memref<128x64xf32, #tpu.memory_space<vmem>>, vector<8x4xf32>
    tpu.vector_store %arg11[%c96_315, %c24_316], %220 {strides = array<i32>} : memref<128x64xf32, #tpu.memory_space<vmem>>, vector<8x4xf32>,
    %c524 = arith.constant 524 : index
    %c0_317 = arith.constant 0 : index
    %222 = tpu.strided_load %arg1[%c524, %c0_317] {strides = array<i32: 2, 1>} : memref<648x4xf32, #tpu.memory_space<vmem>>, vector<8x4xf32>
    %c104_318 = arith.constant 104 : index
    %c24_319 = arith.constant 24 : index
    %223 = vector.load %arg11[%c104_318, %c24_319] : memref<128x64xf32, #tpu.memory_space<vmem>>, vector<8x4xf32>
    tpu.vector_store %arg11[%c104_318, %c24_319], %222 {strides = array<i32>} : memref<128x64xf32, #tpu.memory_space<vmem>>, vector<8x4xf32>,
    %c560 = arith.constant 560 : index
    %c0_320 = arith.constant 0 : index
    %224 = tpu.strided_load %arg1[%c560, %c0_320] {strides = array<i32: 2, 1>} : memref<648x4xf32, #tpu.memory_space<vmem>>, vector<8x4xf32>
    %c112_321 = arith.constant 112 : index
    %c24_322 = arith.constant 24 : index
    %225 = vector.load %arg11[%c112_321, %c24_322] : memref<128x64xf32, #tpu.memory_space<vmem>>, vector<8x4xf32>
    tpu.vector_store %arg11[%c112_321, %c24_322], %224 {strides = array<i32>} : memref<128x64xf32, #tpu.memory_space<vmem>>, vector<8x4xf32>,
    %c596 = arith.constant 596 : index
    %c0_323 = arith.constant 0 : index
    %226 = tpu.strided_load %arg1[%c596, %c0_323] {strides = array<i32: 2, 1>} : memref<648x4xf32, #tpu.memory_space<vmem>>, vector<8x4xf32>
    %c120_324 = arith.constant 120 : index
    %c24_325 = arith.constant 24 : index
    %227 = vector.load %arg11[%c120_324, %c24_325] : memref<128x64xf32, #tpu.memory_space<vmem>>, vector<8x4xf32>
    tpu.vector_store %arg11[%c120_324, %c24_325], %226 {strides = array<i32>} : memref<128x64xf32, #tpu.memory_space<vmem>>, vector<8x4xf32>,
    %c21 = arith.constant 21 : index
    %c0_326 = arith.constant 0 : index
    %228 = tpu.strided_load %arg1[%c21, %c0_326] {strides = array<i32: 2, 1>} : memref<648x4xf32, #tpu.memory_space<vmem>>, vector<8x4xf32>
    %c0_327 = arith.constant 0 : index
    %c28 = arith.constant 28 : index
    %229 = vector.load %arg11[%c0_327, %c28] : memref<128x64xf32, #tpu.memory_space<vmem>>, vector<8x4xf32>
    tpu.vector_store %arg11[%c0_327, %c28], %228 {strides = array<i32>} : memref<128x64xf32, #tpu.memory_space<vmem>>, vector<8x4xf32>,
    %c57 = arith.constant 57 : index
    %c0_328 = arith.constant 0 : index
    %230 = tpu.strided_load %arg1[%c57, %c0_328] {strides = array<i32: 2, 1>} : memref<648x4xf32, #tpu.memory_space<vmem>>, vector<8x4xf32>
    %c8_329 = arith.constant 8 : index
    %c28_330 = arith.constant 28 : index
    %231 = vector.load %arg11[%c8_329, %c28_330] : memref<128x64xf32, #tpu.memory_space<vmem>>, vector<8x4xf32>
    tpu.vector_store %arg11[%c8_329, %c28_330], %230 {strides = array<i32>} : memref<128x64xf32, #tpu.memory_space<vmem>>, vector<8x4xf32>,
    %c93 = arith.constant 93 : index
    %c0_331 = arith.constant 0 : index
    %232 = tpu.strided_load %arg1[%c93, %c0_331] {strides = array<i32: 2, 1>} : memref<648x4xf32, #tpu.memory_space<vmem>>, vector<8x4xf32>
    %c16_332 = arith.constant 16 : index
    %c28_333 = arith.constant 28 : index
    %233 = vector.load %arg11[%c16_332, %c28_333] : memref<128x64xf32, #tpu.memory_space<vmem>>, vector<8x4xf32>
    tpu.vector_store %arg11[%c16_332, %c28_333], %232 {strides = array<i32>} : memref<128x64xf32, #tpu.memory_space<vmem>>, vector<8x4xf32>,
    %c129 = arith.constant 129 : index
    %c0_334 = arith.constant 0 : index
    %234 = tpu.strided_load %arg1[%c129, %c0_334] {strides = array<i32: 2, 1>} : memref<648x4xf32, #tpu.memory_space<vmem>>, vector<8x4xf32>
    %c24_335 = arith.constant 24 : index
    %c28_336 = arith.constant 28 : index
    %235 = vector.load %arg11[%c24_335, %c28_336] : memref<128x64xf32, #tpu.memory_space<vmem>>, vector<8x4xf32>
    tpu.vector_store %arg11[%c24_335, %c28_336], %234 {strides = array<i32>} : memref<128x64xf32, #tpu.memory_space<vmem>>, vector<8x4xf32>,
    %c165 = arith.constant 165 : index
    %c0_337 = arith.constant 0 : index
    %236 = tpu.strided_load %arg1[%c165, %c0_337] {strides = array<i32: 2, 1>} : memref<648x4xf32, #tpu.memory_space<vmem>>, vector<8x4xf32>
    %c32_338 = arith.constant 32 : index
    %c28_339 = arith.constant 28 : index
    %237 = vector.load %arg11[%c32_338, %c28_339] : memref<128x64xf32, #tpu.memory_space<vmem>>, vector<8x4xf32>
    tpu.vector_store %arg11[%c32_338, %c28_339], %236 {strides = array<i32>} : memref<128x64xf32, #tpu.memory_space<vmem>>, vector<8x4xf32>,
    %c201 = arith.constant 201 : index
    %c0_340 = arith.constant 0 : index
    %238 = tpu.strided_load %arg1[%c201, %c0_340] {strides = array<i32: 2, 1>} : memref<648x4xf32, #tpu.memory_space<vmem>>, vector<8x4xf32>
    %c40_341 = arith.constant 40 : index
    %c28_342 = arith.constant 28 : index
    %239 = vector.load %arg11[%c40_341, %c28_342] : memref<128x64xf32, #tpu.memory_space<vmem>>, vector<8x4xf32>
    tpu.vector_store %arg11[%c40_341, %c28_342], %238 {strides = array<i32>} : memref<128x64xf32, #tpu.memory_space<vmem>>, vector<8x4xf32>,
    %c237 = arith.constant 237 : index
    %c0_343 = arith.constant 0 : index
    %240 = tpu.strided_load %arg1[%c237, %c0_343] {strides = array<i32: 2, 1>} : memref<648x4xf32, #tpu.memory_space<vmem>>, vector<8x4xf32>
    %c48_344 = arith.constant 48 : index
    %c28_345 = arith.constant 28 : index
    %241 = vector.load %arg11[%c48_344, %c28_345] : memref<128x64xf32, #tpu.memory_space<vmem>>, vector<8x4xf32>
    tpu.vector_store %arg11[%c48_344, %c28_345], %240 {strides = array<i32>} : memref<128x64xf32, #tpu.memory_space<vmem>>, vector<8x4xf32>,
    %c273 = arith.constant 273 : index
    %c0_346 = arith.constant 0 : index
    %242 = tpu.strided_load %arg1[%c273, %c0_346] {strides = array<i32: 2, 1>} : memref<648x4xf32, #tpu.memory_space<vmem>>, vector<8x4xf32>
    %c56_347 = arith.constant 56 : index
    %c28_348 = arith.constant 28 : index
    %243 = vector.load %arg11[%c56_347, %c28_348] : memref<128x64xf32, #tpu.memory_space<vmem>>, vector<8x4xf32>
    tpu.vector_store %arg11[%c56_347, %c28_348], %242 {strides = array<i32>} : memref<128x64xf32, #tpu.memory_space<vmem>>, vector<8x4xf32>,
    %c345 = arith.constant 345 : index
    %c0_349 = arith.constant 0 : index
    %244 = tpu.strided_load %arg1[%c345, %c0_349] {strides = array<i32: 2, 1>} : memref<648x4xf32, #tpu.memory_space<vmem>>, vector<8x4xf32>
    %c64_350 = arith.constant 64 : index
    %c28_351 = arith.constant 28 : index
    %245 = vector.load %arg11[%c64_350, %c28_351] : memref<128x64xf32, #tpu.memory_space<vmem>>, vector<8x4xf32>
    tpu.vector_store %arg11[%c64_350, %c28_351], %244 {strides = array<i32>} : memref<128x64xf32, #tpu.memory_space<vmem>>, vector<8x4xf32>,
    %c381 = arith.constant 381 : index
    %c0_352 = arith.constant 0 : index
    %246 = tpu.strided_load %arg1[%c381, %c0_352] {strides = array<i32: 2, 1>} : memref<648x4xf32, #tpu.memory_space<vmem>>, vector<8x4xf32>
    %c72_353 = arith.constant 72 : index
    %c28_354 = arith.constant 28 : index
    %247 = vector.load %arg11[%c72_353, %c28_354] : memref<128x64xf32, #tpu.memory_space<vmem>>, vector<8x4xf32>
    tpu.vector_store %arg11[%c72_353, %c28_354], %246 {strides = array<i32>} : memref<128x64xf32, #tpu.memory_space<vmem>>, vector<8x4xf32>,
    %c417 = arith.constant 417 : index
    %c0_355 = arith.constant 0 : index
    %248 = tpu.strided_load %arg1[%c417, %c0_355] {strides = array<i32: 2, 1>} : memref<648x4xf32, #tpu.memory_space<vmem>>, vector<8x4xf32>
    %c80_356 = arith.constant 80 : index
    %c28_357 = arith.constant 28 : index
    %249 = vector.load %arg11[%c80_356, %c28_357] : memref<128x64xf32, #tpu.memory_space<vmem>>, vector<8x4xf32>
    tpu.vector_store %arg11[%c80_356, %c28_357], %248 {strides = array<i32>} : memref<128x64xf32, #tpu.memory_space<vmem>>, vector<8x4xf32>,
    %c453 = arith.constant 453 : index
    %c0_358 = arith.constant 0 : index
    %250 = tpu.strided_load %arg1[%c453, %c0_358] {strides = array<i32: 2, 1>} : memref<648x4xf32, #tpu.memory_space<vmem>>, vector<8x4xf32>
    %c88_359 = arith.constant 88 : index
    %c28_360 = arith.constant 28 : index
    %251 = vector.load %arg11[%c88_359, %c28_360] : memref<128x64xf32, #tpu.memory_space<vmem>>, vector<8x4xf32>
    tpu.vector_store %arg11[%c88_359, %c28_360], %250 {strides = array<i32>} : memref<128x64xf32, #tpu.memory_space<vmem>>, vector<8x4xf32>,
    %c489 = arith.constant 489 : index
    %c0_361 = arith.constant 0 : index
    %252 = tpu.strided_load %arg1[%c489, %c0_361] {strides = array<i32: 2, 1>} : memref<648x4xf32, #tpu.memory_space<vmem>>, vector<8x4xf32>
    %c96_362 = arith.constant 96 : index
    %c28_363 = arith.constant 28 : index
    %253 = vector.load %arg11[%c96_362, %c28_363] : memref<128x64xf32, #tpu.memory_space<vmem>>, vector<8x4xf32>
    tpu.vector_store %arg11[%c96_362, %c28_363], %252 {strides = array<i32>} : memref<128x64xf32, #tpu.memory_space<vmem>>, vector<8x4xf32>,
    %c525 = arith.constant 525 : index
    %c0_364 = arith.constant 0 : index
    %254 = tpu.strided_load %arg1[%c525, %c0_364] {strides = array<i32: 2, 1>} : memref<648x4xf32, #tpu.memory_space<vmem>>, vector<8x4xf32>
    %c104_365 = arith.constant 104 : index
    %c28_366 = arith.constant 28 : index
    %255 = vector.load %arg11[%c104_365, %c28_366] : memref<128x64xf32, #tpu.memory_space<vmem>>, vector<8x4xf32>
    tpu.vector_store %arg11[%c104_365, %c28_366], %254 {strides = array<i32>} : memref<128x64xf32, #tpu.memory_space<vmem>>, vector<8x4xf32>,
    %c561 = arith.constant 561 : index
    %c0_367 = arith.constant 0 : index
    %256 = tpu.strided_load %arg1[%c561, %c0_367] {strides = array<i32: 2, 1>} : memref<648x4xf32, #tpu.memory_space<vmem>>, vector<8x4xf32>
    %c112_368 = arith.constant 112 : index
    %c28_369 = arith.constant 28 : index
    %257 = vector.load %arg11[%c112_368, %c28_369] : memref<128x64xf32, #tpu.memory_space<vmem>>, vector<8x4xf32>
    tpu.vector_store %arg11[%c112_368, %c28_369], %256 {strides = array<i32>} : memref<128x64xf32, #tpu.memory_space<vmem>>, vector<8x4xf32>,
    %c597 = arith.constant 597 : index
    %c0_370 = arith.constant 0 : index
    %258 = tpu.strided_load %arg1[%c597, %c0_370] {strides = array<i32: 2, 1>} : memref<648x4xf32, #tpu.memory_space<vmem>>, vector<8x4xf32>
    %c120_371 = arith.constant 120 : index
    %c28_372 = arith.constant 28 : index
    %259 = vector.load %arg11[%c120_371, %c28_372] : memref<128x64xf32, #tpu.memory_space<vmem>>, vector<8x4xf32>
    tpu.vector_store %arg11[%c120_371, %c28_372], %258 {strides = array<i32>} : memref<128x64xf32, #tpu.memory_space<vmem>>, vector<8x4xf32>,
    %c36_373 = arith.constant 36 : index
    %c0_374 = arith.constant 0 : index
    %260 = tpu.strided_load %arg1[%c36_373, %c0_374] {strides = array<i32: 2, 1>} : memref<648x4xf32, #tpu.memory_space<vmem>>, vector<8x4xf32>
    %c0_375 = arith.constant 0 : index
    %c32_376 = arith.constant 32 : index
    %261 = vector.load %arg11[%c0_375, %c32_376] : memref<128x64xf32, #tpu.memory_space<vmem>>, vector<8x4xf32>
    tpu.vector_store %arg11[%c0_375, %c32_376], %260 {strides = array<i32>} : memref<128x64xf32, #tpu.memory_space<vmem>>, vector<8x4xf32>,
    %c72_377 = arith.constant 72 : index
    %c0_378 = arith.constant 0 : index
    %262 = tpu.strided_load %arg1[%c72_377, %c0_378] {strides = array<i32: 2, 1>} : memref<648x4xf32, #tpu.memory_space<vmem>>, vector<8x4xf32>
    %c8_379 = arith.constant 8 : index
    %c32_380 = arith.constant 32 : index
    %263 = vector.load %arg11[%c8_379, %c32_380] : memref<128x64xf32, #tpu.memory_space<vmem>>, vector<8x4xf32>
    tpu.vector_store %arg11[%c8_379, %c32_380], %262 {strides = array<i32>} : memref<128x64xf32, #tpu.memory_space<vmem>>, vector<8x4xf32>,
    %c108_381 = arith.constant 108 : index
    %c0_382 = arith.constant 0 : index
    %264 = tpu.strided_load %arg1[%c108_381, %c0_382] {strides = array<i32: 2, 1>} : memref<648x4xf32, #tpu.memory_space<vmem>>, vector<8x4xf32>
    %c16_383 = arith.constant 16 : index
    %c32_384 = arith.constant 32 : index
    %265 = vector.load %arg11[%c16_383, %c32_384] : memref<128x64xf32, #tpu.memory_space<vmem>>, vector<8x4xf32>
    tpu.vector_store %arg11[%c16_383, %c32_384], %264 {strides = array<i32>} : memref<128x64xf32, #tpu.memory_space<vmem>>, vector<8x4xf32>,
    %c144_385 = arith.constant 144 : index
    %c0_386 = arith.constant 0 : index
    %266 = tpu.strided_load %arg1[%c144_385, %c0_386] {strides = array<i32: 2, 1>} : memref<648x4xf32, #tpu.memory_space<vmem>>, vector<8x4xf32>
    %c24_387 = arith.constant 24 : index
    %c32_388 = arith.constant 32 : index
    %267 = vector.load %arg11[%c24_387, %c32_388] : memref<128x64xf32, #tpu.memory_space<vmem>>, vector<8x4xf32>
    tpu.vector_store %arg11[%c24_387, %c32_388], %266 {strides = array<i32>} : memref<128x64xf32, #tpu.memory_space<vmem>>, vector<8x4xf32>,
    %c180_389 = arith.constant 180 : index
    %c0_390 = arith.constant 0 : index
    %268 = tpu.strided_load %arg1[%c180_389, %c0_390] {strides = array<i32: 2, 1>} : memref<648x4xf32, #tpu.memory_space<vmem>>, vector<8x4xf32>
    %c32_391 = arith.constant 32 : index
    %c32_392 = arith.constant 32 : index
    %269 = vector.load %arg11[%c32_391, %c32_392] : memref<128x64xf32, #tpu.memory_space<vmem>>, vector<8x4xf32>
    tpu.vector_store %arg11[%c32_391, %c32_392], %268 {strides = array<i32>} : memref<128x64xf32, #tpu.memory_space<vmem>>, vector<8x4xf32>,
    %c216_393 = arith.constant 216 : index
    %c0_394 = arith.constant 0 : index
    %270 = tpu.strided_load %arg1[%c216_393, %c0_394] {strides = array<i32: 2, 1>} : memref<648x4xf32, #tpu.memory_space<vmem>>, vector<8x4xf32>
    %c40_395 = arith.constant 40 : index
    %c32_396 = arith.constant 32 : index
    %271 = vector.load %arg11[%c40_395, %c32_396] : memref<128x64xf32, #tpu.memory_space<vmem>>, vector<8x4xf32>
    tpu.vector_store %arg11[%c40_395, %c32_396], %270 {strides = array<i32>} : memref<128x64xf32, #tpu.memory_space<vmem>>, vector<8x4xf32>,
    %c252_397 = arith.constant 252 : index
    %c0_398 = arith.constant 0 : index
    %272 = tpu.strided_load %arg1[%c252_397, %c0_398] {strides = array<i32: 2, 1>} : memref<648x4xf32, #tpu.memory_space<vmem>>, vector<8x4xf32>
    %c48_399 = arith.constant 48 : index
    %c32_400 = arith.constant 32 : index
    %273 = vector.load %arg11[%c48_399, %c32_400] : memref<128x64xf32, #tpu.memory_space<vmem>>, vector<8x4xf32>
    tpu.vector_store %arg11[%c48_399, %c32_400], %272 {strides = array<i32>} : memref<128x64xf32, #tpu.memory_space<vmem>>, vector<8x4xf32>,
    %c288 = arith.constant 288 : index
    %c0_401 = arith.constant 0 : index
    %274 = tpu.strided_load %arg1[%c288, %c0_401] {strides = array<i32: 2, 1>} : memref<648x4xf32, #tpu.memory_space<vmem>>, vector<8x4xf32>
    %c56_402 = arith.constant 56 : index
    %c32_403 = arith.constant 32 : index
    %275 = vector.load %arg11[%c56_402, %c32_403] : memref<128x64xf32, #tpu.memory_space<vmem>>, vector<8x4xf32>
    tpu.vector_store %arg11[%c56_402, %c32_403], %274 {strides = array<i32>} : memref<128x64xf32, #tpu.memory_space<vmem>>, vector<8x4xf32>,
    %c360_404 = arith.constant 360 : index
    %c0_405 = arith.constant 0 : index
    %276 = tpu.strided_load %arg1[%c360_404, %c0_405] {strides = array<i32: 2, 1>} : memref<648x4xf32, #tpu.memory_space<vmem>>, vector<8x4xf32>
    %c64_406 = arith.constant 64 : index
    %c32_407 = arith.constant 32 : index
    %277 = vector.load %arg11[%c64_406, %c32_407] : memref<128x64xf32, #tpu.memory_space<vmem>>, vector<8x4xf32>
    tpu.vector_store %arg11[%c64_406, %c32_407], %276 {strides = array<i32>} : memref<128x64xf32, #tpu.memory_space<vmem>>, vector<8x4xf32>,
    %c396_408 = arith.constant 396 : index
    %c0_409 = arith.constant 0 : index
    %278 = tpu.strided_load %arg1[%c396_408, %c0_409] {strides = array<i32: 2, 1>} : memref<648x4xf32, #tpu.memory_space<vmem>>, vector<8x4xf32>
    %c72_410 = arith.constant 72 : index
    %c32_411 = arith.constant 32 : index
    %279 = vector.load %arg11[%c72_410, %c32_411] : memref<128x64xf32, #tpu.memory_space<vmem>>, vector<8x4xf32>
    tpu.vector_store %arg11[%c72_410, %c32_411], %278 {strides = array<i32>} : memref<128x64xf32, #tpu.memory_space<vmem>>, vector<8x4xf32>,
    %c432_412 = arith.constant 432 : index
    %c0_413 = arith.constant 0 : index
    %280 = tpu.strided_load %arg1[%c432_412, %c0_413] {strides = array<i32: 2, 1>} : memref<648x4xf32, #tpu.memory_space<vmem>>, vector<8x4xf32>
    %c80_414 = arith.constant 80 : index
    %c32_415 = arith.constant 32 : index
    %281 = vector.load %arg11[%c80_414, %c32_415] : memref<128x64xf32, #tpu.memory_space<vmem>>, vector<8x4xf32>
    tpu.vector_store %arg11[%c80_414, %c32_415], %280 {strides = array<i32>} : memref<128x64xf32, #tpu.memory_space<vmem>>, vector<8x4xf32>,
    %c468_416 = arith.constant 468 : index
    %c0_417 = arith.constant 0 : index
    %282 = tpu.strided_load %arg1[%c468_416, %c0_417] {strides = array<i32: 2, 1>} : memref<648x4xf32, #tpu.memory_space<vmem>>, vector<8x4xf32>
    %c88_418 = arith.constant 88 : index
    %c32_419 = arith.constant 32 : index
    %283 = vector.load %arg11[%c88_418, %c32_419] : memref<128x64xf32, #tpu.memory_space<vmem>>, vector<8x4xf32>
    tpu.vector_store %arg11[%c88_418, %c32_419], %282 {strides = array<i32>} : memref<128x64xf32, #tpu.memory_space<vmem>>, vector<8x4xf32>,
    %c504_420 = arith.constant 504 : index
    %c0_421 = arith.constant 0 : index
    %284 = tpu.strided_load %arg1[%c504_420, %c0_421] {strides = array<i32: 2, 1>} : memref<648x4xf32, #tpu.memory_space<vmem>>, vector<8x4xf32>
    %c96_422 = arith.constant 96 : index
    %c32_423 = arith.constant 32 : index
    %285 = vector.load %arg11[%c96_422, %c32_423] : memref<128x64xf32, #tpu.memory_space<vmem>>, vector<8x4xf32>
    tpu.vector_store %arg11[%c96_422, %c32_423], %284 {strides = array<i32>} : memref<128x64xf32, #tpu.memory_space<vmem>>, vector<8x4xf32>,
    %c540_424 = arith.constant 540 : index
    %c0_425 = arith.constant 0 : index
    %286 = tpu.strided_load %arg1[%c540_424, %c0_425] {strides = array<i32: 2, 1>} : memref<648x4xf32, #tpu.memory_space<vmem>>, vector<8x4xf32>
    %c104_426 = arith.constant 104 : index
    %c32_427 = arith.constant 32 : index
    %287 = vector.load %arg11[%c104_426, %c32_427] : memref<128x64xf32, #tpu.memory_space<vmem>>, vector<8x4xf32>
    tpu.vector_store %arg11[%c104_426, %c32_427], %286 {strides = array<i32>} : memref<128x64xf32, #tpu.memory_space<vmem>>, vector<8x4xf32>,
    %c576_428 = arith.constant 576 : index
    %c0_429 = arith.constant 0 : index
    %288 = tpu.strided_load %arg1[%c576_428, %c0_429] {strides = array<i32: 2, 1>} : memref<648x4xf32, #tpu.memory_space<vmem>>, vector<8x4xf32>
    %c112_430 = arith.constant 112 : index
    %c32_431 = arith.constant 32 : index
    %289 = vector.load %arg11[%c112_430, %c32_431] : memref<128x64xf32, #tpu.memory_space<vmem>>, vector<8x4xf32>
    tpu.vector_store %arg11[%c112_430, %c32_431], %288 {strides = array<i32>} : memref<128x64xf32, #tpu.memory_space<vmem>>, vector<8x4xf32>,
    %c612 = arith.constant 612 : index
    %c0_432 = arith.constant 0 : index
    %290 = tpu.strided_load %arg1[%c612, %c0_432] {strides = array<i32: 2, 1>} : memref<648x4xf32, #tpu.memory_space<vmem>>, vector<8x4xf32>
    %c120_433 = arith.constant 120 : index
    %c32_434 = arith.constant 32 : index
    %291 = vector.load %arg11[%c120_433, %c32_434] : memref<128x64xf32, #tpu.memory_space<vmem>>, vector<8x4xf32>
    tpu.vector_store %arg11[%c120_433, %c32_434], %290 {strides = array<i32>} : memref<128x64xf32, #tpu.memory_space<vmem>>, vector<8x4xf32>,
    %c37_435 = arith.constant 37 : index
    %c0_436 = arith.constant 0 : index
    %292 = tpu.strided_load %arg1[%c37_435, %c0_436] {strides = array<i32: 2, 1>} : memref<648x4xf32, #tpu.memory_space<vmem>>, vector<8x4xf32>
    %c0_437 = arith.constant 0 : index
    %c36_438 = arith.constant 36 : index
    %293 = vector.load %arg11[%c0_437, %c36_438] : memref<128x64xf32, #tpu.memory_space<vmem>>, vector<8x4xf32>
    tpu.vector_store %arg11[%c0_437, %c36_438], %292 {strides = array<i32>} : memref<128x64xf32, #tpu.memory_space<vmem>>, vector<8x4xf32>,
    %c73_439 = arith.constant 73 : index
    %c0_440 = arith.constant 0 : index
    %294 = tpu.strided_load %arg1[%c73_439, %c0_440] {strides = array<i32: 2, 1>} : memref<648x4xf32, #tpu.memory_space<vmem>>, vector<8x4xf32>
    %c8_441 = arith.constant 8 : index
    %c36_442 = arith.constant 36 : index
    %295 = vector.load %arg11[%c8_441, %c36_442] : memref<128x64xf32, #tpu.memory_space<vmem>>, vector<8x4xf32>
    tpu.vector_store %arg11[%c8_441, %c36_442], %294 {strides = array<i32>} : memref<128x64xf32, #tpu.memory_space<vmem>>, vector<8x4xf32>,
    %c109_443 = arith.constant 109 : index
    %c0_444 = arith.constant 0 : index
    %296 = tpu.strided_load %arg1[%c109_443, %c0_444] {strides = array<i32: 2, 1>} : memref<648x4xf32, #tpu.memory_space<vmem>>, vector<8x4xf32>
    %c16_445 = arith.constant 16 : index
    %c36_446 = arith.constant 36 : index
    %297 = vector.load %arg11[%c16_445, %c36_446] : memref<128x64xf32, #tpu.memory_space<vmem>>, vector<8x4xf32>
    tpu.vector_store %arg11[%c16_445, %c36_446], %296 {strides = array<i32>} : memref<128x64xf32, #tpu.memory_space<vmem>>, vector<8x4xf32>,
    %c145_447 = arith.constant 145 : index
    %c0_448 = arith.constant 0 : index
    %298 = tpu.strided_load %arg1[%c145_447, %c0_448] {strides = array<i32: 2, 1>} : memref<648x4xf32, #tpu.memory_space<vmem>>, vector<8x4xf32>
    %c24_449 = arith.constant 24 : index
    %c36_450 = arith.constant 36 : index
    %299 = vector.load %arg11[%c24_449, %c36_450] : memref<128x64xf32, #tpu.memory_space<vmem>>, vector<8x4xf32>
    tpu.vector_store %arg11[%c24_449, %c36_450], %298 {strides = array<i32>} : memref<128x64xf32, #tpu.memory_space<vmem>>, vector<8x4xf32>,
    %c181_451 = arith.constant 181 : index
    %c0_452 = arith.constant 0 : index
    %300 = tpu.strided_load %arg1[%c181_451, %c0_452] {strides = array<i32: 2, 1>} : memref<648x4xf32, #tpu.memory_space<vmem>>, vector<8x4xf32>
    %c32_453 = arith.constant 32 : index
    %c36_454 = arith.constant 36 : index
    %301 = vector.load %arg11[%c32_453, %c36_454] : memref<128x64xf32, #tpu.memory_space<vmem>>, vector<8x4xf32>
    tpu.vector_store %arg11[%c32_453, %c36_454], %300 {strides = array<i32>} : memref<128x64xf32, #tpu.memory_space<vmem>>, vector<8x4xf32>,
    %c217_455 = arith.constant 217 : index
    %c0_456 = arith.constant 0 : index
    %302 = tpu.strided_load %arg1[%c217_455, %c0_456] {strides = array<i32: 2, 1>} : memref<648x4xf32, #tpu.memory_space<vmem>>, vector<8x4xf32>
    %c40_457 = arith.constant 40 : index
    %c36_458 = arith.constant 36 : index
    %303 = vector.load %arg11[%c40_457, %c36_458] : memref<128x64xf32, #tpu.memory_space<vmem>>, vector<8x4xf32>
    tpu.vector_store %arg11[%c40_457, %c36_458], %302 {strides = array<i32>} : memref<128x64xf32, #tpu.memory_space<vmem>>, vector<8x4xf32>,
    %c253_459 = arith.constant 253 : index
    %c0_460 = arith.constant 0 : index
    %304 = tpu.strided_load %arg1[%c253_459, %c0_460] {strides = array<i32: 2, 1>} : memref<648x4xf32, #tpu.memory_space<vmem>>, vector<8x4xf32>
    %c48_461 = arith.constant 48 : index
    %c36_462 = arith.constant 36 : index
    %305 = vector.load %arg11[%c48_461, %c36_462] : memref<128x64xf32, #tpu.memory_space<vmem>>, vector<8x4xf32>
    tpu.vector_store %arg11[%c48_461, %c36_462], %304 {strides = array<i32>} : memref<128x64xf32, #tpu.memory_space<vmem>>, vector<8x4xf32>,
    %c289 = arith.constant 289 : index
    %c0_463 = arith.constant 0 : index
    %306 = tpu.strided_load %arg1[%c289, %c0_463] {strides = array<i32: 2, 1>} : memref<648x4xf32, #tpu.memory_space<vmem>>, vector<8x4xf32>
    %c56_464 = arith.constant 56 : index
    %c36_465 = arith.constant 36 : index
    %307 = vector.load %arg11[%c56_464, %c36_465] : memref<128x64xf32, #tpu.memory_space<vmem>>, vector<8x4xf32>
    tpu.vector_store %arg11[%c56_464, %c36_465], %306 {strides = array<i32>} : memref<128x64xf32, #tpu.memory_space<vmem>>, vector<8x4xf32>,
    %c361_466 = arith.constant 361 : index
    %c0_467 = arith.constant 0 : index
    %308 = tpu.strided_load %arg1[%c361_466, %c0_467] {strides = array<i32: 2, 1>} : memref<648x4xf32, #tpu.memory_space<vmem>>, vector<8x4xf32>
    %c64_468 = arith.constant 64 : index
    %c36_469 = arith.constant 36 : index
    %309 = vector.load %arg11[%c64_468, %c36_469] : memref<128x64xf32, #tpu.memory_space<vmem>>, vector<8x4xf32>
    tpu.vector_store %arg11[%c64_468, %c36_469], %308 {strides = array<i32>} : memref<128x64xf32, #tpu.memory_space<vmem>>, vector<8x4xf32>,
    %c397_470 = arith.constant 397 : index
    %c0_471 = arith.constant 0 : index
    %310 = tpu.strided_load %arg1[%c397_470, %c0_471] {strides = array<i32: 2, 1>} : memref<648x4xf32, #tpu.memory_space<vmem>>, vector<8x4xf32>
    %c72_472 = arith.constant 72 : index
    %c36_473 = arith.constant 36 : index
    %311 = vector.load %arg11[%c72_472, %c36_473] : memref<128x64xf32, #tpu.memory_space<vmem>>, vector<8x4xf32>
    tpu.vector_store %arg11[%c72_472, %c36_473], %310 {strides = array<i32>} : memref<128x64xf32, #tpu.memory_space<vmem>>, vector<8x4xf32>,
    %c433_474 = arith.constant 433 : index
    %c0_475 = arith.constant 0 : index
    %312 = tpu.strided_load %arg1[%c433_474, %c0_475] {strides = array<i32: 2, 1>} : memref<648x4xf32, #tpu.memory_space<vmem>>, vector<8x4xf32>
    %c80_476 = arith.constant 80 : index
    %c36_477 = arith.constant 36 : index
    %313 = vector.load %arg11[%c80_476, %c36_477] : memref<128x64xf32, #tpu.memory_space<vmem>>, vector<8x4xf32>
    tpu.vector_store %arg11[%c80_476, %c36_477], %312 {strides = array<i32>} : memref<128x64xf32, #tpu.memory_space<vmem>>, vector<8x4xf32>,
    %c469_478 = arith.constant 469 : index
    %c0_479 = arith.constant 0 : index
    %314 = tpu.strided_load %arg1[%c469_478, %c0_479] {strides = array<i32: 2, 1>} : memref<648x4xf32, #tpu.memory_space<vmem>>, vector<8x4xf32>
    %c88_480 = arith.constant 88 : index
    %c36_481 = arith.constant 36 : index
    %315 = vector.load %arg11[%c88_480, %c36_481] : memref<128x64xf32, #tpu.memory_space<vmem>>, vector<8x4xf32>
    tpu.vector_store %arg11[%c88_480, %c36_481], %314 {strides = array<i32>} : memref<128x64xf32, #tpu.memory_space<vmem>>, vector<8x4xf32>,
    %c505_482 = arith.constant 505 : index
    %c0_483 = arith.constant 0 : index
    %316 = tpu.strided_load %arg1[%c505_482, %c0_483] {strides = array<i32: 2, 1>} : memref<648x4xf32, #tpu.memory_space<vmem>>, vector<8x4xf32>
    %c96_484 = arith.constant 96 : index
    %c36_485 = arith.constant 36 : index
    %317 = vector.load %arg11[%c96_484, %c36_485] : memref<128x64xf32, #tpu.memory_space<vmem>>, vector<8x4xf32>
    tpu.vector_store %arg11[%c96_484, %c36_485], %316 {strides = array<i32>} : memref<128x64xf32, #tpu.memory_space<vmem>>, vector<8x4xf32>,
    %c541_486 = arith.constant 541 : index
    %c0_487 = arith.constant 0 : index
    %318 = tpu.strided_load %arg1[%c541_486, %c0_487] {strides = array<i32: 2, 1>} : memref<648x4xf32, #tpu.memory_space<vmem>>, vector<8x4xf32>
    %c104_488 = arith.constant 104 : index
    %c36_489 = arith.constant 36 : index
    %319 = vector.load %arg11[%c104_488, %c36_489] : memref<128x64xf32, #tpu.memory_space<vmem>>, vector<8x4xf32>
    tpu.vector_store %arg11[%c104_488, %c36_489], %318 {strides = array<i32>} : memref<128x64xf32, #tpu.memory_space<vmem>>, vector<8x4xf32>,
    %c577_490 = arith.constant 577 : index
    %c0_491 = arith.constant 0 : index
    %320 = tpu.strided_load %arg1[%c577_490, %c0_491] {strides = array<i32: 2, 1>} : memref<648x4xf32, #tpu.memory_space<vmem>>, vector<8x4xf32>
    %c112_492 = arith.constant 112 : index
    %c36_493 = arith.constant 36 : index
    %321 = vector.load %arg11[%c112_492, %c36_493] : memref<128x64xf32, #tpu.memory_space<vmem>>, vector<8x4xf32>
    tpu.vector_store %arg11[%c112_492, %c36_493], %320 {strides = array<i32>} : memref<128x64xf32, #tpu.memory_space<vmem>>, vector<8x4xf32>,
    %c613 = arith.constant 613 : index
    %c0_494 = arith.constant 0 : index
    %322 = tpu.strided_load %arg1[%c613, %c0_494] {strides = array<i32: 2, 1>} : memref<648x4xf32, #tpu.memory_space<vmem>>, vector<8x4xf32>
    %c120_495 = arith.constant 120 : index
    %c36_496 = arith.constant 36 : index
    %323 = vector.load %arg11[%c120_495, %c36_496] : memref<128x64xf32, #tpu.memory_space<vmem>>, vector<8x4xf32>
    tpu.vector_store %arg11[%c120_495, %c36_496], %322 {strides = array<i32>} : memref<128x64xf32, #tpu.memory_space<vmem>>, vector<8x4xf32>,
    %c38_497 = arith.constant 38 : index
    %c0_498 = arith.constant 0 : index
    %324 = tpu.strided_load %arg1[%c38_497, %c0_498] {strides = array<i32: 2, 1>} : memref<648x4xf32, #tpu.memory_space<vmem>>, vector<8x4xf32>
    %c0_499 = arith.constant 0 : index
    %c40_500 = arith.constant 40 : index
    %325 = vector.load %arg11[%c0_499, %c40_500] : memref<128x64xf32, #tpu.memory_space<vmem>>, vector<8x4xf32>
    tpu.vector_store %arg11[%c0_499, %c40_500], %324 {strides = array<i32>} : memref<128x64xf32, #tpu.memory_space<vmem>>, vector<8x4xf32>,
    %c74_501 = arith.constant 74 : index
    %c0_502 = arith.constant 0 : index
    %326 = tpu.strided_load %arg1[%c74_501, %c0_502] {strides = array<i32: 2, 1>} : memref<648x4xf32, #tpu.memory_space<vmem>>, vector<8x4xf32>
    %c8_503 = arith.constant 8 : index
    %c40_504 = arith.constant 40 : index
    %327 = vector.load %arg11[%c8_503, %c40_504] : memref<128x64xf32, #tpu.memory_space<vmem>>, vector<8x4xf32>
    tpu.vector_store %arg11[%c8_503, %c40_504], %326 {strides = array<i32>} : memref<128x64xf32, #tpu.memory_space<vmem>>, vector<8x4xf32>,
    %c110_505 = arith.constant 110 : index
    %c0_506 = arith.constant 0 : index
    %328 = tpu.strided_load %arg1[%c110_505, %c0_506] {strides = array<i32: 2, 1>} : memref<648x4xf32, #tpu.memory_space<vmem>>, vector<8x4xf32>
    %c16_507 = arith.constant 16 : index
    %c40_508 = arith.constant 40 : index
    %329 = vector.load %arg11[%c16_507, %c40_508] : memref<128x64xf32, #tpu.memory_space<vmem>>, vector<8x4xf32>
    tpu.vector_store %arg11[%c16_507, %c40_508], %328 {strides = array<i32>} : memref<128x64xf32, #tpu.memory_space<vmem>>, vector<8x4xf32>,
    %c146_509 = arith.constant 146 : index
    %c0_510 = arith.constant 0 : index
    %330 = tpu.strided_load %arg1[%c146_509, %c0_510] {strides = array<i32: 2, 1>} : memref<648x4xf32, #tpu.memory_space<vmem>>, vector<8x4xf32>
    %c24_511 = arith.constant 24 : index
    %c40_512 = arith.constant 40 : index
    %331 = vector.load %arg11[%c24_511, %c40_512] : memref<128x64xf32, #tpu.memory_space<vmem>>, vector<8x4xf32>
    tpu.vector_store %arg11[%c24_511, %c40_512], %330 {strides = array<i32>} : memref<128x64xf32, #tpu.memory_space<vmem>>, vector<8x4xf32>,
    %c182_513 = arith.constant 182 : index
    %c0_514 = arith.constant 0 : index
    %332 = tpu.strided_load %arg1[%c182_513, %c0_514] {strides = array<i32: 2, 1>} : memref<648x4xf32, #tpu.memory_space<vmem>>, vector<8x4xf32>
    %c32_515 = arith.constant 32 : index
    %c40_516 = arith.constant 40 : index
    %333 = vector.load %arg11[%c32_515, %c40_516] : memref<128x64xf32, #tpu.memory_space<vmem>>, vector<8x4xf32>
    tpu.vector_store %arg11[%c32_515, %c40_516], %332 {strides = array<i32>} : memref<128x64xf32, #tpu.memory_space<vmem>>, vector<8x4xf32>,
    %c218_517 = arith.constant 218 : index
    %c0_518 = arith.constant 0 : index
    %334 = tpu.strided_load %arg1[%c218_517, %c0_518] {strides = array<i32: 2, 1>} : memref<648x4xf32, #tpu.memory_space<vmem>>, vector<8x4xf32>
    %c40_519 = arith.constant 40 : index
    %c40_520 = arith.constant 40 : index
    %335 = vector.load %arg11[%c40_519, %c40_520] : memref<128x64xf32, #tpu.memory_space<vmem>>, vector<8x4xf32>
    tpu.vector_store %arg11[%c40_519, %c40_520], %334 {strides = array<i32>} : memref<128x64xf32, #tpu.memory_space<vmem>>, vector<8x4xf32>,
    %c254_521 = arith.constant 254 : index
    %c0_522 = arith.constant 0 : index
    %336 = tpu.strided_load %arg1[%c254_521, %c0_522] {strides = array<i32: 2, 1>} : memref<648x4xf32, #tpu.memory_space<vmem>>, vector<8x4xf32>
    %c48_523 = arith.constant 48 : index
    %c40_524 = arith.constant 40 : index
    %337 = vector.load %arg11[%c48_523, %c40_524] : memref<128x64xf32, #tpu.memory_space<vmem>>, vector<8x4xf32>
    tpu.vector_store %arg11[%c48_523, %c40_524], %336 {strides = array<i32>} : memref<128x64xf32, #tpu.memory_space<vmem>>, vector<8x4xf32>,
    %c290 = arith.constant 290 : index
    %c0_525 = arith.constant 0 : index
    %338 = tpu.strided_load %arg1[%c290, %c0_525] {strides = array<i32: 2, 1>} : memref<648x4xf32, #tpu.memory_space<vmem>>, vector<8x4xf32>
    %c56_526 = arith.constant 56 : index
    %c40_527 = arith.constant 40 : index
    %339 = vector.load %arg11[%c56_526, %c40_527] : memref<128x64xf32, #tpu.memory_space<vmem>>, vector<8x4xf32>
    tpu.vector_store %arg11[%c56_526, %c40_527], %338 {strides = array<i32>} : memref<128x64xf32, #tpu.memory_space<vmem>>, vector<8x4xf32>,
    %c362_528 = arith.constant 362 : index
    %c0_529 = arith.constant 0 : index
    %340 = tpu.strided_load %arg1[%c362_528, %c0_529] {strides = array<i32: 2, 1>} : memref<648x4xf32, #tpu.memory_space<vmem>>, vector<8x4xf32>
    %c64_530 = arith.constant 64 : index
    %c40_531 = arith.constant 40 : index
    %341 = vector.load %arg11[%c64_530, %c40_531] : memref<128x64xf32, #tpu.memory_space<vmem>>, vector<8x4xf32>
    tpu.vector_store %arg11[%c64_530, %c40_531], %340 {strides = array<i32>} : memref<128x64xf32, #tpu.memory_space<vmem>>, vector<8x4xf32>,
    %c398_532 = arith.constant 398 : index
    %c0_533 = arith.constant 0 : index
    %342 = tpu.strided_load %arg1[%c398_532, %c0_533] {strides = array<i32: 2, 1>} : memref<648x4xf32, #tpu.memory_space<vmem>>, vector<8x4xf32>
    %c72_534 = arith.constant 72 : index
    %c40_535 = arith.constant 40 : index
    %343 = vector.load %arg11[%c72_534, %c40_535] : memref<128x64xf32, #tpu.memory_space<vmem>>, vector<8x4xf32>
    tpu.vector_store %arg11[%c72_534, %c40_535], %342 {strides = array<i32>} : memref<128x64xf32, #tpu.memory_space<vmem>>, vector<8x4xf32>,
    %c434_536 = arith.constant 434 : index
    %c0_537 = arith.constant 0 : index
    %344 = tpu.strided_load %arg1[%c434_536, %c0_537] {strides = array<i32: 2, 1>} : memref<648x4xf32, #tpu.memory_space<vmem>>, vector<8x4xf32>
    %c80_538 = arith.constant 80 : index
    %c40_539 = arith.constant 40 : index
    %345 = vector.load %arg11[%c80_538, %c40_539] : memref<128x64xf32, #tpu.memory_space<vmem>>, vector<8x4xf32>
    tpu.vector_store %arg11[%c80_538, %c40_539], %344 {strides = array<i32>} : memref<128x64xf32, #tpu.memory_space<vmem>>, vector<8x4xf32>,
    %c470_540 = arith.constant 470 : index
    %c0_541 = arith.constant 0 : index
    %346 = tpu.strided_load %arg1[%c470_540, %c0_541] {strides = array<i32: 2, 1>} : memref<648x4xf32, #tpu.memory_space<vmem>>, vector<8x4xf32>
    %c88_542 = arith.constant 88 : index
    %c40_543 = arith.constant 40 : index
    %347 = vector.load %arg11[%c88_542, %c40_543] : memref<128x64xf32, #tpu.memory_space<vmem>>, vector<8x4xf32>
    tpu.vector_store %arg11[%c88_542, %c40_543], %346 {strides = array<i32>} : memref<128x64xf32, #tpu.memory_space<vmem>>, vector<8x4xf32>,
    %c506_544 = arith.constant 506 : index
    %c0_545 = arith.constant 0 : index
    %348 = tpu.strided_load %arg1[%c506_544, %c0_545] {strides = array<i32: 2, 1>} : memref<648x4xf32, #tpu.memory_space<vmem>>, vector<8x4xf32>
    %c96_546 = arith.constant 96 : index
    %c40_547 = arith.constant 40 : index
    %349 = vector.load %arg11[%c96_546, %c40_547] : memref<128x64xf32, #tpu.memory_space<vmem>>, vector<8x4xf32>
    tpu.vector_store %arg11[%c96_546, %c40_547], %348 {strides = array<i32>} : memref<128x64xf32, #tpu.memory_space<vmem>>, vector<8x4xf32>,
    %c542_548 = arith.constant 542 : index
    %c0_549 = arith.constant 0 : index
    %350 = tpu.strided_load %arg1[%c542_548, %c0_549] {strides = array<i32: 2, 1>} : memref<648x4xf32, #tpu.memory_space<vmem>>, vector<8x4xf32>
    %c104_550 = arith.constant 104 : index
    %c40_551 = arith.constant 40 : index
    %351 = vector.load %arg11[%c104_550, %c40_551] : memref<128x64xf32, #tpu.memory_space<vmem>>, vector<8x4xf32>
    tpu.vector_store %arg11[%c104_550, %c40_551], %350 {strides = array<i32>} : memref<128x64xf32, #tpu.memory_space<vmem>>, vector<8x4xf32>,
    %c578_552 = arith.constant 578 : index
    %c0_553 = arith.constant 0 : index
    %352 = tpu.strided_load %arg1[%c578_552, %c0_553] {strides = array<i32: 2, 1>} : memref<648x4xf32, #tpu.memory_space<vmem>>, vector<8x4xf32>
    %c112_554 = arith.constant 112 : index
    %c40_555 = arith.constant 40 : index
    %353 = vector.load %arg11[%c112_554, %c40_555] : memref<128x64xf32, #tpu.memory_space<vmem>>, vector<8x4xf32>
    tpu.vector_store %arg11[%c112_554, %c40_555], %352 {strides = array<i32>} : memref<128x64xf32, #tpu.memory_space<vmem>>, vector<8x4xf32>,
    %c614 = arith.constant 614 : index
    %c0_556 = arith.constant 0 : index
    %354 = tpu.strided_load %arg1[%c614, %c0_556] {strides = array<i32: 2, 1>} : memref<648x4xf32, #tpu.memory_space<vmem>>, vector<8x4xf32>
    %c120_557 = arith.constant 120 : index
    %c40_558 = arith.constant 40 : index
    %355 = vector.load %arg11[%c120_557, %c40_558] : memref<128x64xf32, #tpu.memory_space<vmem>>, vector<8x4xf32>
    tpu.vector_store %arg11[%c120_557, %c40_558], %354 {strides = array<i32>} : memref<128x64xf32, #tpu.memory_space<vmem>>, vector<8x4xf32>,
    %c39_559 = arith.constant 39 : index
    %c0_560 = arith.constant 0 : index
    %356 = tpu.strided_load %arg1[%c39_559, %c0_560] {strides = array<i32: 2, 1>} : memref<648x4xf32, #tpu.memory_space<vmem>>, vector<8x4xf32>
    %c0_561 = arith.constant 0 : index
    %c44 = arith.constant 44 : index
    %357 = vector.load %arg11[%c0_561, %c44] : memref<128x64xf32, #tpu.memory_space<vmem>>, vector<8x4xf32>
    tpu.vector_store %arg11[%c0_561, %c44], %356 {strides = array<i32>} : memref<128x64xf32, #tpu.memory_space<vmem>>, vector<8x4xf32>,
    %c75_562 = arith.constant 75 : index
    %c0_563 = arith.constant 0 : index
    %358 = tpu.strided_load %arg1[%c75_562, %c0_563] {strides = array<i32: 2, 1>} : memref<648x4xf32, #tpu.memory_space<vmem>>, vector<8x4xf32>
    %c8_564 = arith.constant 8 : index
    %c44_565 = arith.constant 44 : index
    %359 = vector.load %arg11[%c8_564, %c44_565] : memref<128x64xf32, #tpu.memory_space<vmem>>, vector<8x4xf32>
    tpu.vector_store %arg11[%c8_564, %c44_565], %358 {strides = array<i32>} : memref<128x64xf32, #tpu.memory_space<vmem>>, vector<8x4xf32>,
    %c111_566 = arith.constant 111 : index
    %c0_567 = arith.constant 0 : index
    %360 = tpu.strided_load %arg1[%c111_566, %c0_567] {strides = array<i32: 2, 1>} : memref<648x4xf32, #tpu.memory_space<vmem>>, vector<8x4xf32>
    %c16_568 = arith.constant 16 : index
    %c44_569 = arith.constant 44 : index
    %361 = vector.load %arg11[%c16_568, %c44_569] : memref<128x64xf32, #tpu.memory_space<vmem>>, vector<8x4xf32>
    tpu.vector_store %arg11[%c16_568, %c44_569], %360 {strides = array<i32>} : memref<128x64xf32, #tpu.memory_space<vmem>>, vector<8x4xf32>,
    %c147_570 = arith.constant 147 : index
    %c0_571 = arith.constant 0 : index
    %362 = tpu.strided_load %arg1[%c147_570, %c0_571] {strides = array<i32: 2, 1>} : memref<648x4xf32, #tpu.memory_space<vmem>>, vector<8x4xf32>
    %c24_572 = arith.constant 24 : index
    %c44_573 = arith.constant 44 : index
    %363 = vector.load %arg11[%c24_572, %c44_573] : memref<128x64xf32, #tpu.memory_space<vmem>>, vector<8x4xf32>
    tpu.vector_store %arg11[%c24_572, %c44_573], %362 {strides = array<i32>} : memref<128x64xf32, #tpu.memory_space<vmem>>, vector<8x4xf32>,
    %c183_574 = arith.constant 183 : index
    %c0_575 = arith.constant 0 : index
    %364 = tpu.strided_load %arg1[%c183_574, %c0_575] {strides = array<i32: 2, 1>} : memref<648x4xf32, #tpu.memory_space<vmem>>, vector<8x4xf32>
    %c32_576 = arith.constant 32 : index
    %c44_577 = arith.constant 44 : index
    %365 = vector.load %arg11[%c32_576, %c44_577] : memref<128x64xf32, #tpu.memory_space<vmem>>, vector<8x4xf32>
    tpu.vector_store %arg11[%c32_576, %c44_577], %364 {strides = array<i32>} : memref<128x64xf32, #tpu.memory_space<vmem>>, vector<8x4xf32>,
    %c219_578 = arith.constant 219 : index
    %c0_579 = arith.constant 0 : index
    %366 = tpu.strided_load %arg1[%c219_578, %c0_579] {strides = array<i32: 2, 1>} : memref<648x4xf32, #tpu.memory_space<vmem>>, vector<8x4xf32>
    %c40_580 = arith.constant 40 : index
    %c44_581 = arith.constant 44 : index
    %367 = vector.load %arg11[%c40_580, %c44_581] : memref<128x64xf32, #tpu.memory_space<vmem>>, vector<8x4xf32>
    tpu.vector_store %arg11[%c40_580, %c44_581], %366 {strides = array<i32>} : memref<128x64xf32, #tpu.memory_space<vmem>>, vector<8x4xf32>,
    %c255_582 = arith.constant 255 : index
    %c0_583 = arith.constant 0 : index
    %368 = tpu.strided_load %arg1[%c255_582, %c0_583] {strides = array<i32: 2, 1>} : memref<648x4xf32, #tpu.memory_space<vmem>>, vector<8x4xf32>
    %c48_584 = arith.constant 48 : index
    %c44_585 = arith.constant 44 : index
    %369 = vector.load %arg11[%c48_584, %c44_585] : memref<128x64xf32, #tpu.memory_space<vmem>>, vector<8x4xf32>
    tpu.vector_store %arg11[%c48_584, %c44_585], %368 {strides = array<i32>} : memref<128x64xf32, #tpu.memory_space<vmem>>, vector<8x4xf32>,
    %c291 = arith.constant 291 : index
    %c0_586 = arith.constant 0 : index
    %370 = tpu.strided_load %arg1[%c291, %c0_586] {strides = array<i32: 2, 1>} : memref<648x4xf32, #tpu.memory_space<vmem>>, vector<8x4xf32>
    %c56_587 = arith.constant 56 : index
    %c44_588 = arith.constant 44 : index
    %371 = vector.load %arg11[%c56_587, %c44_588] : memref<128x64xf32, #tpu.memory_space<vmem>>, vector<8x4xf32>
    tpu.vector_store %arg11[%c56_587, %c44_588], %370 {strides = array<i32>} : memref<128x64xf32, #tpu.memory_space<vmem>>, vector<8x4xf32>,
    %c363_589 = arith.constant 363 : index
    %c0_590 = arith.constant 0 : index
    %372 = tpu.strided_load %arg1[%c363_589, %c0_590] {strides = array<i32: 2, 1>} : memref<648x4xf32, #tpu.memory_space<vmem>>, vector<8x4xf32>
    %c64_591 = arith.constant 64 : index
    %c44_592 = arith.constant 44 : index
    %373 = vector.load %arg11[%c64_591, %c44_592] : memref<128x64xf32, #tpu.memory_space<vmem>>, vector<8x4xf32>
    tpu.vector_store %arg11[%c64_591, %c44_592], %372 {strides = array<i32>} : memref<128x64xf32, #tpu.memory_space<vmem>>, vector<8x4xf32>,
    %c399_593 = arith.constant 399 : index
    %c0_594 = arith.constant 0 : index
    %374 = tpu.strided_load %arg1[%c399_593, %c0_594] {strides = array<i32: 2, 1>} : memref<648x4xf32, #tpu.memory_space<vmem>>, vector<8x4xf32>
    %c72_595 = arith.constant 72 : index
    %c44_596 = arith.constant 44 : index
    %375 = vector.load %arg11[%c72_595, %c44_596] : memref<128x64xf32, #tpu.memory_space<vmem>>, vector<8x4xf32>
    tpu.vector_store %arg11[%c72_595, %c44_596], %374 {strides = array<i32>} : memref<128x64xf32, #tpu.memory_space<vmem>>, vector<8x4xf32>,
    %c435_597 = arith.constant 435 : index
    %c0_598 = arith.constant 0 : index
    %376 = tpu.strided_load %arg1[%c435_597, %c0_598] {strides = array<i32: 2, 1>} : memref<648x4xf32, #tpu.memory_space<vmem>>, vector<8x4xf32>
    %c80_599 = arith.constant 80 : index
    %c44_600 = arith.constant 44 : index
    %377 = vector.load %arg11[%c80_599, %c44_600] : memref<128x64xf32, #tpu.memory_space<vmem>>, vector<8x4xf32>
    tpu.vector_store %arg11[%c80_599, %c44_600], %376 {strides = array<i32>} : memref<128x64xf32, #tpu.memory_space<vmem>>, vector<8x4xf32>,
    %c471_601 = arith.constant 471 : index
    %c0_602 = arith.constant 0 : index
    %378 = tpu.strided_load %arg1[%c471_601, %c0_602] {strides = array<i32: 2, 1>} : memref<648x4xf32, #tpu.memory_space<vmem>>, vector<8x4xf32>
    %c88_603 = arith.constant 88 : index
    %c44_604 = arith.constant 44 : index
    %379 = vector.load %arg11[%c88_603, %c44_604] : memref<128x64xf32, #tpu.memory_space<vmem>>, vector<8x4xf32>
    tpu.vector_store %arg11[%c88_603, %c44_604], %378 {strides = array<i32>} : memref<128x64xf32, #tpu.memory_space<vmem>>, vector<8x4xf32>,
    %c507_605 = arith.constant 507 : index
    %c0_606 = arith.constant 0 : index
    %380 = tpu.strided_load %arg1[%c507_605, %c0_606] {strides = array<i32: 2, 1>} : memref<648x4xf32, #tpu.memory_space<vmem>>, vector<8x4xf32>
    %c96_607 = arith.constant 96 : index
    %c44_608 = arith.constant 44 : index
    %381 = vector.load %arg11[%c96_607, %c44_608] : memref<128x64xf32, #tpu.memory_space<vmem>>, vector<8x4xf32>
    tpu.vector_store %arg11[%c96_607, %c44_608], %380 {strides = array<i32>} : memref<128x64xf32, #tpu.memory_space<vmem>>, vector<8x4xf32>,
    %c543_609 = arith.constant 543 : index
    %c0_610 = arith.constant 0 : index
    %382 = tpu.strided_load %arg1[%c543_609, %c0_610] {strides = array<i32: 2, 1>} : memref<648x4xf32, #tpu.memory_space<vmem>>, vector<8x4xf32>
    %c104_611 = arith.constant 104 : index
    %c44_612 = arith.constant 44 : index
    %383 = vector.load %arg11[%c104_611, %c44_612] : memref<128x64xf32, #tpu.memory_space<vmem>>, vector<8x4xf32>
    tpu.vector_store %arg11[%c104_611, %c44_612], %382 {strides = array<i32>} : memref<128x64xf32, #tpu.memory_space<vmem>>, vector<8x4xf32>,
    %c579_613 = arith.constant 579 : index
    %c0_614 = arith.constant 0 : index
    %384 = tpu.strided_load %arg1[%c579_613, %c0_614] {strides = array<i32: 2, 1>} : memref<648x4xf32, #tpu.memory_space<vmem>>, vector<8x4xf32>
    %c112_615 = arith.constant 112 : index
    %c44_616 = arith.constant 44 : index
    %385 = vector.load %arg11[%c112_615, %c44_616] : memref<128x64xf32, #tpu.memory_space<vmem>>, vector<8x4xf32>
    tpu.vector_store %arg11[%c112_615, %c44_616], %384 {strides = array<i32>} : memref<128x64xf32, #tpu.memory_space<vmem>>, vector<8x4xf32>,
    %c615 = arith.constant 615 : index
    %c0_617 = arith.constant 0 : index
    %386 = tpu.strided_load %arg1[%c615, %c0_617] {strides = array<i32: 2, 1>} : memref<648x4xf32, #tpu.memory_space<vmem>>, vector<8x4xf32>
    %c120_618 = arith.constant 120 : index
    %c44_619 = arith.constant 44 : index
    %387 = vector.load %arg11[%c120_618, %c44_619] : memref<128x64xf32, #tpu.memory_space<vmem>>, vector<8x4xf32>
    tpu.vector_store %arg11[%c120_618, %c44_619], %386 {strides = array<i32>} : memref<128x64xf32, #tpu.memory_space<vmem>>, vector<8x4xf32>,
    %c54_620 = arith.constant 54 : index
    %c0_621 = arith.constant 0 : index
    %388 = tpu.strided_load %arg1[%c54_620, %c0_621] {strides = array<i32: 2, 1>} : memref<648x4xf32, #tpu.memory_space<vmem>>, vector<8x4xf32>
    %c0_622 = arith.constant 0 : index
    %c48_623 = arith.constant 48 : index
    %389 = vector.load %arg11[%c0_622, %c48_623] : memref<128x64xf32, #tpu.memory_space<vmem>>, vector<8x4xf32>
    tpu.vector_store %arg11[%c0_622, %c48_623], %388 {strides = array<i32>} : memref<128x64xf32, #tpu.memory_space<vmem>>, vector<8x4xf32>,
    %c90_624 = arith.constant 90 : index
    %c0_625 = arith.constant 0 : index
    %390 = tpu.strided_load %arg1[%c90_624, %c0_625] {strides = array<i32: 2, 1>} : memref<648x4xf32, #tpu.memory_space<vmem>>, vector<8x4xf32>
    %c8_626 = arith.constant 8 : index
    %c48_627 = arith.constant 48 : index
    %391 = vector.load %arg11[%c8_626, %c48_627] : memref<128x64xf32, #tpu.memory_space<vmem>>, vector<8x4xf32>
    tpu.vector_store %arg11[%c8_626, %c48_627], %390 {strides = array<i32>} : memref<128x64xf32, #tpu.memory_space<vmem>>, vector<8x4xf32>,
    %c126_628 = arith.constant 126 : index
    %c0_629 = arith.constant 0 : index
    %392 = tpu.strided_load %arg1[%c126_628, %c0_629] {strides = array<i32: 2, 1>} : memref<648x4xf32, #tpu.memory_space<vmem>>, vector<8x4xf32>
    %c16_630 = arith.constant 16 : index
    %c48_631 = arith.constant 48 : index
    %393 = vector.load %arg11[%c16_630, %c48_631] : memref<128x64xf32, #tpu.memory_space<vmem>>, vector<8x4xf32>
    tpu.vector_store %arg11[%c16_630, %c48_631], %392 {strides = array<i32>} : memref<128x64xf32, #tpu.memory_space<vmem>>, vector<8x4xf32>,
    %c162_632 = arith.constant 162 : index
    %c0_633 = arith.constant 0 : index
    %394 = tpu.strided_load %arg1[%c162_632, %c0_633] {strides = array<i32: 2, 1>} : memref<648x4xf32, #tpu.memory_space<vmem>>, vector<8x4xf32>
    %c24_634 = arith.constant 24 : index
    %c48_635 = arith.constant 48 : index
    %395 = vector.load %arg11[%c24_634, %c48_635] : memref<128x64xf32, #tpu.memory_space<vmem>>, vector<8x4xf32>
    tpu.vector_store %arg11[%c24_634, %c48_635], %394 {strides = array<i32>} : memref<128x64xf32, #tpu.memory_space<vmem>>, vector<8x4xf32>,
    %c198_636 = arith.constant 198 : index
    %c0_637 = arith.constant 0 : index
    %396 = tpu.strided_load %arg1[%c198_636, %c0_637] {strides = array<i32: 2, 1>} : memref<648x4xf32, #tpu.memory_space<vmem>>, vector<8x4xf32>
    %c32_638 = arith.constant 32 : index
    %c48_639 = arith.constant 48 : index
    %397 = vector.load %arg11[%c32_638, %c48_639] : memref<128x64xf32, #tpu.memory_space<vmem>>, vector<8x4xf32>
    tpu.vector_store %arg11[%c32_638, %c48_639], %396 {strides = array<i32>} : memref<128x64xf32, #tpu.memory_space<vmem>>, vector<8x4xf32>,
    %c234_640 = arith.constant 234 : index
    %c0_641 = arith.constant 0 : index
    %398 = tpu.strided_load %arg1[%c234_640, %c0_641] {strides = array<i32: 2, 1>} : memref<648x4xf32, #tpu.memory_space<vmem>>, vector<8x4xf32>
    %c40_642 = arith.constant 40 : index
    %c48_643 = arith.constant 48 : index
    %399 = vector.load %arg11[%c40_642, %c48_643] : memref<128x64xf32, #tpu.memory_space<vmem>>, vector<8x4xf32>
    tpu.vector_store %arg11[%c40_642, %c48_643], %398 {strides = array<i32>} : memref<128x64xf32, #tpu.memory_space<vmem>>, vector<8x4xf32>,
    %c270_644 = arith.constant 270 : index
    %c0_645 = arith.constant 0 : index
    %400 = tpu.strided_load %arg1[%c270_644, %c0_645] {strides = array<i32: 2, 1>} : memref<648x4xf32, #tpu.memory_space<vmem>>, vector<8x4xf32>
    %c48_646 = arith.constant 48 : index
    %c48_647 = arith.constant 48 : index
    %401 = vector.load %arg11[%c48_646, %c48_647] : memref<128x64xf32, #tpu.memory_space<vmem>>, vector<8x4xf32>
    tpu.vector_store %arg11[%c48_646, %c48_647], %400 {strides = array<i32>} : memref<128x64xf32, #tpu.memory_space<vmem>>, vector<8x4xf32>,
    %c306 = arith.constant 306 : index
    %c0_648 = arith.constant 0 : index
    %402 = tpu.strided_load %arg1[%c306, %c0_648] {strides = array<i32: 2, 1>} : memref<648x4xf32, #tpu.memory_space<vmem>>, vector<8x4xf32>
    %c56_649 = arith.constant 56 : index
    %c48_650 = arith.constant 48 : index
    %403 = vector.load %arg11[%c56_649, %c48_650] : memref<128x64xf32, #tpu.memory_space<vmem>>, vector<8x4xf32>
    tpu.vector_store %arg11[%c56_649, %c48_650], %402 {strides = array<i32>} : memref<128x64xf32, #tpu.memory_space<vmem>>, vector<8x4xf32>,
    %c378_651 = arith.constant 378 : index
    %c0_652 = arith.constant 0 : index
    %404 = tpu.strided_load %arg1[%c378_651, %c0_652] {strides = array<i32: 2, 1>} : memref<648x4xf32, #tpu.memory_space<vmem>>, vector<8x4xf32>
    %c64_653 = arith.constant 64 : index
    %c48_654 = arith.constant 48 : index
    %405 = vector.load %arg11[%c64_653, %c48_654] : memref<128x64xf32, #tpu.memory_space<vmem>>, vector<8x4xf32>
    tpu.vector_store %arg11[%c64_653, %c48_654], %404 {strides = array<i32>} : memref<128x64xf32, #tpu.memory_space<vmem>>, vector<8x4xf32>,
    %c414_655 = arith.constant 414 : index
    %c0_656 = arith.constant 0 : index
    %406 = tpu.strided_load %arg1[%c414_655, %c0_656] {strides = array<i32: 2, 1>} : memref<648x4xf32, #tpu.memory_space<vmem>>, vector<8x4xf32>
    %c72_657 = arith.constant 72 : index
    %c48_658 = arith.constant 48 : index
    %407 = vector.load %arg11[%c72_657, %c48_658] : memref<128x64xf32, #tpu.memory_space<vmem>>, vector<8x4xf32>
    tpu.vector_store %arg11[%c72_657, %c48_658], %406 {strides = array<i32>} : memref<128x64xf32, #tpu.memory_space<vmem>>, vector<8x4xf32>,
    %c450_659 = arith.constant 450 : index
    %c0_660 = arith.constant 0 : index
    %408 = tpu.strided_load %arg1[%c450_659, %c0_660] {strides = array<i32: 2, 1>} : memref<648x4xf32, #tpu.memory_space<vmem>>, vector<8x4xf32>
    %c80_661 = arith.constant 80 : index
    %c48_662 = arith.constant 48 : index
    %409 = vector.load %arg11[%c80_661, %c48_662] : memref<128x64xf32, #tpu.memory_space<vmem>>, vector<8x4xf32>
    tpu.vector_store %arg11[%c80_661, %c48_662], %408 {strides = array<i32>} : memref<128x64xf32, #tpu.memory_space<vmem>>, vector<8x4xf32>,
    %c486_663 = arith.constant 486 : index
    %c0_664 = arith.constant 0 : index
    %410 = tpu.strided_load %arg1[%c486_663, %c0_664] {strides = array<i32: 2, 1>} : memref<648x4xf32, #tpu.memory_space<vmem>>, vector<8x4xf32>
    %c88_665 = arith.constant 88 : index
    %c48_666 = arith.constant 48 : index
    %411 = vector.load %arg11[%c88_665, %c48_666] : memref<128x64xf32, #tpu.memory_space<vmem>>, vector<8x4xf32>
    tpu.vector_store %arg11[%c88_665, %c48_666], %410 {strides = array<i32>} : memref<128x64xf32, #tpu.memory_space<vmem>>, vector<8x4xf32>,
    %c522_667 = arith.constant 522 : index
    %c0_668 = arith.constant 0 : index
    %412 = tpu.strided_load %arg1[%c522_667, %c0_668] {strides = array<i32: 2, 1>} : memref<648x4xf32, #tpu.memory_space<vmem>>, vector<8x4xf32>
    %c96_669 = arith.constant 96 : index
    %c48_670 = arith.constant 48 : index
    %413 = vector.load %arg11[%c96_669, %c48_670] : memref<128x64xf32, #tpu.memory_space<vmem>>, vector<8x4xf32>
    tpu.vector_store %arg11[%c96_669, %c48_670], %412 {strides = array<i32>} : memref<128x64xf32, #tpu.memory_space<vmem>>, vector<8x4xf32>,
    %c558_671 = arith.constant 558 : index
    %c0_672 = arith.constant 0 : index
    %414 = tpu.strided_load %arg1[%c558_671, %c0_672] {strides = array<i32: 2, 1>} : memref<648x4xf32, #tpu.memory_space<vmem>>, vector<8x4xf32>
    %c104_673 = arith.constant 104 : index
    %c48_674 = arith.constant 48 : index
    %415 = vector.load %arg11[%c104_673, %c48_674] : memref<128x64xf32, #tpu.memory_space<vmem>>, vector<8x4xf32>
    tpu.vector_store %arg11[%c104_673, %c48_674], %414 {strides = array<i32>} : memref<128x64xf32, #tpu.memory_space<vmem>>, vector<8x4xf32>,
    %c594_675 = arith.constant 594 : index
    %c0_676 = arith.constant 0 : index
    %416 = tpu.strided_load %arg1[%c594_675, %c0_676] {strides = array<i32: 2, 1>} : memref<648x4xf32, #tpu.memory_space<vmem>>, vector<8x4xf32>
    %c112_677 = arith.constant 112 : index
    %c48_678 = arith.constant 48 : index
    %417 = vector.load %arg11[%c112_677, %c48_678] : memref<128x64xf32, #tpu.memory_space<vmem>>, vector<8x4xf32>
    tpu.vector_store %arg11[%c112_677, %c48_678], %416 {strides = array<i32>} : memref<128x64xf32, #tpu.memory_space<vmem>>, vector<8x4xf32>,
    %c630 = arith.constant 630 : index
    %c0_679 = arith.constant 0 : index
    %418 = tpu.strided_load %arg1[%c630, %c0_679] {strides = array<i32: 2, 1>} : memref<648x4xf32, #tpu.memory_space<vmem>>, vector<8x4xf32>
    %c120_680 = arith.constant 120 : index
    %c48_681 = arith.constant 48 : index
    %419 = vector.load %arg11[%c120_680, %c48_681] : memref<128x64xf32, #tpu.memory_space<vmem>>, vector<8x4xf32>
    tpu.vector_store %arg11[%c120_680, %c48_681], %418 {strides = array<i32>} : memref<128x64xf32, #tpu.memory_space<vmem>>, vector<8x4xf32>,
    %c55_682 = arith.constant 55 : index
    %c0_683 = arith.constant 0 : index
    %420 = tpu.strided_load %arg1[%c55_682, %c0_683] {strides = array<i32: 2, 1>} : memref<648x4xf32, #tpu.memory_space<vmem>>, vector<8x4xf32>
    %c0_684 = arith.constant 0 : index
    %c52 = arith.constant 52 : index
    %421 = vector.load %arg11[%c0_684, %c52] : memref<128x64xf32, #tpu.memory_space<vmem>>, vector<8x4xf32>
    tpu.vector_store %arg11[%c0_684, %c52], %420 {strides = array<i32>} : memref<128x64xf32, #tpu.memory_space<vmem>>, vector<8x4xf32>,
    %c91_685 = arith.constant 91 : index
    %c0_686 = arith.constant 0 : index
    %422 = tpu.strided_load %arg1[%c91_685, %c0_686] {strides = array<i32: 2, 1>} : memref<648x4xf32, #tpu.memory_space<vmem>>, vector<8x4xf32>
    %c8_687 = arith.constant 8 : index
    %c52_688 = arith.constant 52 : index
    %423 = vector.load %arg11[%c8_687, %c52_688] : memref<128x64xf32, #tpu.memory_space<vmem>>, vector<8x4xf32>
    tpu.vector_store %arg11[%c8_687, %c52_688], %422 {strides = array<i32>} : memref<128x64xf32, #tpu.memory_space<vmem>>, vector<8x4xf32>,
    %c127_689 = arith.constant 127 : index
    %c0_690 = arith.constant 0 : index
    %424 = tpu.strided_load %arg1[%c127_689, %c0_690] {strides = array<i32: 2, 1>} : memref<648x4xf32, #tpu.memory_space<vmem>>, vector<8x4xf32>
    %c16_691 = arith.constant 16 : index
    %c52_692 = arith.constant 52 : index
    %425 = vector.load %arg11[%c16_691, %c52_692] : memref<128x64xf32, #tpu.memory_space<vmem>>, vector<8x4xf32>
    tpu.vector_store %arg11[%c16_691, %c52_692], %424 {strides = array<i32>} : memref<128x64xf32, #tpu.memory_space<vmem>>, vector<8x4xf32>,
    %c163_693 = arith.constant 163 : index
    %c0_694 = arith.constant 0 : index
    %426 = tpu.strided_load %arg1[%c163_693, %c0_694] {strides = array<i32: 2, 1>} : memref<648x4xf32, #tpu.memory_space<vmem>>, vector<8x4xf32>
    %c24_695 = arith.constant 24 : index
    %c52_696 = arith.constant 52 : index
    %427 = vector.load %arg11[%c24_695, %c52_696] : memref<128x64xf32, #tpu.memory_space<vmem>>, vector<8x4xf32>
    tpu.vector_store %arg11[%c24_695, %c52_696], %426 {strides = array<i32>} : memref<128x64xf32, #tpu.memory_space<vmem>>, vector<8x4xf32>,
    %c199_697 = arith.constant 199 : index
    %c0_698 = arith.constant 0 : index
    %428 = tpu.strided_load %arg1[%c199_697, %c0_698] {strides = array<i32: 2, 1>} : memref<648x4xf32, #tpu.memory_space<vmem>>, vector<8x4xf32>
    %c32_699 = arith.constant 32 : index
    %c52_700 = arith.constant 52 : index
    %429 = vector.load %arg11[%c32_699, %c52_700] : memref<128x64xf32, #tpu.memory_space<vmem>>, vector<8x4xf32>
    tpu.vector_store %arg11[%c32_699, %c52_700], %428 {strides = array<i32>} : memref<128x64xf32, #tpu.memory_space<vmem>>, vector<8x4xf32>,
    %c235_701 = arith.constant 235 : index
    %c0_702 = arith.constant 0 : index
    %430 = tpu.strided_load %arg1[%c235_701, %c0_702] {strides = array<i32: 2, 1>} : memref<648x4xf32, #tpu.memory_space<vmem>>, vector<8x4xf32>
    %c40_703 = arith.constant 40 : index
    %c52_704 = arith.constant 52 : index
    %431 = vector.load %arg11[%c40_703, %c52_704] : memref<128x64xf32, #tpu.memory_space<vmem>>, vector<8x4xf32>
    tpu.vector_store %arg11[%c40_703, %c52_704], %430 {strides = array<i32>} : memref<128x64xf32, #tpu.memory_space<vmem>>, vector<8x4xf32>,
    %c271_705 = arith.constant 271 : index
    %c0_706 = arith.constant 0 : index
    %432 = tpu.strided_load %arg1[%c271_705, %c0_706] {strides = array<i32: 2, 1>} : memref<648x4xf32, #tpu.memory_space<vmem>>, vector<8x4xf32>
    %c48_707 = arith.constant 48 : index
    %c52_708 = arith.constant 52 : index
    %433 = vector.load %arg11[%c48_707, %c52_708] : memref<128x64xf32, #tpu.memory_space<vmem>>, vector<8x4xf32>
    tpu.vector_store %arg11[%c48_707, %c52_708], %432 {strides = array<i32>} : memref<128x64xf32, #tpu.memory_space<vmem>>, vector<8x4xf32>,
    %c307 = arith.constant 307 : index
    %c0_709 = arith.constant 0 : index
    %434 = tpu.strided_load %arg1[%c307, %c0_709] {strides = array<i32: 2, 1>} : memref<648x4xf32, #tpu.memory_space<vmem>>, vector<8x4xf32>
    %c56_710 = arith.constant 56 : index
    %c52_711 = arith.constant 52 : index
    %435 = vector.load %arg11[%c56_710, %c52_711] : memref<128x64xf32, #tpu.memory_space<vmem>>, vector<8x4xf32>
    tpu.vector_store %arg11[%c56_710, %c52_711], %434 {strides = array<i32>} : memref<128x64xf32, #tpu.memory_space<vmem>>, vector<8x4xf32>,
    %c379_712 = arith.constant 379 : index
    %c0_713 = arith.constant 0 : index
    %436 = tpu.strided_load %arg1[%c379_712, %c0_713] {strides = array<i32: 2, 1>} : memref<648x4xf32, #tpu.memory_space<vmem>>, vector<8x4xf32>
    %c64_714 = arith.constant 64 : index
    %c52_715 = arith.constant 52 : index
    %437 = vector.load %arg11[%c64_714, %c52_715] : memref<128x64xf32, #tpu.memory_space<vmem>>, vector<8x4xf32>
    tpu.vector_store %arg11[%c64_714, %c52_715], %436 {strides = array<i32>} : memref<128x64xf32, #tpu.memory_space<vmem>>, vector<8x4xf32>,
    %c415_716 = arith.constant 415 : index
    %c0_717 = arith.constant 0 : index
    %438 = tpu.strided_load %arg1[%c415_716, %c0_717] {strides = array<i32: 2, 1>} : memref<648x4xf32, #tpu.memory_space<vmem>>, vector<8x4xf32>
    %c72_718 = arith.constant 72 : index
    %c52_719 = arith.constant 52 : index
    %439 = vector.load %arg11[%c72_718, %c52_719] : memref<128x64xf32, #tpu.memory_space<vmem>>, vector<8x4xf32>
    tpu.vector_store %arg11[%c72_718, %c52_719], %438 {strides = array<i32>} : memref<128x64xf32, #tpu.memory_space<vmem>>, vector<8x4xf32>,
    %c451_720 = arith.constant 451 : index
    %c0_721 = arith.constant 0 : index
    %440 = tpu.strided_load %arg1[%c451_720, %c0_721] {strides = array<i32: 2, 1>} : memref<648x4xf32, #tpu.memory_space<vmem>>, vector<8x4xf32>
    %c80_722 = arith.constant 80 : index
    %c52_723 = arith.constant 52 : index
    %441 = vector.load %arg11[%c80_722, %c52_723] : memref<128x64xf32, #tpu.memory_space<vmem>>, vector<8x4xf32>
    tpu.vector_store %arg11[%c80_722, %c52_723], %440 {strides = array<i32>} : memref<128x64xf32, #tpu.memory_space<vmem>>, vector<8x4xf32>,
    %c487_724 = arith.constant 487 : index
    %c0_725 = arith.constant 0 : index
    %442 = tpu.strided_load %arg1[%c487_724, %c0_725] {strides = array<i32: 2, 1>} : memref<648x4xf32, #tpu.memory_space<vmem>>, vector<8x4xf32>
    %c88_726 = arith.constant 88 : index
    %c52_727 = arith.constant 52 : index
    %443 = vector.load %arg11[%c88_726, %c52_727] : memref<128x64xf32, #tpu.memory_space<vmem>>, vector<8x4xf32>
    tpu.vector_store %arg11[%c88_726, %c52_727], %442 {strides = array<i32>} : memref<128x64xf32, #tpu.memory_space<vmem>>, vector<8x4xf32>,
    %c523_728 = arith.constant 523 : index
    %c0_729 = arith.constant 0 : index
    %444 = tpu.strided_load %arg1[%c523_728, %c0_729] {strides = array<i32: 2, 1>} : memref<648x4xf32, #tpu.memory_space<vmem>>, vector<8x4xf32>
    %c96_730 = arith.constant 96 : index
    %c52_731 = arith.constant 52 : index
    %445 = vector.load %arg11[%c96_730, %c52_731] : memref<128x64xf32, #tpu.memory_space<vmem>>, vector<8x4xf32>
    tpu.vector_store %arg11[%c96_730, %c52_731], %444 {strides = array<i32>} : memref<128x64xf32, #tpu.memory_space<vmem>>, vector<8x4xf32>,
    %c559_732 = arith.constant 559 : index
    %c0_733 = arith.constant 0 : index
    %446 = tpu.strided_load %arg1[%c559_732, %c0_733] {strides = array<i32: 2, 1>} : memref<648x4xf32, #tpu.memory_space<vmem>>, vector<8x4xf32>
    %c104_734 = arith.constant 104 : index
    %c52_735 = arith.constant 52 : index
    %447 = vector.load %arg11[%c104_734, %c52_735] : memref<128x64xf32, #tpu.memory_space<vmem>>, vector<8x4xf32>
    tpu.vector_store %arg11[%c104_734, %c52_735], %446 {strides = array<i32>} : memref<128x64xf32, #tpu.memory_space<vmem>>, vector<8x4xf32>,
    %c595_736 = arith.constant 595 : index
    %c0_737 = arith.constant 0 : index
    %448 = tpu.strided_load %arg1[%c595_736, %c0_737] {strides = array<i32: 2, 1>} : memref<648x4xf32, #tpu.memory_space<vmem>>, vector<8x4xf32>
    %c112_738 = arith.constant 112 : index
    %c52_739 = arith.constant 52 : index
    %449 = vector.load %arg11[%c112_738, %c52_739] : memref<128x64xf32, #tpu.memory_space<vmem>>, vector<8x4xf32>
    tpu.vector_store %arg11[%c112_738, %c52_739], %448 {strides = array<i32>} : memref<128x64xf32, #tpu.memory_space<vmem>>, vector<8x4xf32>,
    %c631 = arith.constant 631 : index
    %c0_740 = arith.constant 0 : index
    %450 = tpu.strided_load %arg1[%c631, %c0_740] {strides = array<i32: 2, 1>} : memref<648x4xf32, #tpu.memory_space<vmem>>, vector<8x4xf32>
    %c120_741 = arith.constant 120 : index
    %c52_742 = arith.constant 52 : index
    %451 = vector.load %arg11[%c120_741, %c52_742] : memref<128x64xf32, #tpu.memory_space<vmem>>, vector<8x4xf32>
    tpu.vector_store %arg11[%c120_741, %c52_742], %450 {strides = array<i32>} : memref<128x64xf32, #tpu.memory_space<vmem>>, vector<8x4xf32>,
    %c56_743 = arith.constant 56 : index
    %c0_744 = arith.constant 0 : index
    %452 = tpu.strided_load %arg1[%c56_743, %c0_744] {strides = array<i32: 2, 1>} : memref<648x4xf32, #tpu.memory_space<vmem>>, vector<8x4xf32>
    %c0_745 = arith.constant 0 : index
    %c56_746 = arith.constant 56 : index
    %453 = vector.load %arg11[%c0_745, %c56_746] : memref<128x64xf32, #tpu.memory_space<vmem>>, vector<8x4xf32>
    tpu.vector_store %arg11[%c0_745, %c56_746], %452 {strides = array<i32>} : memref<128x64xf32, #tpu.memory_space<vmem>>, vector<8x4xf32>,
    %c92_747 = arith.constant 92 : index
    %c0_748 = arith.constant 0 : index
    %454 = tpu.strided_load %arg1[%c92_747, %c0_748] {strides = array<i32: 2, 1>} : memref<648x4xf32, #tpu.memory_space<vmem>>, vector<8x4xf32>
    %c8_749 = arith.constant 8 : index
    %c56_750 = arith.constant 56 : index
    %455 = vector.load %arg11[%c8_749, %c56_750] : memref<128x64xf32, #tpu.memory_space<vmem>>, vector<8x4xf32>
    tpu.vector_store %arg11[%c8_749, %c56_750], %454 {strides = array<i32>} : memref<128x64xf32, #tpu.memory_space<vmem>>, vector<8x4xf32>,
    %c128_751 = arith.constant 128 : index
    %c0_752 = arith.constant 0 : index
    %456 = tpu.strided_load %arg1[%c128_751, %c0_752] {strides = array<i32: 2, 1>} : memref<648x4xf32, #tpu.memory_space<vmem>>, vector<8x4xf32>
    %c16_753 = arith.constant 16 : index
    %c56_754 = arith.constant 56 : index
    %457 = vector.load %arg11[%c16_753, %c56_754] : memref<128x64xf32, #tpu.memory_space<vmem>>, vector<8x4xf32>
    tpu.vector_store %arg11[%c16_753, %c56_754], %456 {strides = array<i32>} : memref<128x64xf32, #tpu.memory_space<vmem>>, vector<8x4xf32>,
    %c164_755 = arith.constant 164 : index
    %c0_756 = arith.constant 0 : index
    %458 = tpu.strided_load %arg1[%c164_755, %c0_756] {strides = array<i32: 2, 1>} : memref<648x4xf32, #tpu.memory_space<vmem>>, vector<8x4xf32>
    %c24_757 = arith.constant 24 : index
    %c56_758 = arith.constant 56 : index
    %459 = vector.load %arg11[%c24_757, %c56_758] : memref<128x64xf32, #tpu.memory_space<vmem>>, vector<8x4xf32>
    tpu.vector_store %arg11[%c24_757, %c56_758], %458 {strides = array<i32>} : memref<128x64xf32, #tpu.memory_space<vmem>>, vector<8x4xf32>,
    %c200_759 = arith.constant 200 : index
    %c0_760 = arith.constant 0 : index
    %460 = tpu.strided_load %arg1[%c200_759, %c0_760] {strides = array<i32: 2, 1>} : memref<648x4xf32, #tpu.memory_space<vmem>>, vector<8x4xf32>
    %c32_761 = arith.constant 32 : index
    %c56_762 = arith.constant 56 : index
    %461 = vector.load %arg11[%c32_761, %c56_762] : memref<128x64xf32, #tpu.memory_space<vmem>>, vector<8x4xf32>
    tpu.vector_store %arg11[%c32_761, %c56_762], %460 {strides = array<i32>} : memref<128x64xf32, #tpu.memory_space<vmem>>, vector<8x4xf32>,
    %c236_763 = arith.constant 236 : index
    %c0_764 = arith.constant 0 : index
    %462 = tpu.strided_load %arg1[%c236_763, %c0_764] {strides = array<i32: 2, 1>} : memref<648x4xf32, #tpu.memory_space<vmem>>, vector<8x4xf32>
    %c40_765 = arith.constant 40 : index
    %c56_766 = arith.constant 56 : index
    %463 = vector.load %arg11[%c40_765, %c56_766] : memref<128x64xf32, #tpu.memory_space<vmem>>, vector<8x4xf32>
    tpu.vector_store %arg11[%c40_765, %c56_766], %462 {strides = array<i32>} : memref<128x64xf32, #tpu.memory_space<vmem>>, vector<8x4xf32>,
    %c272_767 = arith.constant 272 : index
    %c0_768 = arith.constant 0 : index
    %464 = tpu.strided_load %arg1[%c272_767, %c0_768] {strides = array<i32: 2, 1>} : memref<648x4xf32, #tpu.memory_space<vmem>>, vector<8x4xf32>
    %c48_769 = arith.constant 48 : index
    %c56_770 = arith.constant 56 : index
    %465 = vector.load %arg11[%c48_769, %c56_770] : memref<128x64xf32, #tpu.memory_space<vmem>>, vector<8x4xf32>
    tpu.vector_store %arg11[%c48_769, %c56_770], %464 {strides = array<i32>} : memref<128x64xf32, #tpu.memory_space<vmem>>, vector<8x4xf32>,
    %c308 = arith.constant 308 : index
    %c0_771 = arith.constant 0 : index
    %466 = tpu.strided_load %arg1[%c308, %c0_771] {strides = array<i32: 2, 1>} : memref<648x4xf32, #tpu.memory_space<vmem>>, vector<8x4xf32>
    %c56_772 = arith.constant 56 : index
    %c56_773 = arith.constant 56 : index
    %467 = vector.load %arg11[%c56_772, %c56_773] : memref<128x64xf32, #tpu.memory_space<vmem>>, vector<8x4xf32>
    tpu.vector_store %arg11[%c56_772, %c56_773], %466 {strides = array<i32>} : memref<128x64xf32, #tpu.memory_space<vmem>>, vector<8x4xf32>,
    %c380_774 = arith.constant 380 : index
    %c0_775 = arith.constant 0 : index
    %468 = tpu.strided_load %arg1[%c380_774, %c0_775] {strides = array<i32: 2, 1>} : memref<648x4xf32, #tpu.memory_space<vmem>>, vector<8x4xf32>
    %c64_776 = arith.constant 64 : index
    %c56_777 = arith.constant 56 : index
    %469 = vector.load %arg11[%c64_776, %c56_777] : memref<128x64xf32, #tpu.memory_space<vmem>>, vector<8x4xf32>
    tpu.vector_store %arg11[%c64_776, %c56_777], %468 {strides = array<i32>} : memref<128x64xf32, #tpu.memory_space<vmem>>, vector<8x4xf32>,
    %c416_778 = arith.constant 416 : index
    %c0_779 = arith.constant 0 : index
    %470 = tpu.strided_load %arg1[%c416_778, %c0_779] {strides = array<i32: 2, 1>} : memref<648x4xf32, #tpu.memory_space<vmem>>, vector<8x4xf32>
    %c72_780 = arith.constant 72 : index
    %c56_781 = arith.constant 56 : index
    %471 = vector.load %arg11[%c72_780, %c56_781] : memref<128x64xf32, #tpu.memory_space<vmem>>, vector<8x4xf32>
    tpu.vector_store %arg11[%c72_780, %c56_781], %470 {strides = array<i32>} : memref<128x64xf32, #tpu.memory_space<vmem>>, vector<8x4xf32>,
    %c452_782 = arith.constant 452 : index
    %c0_783 = arith.constant 0 : index
    %472 = tpu.strided_load %arg1[%c452_782, %c0_783] {strides = array<i32: 2, 1>} : memref<648x4xf32, #tpu.memory_space<vmem>>, vector<8x4xf32>
    %c80_784 = arith.constant 80 : index
    %c56_785 = arith.constant 56 : index
    %473 = vector.load %arg11[%c80_784, %c56_785] : memref<128x64xf32, #tpu.memory_space<vmem>>, vector<8x4xf32>
    tpu.vector_store %arg11[%c80_784, %c56_785], %472 {strides = array<i32>} : memref<128x64xf32, #tpu.memory_space<vmem>>, vector<8x4xf32>,
    %c488_786 = arith.constant 488 : index
    %c0_787 = arith.constant 0 : index
    %474 = tpu.strided_load %arg1[%c488_786, %c0_787] {strides = array<i32: 2, 1>} : memref<648x4xf32, #tpu.memory_space<vmem>>, vector<8x4xf32>
    %c88_788 = arith.constant 88 : index
    %c56_789 = arith.constant 56 : index
    %475 = vector.load %arg11[%c88_788, %c56_789] : memref<128x64xf32, #tpu.memory_space<vmem>>, vector<8x4xf32>
    tpu.vector_store %arg11[%c88_788, %c56_789], %474 {strides = array<i32>} : memref<128x64xf32, #tpu.memory_space<vmem>>, vector<8x4xf32>,
    %c524_790 = arith.constant 524 : index
    %c0_791 = arith.constant 0 : index
    %476 = tpu.strided_load %arg1[%c524_790, %c0_791] {strides = array<i32: 2, 1>} : memref<648x4xf32, #tpu.memory_space<vmem>>, vector<8x4xf32>
    %c96_792 = arith.constant 96 : index
    %c56_793 = arith.constant 56 : index
    %477 = vector.load %arg11[%c96_792, %c56_793] : memref<128x64xf32, #tpu.memory_space<vmem>>, vector<8x4xf32>
    tpu.vector_store %arg11[%c96_792, %c56_793], %476 {strides = array<i32>} : memref<128x64xf32, #tpu.memory_space<vmem>>, vector<8x4xf32>,
    %c560_794 = arith.constant 560 : index
    %c0_795 = arith.constant 0 : index
    %478 = tpu.strided_load %arg1[%c560_794, %c0_795] {strides = array<i32: 2, 1>} : memref<648x4xf32, #tpu.memory_space<vmem>>, vector<8x4xf32>
    %c104_796 = arith.constant 104 : index
    %c56_797 = arith.constant 56 : index
    %479 = vector.load %arg11[%c104_796, %c56_797] : memref<128x64xf32, #tpu.memory_space<vmem>>, vector<8x4xf32>
    tpu.vector_store %arg11[%c104_796, %c56_797], %478 {strides = array<i32>} : memref<128x64xf32, #tpu.memory_space<vmem>>, vector<8x4xf32>,
    %c596_798 = arith.constant 596 : index
    %c0_799 = arith.constant 0 : index
    %480 = tpu.strided_load %arg1[%c596_798, %c0_799] {strides = array<i32: 2, 1>} : memref<648x4xf32, #tpu.memory_space<vmem>>, vector<8x4xf32>
    %c112_800 = arith.constant 112 : index
    %c56_801 = arith.constant 56 : index
    %481 = vector.load %arg11[%c112_800, %c56_801] : memref<128x64xf32, #tpu.memory_space<vmem>>, vector<8x4xf32>
    tpu.vector_store %arg11[%c112_800, %c56_801], %480 {strides = array<i32>} : memref<128x64xf32, #tpu.memory_space<vmem>>, vector<8x4xf32>,
    %c632 = arith.constant 632 : index
    %c0_802 = arith.constant 0 : index
    %482 = tpu.strided_load %arg1[%c632, %c0_802] {strides = array<i32: 2, 1>} : memref<648x4xf32, #tpu.memory_space<vmem>>, vector<8x4xf32>
    %c120_803 = arith.constant 120 : index
    %c56_804 = arith.constant 56 : index
    %483 = vector.load %arg11[%c120_803, %c56_804] : memref<128x64xf32, #tpu.memory_space<vmem>>, vector<8x4xf32>
    tpu.vector_store %arg11[%c120_803, %c56_804], %482 {strides = array<i32>} : memref<128x64xf32, #tpu.memory_space<vmem>>, vector<8x4xf32>,
    %c57_805 = arith.constant 57 : index
    %c0_806 = arith.constant 0 : index
    %484 = tpu.strided_load %arg1[%c57_805, %c0_806] {strides = array<i32: 2, 1>} : memref<648x4xf32, #tpu.memory_space<vmem>>, vector<8x4xf32>
    %c0_807 = arith.constant 0 : index
    %c60 = arith.constant 60 : index
    %485 = vector.load %arg11[%c0_807, %c60] : memref<128x64xf32, #tpu.memory_space<vmem>>, vector<8x4xf32>
    tpu.vector_store %arg11[%c0_807, %c60], %484 {strides = array<i32>} : memref<128x64xf32, #tpu.memory_space<vmem>>, vector<8x4xf32>,
    %c93_808 = arith.constant 93 : index
    %c0_809 = arith.constant 0 : index
    %486 = tpu.strided_load %arg1[%c93_808, %c0_809] {strides = array<i32: 2, 1>} : memref<648x4xf32, #tpu.memory_space<vmem>>, vector<8x4xf32>
    %c8_810 = arith.constant 8 : index
    %c60_811 = arith.constant 60 : index
    %487 = vector.load %arg11[%c8_810, %c60_811] : memref<128x64xf32, #tpu.memory_space<vmem>>, vector<8x4xf32>
    tpu.vector_store %arg11[%c8_810, %c60_811], %486 {strides = array<i32>} : memref<128x64xf32, #tpu.memory_space<vmem>>, vector<8x4xf32>,
    %c129_812 = arith.constant 129 : index
    %c0_813 = arith.constant 0 : index
    %488 = tpu.strided_load %arg1[%c129_812, %c0_813] {strides = array<i32: 2, 1>} : memref<648x4xf32, #tpu.memory_space<vmem>>, vector<8x4xf32>
    %c16_814 = arith.constant 16 : index
    %c60_815 = arith.constant 60 : index
    %489 = vector.load %arg11[%c16_814, %c60_815] : memref<128x64xf32, #tpu.memory_space<vmem>>, vector<8x4xf32>
    tpu.vector_store %arg11[%c16_814, %c60_815], %488 {strides = array<i32>} : memref<128x64xf32, #tpu.memory_space<vmem>>, vector<8x4xf32>,
    %c165_816 = arith.constant 165 : index
    %c0_817 = arith.constant 0 : index
    %490 = tpu.strided_load %arg1[%c165_816, %c0_817] {strides = array<i32: 2, 1>} : memref<648x4xf32, #tpu.memory_space<vmem>>, vector<8x4xf32>
    %c24_818 = arith.constant 24 : index
    %c60_819 = arith.constant 60 : index
    %491 = vector.load %arg11[%c24_818, %c60_819] : memref<128x64xf32, #tpu.memory_space<vmem>>, vector<8x4xf32>
    tpu.vector_store %arg11[%c24_818, %c60_819], %490 {strides = array<i32>} : memref<128x64xf32, #tpu.memory_space<vmem>>, vector<8x4xf32>,
    %c201_820 = arith.constant 201 : index
    %c0_821 = arith.constant 0 : index
    %492 = tpu.strided_load %arg1[%c201_820, %c0_821] {strides = array<i32: 2, 1>} : memref<648x4xf32, #tpu.memory_space<vmem>>, vector<8x4xf32>
    %c32_822 = arith.constant 32 : index
    %c60_823 = arith.constant 60 : index
    %493 = vector.load %arg11[%c32_822, %c60_823] : memref<128x64xf32, #tpu.memory_space<vmem>>, vector<8x4xf32>
    tpu.vector_store %arg11[%c32_822, %c60_823], %492 {strides = array<i32>} : memref<128x64xf32, #tpu.memory_space<vmem>>, vector<8x4xf32>,
    %c237_824 = arith.constant 237 : index
    %c0_825 = arith.constant 0 : index
    %494 = tpu.strided_load %arg1[%c237_824, %c0_825] {strides = array<i32: 2, 1>} : memref<648x4xf32, #tpu.memory_space<vmem>>, vector<8x4xf32>
    %c40_826 = arith.constant 40 : index
    %c60_827 = arith.constant 60 : index
    %495 = vector.load %arg11[%c40_826, %c60_827] : memref<128x64xf32, #tpu.memory_space<vmem>>, vector<8x4xf32>
    tpu.vector_store %arg11[%c40_826, %c60_827], %494 {strides = array<i32>} : memref<128x64xf32, #tpu.memory_space<vmem>>, vector<8x4xf32>,
    %c273_828 = arith.constant 273 : index
    %c0_829 = arith.constant 0 : index
    %496 = tpu.strided_load %arg1[%c273_828, %c0_829] {strides = array<i32: 2, 1>} : memref<648x4xf32, #tpu.memory_space<vmem>>, vector<8x4xf32>
    %c48_830 = arith.constant 48 : index
    %c60_831 = arith.constant 60 : index
    %497 = vector.load %arg11[%c48_830, %c60_831] : memref<128x64xf32, #tpu.memory_space<vmem>>, vector<8x4xf32>
    tpu.vector_store %arg11[%c48_830, %c60_831], %496 {strides = array<i32>} : memref<128x64xf32, #tpu.memory_space<vmem>>, vector<8x4xf32>,
    %c309 = arith.constant 309 : index
    %c0_832 = arith.constant 0 : index
    %498 = tpu.strided_load %arg1[%c309, %c0_832] {strides = array<i32: 2, 1>} : memref<648x4xf32, #tpu.memory_space<vmem>>, vector<8x4xf32>
    %c56_833 = arith.constant 56 : index
    %c60_834 = arith.constant 60 : index
    %499 = vector.load %arg11[%c56_833, %c60_834] : memref<128x64xf32, #tpu.memory_space<vmem>>, vector<8x4xf32>
    tpu.vector_store %arg11[%c56_833, %c60_834], %498 {strides = array<i32>} : memref<128x64xf32, #tpu.memory_space<vmem>>, vector<8x4xf32>,
    %c381_835 = arith.constant 381 : index
    %c0_836 = arith.constant 0 : index
    %500 = tpu.strided_load %arg1[%c381_835, %c0_836] {strides = array<i32: 2, 1>} : memref<648x4xf32, #tpu.memory_space<vmem>>, vector<8x4xf32>
    %c64_837 = arith.constant 64 : index
    %c60_838 = arith.constant 60 : index
    %501 = vector.load %arg11[%c64_837, %c60_838] : memref<128x64xf32, #tpu.memory_space<vmem>>, vector<8x4xf32>
    tpu.vector_store %arg11[%c64_837, %c60_838], %500 {strides = array<i32>} : memref<128x64xf32, #tpu.memory_space<vmem>>, vector<8x4xf32>,
    %c417_839 = arith.constant 417 : index
    %c0_840 = arith.constant 0 : index
    %502 = tpu.strided_load %arg1[%c417_839, %c0_840] {strides = array<i32: 2, 1>} : memref<648x4xf32, #tpu.memory_space<vmem>>, vector<8x4xf32>
    %c72_841 = arith.constant 72 : index
    %c60_842 = arith.constant 60 : index
    %503 = vector.load %arg11[%c72_841, %c60_842] : memref<128x64xf32, #tpu.memory_space<vmem>>, vector<8x4xf32>
    tpu.vector_store %arg11[%c72_841, %c60_842], %502 {strides = array<i32>} : memref<128x64xf32, #tpu.memory_space<vmem>>, vector<8x4xf32>,
    %c453_843 = arith.constant 453 : index
    %c0_844 = arith.constant 0 : index
    %504 = tpu.strided_load %arg1[%c453_843, %c0_844] {strides = array<i32: 2, 1>} : memref<648x4xf32, #tpu.memory_space<vmem>>, vector<8x4xf32>
    %c80_845 = arith.constant 80 : index
    %c60_846 = arith.constant 60 : index
    %505 = vector.load %arg11[%c80_845, %c60_846] : memref<128x64xf32, #tpu.memory_space<vmem>>, vector<8x4xf32>
    tpu.vector_store %arg11[%c80_845, %c60_846], %504 {strides = array<i32>} : memref<128x64xf32, #tpu.memory_space<vmem>>, vector<8x4xf32>,
    %c489_847 = arith.constant 489 : index
    %c0_848 = arith.constant 0 : index
    %506 = tpu.strided_load %arg1[%c489_847, %c0_848] {strides = array<i32: 2, 1>} : memref<648x4xf32, #tpu.memory_space<vmem>>, vector<8x4xf32>
    %c88_849 = arith.constant 88 : index
    %c60_850 = arith.constant 60 : index
    %507 = vector.load %arg11[%c88_849, %c60_850] : memref<128x64xf32, #tpu.memory_space<vmem>>, vector<8x4xf32>
    tpu.vector_store %arg11[%c88_849, %c60_850], %506 {strides = array<i32>} : memref<128x64xf32, #tpu.memory_space<vmem>>, vector<8x4xf32>,
    %c525_851 = arith.constant 525 : index
    %c0_852 = arith.constant 0 : index
    %508 = tpu.strided_load %arg1[%c525_851, %c0_852] {strides = array<i32: 2, 1>} : memref<648x4xf32, #tpu.memory_space<vmem>>, vector<8x4xf32>
    %c96_853 = arith.constant 96 : index
    %c60_854 = arith.constant 60 : index
    %509 = vector.load %arg11[%c96_853, %c60_854] : memref<128x64xf32, #tpu.memory_space<vmem>>, vector<8x4xf32>
    tpu.vector_store %arg11[%c96_853, %c60_854], %508 {strides = array<i32>} : memref<128x64xf32, #tpu.memory_space<vmem>>, vector<8x4xf32>,
    %c561_855 = arith.constant 561 : index
    %c0_856 = arith.constant 0 : index
    %510 = tpu.strided_load %arg1[%c561_855, %c0_856] {strides = array<i32: 2, 1>} : memref<648x4xf32, #tpu.memory_space<vmem>>, vector<8x4xf32>
    %c104_857 = arith.constant 104 : index
    %c60_858 = arith.constant 60 : index
    %511 = vector.load %arg11[%c104_857, %c60_858] : memref<128x64xf32, #tpu.memory_space<vmem>>, vector<8x4xf32>
    tpu.vector_store %arg11[%c104_857, %c60_858], %510 {strides = array<i32>} : memref<128x64xf32, #tpu.memory_space<vmem>>, vector<8x4xf32>,
    %c597_859 = arith.constant 597 : index
    %c0_860 = arith.constant 0 : index
    %512 = tpu.strided_load %arg1[%c597_859, %c0_860] {strides = array<i32: 2, 1>} : memref<648x4xf32, #tpu.memory_space<vmem>>, vector<8x4xf32>
    %c112_861 = arith.constant 112 : index
    %c60_862 = arith.constant 60 : index
    %513 = vector.load %arg11[%c112_861, %c60_862] : memref<128x64xf32, #tpu.memory_space<vmem>>, vector<8x4xf32>
    tpu.vector_store %arg11[%c112_861, %c60_862], %512 {strides = array<i32>} : memref<128x64xf32, #tpu.memory_space<vmem>>, vector<8x4xf32>,
    %c633 = arith.constant 633 : index
    %c0_863 = arith.constant 0 : index
    %514 = tpu.strided_load %arg1[%c633, %c0_863] {strides = array<i32: 2, 1>} : memref<648x4xf32, #tpu.memory_space<vmem>>, vector<8x4xf32>
    %c120_864 = arith.constant 120 : index
    %c60_865 = arith.constant 60 : index
    %515 = vector.load %arg11[%c120_864, %c60_865] : memref<128x64xf32, #tpu.memory_space<vmem>>, vector<8x4xf32>
    tpu.vector_store %arg11[%c120_864, %c60_865], %514 {strides = array<i32>} : memref<128x64xf32, #tpu.memory_space<vmem>>, vector<8x4xf32>,
    %c0_866 = arith.constant 0 : index
    %c0_867 = arith.constant 0 : index
    %516 = vector.load %arg11[%c0_866, %c0_867] : memref<128x64xf32, #tpu.memory_space<vmem>>, vector<128x64xf32>
    %517 = arith.truncf %516 : vector<128x64xf32> to vector<128x64xbf16>
    %c0_868 = arith.constant 0 : index
    %c0_869 = arith.constant 0 : index
    %518 = vector.load %arg2[%c0_868, %c0_869] : memref<64x128xbf16, #tpu.memory_space<vmem>>, vector<64x128xbf16>
    %cst_870 = arith.constant dense<0.000000e+00> : vector<128x128xf32>
    %519 = tpu.matmul %517, %518, %cst_870 {dimension_numbers = #tpu.dot_dimension_numbers<[1], [0], [0], [1], [0, 0, 1, 1], [], []>} : vector<128x64xbf16>, vector<64x128xbf16>, vector<128x128xf32> -> vector<128x128xf32>
    %c0_871 = arith.constant 0 : index
    %c0_872 = arith.constant 0 : index
    %520 = vector.load %arg3[%c0_871, %c0_872] : memref<3x128xf32, #tpu.memory_space<vmem>>, vector<1x128xf32>
    %c1_873 = arith.constant 1 : index
    %c0_874 = arith.constant 0 : index
    %521 = vector.load %arg3[%c1_873, %c0_874] : memref<3x128xf32, #tpu.memory_space<vmem>>, vector<1x128xf32>
    %c2_875 = arith.constant 2 : index
    %c0_876 = arith.constant 0 : index
    %522 = vector.load %arg3[%c2_875, %c0_876] : memref<3x128xf32, #tpu.memory_space<vmem>>, vector<1x128xf32>
    %523 = vector.broadcast %520 : vector<1x128xf32> to vector<128x128xf32>
    %524 = arith.addf %519, %523 : vector<128x128xf32>
    %cst_877 = arith.constant 0.000000e+00 : f32
    %525 = vector.broadcast %cst_877 : f32 to vector<128x128xf32>
    %526 = arith.cmpf oge, %524, %525 : vector<128x128xf32>
    %cst_878 = arith.constant 0.00999999977 : f32
    %527 = vector.broadcast %cst_878 : f32 to vector<128x128xf32>
    %528 = arith.mulf %527, %524 : vector<128x128xf32>
    %529 = arith.select %526, %524, %528 : vector<128x128xi1>, vector<128x128xf32>
    %cst_879 = arith.constant dense<0.000000e+00> : vector<128xf32>
    %530 = vector.multi_reduction <add>, %529, %cst_879 [0] : vector<128x128xf32> to vector<128xf32>
    %531 = vector.shape_cast %530 : vector<128xf32> to vector<1x128xf32>
    %cst_880 = arith.constant 7.812500e-03 : f32
    %532 = vector.broadcast %cst_880 : f32 to vector<1x128xf32>
    %533 = arith.mulf %531, %532 : vector<1x128xf32>
    %534 = vector.broadcast %533 : vector<1x128xf32> to vector<128x128xf32>
    %535 = arith.subf %529, %534 : vector<128x128xf32>
    %536 = arith.mulf %535, %535 : vector<128x128xf32>
    %cst_881 = arith.constant dense<0.000000e+00> : vector<128xf32>
    %537 = vector.multi_reduction <add>, %536, %cst_881 [0] : vector<128x128xf32> to vector<128xf32>
    %538 = vector.shape_cast %537 : vector<128xf32> to vector<1x128xf32>
    %cst_882 = arith.constant 7.812500e-03 : f32
    %539 = vector.broadcast %cst_882 : f32 to vector<1x128xf32>
    %540 = arith.mulf %538, %539 : vector<1x128xf32>
    %cst_883 = arith.constant 9.99999974E-6 : f32
    %541 = vector.broadcast %cst_883 : f32 to vector<1x128xf32>
    %542 = arith.addf %540, %541 : vector<1x128xf32>
    %543 = math.rsqrt %542 : vector<1x128xf32>
    %544 = arith.mulf %521, %543 : vector<1x128xf32>
    %545 = arith.mulf %533, %544 : vector<1x128xf32>
    %546 = arith.subf %522, %545 : vector<1x128xf32>
    %547 = vector.broadcast %544 : vector<1x128xf32> to vector<128x128xf32>
    %548 = arith.mulf %529, %547 : vector<128x128xf32>
    %549 = vector.broadcast %546 : vector<1x128xf32> to vector<128x128xf32>
    %550 = arith.addf %548, %549 : vector<128x128xf32>
    %551 = vector.extract_strided_slice %550 {offsets = [0, 0], sizes = [8, 32], strides = [1, 1]} : vector<128x128xf32> to vector<8x32xf32>
    %c11 = arith.constant 11 : index
    %c0_884 = arith.constant 0 : index
    %552 = vector.load %arg14[%c11, %c0_884] : memref<200x32xf32, #tpu.memory_space<vmem>>, vector<8x32xf32>
    tpu.vector_store %arg14[%c11, %c0_884], %551 {strides = array<i32>} : memref<200x32xf32, #tpu.memory_space<vmem>>, vector<8x32xf32>,
    %553 = vector.extract_strided_slice %550 {offsets = [8, 0], sizes = [8, 32], strides = [1, 1]} : vector<128x128xf32> to vector<8x32xf32>
    %c21_885 = arith.constant 21 : index
    %c0_886 = arith.constant 0 : index
    %554 = vector.load %arg14[%c21_885, %c0_886] : memref<200x32xf32, #tpu.memory_space<vmem>>, vector<8x32xf32>
    tpu.vector_store %arg14[%c21_885, %c0_886], %553 {strides = array<i32>} : memref<200x32xf32, #tpu.memory_space<vmem>>, vector<8x32xf32>,
    %555 = vector.extract_strided_slice %550 {offsets = [16, 0], sizes = [8, 32], strides = [1, 1]} : vector<128x128xf32> to vector<8x32xf32>
    %c31 = arith.constant 31 : index
    %c0_887 = arith.constant 0 : index
    %556 = vector.load %arg14[%c31, %c0_887] : memref<200x32xf32, #tpu.memory_space<vmem>>, vector<8x32xf32>
    tpu.vector_store %arg14[%c31, %c0_887], %555 {strides = array<i32>} : memref<200x32xf32, #tpu.memory_space<vmem>>, vector<8x32xf32>,
    %557 = vector.extract_strided_slice %550 {offsets = [24, 0], sizes = [8, 32], strides = [1, 1]} : vector<128x128xf32> to vector<8x32xf32>
    %c41 = arith.constant 41 : index
    %c0_888 = arith.constant 0 : index
    %558 = vector.load %arg14[%c41, %c0_888] : memref<200x32xf32, #tpu.memory_space<vmem>>, vector<8x32xf32>
    tpu.vector_store %arg14[%c41, %c0_888], %557 {strides = array<i32>} : memref<200x32xf32, #tpu.memory_space<vmem>>, vector<8x32xf32>,
    %559 = vector.extract_strided_slice %550 {offsets = [32, 0], sizes = [8, 32], strides = [1, 1]} : vector<128x128xf32> to vector<8x32xf32>
    %c51 = arith.constant 51 : index
    %c0_889 = arith.constant 0 : index
    %560 = vector.load %arg14[%c51, %c0_889] : memref<200x32xf32, #tpu.memory_space<vmem>>, vector<8x32xf32>
    tpu.vector_store %arg14[%c51, %c0_889], %559 {strides = array<i32>} : memref<200x32xf32, #tpu.memory_space<vmem>>, vector<8x32xf32>,
    %561 = vector.extract_strided_slice %550 {offsets = [40, 0], sizes = [8, 32], strides = [1, 1]} : vector<128x128xf32> to vector<8x32xf32>
    %c61 = arith.constant 61 : index
    %c0_890 = arith.constant 0 : index
    %562 = vector.load %arg14[%c61, %c0_890] : memref<200x32xf32, #tpu.memory_space<vmem>>, vector<8x32xf32>
    tpu.vector_store %arg14[%c61, %c0_890], %561 {strides = array<i32>} : memref<200x32xf32, #tpu.memory_space<vmem>>, vector<8x32xf32>,
    %563 = vector.extract_strided_slice %550 {offsets = [48, 0], sizes = [8, 32], strides = [1, 1]} : vector<128x128xf32> to vector<8x32xf32>
    %c71 = arith.constant 71 : index
    %c0_891 = arith.constant 0 : index
    %564 = vector.load %arg14[%c71, %c0_891] : memref<200x32xf32, #tpu.memory_space<vmem>>, vector<8x32xf32>
    tpu.vector_store %arg14[%c71, %c0_891], %563 {strides = array<i32>} : memref<200x32xf32, #tpu.memory_space<vmem>>, vector<8x32xf32>,
    %565 = vector.extract_strided_slice %550 {offsets = [56, 0], sizes = [8, 32], strides = [1, 1]} : vector<128x128xf32> to vector<8x32xf32>
    %c81 = arith.constant 81 : index
    %c0_892 = arith.constant 0 : index
    %566 = vector.load %arg14[%c81, %c0_892] : memref<200x32xf32, #tpu.memory_space<vmem>>, vector<8x32xf32>
    tpu.vector_store %arg14[%c81, %c0_892], %565 {strides = array<i32>} : memref<200x32xf32, #tpu.memory_space<vmem>>, vector<8x32xf32>,
    %567 = vector.extract_strided_slice %550 {offsets = [64, 0], sizes = [8, 32], strides = [1, 1]} : vector<128x128xf32> to vector<8x32xf32>
    %c111_893 = arith.constant 111 : index
    %c0_894 = arith.constant 0 : index
    %568 = vector.load %arg14[%c111_893, %c0_894] : memref<200x32xf32, #tpu.memory_space<vmem>>, vector<8x32xf32>
    tpu.vector_store %arg14[%c111_893, %c0_894], %567 {strides = array<i32>} : memref<200x32xf32, #tpu.memory_space<vmem>>, vector<8x32xf32>,
    %569 = vector.extract_strided_slice %550 {offsets = [72, 0], sizes = [8, 32], strides = [1, 1]} : vector<128x128xf32> to vector<8x32xf32>
    %c121 = arith.constant 121 : index
    %c0_895 = arith.constant 0 : index
    %570 = vector.load %arg14[%c121, %c0_895] : memref<200x32xf32, #tpu.memory_space<vmem>>, vector<8x32xf32>
    tpu.vector_store %arg14[%c121, %c0_895], %569 {strides = array<i32>} : memref<200x32xf32, #tpu.memory_space<vmem>>, vector<8x32xf32>,
    %571 = vector.extract_strided_slice %550 {offsets = [80, 0], sizes = [8, 32], strides = [1, 1]} : vector<128x128xf32> to vector<8x32xf32>
    %c131 = arith.constant 131 : index
    %c0_896 = arith.constant 0 : index
    %572 = vector.load %arg14[%c131, %c0_896] : memref<200x32xf32, #tpu.memory_space<vmem>>, vector<8x32xf32>
    tpu.vector_store %arg14[%c131, %c0_896], %571 {strides = array<i32>} : memref<200x32xf32, #tpu.memory_space<vmem>>, vector<8x32xf32>,
    %573 = vector.extract_strided_slice %550 {offsets = [88, 0], sizes = [8, 32], strides = [1, 1]} : vector<128x128xf32> to vector<8x32xf32>
    %c141 = arith.constant 141 : index
    %c0_897 = arith.constant 0 : index
    %574 = vector.load %arg14[%c141, %c0_897] : memref<200x32xf32, #tpu.memory_space<vmem>>, vector<8x32xf32>
    tpu.vector_store %arg14[%c141, %c0_897], %573 {strides = array<i32>} : memref<200x32xf32, #tpu.memory_space<vmem>>, vector<8x32xf32>,
    %575 = vector.extract_strided_slice %550 {offsets = [96, 0], sizes = [8, 32], strides = [1, 1]} : vector<128x128xf32> to vector<8x32xf32>
    %c151 = arith.constant 151 : index
    %c0_898 = arith.constant 0 : index
    %576 = vector.load %arg14[%c151, %c0_898] : memref<200x32xf32, #tpu.memory_space<vmem>>, vector<8x32xf32>
    tpu.vector_store %arg14[%c151, %c0_898], %575 {strides = array<i32>} : memref<200x32xf32, #tpu.memory_space<vmem>>, vector<8x32xf32>,
    %577 = vector.extract_strided_slice %550 {offsets = [104, 0], sizes = [8, 32], strides = [1, 1]} : vector<128x128xf32> to vector<8x32xf32>
    %c161 = arith.constant 161 : index
    %c0_899 = arith.constant 0 : index
    %578 = vector.load %arg14[%c161, %c0_899] : memref<200x32xf32, #tpu.memory_space<vmem>>, vector<8x32xf32>
    tpu.vector_store %arg14[%c161, %c0_899], %577 {strides = array<i32>} : memref<200x32xf32, #tpu.memory_space<vmem>>, vector<8x32xf32>,
    %579 = vector.extract_strided_slice %550 {offsets = [112, 0], sizes = [8, 32], strides = [1, 1]} : vector<128x128xf32> to vector<8x32xf32>
    %c171 = arith.constant 171 : index
    %c0_900 = arith.constant 0 : index
    %580 = vector.load %arg14[%c171, %c0_900] : memref<200x32xf32, #tpu.memory_space<vmem>>, vector<8x32xf32>
    tpu.vector_store %arg14[%c171, %c0_900], %579 {strides = array<i32>} : memref<200x32xf32, #tpu.memory_space<vmem>>, vector<8x32xf32>,
    %581 = vector.extract_strided_slice %550 {offsets = [120, 0], sizes = [8, 32], strides = [1, 1]} : vector<128x128xf32> to vector<8x32xf32>
    %c181_901 = arith.constant 181 : index
    %c0_902 = arith.constant 0 : index
    %582 = vector.load %arg14[%c181_901, %c0_902] : memref<200x32xf32, #tpu.memory_space<vmem>>, vector<8x32xf32>
    tpu.vector_store %arg14[%c181_901, %c0_902], %581 {strides = array<i32>} : memref<200x32xf32, #tpu.memory_space<vmem>>, vector<8x32xf32>,
    %c0_903 = arith.constant 0 : index
    %c0_904 = arith.constant 0 : index
    %583 = tpu.strided_load %arg14[%c0_903, %c0_904] {strides = array<i32: 2, 1>} : memref<200x32xf32, #tpu.memory_space<vmem>>, vector<4x32xf32>
    %c0_905 = arith.constant 0 : index
    %c0_906 = arith.constant 0 : index
    %584 = vector.load %arg12[%c0_905, %c0_906] : memref<32x512xf32, #tpu.memory_space<vmem>>, vector<4x32xf32>
    tpu.vector_store %arg12[%c0_905, %c0_906], %583 {strides = array<i32>} : memref<32x512xf32, #tpu.memory_space<vmem>>, vector<4x32xf32>,
    %c20_907 = arith.constant 20 : index
    %c0_908 = arith.constant 0 : index
    %585 = tpu.strided_load %arg14[%c20_907, %c0_908] {strides = array<i32: 2, 1>} : memref<200x32xf32, #tpu.memory_space<vmem>>, vector<4x32xf32>
    %c4_909 = arith.constant 4 : index
    %c0_910 = arith.constant 0 : index
    %586 = vector.load %arg12[%c4_909, %c0_910] : memref<32x512xf32, #tpu.memory_space<vmem>>, vector<4x32xf32>
    tpu.vector_store %arg12[%c4_909, %c0_910], %585 {strides = array<i32>} : memref<32x512xf32, #tpu.memory_space<vmem>>, vector<4x32xf32>,
    %c40_911 = arith.constant 40 : index
    %c0_912 = arith.constant 0 : index
    %587 = tpu.strided_load %arg14[%c40_911, %c0_912] {strides = array<i32: 2, 1>} : memref<200x32xf32, #tpu.memory_space<vmem>>, vector<4x32xf32>
    %c8_913 = arith.constant 8 : index
    %c0_914 = arith.constant 0 : index
    %588 = vector.load %arg12[%c8_913, %c0_914] : memref<32x512xf32, #tpu.memory_space<vmem>>, vector<4x32xf32>
    tpu.vector_store %arg12[%c8_913, %c0_914], %587 {strides = array<i32>} : memref<32x512xf32, #tpu.memory_space<vmem>>, vector<4x32xf32>,
    %c60_915 = arith.constant 60 : index
    %c0_916 = arith.constant 0 : index
    %589 = tpu.strided_load %arg14[%c60_915, %c0_916] {strides = array<i32: 2, 1>} : memref<200x32xf32, #tpu.memory_space<vmem>>, vector<4x32xf32>
    %c12_917 = arith.constant 12 : index
    %c0_918 = arith.constant 0 : index
    %590 = vector.load %arg12[%c12_917, %c0_918] : memref<32x512xf32, #tpu.memory_space<vmem>>, vector<4x32xf32>
    tpu.vector_store %arg12[%c12_917, %c0_918], %589 {strides = array<i32>} : memref<32x512xf32, #tpu.memory_space<vmem>>, vector<4x32xf32>,
    %c100 = arith.constant 100 : index
    %c0_919 = arith.constant 0 : index
    %591 = tpu.strided_load %arg14[%c100, %c0_919] {strides = array<i32: 2, 1>} : memref<200x32xf32, #tpu.memory_space<vmem>>, vector<4x32xf32>
    %c16_920 = arith.constant 16 : index
    %c0_921 = arith.constant 0 : index
    %592 = vector.load %arg12[%c16_920, %c0_921] : memref<32x512xf32, #tpu.memory_space<vmem>>, vector<4x32xf32>
    tpu.vector_store %arg12[%c16_920, %c0_921], %591 {strides = array<i32>} : memref<32x512xf32, #tpu.memory_space<vmem>>, vector<4x32xf32>,
    %c120_922 = arith.constant 120 : index
    %c0_923 = arith.constant 0 : index
    %593 = tpu.strided_load %arg14[%c120_922, %c0_923] {strides = array<i32: 2, 1>} : memref<200x32xf32, #tpu.memory_space<vmem>>, vector<4x32xf32>
    %c20_924 = arith.constant 20 : index
    %c0_925 = arith.constant 0 : index
    %594 = vector.load %arg12[%c20_924, %c0_925] : memref<32x512xf32, #tpu.memory_space<vmem>>, vector<4x32xf32>
    tpu.vector_store %arg12[%c20_924, %c0_925], %593 {strides = array<i32>} : memref<32x512xf32, #tpu.memory_space<vmem>>, vector<4x32xf32>,
    %c140 = arith.constant 140 : index
    %c0_926 = arith.constant 0 : index
    %595 = tpu.strided_load %arg14[%c140, %c0_926] {strides = array<i32: 2, 1>} : memref<200x32xf32, #tpu.memory_space<vmem>>, vector<4x32xf32>
    %c24_927 = arith.constant 24 : index
    %c0_928 = arith.constant 0 : index
    %596 = vector.load %arg12[%c24_927, %c0_928] : memref<32x512xf32, #tpu.memory_space<vmem>>, vector<4x32xf32>
    tpu.vector_store %arg12[%c24_927, %c0_928], %595 {strides = array<i32>} : memref<32x512xf32, #tpu.memory_space<vmem>>, vector<4x32xf32>,
    %c160 = arith.constant 160 : index
    %c0_929 = arith.constant 0 : index
    %597 = tpu.strided_load %arg14[%c160, %c0_929] {strides = array<i32: 2, 1>} : memref<200x32xf32, #tpu.memory_space<vmem>>, vector<4x32xf32>
    %c28_930 = arith.constant 28 : index
    %c0_931 = arith.constant 0 : index
    %598 = vector.load %arg12[%c28_930, %c0_931] : memref<32x512xf32, #tpu.memory_space<vmem>>, vector<4x32xf32>
    tpu.vector_store %arg12[%c28_930, %c0_931], %597 {strides = array<i32>} : memref<32x512xf32, #tpu.memory_space<vmem>>, vector<4x32xf32>,
    %c1_932 = arith.constant 1 : index
    %c0_933 = arith.constant 0 : index
    %599 = tpu.strided_load %arg14[%c1_932, %c0_933] {strides = array<i32: 2, 1>} : memref<200x32xf32, #tpu.memory_space<vmem>>, vector<4x32xf32>
    %c0_934 = arith.constant 0 : index
    %c32_935 = arith.constant 32 : index
    %600 = vector.load %arg12[%c0_934, %c32_935] : memref<32x512xf32, #tpu.memory_space<vmem>>, vector<4x32xf32>
    tpu.vector_store %arg12[%c0_934, %c32_935], %599 {strides = array<i32>} : memref<32x512xf32, #tpu.memory_space<vmem>>, vector<4x32xf32>,
    %c21_936 = arith.constant 21 : index
    %c0_937 = arith.constant 0 : index
    %601 = tpu.strided_load %arg14[%c21_936, %c0_937] {strides = array<i32: 2, 1>} : memref<200x32xf32, #tpu.memory_space<vmem>>, vector<4x32xf32>
    %c4_938 = arith.constant 4 : index
    %c32_939 = arith.constant 32 : index
    %602 = vector.load %arg12[%c4_938, %c32_939] : memref<32x512xf32, #tpu.memory_space<vmem>>, vector<4x32xf32>
    tpu.vector_store %arg12[%c4_938, %c32_939], %601 {strides = array<i32>} : memref<32x512xf32, #tpu.memory_space<vmem>>, vector<4x32xf32>,
    %c41_940 = arith.constant 41 : index
    %c0_941 = arith.constant 0 : index
    %603 = tpu.strided_load %arg14[%c41_940, %c0_941] {strides = array<i32: 2, 1>} : memref<200x32xf32, #tpu.memory_space<vmem>>, vector<4x32xf32>
    %c8_942 = arith.constant 8 : index
    %c32_943 = arith.constant 32 : index
    %604 = vector.load %arg12[%c8_942, %c32_943] : memref<32x512xf32, #tpu.memory_space<vmem>>, vector<4x32xf32>
    tpu.vector_store %arg12[%c8_942, %c32_943], %603 {strides = array<i32>} : memref<32x512xf32, #tpu.memory_space<vmem>>, vector<4x32xf32>,
    %c61_944 = arith.constant 61 : index
    %c0_945 = arith.constant 0 : index
    %605 = tpu.strided_load %arg14[%c61_944, %c0_945] {strides = array<i32: 2, 1>} : memref<200x32xf32, #tpu.memory_space<vmem>>, vector<4x32xf32>
    %c12_946 = arith.constant 12 : index
    %c32_947 = arith.constant 32 : index
    %606 = vector.load %arg12[%c12_946, %c32_947] : memref<32x512xf32, #tpu.memory_space<vmem>>, vector<4x32xf32>
    tpu.vector_store %arg12[%c12_946, %c32_947], %605 {strides = array<i32>} : memref<32x512xf32, #tpu.memory_space<vmem>>, vector<4x32xf32>,
    %c101 = arith.constant 101 : index
    %c0_948 = arith.constant 0 : index
    %607 = tpu.strided_load %arg14[%c101, %c0_948] {strides = array<i32: 2, 1>} : memref<200x32xf32, #tpu.memory_space<vmem>>, vector<4x32xf32>
    %c16_949 = arith.constant 16 : index
    %c32_950 = arith.constant 32 : index
    %608 = vector.load %arg12[%c16_949, %c32_950] : memref<32x512xf32, #tpu.memory_space<vmem>>, vector<4x32xf32>
    tpu.vector_store %arg12[%c16_949, %c32_950], %607 {strides = array<i32>} : memref<32x512xf32, #tpu.memory_space<vmem>>, vector<4x32xf32>,
    %c121_951 = arith.constant 121 : index
    %c0_952 = arith.constant 0 : index
    %609 = tpu.strided_load %arg14[%c121_951, %c0_952] {strides = array<i32: 2, 1>} : memref<200x32xf32, #tpu.memory_space<vmem>>, vector<4x32xf32>
    %c20_953 = arith.constant 20 : index
    %c32_954 = arith.constant 32 : index
    %610 = vector.load %arg12[%c20_953, %c32_954] : memref<32x512xf32, #tpu.memory_space<vmem>>, vector<4x32xf32>
    tpu.vector_store %arg12[%c20_953, %c32_954], %609 {strides = array<i32>} : memref<32x512xf32, #tpu.memory_space<vmem>>, vector<4x32xf32>,
    %c141_955 = arith.constant 141 : index
    %c0_956 = arith.constant 0 : index
    %611 = tpu.strided_load %arg14[%c141_955, %c0_956] {strides = array<i32: 2, 1>} : memref<200x32xf32, #tpu.memory_space<vmem>>, vector<4x32xf32>
    %c24_957 = arith.constant 24 : index
    %c32_958 = arith.constant 32 : index
    %612 = vector.load %arg12[%c24_957, %c32_958] : memref<32x512xf32, #tpu.memory_space<vmem>>, vector<4x32xf32>
    tpu.vector_store %arg12[%c24_957, %c32_958], %611 {strides = array<i32>} : memref<32x512xf32, #tpu.memory_space<vmem>>, vector<4x32xf32>,
    %c161_959 = arith.constant 161 : index
    %c0_960 = arith.constant 0 : index
    %613 = tpu.strided_load %arg14[%c161_959, %c0_960] {strides = array<i32: 2, 1>} : memref<200x32xf32, #tpu.memory_space<vmem>>, vector<4x32xf32>
    %c28_961 = arith.constant 28 : index
    %c32_962 = arith.constant 32 : index
    %614 = vector.load %arg12[%c28_961, %c32_962] : memref<32x512xf32, #tpu.memory_space<vmem>>, vector<4x32xf32>
    tpu.vector_store %arg12[%c28_961, %c32_962], %613 {strides = array<i32>} : memref<32x512xf32, #tpu.memory_space<vmem>>, vector<4x32xf32>,
    %c2_963 = arith.constant 2 : index
    %c0_964 = arith.constant 0 : index
    %615 = tpu.strided_load %arg14[%c2_963, %c0_964] {strides = array<i32: 2, 1>} : memref<200x32xf32, #tpu.memory_space<vmem>>, vector<4x32xf32>
    %c0_965 = arith.constant 0 : index
    %c64_966 = arith.constant 64 : index
    %616 = vector.load %arg12[%c0_965, %c64_966] : memref<32x512xf32, #tpu.memory_space<vmem>>, vector<4x32xf32>
    tpu.vector_store %arg12[%c0_965, %c64_966], %615 {strides = array<i32>} : memref<32x512xf32, #tpu.memory_space<vmem>>, vector<4x32xf32>,
    %c22 = arith.constant 22 : index
    %c0_967 = arith.constant 0 : index
    %617 = tpu.strided_load %arg14[%c22, %c0_967] {strides = array<i32: 2, 1>} : memref<200x32xf32, #tpu.memory_space<vmem>>, vector<4x32xf32>
    %c4_968 = arith.constant 4 : index
    %c64_969 = arith.constant 64 : index
    %618 = vector.load %arg12[%c4_968, %c64_969] : memref<32x512xf32, #tpu.memory_space<vmem>>, vector<4x32xf32>
    tpu.vector_store %arg12[%c4_968, %c64_969], %617 {strides = array<i32>} : memref<32x512xf32, #tpu.memory_space<vmem>>, vector<4x32xf32>,
    %c42 = arith.constant 42 : index
    %c0_970 = arith.constant 0 : index
    %619 = tpu.strided_load %arg14[%c42, %c0_970] {strides = array<i32: 2, 1>} : memref<200x32xf32, #tpu.memory_space<vmem>>, vector<4x32xf32>
    %c8_971 = arith.constant 8 : index
    %c64_972 = arith.constant 64 : index
    %620 = vector.load %arg12[%c8_971, %c64_972] : memref<32x512xf32, #tpu.memory_space<vmem>>, vector<4x32xf32>
    tpu.vector_store %arg12[%c8_971, %c64_972], %619 {strides = array<i32>} : memref<32x512xf32, #tpu.memory_space<vmem>>, vector<4x32xf32>,
    %c62 = arith.constant 62 : index
    %c0_973 = arith.constant 0 : index
    %621 = tpu.strided_load %arg14[%c62, %c0_973] {strides = array<i32: 2, 1>} : memref<200x32xf32, #tpu.memory_space<vmem>>, vector<4x32xf32>
    %c12_974 = arith.constant 12 : index
    %c64_975 = arith.constant 64 : index
    %622 = vector.load %arg12[%c12_974, %c64_975] : memref<32x512xf32, #tpu.memory_space<vmem>>, vector<4x32xf32>
    tpu.vector_store %arg12[%c12_974, %c64_975], %621 {strides = array<i32>} : memref<32x512xf32, #tpu.memory_space<vmem>>, vector<4x32xf32>,
    %c102 = arith.constant 102 : index
    %c0_976 = arith.constant 0 : index
    %623 = tpu.strided_load %arg14[%c102, %c0_976] {strides = array<i32: 2, 1>} : memref<200x32xf32, #tpu.memory_space<vmem>>, vector<4x32xf32>
    %c16_977 = arith.constant 16 : index
    %c64_978 = arith.constant 64 : index
    %624 = vector.load %arg12[%c16_977, %c64_978] : memref<32x512xf32, #tpu.memory_space<vmem>>, vector<4x32xf32>
    tpu.vector_store %arg12[%c16_977, %c64_978], %623 {strides = array<i32>} : memref<32x512xf32, #tpu.memory_space<vmem>>, vector<4x32xf32>,
    %c122 = arith.constant 122 : index
    %c0_979 = arith.constant 0 : index
    %625 = tpu.strided_load %arg14[%c122, %c0_979] {strides = array<i32: 2, 1>} : memref<200x32xf32, #tpu.memory_space<vmem>>, vector<4x32xf32>
    %c20_980 = arith.constant 20 : index
    %c64_981 = arith.constant 64 : index
    %626 = vector.load %arg12[%c20_980, %c64_981] : memref<32x512xf32, #tpu.memory_space<vmem>>, vector<4x32xf32>
    tpu.vector_store %arg12[%c20_980, %c64_981], %625 {strides = array<i32>} : memref<32x512xf32, #tpu.memory_space<vmem>>, vector<4x32xf32>,
    %c142 = arith.constant 142 : index
    %c0_982 = arith.constant 0 : index
    %627 = tpu.strided_load %arg14[%c142, %c0_982] {strides = array<i32: 2, 1>} : memref<200x32xf32, #tpu.memory_space<vmem>>, vector<4x32xf32>
    %c24_983 = arith.constant 24 : index
    %c64_984 = arith.constant 64 : index
    %628 = vector.load %arg12[%c24_983, %c64_984] : memref<32x512xf32, #tpu.memory_space<vmem>>, vector<4x32xf32>
    tpu.vector_store %arg12[%c24_983, %c64_984], %627 {strides = array<i32>} : memref<32x512xf32, #tpu.memory_space<vmem>>, vector<4x32xf32>,
    %c162_985 = arith.constant 162 : index
    %c0_986 = arith.constant 0 : index
    %629 = tpu.strided_load %arg14[%c162_985, %c0_986] {strides = array<i32: 2, 1>} : memref<200x32xf32, #tpu.memory_space<vmem>>, vector<4x32xf32>
    %c28_987 = arith.constant 28 : index
    %c64_988 = arith.constant 64 : index
    %630 = vector.load %arg12[%c28_987, %c64_988] : memref<32x512xf32, #tpu.memory_space<vmem>>, vector<4x32xf32>
    tpu.vector_store %arg12[%c28_987, %c64_988], %629 {strides = array<i32>} : memref<32x512xf32, #tpu.memory_space<vmem>>, vector<4x32xf32>,
    %c3_989 = arith.constant 3 : index
    %c0_990 = arith.constant 0 : index
    %631 = tpu.strided_load %arg14[%c3_989, %c0_990] {strides = array<i32: 2, 1>} : memref<200x32xf32, #tpu.memory_space<vmem>>, vector<4x32xf32>
    %c0_991 = arith.constant 0 : index
    %c96_992 = arith.constant 96 : index
    %632 = vector.load %arg12[%c0_991, %c96_992] : memref<32x512xf32, #tpu.memory_space<vmem>>, vector<4x32xf32>
    tpu.vector_store %arg12[%c0_991, %c96_992], %631 {strides = array<i32>} : memref<32x512xf32, #tpu.memory_space<vmem>>, vector<4x32xf32>,
    %c23 = arith.constant 23 : index
    %c0_993 = arith.constant 0 : index
    %633 = tpu.strided_load %arg14[%c23, %c0_993] {strides = array<i32: 2, 1>} : memref<200x32xf32, #tpu.memory_space<vmem>>, vector<4x32xf32>
    %c4_994 = arith.constant 4 : index
    %c96_995 = arith.constant 96 : index
    %634 = vector.load %arg12[%c4_994, %c96_995] : memref<32x512xf32, #tpu.memory_space<vmem>>, vector<4x32xf32>
    tpu.vector_store %arg12[%c4_994, %c96_995], %633 {strides = array<i32>} : memref<32x512xf32, #tpu.memory_space<vmem>>, vector<4x32xf32>,
    %c43 = arith.constant 43 : index
    %c0_996 = arith.constant 0 : index
    %635 = tpu.strided_load %arg14[%c43, %c0_996] {strides = array<i32: 2, 1>} : memref<200x32xf32, #tpu.memory_space<vmem>>, vector<4x32xf32>
    %c8_997 = arith.constant 8 : index
    %c96_998 = arith.constant 96 : index
    %636 = vector.load %arg12[%c8_997, %c96_998] : memref<32x512xf32, #tpu.memory_space<vmem>>, vector<4x32xf32>
    tpu.vector_store %arg12[%c8_997, %c96_998], %635 {strides = array<i32>} : memref<32x512xf32, #tpu.memory_space<vmem>>, vector<4x32xf32>,
    %c63 = arith.constant 63 : index
    %c0_999 = arith.constant 0 : index
    %637 = tpu.strided_load %arg14[%c63, %c0_999] {strides = array<i32: 2, 1>} : memref<200x32xf32, #tpu.memory_space<vmem>>, vector<4x32xf32>
    %c12_1000 = arith.constant 12 : index
    %c96_1001 = arith.constant 96 : index
    %638 = vector.load %arg12[%c12_1000, %c96_1001] : memref<32x512xf32, #tpu.memory_space<vmem>>, vector<4x32xf32>
    tpu.vector_store %arg12[%c12_1000, %c96_1001], %637 {strides = array<i32>} : memref<32x512xf32, #tpu.memory_space<vmem>>, vector<4x32xf32>,
    %c103 = arith.constant 103 : index
    %c0_1002 = arith.constant 0 : index
    %639 = tpu.strided_load %arg14[%c103, %c0_1002] {strides = array<i32: 2, 1>} : memref<200x32xf32, #tpu.memory_space<vmem>>, vector<4x32xf32>
    %c16_1003 = arith.constant 16 : index
    %c96_1004 = arith.constant 96 : index
    %640 = vector.load %arg12[%c16_1003, %c96_1004] : memref<32x512xf32, #tpu.memory_space<vmem>>, vector<4x32xf32>
    tpu.vector_store %arg12[%c16_1003, %c96_1004], %639 {strides = array<i32>} : memref<32x512xf32, #tpu.memory_space<vmem>>, vector<4x32xf32>,
    %c123 = arith.constant 123 : index
    %c0_1005 = arith.constant 0 : index
    %641 = tpu.strided_load %arg14[%c123, %c0_1005] {strides = array<i32: 2, 1>} : memref<200x32xf32, #tpu.memory_space<vmem>>, vector<4x32xf32>
    %c20_1006 = arith.constant 20 : index
    %c96_1007 = arith.constant 96 : index
    %642 = vector.load %arg12[%c20_1006, %c96_1007] : memref<32x512xf32, #tpu.memory_space<vmem>>, vector<4x32xf32>
    tpu.vector_store %arg12[%c20_1006, %c96_1007], %641 {strides = array<i32>} : memref<32x512xf32, #tpu.memory_space<vmem>>, vector<4x32xf32>,
    %c143 = arith.constant 143 : index
    %c0_1008 = arith.constant 0 : index
    %643 = tpu.strided_load %arg14[%c143, %c0_1008] {strides = array<i32: 2, 1>} : memref<200x32xf32, #tpu.memory_space<vmem>>, vector<4x32xf32>
    %c24_1009 = arith.constant 24 : index
    %c96_1010 = arith.constant 96 : index
    %644 = vector.load %arg12[%c24_1009, %c96_1010] : memref<32x512xf32, #tpu.memory_space<vmem>>, vector<4x32xf32>
    tpu.vector_store %arg12[%c24_1009, %c96_1010], %643 {strides = array<i32>} : memref<32x512xf32, #tpu.memory_space<vmem>>, vector<4x32xf32>,
    %c163_1011 = arith.constant 163 : index
    %c0_1012 = arith.constant 0 : index
    %645 = tpu.strided_load %arg14[%c163_1011, %c0_1012] {strides = array<i32: 2, 1>} : memref<200x32xf32, #tpu.memory_space<vmem>>, vector<4x32xf32>
    %c28_1013 = arith.constant 28 : index
    %c96_1014 = arith.constant 96 : index
    %646 = vector.load %arg12[%c28_1013, %c96_1014] : memref<32x512xf32, #tpu.memory_space<vmem>>, vector<4x32xf32>
    tpu.vector_store %arg12[%c28_1013, %c96_1014], %645 {strides = array<i32>} : memref<32x512xf32, #tpu.memory_space<vmem>>, vector<4x32xf32>,
    %c10 = arith.constant 10 : index
    %c0_1015 = arith.constant 0 : index
    %647 = tpu.strided_load %arg14[%c10, %c0_1015] {strides = array<i32: 2, 1>} : memref<200x32xf32, #tpu.memory_space<vmem>>, vector<4x32xf32>
    %c0_1016 = arith.constant 0 : index
    %c128_1017 = arith.constant 128 : index
    %648 = vector.load %arg12[%c0_1016, %c128_1017] : memref<32x512xf32, #tpu.memory_space<vmem>>, vector<4x32xf32>
    tpu.vector_store %arg12[%c0_1016, %c128_1017], %647 {strides = array<i32>} : memref<32x512xf32, #tpu.memory_space<vmem>>, vector<4x32xf32>,
    %c30 = arith.constant 30 : index
    %c0_1018 = arith.constant 0 : index
    %649 = tpu.strided_load %arg14[%c30, %c0_1018] {strides = array<i32: 2, 1>} : memref<200x32xf32, #tpu.memory_space<vmem>>, vector<4x32xf32>
    %c4_1019 = arith.constant 4 : index
    %c128_1020 = arith.constant 128 : index
    %650 = vector.load %arg12[%c4_1019, %c128_1020] : memref<32x512xf32, #tpu.memory_space<vmem>>, vector<4x32xf32>
    tpu.vector_store %arg12[%c4_1019, %c128_1020], %649 {strides = array<i32>} : memref<32x512xf32, #tpu.memory_space<vmem>>, vector<4x32xf32>,
    %c50 = arith.constant 50 : index
    %c0_1021 = arith.constant 0 : index
    %651 = tpu.strided_load %arg14[%c50, %c0_1021] {strides = array<i32: 2, 1>} : memref<200x32xf32, #tpu.memory_space<vmem>>, vector<4x32xf32>
    %c8_1022 = arith.constant 8 : index
    %c128_1023 = arith.constant 128 : index
    %652 = vector.load %arg12[%c8_1022, %c128_1023] : memref<32x512xf32, #tpu.memory_space<vmem>>, vector<4x32xf32>
    tpu.vector_store %arg12[%c8_1022, %c128_1023], %651 {strides = array<i32>} : memref<32x512xf32, #tpu.memory_space<vmem>>, vector<4x32xf32>,
    %c70 = arith.constant 70 : index
    %c0_1024 = arith.constant 0 : index
    %653 = tpu.strided_load %arg14[%c70, %c0_1024] {strides = array<i32: 2, 1>} : memref<200x32xf32, #tpu.memory_space<vmem>>, vector<4x32xf32>
    %c12_1025 = arith.constant 12 : index
    %c128_1026 = arith.constant 128 : index
    %654 = vector.load %arg12[%c12_1025, %c128_1026] : memref<32x512xf32, #tpu.memory_space<vmem>>, vector<4x32xf32>
    tpu.vector_store %arg12[%c12_1025, %c128_1026], %653 {strides = array<i32>} : memref<32x512xf32, #tpu.memory_space<vmem>>, vector<4x32xf32>,
    %c110_1027 = arith.constant 110 : index
    %c0_1028 = arith.constant 0 : index
    %655 = tpu.strided_load %arg14[%c110_1027, %c0_1028] {strides = array<i32: 2, 1>} : memref<200x32xf32, #tpu.memory_space<vmem>>, vector<4x32xf32>
    %c16_1029 = arith.constant 16 : index
    %c128_1030 = arith.constant 128 : index
    %656 = vector.load %arg12[%c16_1029, %c128_1030] : memref<32x512xf32, #tpu.memory_space<vmem>>, vector<4x32xf32>
    tpu.vector_store %arg12[%c16_1029, %c128_1030], %655 {strides = array<i32>} : memref<32x512xf32, #tpu.memory_space<vmem>>, vector<4x32xf32>,
    %c130 = arith.constant 130 : index
    %c0_1031 = arith.constant 0 : index
    %657 = tpu.strided_load %arg14[%c130, %c0_1031] {strides = array<i32: 2, 1>} : memref<200x32xf32, #tpu.memory_space<vmem>>, vector<4x32xf32>
    %c20_1032 = arith.constant 20 : index
    %c128_1033 = arith.constant 128 : index
    %658 = vector.load %arg12[%c20_1032, %c128_1033] : memref<32x512xf32, #tpu.memory_space<vmem>>, vector<4x32xf32>
    tpu.vector_store %arg12[%c20_1032, %c128_1033], %657 {strides = array<i32>} : memref<32x512xf32, #tpu.memory_space<vmem>>, vector<4x32xf32>,
    %c150 = arith.constant 150 : index
    %c0_1034 = arith.constant 0 : index
    %659 = tpu.strided_load %arg14[%c150, %c0_1034] {strides = array<i32: 2, 1>} : memref<200x32xf32, #tpu.memory_space<vmem>>, vector<4x32xf32>
    %c24_1035 = arith.constant 24 : index
    %c128_1036 = arith.constant 128 : index
    %660 = vector.load %arg12[%c24_1035, %c128_1036] : memref<32x512xf32, #tpu.memory_space<vmem>>, vector<4x32xf32>
    tpu.vector_store %arg12[%c24_1035, %c128_1036], %659 {strides = array<i32>} : memref<32x512xf32, #tpu.memory_space<vmem>>, vector<4x32xf32>,
    %c170 = arith.constant 170 : index
    %c0_1037 = arith.constant 0 : index
    %661 = tpu.strided_load %arg14[%c170, %c0_1037] {strides = array<i32: 2, 1>} : memref<200x32xf32, #tpu.memory_space<vmem>>, vector<4x32xf32>
    %c28_1038 = arith.constant 28 : index
    %c128_1039 = arith.constant 128 : index
    %662 = vector.load %arg12[%c28_1038, %c128_1039] : memref<32x512xf32, #tpu.memory_space<vmem>>, vector<4x32xf32>
    tpu.vector_store %arg12[%c28_1038, %c128_1039], %661 {strides = array<i32>} : memref<32x512xf32, #tpu.memory_space<vmem>>, vector<4x32xf32>,
    %c11_1040 = arith.constant 11 : index
    %c0_1041 = arith.constant 0 : index
    %663 = tpu.strided_load %arg14[%c11_1040, %c0_1041] {strides = array<i32: 2, 1>} : memref<200x32xf32, #tpu.memory_space<vmem>>, vector<4x32xf32>
    %c0_1042 = arith.constant 0 : index
    %c160_1043 = arith.constant 160 : index
    %664 = vector.load %arg12[%c0_1042, %c160_1043] : memref<32x512xf32, #tpu.memory_space<vmem>>, vector<4x32xf32>
    tpu.vector_store %arg12[%c0_1042, %c160_1043], %663 {strides = array<i32>} : memref<32x512xf32, #tpu.memory_space<vmem>>, vector<4x32xf32>,
    %c31_1044 = arith.constant 31 : index
    %c0_1045 = arith.constant 0 : index
    %665 = tpu.strided_load %arg14[%c31_1044, %c0_1045] {strides = array<i32: 2, 1>} : memref<200x32xf32, #tpu.memory_space<vmem>>, vector<4x32xf32>
    %c4_1046 = arith.constant 4 : index
    %c160_1047 = arith.constant 160 : index
    %666 = vector.load %arg12[%c4_1046, %c160_1047] : memref<32x512xf32, #tpu.memory_space<vmem>>, vector<4x32xf32>
    tpu.vector_store %arg12[%c4_1046, %c160_1047], %665 {strides = array<i32>} : memref<32x512xf32, #tpu.memory_space<vmem>>, vector<4x32xf32>,
    %c51_1048 = arith.constant 51 : index
    %c0_1049 = arith.constant 0 : index
    %667 = tpu.strided_load %arg14[%c51_1048, %c0_1049] {strides = array<i32: 2, 1>} : memref<200x32xf32, #tpu.memory_space<vmem>>, vector<4x32xf32>
    %c8_1050 = arith.constant 8 : index
    %c160_1051 = arith.constant 160 : index
    %668 = vector.load %arg12[%c8_1050, %c160_1051] : memref<32x512xf32, #tpu.memory_space<vmem>>, vector<4x32xf32>
    tpu.vector_store %arg12[%c8_1050, %c160_1051], %667 {strides = array<i32>} : memref<32x512xf32, #tpu.memory_space<vmem>>, vector<4x32xf32>,
    %c71_1052 = arith.constant 71 : index
    %c0_1053 = arith.constant 0 : index
    %669 = tpu.strided_load %arg14[%c71_1052, %c0_1053] {strides = array<i32: 2, 1>} : memref<200x32xf32, #tpu.memory_space<vmem>>, vector<4x32xf32>
    %c12_1054 = arith.constant 12 : index
    %c160_1055 = arith.constant 160 : index
    %670 = vector.load %arg12[%c12_1054, %c160_1055] : memref<32x512xf32, #tpu.memory_space<vmem>>, vector<4x32xf32>
    tpu.vector_store %arg12[%c12_1054, %c160_1055], %669 {strides = array<i32>} : memref<32x512xf32, #tpu.memory_space<vmem>>, vector<4x32xf32>,
    %c111_1056 = arith.constant 111 : index
    %c0_1057 = arith.constant 0 : index
    %671 = tpu.strided_load %arg14[%c111_1056, %c0_1057] {strides = array<i32: 2, 1>} : memref<200x32xf32, #tpu.memory_space<vmem>>, vector<4x32xf32>
    %c16_1058 = arith.constant 16 : index
    %c160_1059 = arith.constant 160 : index
    %672 = vector.load %arg12[%c16_1058, %c160_1059] : memref<32x512xf32, #tpu.memory_space<vmem>>, vector<4x32xf32>
    tpu.vector_store %arg12[%c16_1058, %c160_1059], %671 {strides = array<i32>} : memref<32x512xf32, #tpu.memory_space<vmem>>, vector<4x32xf32>,
    %c131_1060 = arith.constant 131 : index
    %c0_1061 = arith.constant 0 : index
    %673 = tpu.strided_load %arg14[%c131_1060, %c0_1061] {strides = array<i32: 2, 1>} : memref<200x32xf32, #tpu.memory_space<vmem>>, vector<4x32xf32>
    %c20_1062 = arith.constant 20 : index
    %c160_1063 = arith.constant 160 : index
    %674 = vector.load %arg12[%c20_1062, %c160_1063] : memref<32x512xf32, #tpu.memory_space<vmem>>, vector<4x32xf32>
    tpu.vector_store %arg12[%c20_1062, %c160_1063], %673 {strides = array<i32>} : memref<32x512xf32, #tpu.memory_space<vmem>>, vector<4x32xf32>,
    %c151_1064 = arith.constant 151 : index
    %c0_1065 = arith.constant 0 : index
    %675 = tpu.strided_load %arg14[%c151_1064, %c0_1065] {strides = array<i32: 2, 1>} : memref<200x32xf32, #tpu.memory_space<vmem>>, vector<4x32xf32>
    %c24_1066 = arith.constant 24 : index
    %c160_1067 = arith.constant 160 : index
    %676 = vector.load %arg12[%c24_1066, %c160_1067] : memref<32x512xf32, #tpu.memory_space<vmem>>, vector<4x32xf32>
    tpu.vector_store %arg12[%c24_1066, %c160_1067], %675 {strides = array<i32>} : memref<32x512xf32, #tpu.memory_space<vmem>>, vector<4x32xf32>,
    %c171_1068 = arith.constant 171 : index
    %c0_1069 = arith.constant 0 : index
    %677 = tpu.strided_load %arg14[%c171_1068, %c0_1069] {strides = array<i32: 2, 1>} : memref<200x32xf32, #tpu.memory_space<vmem>>, vector<4x32xf32>
    %c28_1070 = arith.constant 28 : index
    %c160_1071 = arith.constant 160 : index
    %678 = vector.load %arg12[%c28_1070, %c160_1071] : memref<32x512xf32, #tpu.memory_space<vmem>>, vector<4x32xf32>
    tpu.vector_store %arg12[%c28_1070, %c160_1071], %677 {strides = array<i32>} : memref<32x512xf32, #tpu.memory_space<vmem>>, vector<4x32xf32>,
    %c12_1072 = arith.constant 12 : index
    %c0_1073 = arith.constant 0 : index
    %679 = tpu.strided_load %arg14[%c12_1072, %c0_1073] {strides = array<i32: 2, 1>} : memref<200x32xf32, #tpu.memory_space<vmem>>, vector<4x32xf32>
    %c0_1074 = arith.constant 0 : index
    %c192 = arith.constant 192 : index
    %680 = vector.load %arg12[%c0_1074, %c192] : memref<32x512xf32, #tpu.memory_space<vmem>>, vector<4x32xf32>
    tpu.vector_store %arg12[%c0_1074, %c192], %679 {strides = array<i32>} : memref<32x512xf32, #tpu.memory_space<vmem>>, vector<4x32xf32>,
    %c32_1075 = arith.constant 32 : index
    %c0_1076 = arith.constant 0 : index
    %681 = tpu.strided_load %arg14[%c32_1075, %c0_1076] {strides = array<i32: 2, 1>} : memref<200x32xf32, #tpu.memory_space<vmem>>, vector<4x32xf32>
    %c4_1077 = arith.constant 4 : index
    %c192_1078 = arith.constant 192 : index
    %682 = vector.load %arg12[%c4_1077, %c192_1078] : memref<32x512xf32, #tpu.memory_space<vmem>>, vector<4x32xf32>
    tpu.vector_store %arg12[%c4_1077, %c192_1078], %681 {strides = array<i32>} : memref<32x512xf32, #tpu.memory_space<vmem>>, vector<4x32xf32>,
    %c52_1079 = arith.constant 52 : index
    %c0_1080 = arith.constant 0 : index
    %683 = tpu.strided_load %arg14[%c52_1079, %c0_1080] {strides = array<i32: 2, 1>} : memref<200x32xf32, #tpu.memory_space<vmem>>, vector<4x32xf32>
    %c8_1081 = arith.constant 8 : index
    %c192_1082 = arith.constant 192 : index
    %684 = vector.load %arg12[%c8_1081, %c192_1082] : memref<32x512xf32, #tpu.memory_space<vmem>>, vector<4x32xf32>
    tpu.vector_store %arg12[%c8_1081, %c192_1082], %683 {strides = array<i32>} : memref<32x512xf32, #tpu.memory_space<vmem>>, vector<4x32xf32>,
    %c72_1083 = arith.constant 72 : index
    %c0_1084 = arith.constant 0 : index
    %685 = tpu.strided_load %arg14[%c72_1083, %c0_1084] {strides = array<i32: 2, 1>} : memref<200x32xf32, #tpu.memory_space<vmem>>, vector<4x32xf32>
    %c12_1085 = arith.constant 12 : index
    %c192_1086 = arith.constant 192 : index
    %686 = vector.load %arg12[%c12_1085, %c192_1086] : memref<32x512xf32, #tpu.memory_space<vmem>>, vector<4x32xf32>
    tpu.vector_store %arg12[%c12_1085, %c192_1086], %685 {strides = array<i32>} : memref<32x512xf32, #tpu.memory_space<vmem>>, vector<4x32xf32>,
    %c112_1087 = arith.constant 112 : index
    %c0_1088 = arith.constant 0 : index
    %687 = tpu.strided_load %arg14[%c112_1087, %c0_1088] {strides = array<i32: 2, 1>} : memref<200x32xf32, #tpu.memory_space<vmem>>, vector<4x32xf32>
    %c16_1089 = arith.constant 16 : index
    %c192_1090 = arith.constant 192 : index
    %688 = vector.load %arg12[%c16_1089, %c192_1090] : memref<32x512xf32, #tpu.memory_space<vmem>>, vector<4x32xf32>
    tpu.vector_store %arg12[%c16_1089, %c192_1090], %687 {strides = array<i32>} : memref<32x512xf32, #tpu.memory_space<vmem>>, vector<4x32xf32>,
    %c132 = arith.constant 132 : index
    %c0_1091 = arith.constant 0 : index
    %689 = tpu.strided_load %arg14[%c132, %c0_1091] {strides = array<i32: 2, 1>} : memref<200x32xf32, #tpu.memory_space<vmem>>, vector<4x32xf32>
    %c20_1092 = arith.constant 20 : index
    %c192_1093 = arith.constant 192 : index
    %690 = vector.load %arg12[%c20_1092, %c192_1093] : memref<32x512xf32, #tpu.memory_space<vmem>>, vector<4x32xf32>
    tpu.vector_store %arg12[%c20_1092, %c192_1093], %689 {strides = array<i32>} : memref<32x512xf32, #tpu.memory_space<vmem>>, vector<4x32xf32>,
    %c152 = arith.constant 152 : index
    %c0_1094 = arith.constant 0 : index
    %691 = tpu.strided_load %arg14[%c152, %c0_1094] {strides = array<i32: 2, 1>} : memref<200x32xf32, #tpu.memory_space<vmem>>, vector<4x32xf32>
    %c24_1095 = arith.constant 24 : index
    %c192_1096 = arith.constant 192 : index
    %692 = vector.load %arg12[%c24_1095, %c192_1096] : memref<32x512xf32, #tpu.memory_space<vmem>>, vector<4x32xf32>
    tpu.vector_store %arg12[%c24_1095, %c192_1096], %691 {strides = array<i32>} : memref<32x512xf32, #tpu.memory_space<vmem>>, vector<4x32xf32>,
    %c172 = arith.constant 172 : index
    %c0_1097 = arith.constant 0 : index
    %693 = tpu.strided_load %arg14[%c172, %c0_1097] {strides = array<i32: 2, 1>} : memref<200x32xf32, #tpu.memory_space<vmem>>, vector<4x32xf32>
    %c28_1098 = arith.constant 28 : index
    %c192_1099 = arith.constant 192 : index
    %694 = vector.load %arg12[%c28_1098, %c192_1099] : memref<32x512xf32, #tpu.memory_space<vmem>>, vector<4x32xf32>
    tpu.vector_store %arg12[%c28_1098, %c192_1099], %693 {strides = array<i32>} : memref<32x512xf32, #tpu.memory_space<vmem>>, vector<4x32xf32>,
    %c13 = arith.constant 13 : index
    %c0_1100 = arith.constant 0 : index
    %695 = tpu.strided_load %arg14[%c13, %c0_1100] {strides = array<i32: 2, 1>} : memref<200x32xf32, #tpu.memory_space<vmem>>, vector<4x32xf32>
    %c0_1101 = arith.constant 0 : index
    %c224 = arith.constant 224 : index
    %696 = vector.load %arg12[%c0_1101, %c224] : memref<32x512xf32, #tpu.memory_space<vmem>>, vector<4x32xf32>
    tpu.vector_store %arg12[%c0_1101, %c224], %695 {strides = array<i32>} : memref<32x512xf32, #tpu.memory_space<vmem>>, vector<4x32xf32>,
    %c33 = arith.constant 33 : index
    %c0_1102 = arith.constant 0 : index
    %697 = tpu.strided_load %arg14[%c33, %c0_1102] {strides = array<i32: 2, 1>} : memref<200x32xf32, #tpu.memory_space<vmem>>, vector<4x32xf32>
    %c4_1103 = arith.constant 4 : index
    %c224_1104 = arith.constant 224 : index
    %698 = vector.load %arg12[%c4_1103, %c224_1104] : memref<32x512xf32, #tpu.memory_space<vmem>>, vector<4x32xf32>
    tpu.vector_store %arg12[%c4_1103, %c224_1104], %697 {strides = array<i32>} : memref<32x512xf32, #tpu.memory_space<vmem>>, vector<4x32xf32>,
    %c53 = arith.constant 53 : index
    %c0_1105 = arith.constant 0 : index
    %699 = tpu.strided_load %arg14[%c53, %c0_1105] {strides = array<i32: 2, 1>} : memref<200x32xf32, #tpu.memory_space<vmem>>, vector<4x32xf32>
    %c8_1106 = arith.constant 8 : index
    %c224_1107 = arith.constant 224 : index
    %700 = vector.load %arg12[%c8_1106, %c224_1107] : memref<32x512xf32, #tpu.memory_space<vmem>>, vector<4x32xf32>
    tpu.vector_store %arg12[%c8_1106, %c224_1107], %699 {strides = array<i32>} : memref<32x512xf32, #tpu.memory_space<vmem>>, vector<4x32xf32>,
    %c73_1108 = arith.constant 73 : index
    %c0_1109 = arith.constant 0 : index
    %701 = tpu.strided_load %arg14[%c73_1108, %c0_1109] {strides = array<i32: 2, 1>} : memref<200x32xf32, #tpu.memory_space<vmem>>, vector<4x32xf32>
    %c12_1110 = arith.constant 12 : index
    %c224_1111 = arith.constant 224 : index
    %702 = vector.load %arg12[%c12_1110, %c224_1111] : memref<32x512xf32, #tpu.memory_space<vmem>>, vector<4x32xf32>
    tpu.vector_store %arg12[%c12_1110, %c224_1111], %701 {strides = array<i32>} : memref<32x512xf32, #tpu.memory_space<vmem>>, vector<4x32xf32>,
    %c113 = arith.constant 113 : index
    %c0_1112 = arith.constant 0 : index
    %703 = tpu.strided_load %arg14[%c113, %c0_1112] {strides = array<i32: 2, 1>} : memref<200x32xf32, #tpu.memory_space<vmem>>, vector<4x32xf32>
    %c16_1113 = arith.constant 16 : index
    %c224_1114 = arith.constant 224 : index
    %704 = vector.load %arg12[%c16_1113, %c224_1114] : memref<32x512xf32, #tpu.memory_space<vmem>>, vector<4x32xf32>
    tpu.vector_store %arg12[%c16_1113, %c224_1114], %703 {strides = array<i32>} : memref<32x512xf32, #tpu.memory_space<vmem>>, vector<4x32xf32>,
    %c133 = arith.constant 133 : index
    %c0_1115 = arith.constant 0 : index
    %705 = tpu.strided_load %arg14[%c133, %c0_1115] {strides = array<i32: 2, 1>} : memref<200x32xf32, #tpu.memory_space<vmem>>, vector<4x32xf32>
    %c20_1116 = arith.constant 20 : index
    %c224_1117 = arith.constant 224 : index
    %706 = vector.load %arg12[%c20_1116, %c224_1117] : memref<32x512xf32, #tpu.memory_space<vmem>>, vector<4x32xf32>
    tpu.vector_store %arg12[%c20_1116, %c224_1117], %705 {strides = array<i32>} : memref<32x512xf32, #tpu.memory_space<vmem>>, vector<4x32xf32>,
    %c153 = arith.constant 153 : index
    %c0_1118 = arith.constant 0 : index
    %707 = tpu.strided_load %arg14[%c153, %c0_1118] {strides = array<i32: 2, 1>} : memref<200x32xf32, #tpu.memory_space<vmem>>, vector<4x32xf32>
    %c24_1119 = arith.constant 24 : index
    %c224_1120 = arith.constant 224 : index
    %708 = vector.load %arg12[%c24_1119, %c224_1120] : memref<32x512xf32, #tpu.memory_space<vmem>>, vector<4x32xf32>
    tpu.vector_store %arg12[%c24_1119, %c224_1120], %707 {strides = array<i32>} : memref<32x512xf32, #tpu.memory_space<vmem>>, vector<4x32xf32>,
    %c173 = arith.constant 173 : index
    %c0_1121 = arith.constant 0 : index
    %709 = tpu.strided_load %arg14[%c173, %c0_1121] {strides = array<i32: 2, 1>} : memref<200x32xf32, #tpu.memory_space<vmem>>, vector<4x32xf32>
    %c28_1122 = arith.constant 28 : index
    %c224_1123 = arith.constant 224 : index
    %710 = vector.load %arg12[%c28_1122, %c224_1123] : memref<32x512xf32, #tpu.memory_space<vmem>>, vector<4x32xf32>
    tpu.vector_store %arg12[%c28_1122, %c224_1123], %709 {strides = array<i32>} : memref<32x512xf32, #tpu.memory_space<vmem>>, vector<4x32xf32>,
    %c20_1124 = arith.constant 20 : index
    %c0_1125 = arith.constant 0 : index
    %711 = tpu.strided_load %arg14[%c20_1124, %c0_1125] {strides = array<i32: 2, 1>} : memref<200x32xf32, #tpu.memory_space<vmem>>, vector<4x32xf32>
    %c0_1126 = arith.constant 0 : index
    %c256 = arith.constant 256 : index
    %712 = vector.load %arg12[%c0_1126, %c256] : memref<32x512xf32, #tpu.memory_space<vmem>>, vector<4x32xf32>
    tpu.vector_store %arg12[%c0_1126, %c256], %711 {strides = array<i32>} : memref<32x512xf32, #tpu.memory_space<vmem>>, vector<4x32xf32>,
    %c40_1127 = arith.constant 40 : index
    %c0_1128 = arith.constant 0 : index
    %713 = tpu.strided_load %arg14[%c40_1127, %c0_1128] {strides = array<i32: 2, 1>} : memref<200x32xf32, #tpu.memory_space<vmem>>, vector<4x32xf32>
    %c4_1129 = arith.constant 4 : index
    %c256_1130 = arith.constant 256 : index
    %714 = vector.load %arg12[%c4_1129, %c256_1130] : memref<32x512xf32, #tpu.memory_space<vmem>>, vector<4x32xf32>
    tpu.vector_store %arg12[%c4_1129, %c256_1130], %713 {strides = array<i32>} : memref<32x512xf32, #tpu.memory_space<vmem>>, vector<4x32xf32>,
    %c60_1131 = arith.constant 60 : index
    %c0_1132 = arith.constant 0 : index
    %715 = tpu.strided_load %arg14[%c60_1131, %c0_1132] {strides = array<i32: 2, 1>} : memref<200x32xf32, #tpu.memory_space<vmem>>, vector<4x32xf32>
    %c8_1133 = arith.constant 8 : index
    %c256_1134 = arith.constant 256 : index
    %716 = vector.load %arg12[%c8_1133, %c256_1134] : memref<32x512xf32, #tpu.memory_space<vmem>>, vector<4x32xf32>
    tpu.vector_store %arg12[%c8_1133, %c256_1134], %715 {strides = array<i32>} : memref<32x512xf32, #tpu.memory_space<vmem>>, vector<4x32xf32>,
    %c80_1135 = arith.constant 80 : index
    %c0_1136 = arith.constant 0 : index
    %717 = tpu.strided_load %arg14[%c80_1135, %c0_1136] {strides = array<i32: 2, 1>} : memref<200x32xf32, #tpu.memory_space<vmem>>, vector<4x32xf32>
    %c12_1137 = arith.constant 12 : index
    %c256_1138 = arith.constant 256 : index
    %718 = vector.load %arg12[%c12_1137, %c256_1138] : memref<32x512xf32, #tpu.memory_space<vmem>>, vector<4x32xf32>
    tpu.vector_store %arg12[%c12_1137, %c256_1138], %717 {strides = array<i32>} : memref<32x512xf32, #tpu.memory_space<vmem>>, vector<4x32xf32>,
    %c120_1139 = arith.constant 120 : index
    %c0_1140 = arith.constant 0 : index
    %719 = tpu.strided_load %arg14[%c120_1139, %c0_1140] {strides = array<i32: 2, 1>} : memref<200x32xf32, #tpu.memory_space<vmem>>, vector<4x32xf32>
    %c16_1141 = arith.constant 16 : index
    %c256_1142 = arith.constant 256 : index
    %720 = vector.load %arg12[%c16_1141, %c256_1142] : memref<32x512xf32, #tpu.memory_space<vmem>>, vector<4x32xf32>
    tpu.vector_store %arg12[%c16_1141, %c256_1142], %719 {strides = array<i32>} : memref<32x512xf32, #tpu.memory_space<vmem>>, vector<4x32xf32>,
    %c140_1143 = arith.constant 140 : index
    %c0_1144 = arith.constant 0 : index
    %721 = tpu.strided_load %arg14[%c140_1143, %c0_1144] {strides = array<i32: 2, 1>} : memref<200x32xf32, #tpu.memory_space<vmem>>, vector<4x32xf32>
    %c20_1145 = arith.constant 20 : index
    %c256_1146 = arith.constant 256 : index
    %722 = vector.load %arg12[%c20_1145, %c256_1146] : memref<32x512xf32, #tpu.memory_space<vmem>>, vector<4x32xf32>
    tpu.vector_store %arg12[%c20_1145, %c256_1146], %721 {strides = array<i32>} : memref<32x512xf32, #tpu.memory_space<vmem>>, vector<4x32xf32>,
    %c160_1147 = arith.constant 160 : index
    %c0_1148 = arith.constant 0 : index
    %723 = tpu.strided_load %arg14[%c160_1147, %c0_1148] {strides = array<i32: 2, 1>} : memref<200x32xf32, #tpu.memory_space<vmem>>, vector<4x32xf32>
    %c24_1149 = arith.constant 24 : index
    %c256_1150 = arith.constant 256 : index
    %724 = vector.load %arg12[%c24_1149, %c256_1150] : memref<32x512xf32, #tpu.memory_space<vmem>>, vector<4x32xf32>
    tpu.vector_store %arg12[%c24_1149, %c256_1150], %723 {strides = array<i32>} : memref<32x512xf32, #tpu.memory_space<vmem>>, vector<4x32xf32>,
    %c180_1151 = arith.constant 180 : index
    %c0_1152 = arith.constant 0 : index
    %725 = tpu.strided_load %arg14[%c180_1151, %c0_1152] {strides = array<i32: 2, 1>} : memref<200x32xf32, #tpu.memory_space<vmem>>, vector<4x32xf32>
    %c28_1153 = arith.constant 28 : index
    %c256_1154 = arith.constant 256 : index
    %726 = vector.load %arg12[%c28_1153, %c256_1154] : memref<32x512xf32, #tpu.memory_space<vmem>>, vector<4x32xf32>
    tpu.vector_store %arg12[%c28_1153, %c256_1154], %725 {strides = array<i32>} : memref<32x512xf32, #tpu.memory_space<vmem>>, vector<4x32xf32>,
    %c21_1155 = arith.constant 21 : index
    %c0_1156 = arith.constant 0 : index
    %727 = tpu.strided_load %arg14[%c21_1155, %c0_1156] {strides = array<i32: 2, 1>} : memref<200x32xf32, #tpu.memory_space<vmem>>, vector<4x32xf32>
    %c0_1157 = arith.constant 0 : index
    %c288_1158 = arith.constant 288 : index
    %728 = vector.load %arg12[%c0_1157, %c288_1158] : memref<32x512xf32, #tpu.memory_space<vmem>>, vector<4x32xf32>
    tpu.vector_store %arg12[%c0_1157, %c288_1158], %727 {strides = array<i32>} : memref<32x512xf32, #tpu.memory_space<vmem>>, vector<4x32xf32>,
    %c41_1159 = arith.constant 41 : index
    %c0_1160 = arith.constant 0 : index
    %729 = tpu.strided_load %arg14[%c41_1159, %c0_1160] {strides = array<i32: 2, 1>} : memref<200x32xf32, #tpu.memory_space<vmem>>, vector<4x32xf32>
    %c4_1161 = arith.constant 4 : index
    %c288_1162 = arith.constant 288 : index
    %730 = vector.load %arg12[%c4_1161, %c288_1162] : memref<32x512xf32, #tpu.memory_space<vmem>>, vector<4x32xf32>
    tpu.vector_store %arg12[%c4_1161, %c288_1162], %729 {strides = array<i32>} : memref<32x512xf32, #tpu.memory_space<vmem>>, vector<4x32xf32>,
    %c61_1163 = arith.constant 61 : index
    %c0_1164 = arith.constant 0 : index
    %731 = tpu.strided_load %arg14[%c61_1163, %c0_1164] {strides = array<i32: 2, 1>} : memref<200x32xf32, #tpu.memory_space<vmem>>, vector<4x32xf32>
    %c8_1165 = arith.constant 8 : index
    %c288_1166 = arith.constant 288 : index
    %732 = vector.load %arg12[%c8_1165, %c288_1166] : memref<32x512xf32, #tpu.memory_space<vmem>>, vector<4x32xf32>
    tpu.vector_store %arg12[%c8_1165, %c288_1166], %731 {strides = array<i32>} : memref<32x512xf32, #tpu.memory_space<vmem>>, vector<4x32xf32>,
    %c81_1167 = arith.constant 81 : index
    %c0_1168 = arith.constant 0 : index
    %733 = tpu.strided_load %arg14[%c81_1167, %c0_1168] {strides = array<i32: 2, 1>} : memref<200x32xf32, #tpu.memory_space<vmem>>, vector<4x32xf32>
    %c12_1169 = arith.constant 12 : index
    %c288_1170 = arith.constant 288 : index
    %734 = vector.load %arg12[%c12_1169, %c288_1170] : memref<32x512xf32, #tpu.memory_space<vmem>>, vector<4x32xf32>
    tpu.vector_store %arg12[%c12_1169, %c288_1170], %733 {strides = array<i32>} : memref<32x512xf32, #tpu.memory_space<vmem>>, vector<4x32xf32>,
    %c121_1171 = arith.constant 121 : index
    %c0_1172 = arith.constant 0 : index
    %735 = tpu.strided_load %arg14[%c121_1171, %c0_1172] {strides = array<i32: 2, 1>} : memref<200x32xf32, #tpu.memory_space<vmem>>, vector<4x32xf32>
    %c16_1173 = arith.constant 16 : index
    %c288_1174 = arith.constant 288 : index
    %736 = vector.load %arg12[%c16_1173, %c288_1174] : memref<32x512xf32, #tpu.memory_space<vmem>>, vector<4x32xf32>
    tpu.vector_store %arg12[%c16_1173, %c288_1174], %735 {strides = array<i32>} : memref<32x512xf32, #tpu.memory_space<vmem>>, vector<4x32xf32>,
    %c141_1175 = arith.constant 141 : index
    %c0_1176 = arith.constant 0 : index
    %737 = tpu.strided_load %arg14[%c141_1175, %c0_1176] {strides = array<i32: 2, 1>} : memref<200x32xf32, #tpu.memory_space<vmem>>, vector<4x32xf32>
    %c20_1177 = arith.constant 20 : index
    %c288_1178 = arith.constant 288 : index
    %738 = vector.load %arg12[%c20_1177, %c288_1178] : memref<32x512xf32, #tpu.memory_space<vmem>>, vector<4x32xf32>
    tpu.vector_store %arg12[%c20_1177, %c288_1178], %737 {strides = array<i32>} : memref<32x512xf32, #tpu.memory_space<vmem>>, vector<4x32xf32>,
    %c161_1179 = arith.constant 161 : index
    %c0_1180 = arith.constant 0 : index
    %739 = tpu.strided_load %arg14[%c161_1179, %c0_1180] {strides = array<i32: 2, 1>} : memref<200x32xf32, #tpu.memory_space<vmem>>, vector<4x32xf32>
    %c24_1181 = arith.constant 24 : index
    %c288_1182 = arith.constant 288 : index
    %740 = vector.load %arg12[%c24_1181, %c288_1182] : memref<32x512xf32, #tpu.memory_space<vmem>>, vector<4x32xf32>
    tpu.vector_store %arg12[%c24_1181, %c288_1182], %739 {strides = array<i32>} : memref<32x512xf32, #tpu.memory_space<vmem>>, vector<4x32xf32>,
    %c181_1183 = arith.constant 181 : index
    %c0_1184 = arith.constant 0 : index
    %741 = tpu.strided_load %arg14[%c181_1183, %c0_1184] {strides = array<i32: 2, 1>} : memref<200x32xf32, #tpu.memory_space<vmem>>, vector<4x32xf32>
    %c28_1185 = arith.constant 28 : index
    %c288_1186 = arith.constant 288 : index
    %742 = vector.load %arg12[%c28_1185, %c288_1186] : memref<32x512xf32, #tpu.memory_space<vmem>>, vector<4x32xf32>
    tpu.vector_store %arg12[%c28_1185, %c288_1186], %741 {strides = array<i32>} : memref<32x512xf32, #tpu.memory_space<vmem>>, vector<4x32xf32>,
    %c22_1187 = arith.constant 22 : index
    %c0_1188 = arith.constant 0 : index
    %743 = tpu.strided_load %arg14[%c22_1187, %c0_1188] {strides = array<i32: 2, 1>} : memref<200x32xf32, #tpu.memory_space<vmem>>, vector<4x32xf32>
    %c0_1189 = arith.constant 0 : index
    %c320 = arith.constant 320 : index
    %744 = vector.load %arg12[%c0_1189, %c320] : memref<32x512xf32, #tpu.memory_space<vmem>>, vector<4x32xf32>
    tpu.vector_store %arg12[%c0_1189, %c320], %743 {strides = array<i32>} : memref<32x512xf32, #tpu.memory_space<vmem>>, vector<4x32xf32>,
    %c42_1190 = arith.constant 42 : index
    %c0_1191 = arith.constant 0 : index
    %745 = tpu.strided_load %arg14[%c42_1190, %c0_1191] {strides = array<i32: 2, 1>} : memref<200x32xf32, #tpu.memory_space<vmem>>, vector<4x32xf32>
    %c4_1192 = arith.constant 4 : index
    %c320_1193 = arith.constant 320 : index
    %746 = vector.load %arg12[%c4_1192, %c320_1193] : memref<32x512xf32, #tpu.memory_space<vmem>>, vector<4x32xf32>
    tpu.vector_store %arg12[%c4_1192, %c320_1193], %745 {strides = array<i32>} : memref<32x512xf32, #tpu.memory_space<vmem>>, vector<4x32xf32>,
    %c62_1194 = arith.constant 62 : index
    %c0_1195 = arith.constant 0 : index
    %747 = tpu.strided_load %arg14[%c62_1194, %c0_1195] {strides = array<i32: 2, 1>} : memref<200x32xf32, #tpu.memory_space<vmem>>, vector<4x32xf32>
    %c8_1196 = arith.constant 8 : index
    %c320_1197 = arith.constant 320 : index
    %748 = vector.load %arg12[%c8_1196, %c320_1197] : memref<32x512xf32, #tpu.memory_space<vmem>>, vector<4x32xf32>
    tpu.vector_store %arg12[%c8_1196, %c320_1197], %747 {strides = array<i32>} : memref<32x512xf32, #tpu.memory_space<vmem>>, vector<4x32xf32>,
    %c82 = arith.constant 82 : index
    %c0_1198 = arith.constant 0 : index
    %749 = tpu.strided_load %arg14[%c82, %c0_1198] {strides = array<i32: 2, 1>} : memref<200x32xf32, #tpu.memory_space<vmem>>, vector<4x32xf32>
    %c12_1199 = arith.constant 12 : index
    %c320_1200 = arith.constant 320 : index
    %750 = vector.load %arg12[%c12_1199, %c320_1200] : memref<32x512xf32, #tpu.memory_space<vmem>>, vector<4x32xf32>
    tpu.vector_store %arg12[%c12_1199, %c320_1200], %749 {strides = array<i32>} : memref<32x512xf32, #tpu.memory_space<vmem>>, vector<4x32xf32>,
    %c122_1201 = arith.constant 122 : index
    %c0_1202 = arith.constant 0 : index
    %751 = tpu.strided_load %arg14[%c122_1201, %c0_1202] {strides = array<i32: 2, 1>} : memref<200x32xf32, #tpu.memory_space<vmem>>, vector<4x32xf32>
    %c16_1203 = arith.constant 16 : index
    %c320_1204 = arith.constant 320 : index
    %752 = vector.load %arg12[%c16_1203, %c320_1204] : memref<32x512xf32, #tpu.memory_space<vmem>>, vector<4x32xf32>
    tpu.vector_store %arg12[%c16_1203, %c320_1204], %751 {strides = array<i32>} : memref<32x512xf32, #tpu.memory_space<vmem>>, vector<4x32xf32>,
    %c142_1205 = arith.constant 142 : index
    %c0_1206 = arith.constant 0 : index
    %753 = tpu.strided_load %arg14[%c142_1205, %c0_1206] {strides = array<i32: 2, 1>} : memref<200x32xf32, #tpu.memory_space<vmem>>, vector<4x32xf32>
    %c20_1207 = arith.constant 20 : index
    %c320_1208 = arith.constant 320 : index
    %754 = vector.load %arg12[%c20_1207, %c320_1208] : memref<32x512xf32, #tpu.memory_space<vmem>>, vector<4x32xf32>
    tpu.vector_store %arg12[%c20_1207, %c320_1208], %753 {strides = array<i32>} : memref<32x512xf32, #tpu.memory_space<vmem>>, vector<4x32xf32>,
    %c162_1209 = arith.constant 162 : index
    %c0_1210 = arith.constant 0 : index
    %755 = tpu.strided_load %arg14[%c162_1209, %c0_1210] {strides = array<i32: 2, 1>} : memref<200x32xf32, #tpu.memory_space<vmem>>, vector<4x32xf32>
    %c24_1211 = arith.constant 24 : index
    %c320_1212 = arith.constant 320 : index
    %756 = vector.load %arg12[%c24_1211, %c320_1212] : memref<32x512xf32, #tpu.memory_space<vmem>>, vector<4x32xf32>
    tpu.vector_store %arg12[%c24_1211, %c320_1212], %755 {strides = array<i32>} : memref<32x512xf32, #tpu.memory_space<vmem>>, vector<4x32xf32>,
    %c182_1213 = arith.constant 182 : index
    %c0_1214 = arith.constant 0 : index
    %757 = tpu.strided_load %arg14[%c182_1213, %c0_1214] {strides = array<i32: 2, 1>} : memref<200x32xf32, #tpu.memory_space<vmem>>, vector<4x32xf32>
    %c28_1215 = arith.constant 28 : index
    %c320_1216 = arith.constant 320 : index
    %758 = vector.load %arg12[%c28_1215, %c320_1216] : memref<32x512xf32, #tpu.memory_space<vmem>>, vector<4x32xf32>
    tpu.vector_store %arg12[%c28_1215, %c320_1216], %757 {strides = array<i32>} : memref<32x512xf32, #tpu.memory_space<vmem>>, vector<4x32xf32>,
    %c23_1217 = arith.constant 23 : index
    %c0_1218 = arith.constant 0 : index
    %759 = tpu.strided_load %arg14[%c23_1217, %c0_1218] {strides = array<i32: 2, 1>} : memref<200x32xf32, #tpu.memory_space<vmem>>, vector<4x32xf32>
    %c0_1219 = arith.constant 0 : index
    %c352 = arith.constant 352 : index
    %760 = vector.load %arg12[%c0_1219, %c352] : memref<32x512xf32, #tpu.memory_space<vmem>>, vector<4x32xf32>
    tpu.vector_store %arg12[%c0_1219, %c352], %759 {strides = array<i32>} : memref<32x512xf32, #tpu.memory_space<vmem>>, vector<4x32xf32>,
    %c43_1220 = arith.constant 43 : index
    %c0_1221 = arith.constant 0 : index
    %761 = tpu.strided_load %arg14[%c43_1220, %c0_1221] {strides = array<i32: 2, 1>} : memref<200x32xf32, #tpu.memory_space<vmem>>, vector<4x32xf32>
    %c4_1222 = arith.constant 4 : index
    %c352_1223 = arith.constant 352 : index
    %762 = vector.load %arg12[%c4_1222, %c352_1223] : memref<32x512xf32, #tpu.memory_space<vmem>>, vector<4x32xf32>
    tpu.vector_store %arg12[%c4_1222, %c352_1223], %761 {strides = array<i32>} : memref<32x512xf32, #tpu.memory_space<vmem>>, vector<4x32xf32>,
    %c63_1224 = arith.constant 63 : index
    %c0_1225 = arith.constant 0 : index
    %763 = tpu.strided_load %arg14[%c63_1224, %c0_1225] {strides = array<i32: 2, 1>} : memref<200x32xf32, #tpu.memory_space<vmem>>, vector<4x32xf32>
    %c8_1226 = arith.constant 8 : index
    %c352_1227 = arith.constant 352 : index
    %764 = vector.load %arg12[%c8_1226, %c352_1227] : memref<32x512xf32, #tpu.memory_space<vmem>>, vector<4x32xf32>
    tpu.vector_store %arg12[%c8_1226, %c352_1227], %763 {strides = array<i32>} : memref<32x512xf32, #tpu.memory_space<vmem>>, vector<4x32xf32>,
    %c83 = arith.constant 83 : index
    %c0_1228 = arith.constant 0 : index
    %765 = tpu.strided_load %arg14[%c83, %c0_1228] {strides = array<i32: 2, 1>} : memref<200x32xf32, #tpu.memory_space<vmem>>, vector<4x32xf32>
    %c12_1229 = arith.constant 12 : index
    %c352_1230 = arith.constant 352 : index
    %766 = vector.load %arg12[%c12_1229, %c352_1230] : memref<32x512xf32, #tpu.memory_space<vmem>>, vector<4x32xf32>
    tpu.vector_store %arg12[%c12_1229, %c352_1230], %765 {strides = array<i32>} : memref<32x512xf32, #tpu.memory_space<vmem>>, vector<4x32xf32>,
    %c123_1231 = arith.constant 123 : index
    %c0_1232 = arith.constant 0 : index
    %767 = tpu.strided_load %arg14[%c123_1231, %c0_1232] {strides = array<i32: 2, 1>} : memref<200x32xf32, #tpu.memory_space<vmem>>, vector<4x32xf32>
    %c16_1233 = arith.constant 16 : index
    %c352_1234 = arith.constant 352 : index
    %768 = vector.load %arg12[%c16_1233, %c352_1234] : memref<32x512xf32, #tpu.memory_space<vmem>>, vector<4x32xf32>
    tpu.vector_store %arg12[%c16_1233, %c352_1234], %767 {strides = array<i32>} : memref<32x512xf32, #tpu.memory_space<vmem>>, vector<4x32xf32>,
    %c143_1235 = arith.constant 143 : index
    %c0_1236 = arith.constant 0 : index
    %769 = tpu.strided_load %arg14[%c143_1235, %c0_1236] {strides = array<i32: 2, 1>} : memref<200x32xf32, #tpu.memory_space<vmem>>, vector<4x32xf32>
    %c20_1237 = arith.constant 20 : index
    %c352_1238 = arith.constant 352 : index
    %770 = vector.load %arg12[%c20_1237, %c352_1238] : memref<32x512xf32, #tpu.memory_space<vmem>>, vector<4x32xf32>
    tpu.vector_store %arg12[%c20_1237, %c352_1238], %769 {strides = array<i32>} : memref<32x512xf32, #tpu.memory_space<vmem>>, vector<4x32xf32>,
    %c163_1239 = arith.constant 163 : index
    %c0_1240 = arith.constant 0 : index
    %771 = tpu.strided_load %arg14[%c163_1239, %c0_1240] {strides = array<i32: 2, 1>} : memref<200x32xf32, #tpu.memory_space<vmem>>, vector<4x32xf32>
    %c24_1241 = arith.constant 24 : index
    %c352_1242 = arith.constant 352 : index
    %772 = vector.load %arg12[%c24_1241, %c352_1242] : memref<32x512xf32, #tpu.memory_space<vmem>>, vector<4x32xf32>
    tpu.vector_store %arg12[%c24_1241, %c352_1242], %771 {strides = array<i32>} : memref<32x512xf32, #tpu.memory_space<vmem>>, vector<4x32xf32>,
    %c183_1243 = arith.constant 183 : index
    %c0_1244 = arith.constant 0 : index
    %773 = tpu.strided_load %arg14[%c183_1243, %c0_1244] {strides = array<i32: 2, 1>} : memref<200x32xf32, #tpu.memory_space<vmem>>, vector<4x32xf32>
    %c28_1245 = arith.constant 28 : index
    %c352_1246 = arith.constant 352 : index
    %774 = vector.load %arg12[%c28_1245, %c352_1246] : memref<32x512xf32, #tpu.memory_space<vmem>>, vector<4x32xf32>
    tpu.vector_store %arg12[%c28_1245, %c352_1246], %773 {strides = array<i32>} : memref<32x512xf32, #tpu.memory_space<vmem>>, vector<4x32xf32>,
    %c30_1247 = arith.constant 30 : index
    %c0_1248 = arith.constant 0 : index
    %775 = tpu.strided_load %arg14[%c30_1247, %c0_1248] {strides = array<i32: 2, 1>} : memref<200x32xf32, #tpu.memory_space<vmem>>, vector<4x32xf32>
    %c0_1249 = arith.constant 0 : index
    %c384 = arith.constant 384 : index
    %776 = vector.load %arg12[%c0_1249, %c384] : memref<32x512xf32, #tpu.memory_space<vmem>>, vector<4x32xf32>
    tpu.vector_store %arg12[%c0_1249, %c384], %775 {strides = array<i32>} : memref<32x512xf32, #tpu.memory_space<vmem>>, vector<4x32xf32>,
    %c50_1250 = arith.constant 50 : index
    %c0_1251 = arith.constant 0 : index
    %777 = tpu.strided_load %arg14[%c50_1250, %c0_1251] {strides = array<i32: 2, 1>} : memref<200x32xf32, #tpu.memory_space<vmem>>, vector<4x32xf32>
    %c4_1252 = arith.constant 4 : index
    %c384_1253 = arith.constant 384 : index
    %778 = vector.load %arg12[%c4_1252, %c384_1253] : memref<32x512xf32, #tpu.memory_space<vmem>>, vector<4x32xf32>
    tpu.vector_store %arg12[%c4_1252, %c384_1253], %777 {strides = array<i32>} : memref<32x512xf32, #tpu.memory_space<vmem>>, vector<4x32xf32>,
    %c70_1254 = arith.constant 70 : index
    %c0_1255 = arith.constant 0 : index
    %779 = tpu.strided_load %arg14[%c70_1254, %c0_1255] {strides = array<i32: 2, 1>} : memref<200x32xf32, #tpu.memory_space<vmem>>, vector<4x32xf32>
    %c8_1256 = arith.constant 8 : index
    %c384_1257 = arith.constant 384 : index
    %780 = vector.load %arg12[%c8_1256, %c384_1257] : memref<32x512xf32, #tpu.memory_space<vmem>>, vector<4x32xf32>
    tpu.vector_store %arg12[%c8_1256, %c384_1257], %779 {strides = array<i32>} : memref<32x512xf32, #tpu.memory_space<vmem>>, vector<4x32xf32>,
    %c90_1258 = arith.constant 90 : index
    %c0_1259 = arith.constant 0 : index
    %781 = tpu.strided_load %arg14[%c90_1258, %c0_1259] {strides = array<i32: 2, 1>} : memref<200x32xf32, #tpu.memory_space<vmem>>, vector<4x32xf32>
    %c12_1260 = arith.constant 12 : index
    %c384_1261 = arith.constant 384 : index
    %782 = vector.load %arg12[%c12_1260, %c384_1261] : memref<32x512xf32, #tpu.memory_space<vmem>>, vector<4x32xf32>
    tpu.vector_store %arg12[%c12_1260, %c384_1261], %781 {strides = array<i32>} : memref<32x512xf32, #tpu.memory_space<vmem>>, vector<4x32xf32>,
    %c130_1262 = arith.constant 130 : index
    %c0_1263 = arith.constant 0 : index
    %783 = tpu.strided_load %arg14[%c130_1262, %c0_1263] {strides = array<i32: 2, 1>} : memref<200x32xf32, #tpu.memory_space<vmem>>, vector<4x32xf32>
    %c16_1264 = arith.constant 16 : index
    %c384_1265 = arith.constant 384 : index
    %784 = vector.load %arg12[%c16_1264, %c384_1265] : memref<32x512xf32, #tpu.memory_space<vmem>>, vector<4x32xf32>
    tpu.vector_store %arg12[%c16_1264, %c384_1265], %783 {strides = array<i32>} : memref<32x512xf32, #tpu.memory_space<vmem>>, vector<4x32xf32>,
    %c150_1266 = arith.constant 150 : index
    %c0_1267 = arith.constant 0 : index
    %785 = tpu.strided_load %arg14[%c150_1266, %c0_1267] {strides = array<i32: 2, 1>} : memref<200x32xf32, #tpu.memory_space<vmem>>, vector<4x32xf32>
    %c20_1268 = arith.constant 20 : index
    %c384_1269 = arith.constant 384 : index
    %786 = vector.load %arg12[%c20_1268, %c384_1269] : memref<32x512xf32, #tpu.memory_space<vmem>>, vector<4x32xf32>
    tpu.vector_store %arg12[%c20_1268, %c384_1269], %785 {strides = array<i32>} : memref<32x512xf32, #tpu.memory_space<vmem>>, vector<4x32xf32>,
    %c170_1270 = arith.constant 170 : index
    %c0_1271 = arith.constant 0 : index
    %787 = tpu.strided_load %arg14[%c170_1270, %c0_1271] {strides = array<i32: 2, 1>} : memref<200x32xf32, #tpu.memory_space<vmem>>, vector<4x32xf32>
    %c24_1272 = arith.constant 24 : index
    %c384_1273 = arith.constant 384 : index
    %788 = vector.load %arg12[%c24_1272, %c384_1273] : memref<32x512xf32, #tpu.memory_space<vmem>>, vector<4x32xf32>
    tpu.vector_store %arg12[%c24_1272, %c384_1273], %787 {strides = array<i32>} : memref<32x512xf32, #tpu.memory_space<vmem>>, vector<4x32xf32>,
    %c190 = arith.constant 190 : index
    %c0_1274 = arith.constant 0 : index
    %789 = tpu.strided_load %arg14[%c190, %c0_1274] {strides = array<i32: 2, 1>} : memref<200x32xf32, #tpu.memory_space<vmem>>, vector<4x32xf32>
    %c28_1275 = arith.constant 28 : index
    %c384_1276 = arith.constant 384 : index
    %790 = vector.load %arg12[%c28_1275, %c384_1276] : memref<32x512xf32, #tpu.memory_space<vmem>>, vector<4x32xf32>
    tpu.vector_store %arg12[%c28_1275, %c384_1276], %789 {strides = array<i32>} : memref<32x512xf32, #tpu.memory_space<vmem>>, vector<4x32xf32>,
    %c31_1277 = arith.constant 31 : index
    %c0_1278 = arith.constant 0 : index
    %791 = tpu.strided_load %arg14[%c31_1277, %c0_1278] {strides = array<i32: 2, 1>} : memref<200x32xf32, #tpu.memory_space<vmem>>, vector<4x32xf32>
    %c0_1279 = arith.constant 0 : index
    %c416_1280 = arith.constant 416 : index
    %792 = vector.load %arg12[%c0_1279, %c416_1280] : memref<32x512xf32, #tpu.memory_space<vmem>>, vector<4x32xf32>
    tpu.vector_store %arg12[%c0_1279, %c416_1280], %791 {strides = array<i32>} : memref<32x512xf32, #tpu.memory_space<vmem>>, vector<4x32xf32>,
    %c51_1281 = arith.constant 51 : index
    %c0_1282 = arith.constant 0 : index
    %793 = tpu.strided_load %arg14[%c51_1281, %c0_1282] {strides = array<i32: 2, 1>} : memref<200x32xf32, #tpu.memory_space<vmem>>, vector<4x32xf32>
    %c4_1283 = arith.constant 4 : index
    %c416_1284 = arith.constant 416 : index
    %794 = vector.load %arg12[%c4_1283, %c416_1284] : memref<32x512xf32, #tpu.memory_space<vmem>>, vector<4x32xf32>
    tpu.vector_store %arg12[%c4_1283, %c416_1284], %793 {strides = array<i32>} : memref<32x512xf32, #tpu.memory_space<vmem>>, vector<4x32xf32>,
    %c71_1285 = arith.constant 71 : index
    %c0_1286 = arith.constant 0 : index
    %795 = tpu.strided_load %arg14[%c71_1285, %c0_1286] {strides = array<i32: 2, 1>} : memref<200x32xf32, #tpu.memory_space<vmem>>, vector<4x32xf32>
    %c8_1287 = arith.constant 8 : index
    %c416_1288 = arith.constant 416 : index
    %796 = vector.load %arg12[%c8_1287, %c416_1288] : memref<32x512xf32, #tpu.memory_space<vmem>>, vector<4x32xf32>
    tpu.vector_store %arg12[%c8_1287, %c416_1288], %795 {strides = array<i32>} : memref<32x512xf32, #tpu.memory_space<vmem>>, vector<4x32xf32>,
    %c91_1289 = arith.constant 91 : index
    %c0_1290 = arith.constant 0 : index
    %797 = tpu.strided_load %arg14[%c91_1289, %c0_1290] {strides = array<i32: 2, 1>} : memref<200x32xf32, #tpu.memory_space<vmem>>, vector<4x32xf32>
    %c12_1291 = arith.constant 12 : index
    %c416_1292 = arith.constant 416 : index
    %798 = vector.load %arg12[%c12_1291, %c416_1292] : memref<32x512xf32, #tpu.memory_space<vmem>>, vector<4x32xf32>
    tpu.vector_store %arg12[%c12_1291, %c416_1292], %797 {strides = array<i32>} : memref<32x512xf32, #tpu.memory_space<vmem>>, vector<4x32xf32>,
    %c131_1293 = arith.constant 131 : index
    %c0_1294 = arith.constant 0 : index
    %799 = tpu.strided_load %arg14[%c131_1293, %c0_1294] {strides = array<i32: 2, 1>} : memref<200x32xf32, #tpu.memory_space<vmem>>, vector<4x32xf32>
    %c16_1295 = arith.constant 16 : index
    %c416_1296 = arith.constant 416 : index
    %800 = vector.load %arg12[%c16_1295, %c416_1296] : memref<32x512xf32, #tpu.memory_space<vmem>>, vector<4x32xf32>
    tpu.vector_store %arg12[%c16_1295, %c416_1296], %799 {strides = array<i32>} : memref<32x512xf32, #tpu.memory_space<vmem>>, vector<4x32xf32>,
    %c151_1297 = arith.constant 151 : index
    %c0_1298 = arith.constant 0 : index
    %801 = tpu.strided_load %arg14[%c151_1297, %c0_1298] {strides = array<i32: 2, 1>} : memref<200x32xf32, #tpu.memory_space<vmem>>, vector<4x32xf32>
    %c20_1299 = arith.constant 20 : index
    %c416_1300 = arith.constant 416 : index
    %802 = vector.load %arg12[%c20_1299, %c416_1300] : memref<32x512xf32, #tpu.memory_space<vmem>>, vector<4x32xf32>
    tpu.vector_store %arg12[%c20_1299, %c416_1300], %801 {strides = array<i32>} : memref<32x512xf32, #tpu.memory_space<vmem>>, vector<4x32xf32>,
    %c171_1301 = arith.constant 171 : index
    %c0_1302 = arith.constant 0 : index
    %803 = tpu.strided_load %arg14[%c171_1301, %c0_1302] {strides = array<i32: 2, 1>} : memref<200x32xf32, #tpu.memory_space<vmem>>, vector<4x32xf32>
    %c24_1303 = arith.constant 24 : index
    %c416_1304 = arith.constant 416 : index
    %804 = vector.load %arg12[%c24_1303, %c416_1304] : memref<32x512xf32, #tpu.memory_space<vmem>>, vector<4x32xf32>
    tpu.vector_store %arg12[%c24_1303, %c416_1304], %803 {strides = array<i32>} : memref<32x512xf32, #tpu.memory_space<vmem>>, vector<4x32xf32>,
    %c191 = arith.constant 191 : index
    %c0_1305 = arith.constant 0 : index
    %805 = tpu.strided_load %arg14[%c191, %c0_1305] {strides = array<i32: 2, 1>} : memref<200x32xf32, #tpu.memory_space<vmem>>, vector<4x32xf32>
    %c28_1306 = arith.constant 28 : index
    %c416_1307 = arith.constant 416 : index
    %806 = vector.load %arg12[%c28_1306, %c416_1307] : memref<32x512xf32, #tpu.memory_space<vmem>>, vector<4x32xf32>
    tpu.vector_store %arg12[%c28_1306, %c416_1307], %805 {strides = array<i32>} : memref<32x512xf32, #tpu.memory_space<vmem>>, vector<4x32xf32>,
    %c32_1308 = arith.constant 32 : index
    %c0_1309 = arith.constant 0 : index
    %807 = tpu.strided_load %arg14[%c32_1308, %c0_1309] {strides = array<i32: 2, 1>} : memref<200x32xf32, #tpu.memory_space<vmem>>, vector<4x32xf32>
    %c0_1310 = arith.constant 0 : index
    %c448 = arith.constant 448 : index
    %808 = vector.load %arg12[%c0_1310, %c448] : memref<32x512xf32, #tpu.memory_space<vmem>>, vector<4x32xf32>
    tpu.vector_store %arg12[%c0_1310, %c448], %807 {strides = array<i32>} : memref<32x512xf32, #tpu.memory_space<vmem>>, vector<4x32xf32>,
    %c52_1311 = arith.constant 52 : index
    %c0_1312 = arith.constant 0 : index
    %809 = tpu.strided_load %arg14[%c52_1311, %c0_1312] {strides = array<i32: 2, 1>} : memref<200x32xf32, #tpu.memory_space<vmem>>, vector<4x32xf32>
    %c4_1313 = arith.constant 4 : index
    %c448_1314 = arith.constant 448 : index
    %810 = vector.load %arg12[%c4_1313, %c448_1314] : memref<32x512xf32, #tpu.memory_space<vmem>>, vector<4x32xf32>
    tpu.vector_store %arg12[%c4_1313, %c448_1314], %809 {strides = array<i32>} : memref<32x512xf32, #tpu.memory_space<vmem>>, vector<4x32xf32>,
    %c72_1315 = arith.constant 72 : index
    %c0_1316 = arith.constant 0 : index
    %811 = tpu.strided_load %arg14[%c72_1315, %c0_1316] {strides = array<i32: 2, 1>} : memref<200x32xf32, #tpu.memory_space<vmem>>, vector<4x32xf32>
    %c8_1317 = arith.constant 8 : index
    %c448_1318 = arith.constant 448 : index
    %812 = vector.load %arg12[%c8_1317, %c448_1318] : memref<32x512xf32, #tpu.memory_space<vmem>>, vector<4x32xf32>
    tpu.vector_store %arg12[%c8_1317, %c448_1318], %811 {strides = array<i32>} : memref<32x512xf32, #tpu.memory_space<vmem>>, vector<4x32xf32>,
    %c92_1319 = arith.constant 92 : index
    %c0_1320 = arith.constant 0 : index
    %813 = tpu.strided_load %arg14[%c92_1319, %c0_1320] {strides = array<i32: 2, 1>} : memref<200x32xf32, #tpu.memory_space<vmem>>, vector<4x32xf32>
    %c12_1321 = arith.constant 12 : index
    %c448_1322 = arith.constant 448 : index
    %814 = vector.load %arg12[%c12_1321, %c448_1322] : memref<32x512xf32, #tpu.memory_space<vmem>>, vector<4x32xf32>
    tpu.vector_store %arg12[%c12_1321, %c448_1322], %813 {strides = array<i32>} : memref<32x512xf32, #tpu.memory_space<vmem>>, vector<4x32xf32>,
    %c132_1323 = arith.constant 132 : index
    %c0_1324 = arith.constant 0 : index
    %815 = tpu.strided_load %arg14[%c132_1323, %c0_1324] {strides = array<i32: 2, 1>} : memref<200x32xf32, #tpu.memory_space<vmem>>, vector<4x32xf32>
    %c16_1325 = arith.constant 16 : index
    %c448_1326 = arith.constant 448 : index
    %816 = vector.load %arg12[%c16_1325, %c448_1326] : memref<32x512xf32, #tpu.memory_space<vmem>>, vector<4x32xf32>
    tpu.vector_store %arg12[%c16_1325, %c448_1326], %815 {strides = array<i32>} : memref<32x512xf32, #tpu.memory_space<vmem>>, vector<4x32xf32>,
    %c152_1327 = arith.constant 152 : index
    %c0_1328 = arith.constant 0 : index
    %817 = tpu.strided_load %arg14[%c152_1327, %c0_1328] {strides = array<i32: 2, 1>} : memref<200x32xf32, #tpu.memory_space<vmem>>, vector<4x32xf32>
    %c20_1329 = arith.constant 20 : index
    %c448_1330 = arith.constant 448 : index
    %818 = vector.load %arg12[%c20_1329, %c448_1330] : memref<32x512xf32, #tpu.memory_space<vmem>>, vector<4x32xf32>
    tpu.vector_store %arg12[%c20_1329, %c448_1330], %817 {strides = array<i32>} : memref<32x512xf32, #tpu.memory_space<vmem>>, vector<4x32xf32>,
    %c172_1331 = arith.constant 172 : index
    %c0_1332 = arith.constant 0 : index
    %819 = tpu.strided_load %arg14[%c172_1331, %c0_1332] {strides = array<i32: 2, 1>} : memref<200x32xf32, #tpu.memory_space<vmem>>, vector<4x32xf32>
    %c24_1333 = arith.constant 24 : index
    %c448_1334 = arith.constant 448 : index
    %820 = vector.load %arg12[%c24_1333, %c448_1334] : memref<32x512xf32, #tpu.memory_space<vmem>>, vector<4x32xf32>
    tpu.vector_store %arg12[%c24_1333, %c448_1334], %819 {strides = array<i32>} : memref<32x512xf32, #tpu.memory_space<vmem>>, vector<4x32xf32>,
    %c192_1335 = arith.constant 192 : index
    %c0_1336 = arith.constant 0 : index
    %821 = tpu.strided_load %arg14[%c192_1335, %c0_1336] {strides = array<i32: 2, 1>} : memref<200x32xf32, #tpu.memory_space<vmem>>, vector<4x32xf32>
    %c28_1337 = arith.constant 28 : index
    %c448_1338 = arith.constant 448 : index
    %822 = vector.load %arg12[%c28_1337, %c448_1338] : memref<32x512xf32, #tpu.memory_space<vmem>>, vector<4x32xf32>
    tpu.vector_store %arg12[%c28_1337, %c448_1338], %821 {strides = array<i32>} : memref<32x512xf32, #tpu.memory_space<vmem>>, vector<4x32xf32>,
    %c33_1339 = arith.constant 33 : index
    %c0_1340 = arith.constant 0 : index
    %823 = tpu.strided_load %arg14[%c33_1339, %c0_1340] {strides = array<i32: 2, 1>} : memref<200x32xf32, #tpu.memory_space<vmem>>, vector<4x32xf32>
    %c0_1341 = arith.constant 0 : index
    %c480 = arith.constant 480 : index
    %824 = vector.load %arg12[%c0_1341, %c480] : memref<32x512xf32, #tpu.memory_space<vmem>>, vector<4x32xf32>
    tpu.vector_store %arg12[%c0_1341, %c480], %823 {strides = array<i32>} : memref<32x512xf32, #tpu.memory_space<vmem>>, vector<4x32xf32>,
    %c53_1342 = arith.constant 53 : index
    %c0_1343 = arith.constant 0 : index
    %825 = tpu.strided_load %arg14[%c53_1342, %c0_1343] {strides = array<i32: 2, 1>} : memref<200x32xf32, #tpu.memory_space<vmem>>, vector<4x32xf32>
    %c4_1344 = arith.constant 4 : index
    %c480_1345 = arith.constant 480 : index
    %826 = vector.load %arg12[%c4_1344, %c480_1345] : memref<32x512xf32, #tpu.memory_space<vmem>>, vector<4x32xf32>
    tpu.vector_store %arg12[%c4_1344, %c480_1345], %825 {strides = array<i32>} : memref<32x512xf32, #tpu.memory_space<vmem>>, vector<4x32xf32>,
    %c73_1346 = arith.constant 73 : index
    %c0_1347 = arith.constant 0 : index
    %827 = tpu.strided_load %arg14[%c73_1346, %c0_1347] {strides = array<i32: 2, 1>} : memref<200x32xf32, #tpu.memory_space<vmem>>, vector<4x32xf32>
    %c8_1348 = arith.constant 8 : index
    %c480_1349 = arith.constant 480 : index
    %828 = vector.load %arg12[%c8_1348, %c480_1349] : memref<32x512xf32, #tpu.memory_space<vmem>>, vector<4x32xf32>
    tpu.vector_store %arg12[%c8_1348, %c480_1349], %827 {strides = array<i32>} : memref<32x512xf32, #tpu.memory_space<vmem>>, vector<4x32xf32>,
    %c93_1350 = arith.constant 93 : index
    %c0_1351 = arith.constant 0 : index
    %829 = tpu.strided_load %arg14[%c93_1350, %c0_1351] {strides = array<i32: 2, 1>} : memref<200x32xf32, #tpu.memory_space<vmem>>, vector<4x32xf32>
    %c12_1352 = arith.constant 12 : index
    %c480_1353 = arith.constant 480 : index
    %830 = vector.load %arg12[%c12_1352, %c480_1353] : memref<32x512xf32, #tpu.memory_space<vmem>>, vector<4x32xf32>
    tpu.vector_store %arg12[%c12_1352, %c480_1353], %829 {strides = array<i32>} : memref<32x512xf32, #tpu.memory_space<vmem>>, vector<4x32xf32>,
    %c133_1354 = arith.constant 133 : index
    %c0_1355 = arith.constant 0 : index
    %831 = tpu.strided_load %arg14[%c133_1354, %c0_1355] {strides = array<i32: 2, 1>} : memref<200x32xf32, #tpu.memory_space<vmem>>, vector<4x32xf32>
    %c16_1356 = arith.constant 16 : index
    %c480_1357 = arith.constant 480 : index
    %832 = vector.load %arg12[%c16_1356, %c480_1357] : memref<32x512xf32, #tpu.memory_space<vmem>>, vector<4x32xf32>
    tpu.vector_store %arg12[%c16_1356, %c480_1357], %831 {strides = array<i32>} : memref<32x512xf32, #tpu.memory_space<vmem>>, vector<4x32xf32>,
    %c153_1358 = arith.constant 153 : index
    %c0_1359 = arith.constant 0 : index
    %833 = tpu.strided_load %arg14[%c153_1358, %c0_1359] {strides = array<i32: 2, 1>} : memref<200x32xf32, #tpu.memory_space<vmem>>, vector<4x32xf32>
    %c20_1360 = arith.constant 20 : index
    %c480_1361 = arith.constant 480 : index
    %834 = vector.load %arg12[%c20_1360, %c480_1361] : memref<32x512xf32, #tpu.memory_space<vmem>>, vector<4x32xf32>
    tpu.vector_store %arg12[%c20_1360, %c480_1361], %833 {strides = array<i32>} : memref<32x512xf32, #tpu.memory_space<vmem>>, vector<4x32xf32>,
    %c173_1362 = arith.constant 173 : index
    %c0_1363 = arith.constant 0 : index
    %835 = tpu.strided_load %arg14[%c173_1362, %c0_1363] {strides = array<i32: 2, 1>} : memref<200x32xf32, #tpu.memory_space<vmem>>, vector<4x32xf32>
    %c24_1364 = arith.constant 24 : index
    %c480_1365 = arith.constant 480 : index
    %836 = vector.load %arg12[%c24_1364, %c480_1365] : memref<32x512xf32, #tpu.memory_space<vmem>>, vector<4x32xf32>
    tpu.vector_store %arg12[%c24_1364, %c480_1365], %835 {strides = array<i32>} : memref<32x512xf32, #tpu.memory_space<vmem>>, vector<4x32xf32>,
    %c193 = arith.constant 193 : index
    %c0_1366 = arith.constant 0 : index
    %837 = tpu.strided_load %arg14[%c193, %c0_1366] {strides = array<i32: 2, 1>} : memref<200x32xf32, #tpu.memory_space<vmem>>, vector<4x32xf32>
    %c28_1367 = arith.constant 28 : index
    %c480_1368 = arith.constant 480 : index
    %838 = vector.load %arg12[%c28_1367, %c480_1368] : memref<32x512xf32, #tpu.memory_space<vmem>>, vector<4x32xf32>
    tpu.vector_store %arg12[%c28_1367, %c480_1368], %837 {strides = array<i32>} : memref<32x512xf32, #tpu.memory_space<vmem>>, vector<4x32xf32>,
    %c0_1369 = arith.constant 0 : index
    %c0_1370 = arith.constant 0 : index
    %839 = vector.load %arg12[%c0_1369, %c0_1370] : memref<32x512xf32, #tpu.memory_space<vmem>>, vector<32x512xf32>
    %840 = arith.truncf %839 : vector<32x512xf32> to vector<32x512xbf16>
    %c0_1371 = arith.constant 0 : index
    %c0_1372 = arith.constant 0 : index
    %841 = vector.load %arg4[%c0_1371, %c0_1372] : memref<512x128xbf16, #tpu.memory_space<vmem>>, vector<512x128xbf16>
    %cst_1373 = arith.constant dense<0.000000e+00> : vector<32x128xf32>
    %842 = tpu.matmul %840, %841, %cst_1373 {dimension_numbers = #tpu.dot_dimension_numbers<[1], [0], [0], [1], [0, 0, 1, 1], [], []>} : vector<32x512xbf16>, vector<512x128xbf16>, vector<32x128xf32> -> vector<32x128xf32>
    %c0_1374 = arith.constant 0 : index
    %c0_1375 = arith.constant 0 : index
    %843 = vector.load %arg5[%c0_1374, %c0_1375] : memref<3x128xf32, #tpu.memory_space<vmem>>, vector<1x128xf32>
    %c1_1376 = arith.constant 1 : index
    %c0_1377 = arith.constant 0 : index
    %844 = vector.load %arg5[%c1_1376, %c0_1377] : memref<3x128xf32, #tpu.memory_space<vmem>>, vector<1x128xf32>
    %c2_1378 = arith.constant 2 : index
    %c0_1379 = arith.constant 0 : index
    %845 = vector.load %arg5[%c2_1378, %c0_1379] : memref<3x128xf32, #tpu.memory_space<vmem>>, vector<1x128xf32>
    %846 = vector.broadcast %843 : vector<1x128xf32> to vector<32x128xf32>
    %847 = arith.addf %842, %846 : vector<32x128xf32>
    %cst_1380 = arith.constant 0.000000e+00 : f32
    %848 = vector.broadcast %cst_1380 : f32 to vector<32x128xf32>
    %849 = arith.cmpf oge, %847, %848 : vector<32x128xf32>
    %cst_1381 = arith.constant 0.00999999977 : f32
    %850 = vector.broadcast %cst_1381 : f32 to vector<32x128xf32>
    %851 = arith.mulf %850, %847 : vector<32x128xf32>
    %852 = arith.select %849, %847, %851 : vector<32x128xi1>, vector<32x128xf32>
    %cst_1382 = arith.constant dense<0.000000e+00> : vector<128xf32>
    %853 = vector.multi_reduction <add>, %852, %cst_1382 [0] : vector<32x128xf32> to vector<128xf32>
    %854 = vector.shape_cast %853 : vector<128xf32> to vector<1x128xf32>
    %cst_1383 = arith.constant 3.125000e-02 : f32
    %855 = vector.broadcast %cst_1383 : f32 to vector<1x128xf32>
    %856 = arith.mulf %854, %855 : vector<1x128xf32>
    %857 = vector.broadcast %856 : vector<1x128xf32> to vector<32x128xf32>
    %858 = arith.subf %852, %857 : vector<32x128xf32>
    %859 = arith.mulf %858, %858 : vector<32x128xf32>
    %cst_1384 = arith.constant dense<0.000000e+00> : vector<128xf32>
    %860 = vector.multi_reduction <add>, %859, %cst_1384 [0] : vector<32x128xf32> to vector<128xf32>
    %861 = vector.shape_cast %860 : vector<128xf32> to vector<1x128xf32>
    %cst_1385 = arith.constant 3.125000e-02 : f32
    %862 = vector.broadcast %cst_1385 : f32 to vector<1x128xf32>
    %863 = arith.mulf %861, %862 : vector<1x128xf32>
    %cst_1386 = arith.constant 9.99999974E-6 : f32
    %864 = vector.broadcast %cst_1386 : f32 to vector<1x128xf32>
    %865 = arith.addf %863, %864 : vector<1x128xf32>
    %866 = math.rsqrt %865 : vector<1x128xf32>
    %867 = arith.mulf %844, %866 : vector<1x128xf32>
    %868 = arith.mulf %856, %867 : vector<1x128xf32>
    %869 = arith.subf %845, %868 : vector<1x128xf32>
    %870 = vector.broadcast %867 : vector<1x128xf32> to vector<32x128xf32>
    %871 = arith.mulf %852, %870 : vector<32x128xf32>
    %872 = vector.broadcast %869 : vector<1x128xf32> to vector<32x128xf32>
    %873 = arith.addf %871, %872 : vector<32x128xf32>
    %874 = vector.extract_strided_slice %873 {offsets = [0, 0], sizes = [4, 64], strides = [1, 1]} : vector<32x128xf32> to vector<4x64xf32>
    %c7 = arith.constant 7 : index
    %c0_1387 = arith.constant 0 : index
    %875 = vector.load %arg15[%c7, %c0_1387] : memref<72x64xf32, #tpu.memory_space<vmem>>, vector<4x64xf32>
    tpu.vector_store %arg15[%c7, %c0_1387], %874 {strides = array<i32>} : memref<72x64xf32, #tpu.memory_space<vmem>>, vector<4x64xf32>,
    %876 = vector.extract_strided_slice %873 {offsets = [4, 0], sizes = [4, 64], strides = [1, 1]} : vector<32x128xf32> to vector<4x64xf32>
    %c13_1388 = arith.constant 13 : index
    %c0_1389 = arith.constant 0 : index
    %877 = vector.load %arg15[%c13_1388, %c0_1389] : memref<72x64xf32, #tpu.memory_space<vmem>>, vector<4x64xf32>
    tpu.vector_store %arg15[%c13_1388, %c0_1389], %876 {strides = array<i32>} : memref<72x64xf32, #tpu.memory_space<vmem>>, vector<4x64xf32>,
    %878 = vector.extract_strided_slice %873 {offsets = [8, 0], sizes = [4, 64], strides = [1, 1]} : vector<32x128xf32> to vector<4x64xf32>
    %c19_1390 = arith.constant 19 : index
    %c0_1391 = arith.constant 0 : index
    %879 = vector.load %arg15[%c19_1390, %c0_1391] : memref<72x64xf32, #tpu.memory_space<vmem>>, vector<4x64xf32>
    tpu.vector_store %arg15[%c19_1390, %c0_1391], %878 {strides = array<i32>} : memref<72x64xf32, #tpu.memory_space<vmem>>, vector<4x64xf32>,
    %880 = vector.extract_strided_slice %873 {offsets = [12, 0], sizes = [4, 64], strides = [1, 1]} : vector<32x128xf32> to vector<4x64xf32>
    %c25 = arith.constant 25 : index
    %c0_1392 = arith.constant 0 : index
    %881 = vector.load %arg15[%c25, %c0_1392] : memref<72x64xf32, #tpu.memory_space<vmem>>, vector<4x64xf32>
    tpu.vector_store %arg15[%c25, %c0_1392], %880 {strides = array<i32>} : memref<72x64xf32, #tpu.memory_space<vmem>>, vector<4x64xf32>,
    %882 = vector.extract_strided_slice %873 {offsets = [16, 0], sizes = [4, 64], strides = [1, 1]} : vector<32x128xf32> to vector<4x64xf32>
    %c43_1393 = arith.constant 43 : index
    %c0_1394 = arith.constant 0 : index
    %883 = vector.load %arg15[%c43_1393, %c0_1394] : memref<72x64xf32, #tpu.memory_space<vmem>>, vector<4x64xf32>
    tpu.vector_store %arg15[%c43_1393, %c0_1394], %882 {strides = array<i32>} : memref<72x64xf32, #tpu.memory_space<vmem>>, vector<4x64xf32>,
    %884 = vector.extract_strided_slice %873 {offsets = [20, 0], sizes = [4, 64], strides = [1, 1]} : vector<32x128xf32> to vector<4x64xf32>
    %c49 = arith.constant 49 : index
    %c0_1395 = arith.constant 0 : index
    %885 = vector.load %arg15[%c49, %c0_1395] : memref<72x64xf32, #tpu.memory_space<vmem>>, vector<4x64xf32>
    tpu.vector_store %arg15[%c49, %c0_1395], %884 {strides = array<i32>} : memref<72x64xf32, #tpu.memory_space<vmem>>, vector<4x64xf32>,
    %886 = vector.extract_strided_slice %873 {offsets = [24, 0], sizes = [4, 64], strides = [1, 1]} : vector<32x128xf32> to vector<4x64xf32>
    %c55_1396 = arith.constant 55 : index
    %c0_1397 = arith.constant 0 : index
    %887 = vector.load %arg15[%c55_1396, %c0_1397] : memref<72x64xf32, #tpu.memory_space<vmem>>, vector<4x64xf32>
    tpu.vector_store %arg15[%c55_1396, %c0_1397], %886 {strides = array<i32>} : memref<72x64xf32, #tpu.memory_space<vmem>>, vector<4x64xf32>,
    %888 = vector.extract_strided_slice %873 {offsets = [28, 0], sizes = [4, 64], strides = [1, 1]} : vector<32x128xf32> to vector<4x64xf32>
    %c61_1398 = arith.constant 61 : index
    %c0_1399 = arith.constant 0 : index
    %889 = vector.load %arg15[%c61_1398, %c0_1399] : memref<72x64xf32, #tpu.memory_space<vmem>>, vector<4x64xf32>
    tpu.vector_store %arg15[%c61_1398, %c0_1399], %888 {strides = array<i32>} : memref<72x64xf32, #tpu.memory_space<vmem>>, vector<4x64xf32>,
    %c0_1400 = arith.constant 0 : index
    %c0_1401 = arith.constant 0 : index
    %890 = tpu.strided_load %arg15[%c0_1400, %c0_1401] {strides = array<i32: 2, 1>} : memref<72x64xf32, #tpu.memory_space<vmem>>, vector<2x64xf32>
    %c0_1402 = arith.constant 0 : index
    %c0_1403 = arith.constant 0 : index
    %891 = vector.load %arg13[%c0_1402, %c0_1403] : memref<8x1024xf32, #tpu.memory_space<vmem>>, vector<2x64xf32>
    tpu.vector_store %arg13[%c0_1402, %c0_1403], %890 {strides = array<i32>} : memref<8x1024xf32, #tpu.memory_space<vmem>>, vector<2x64xf32>,
    %c12_1404 = arith.constant 12 : index
    %c0_1405 = arith.constant 0 : index
    %892 = tpu.strided_load %arg15[%c12_1404, %c0_1405] {strides = array<i32: 2, 1>} : memref<72x64xf32, #tpu.memory_space<vmem>>, vector<2x64xf32>
    %c2_1406 = arith.constant 2 : index
    %c0_1407 = arith.constant 0 : index
    %893 = vector.load %arg13[%c2_1406, %c0_1407] : memref<8x1024xf32, #tpu.memory_space<vmem>>, vector<2x64xf32>
    tpu.vector_store %arg13[%c2_1406, %c0_1407], %892 {strides = array<i32>} : memref<8x1024xf32, #tpu.memory_space<vmem>>, vector<2x64xf32>,
    %c36_1408 = arith.constant 36 : index
    %c0_1409 = arith.constant 0 : index
    %894 = tpu.strided_load %arg15[%c36_1408, %c0_1409] {strides = array<i32: 2, 1>} : memref<72x64xf32, #tpu.memory_space<vmem>>, vector<2x64xf32>
    %c4_1410 = arith.constant 4 : index
    %c0_1411 = arith.constant 0 : index
    %895 = vector.load %arg13[%c4_1410, %c0_1411] : memref<8x1024xf32, #tpu.memory_space<vmem>>, vector<2x64xf32>
    tpu.vector_store %arg13[%c4_1410, %c0_1411], %894 {strides = array<i32>} : memref<8x1024xf32, #tpu.memory_space<vmem>>, vector<2x64xf32>,
    %c48_1412 = arith.constant 48 : index
    %c0_1413 = arith.constant 0 : index
    %896 = tpu.strided_load %arg15[%c48_1412, %c0_1413] {strides = array<i32: 2, 1>} : memref<72x64xf32, #tpu.memory_space<vmem>>, vector<2x64xf32>
    %c6 = arith.constant 6 : index
    %c0_1414 = arith.constant 0 : index
    %897 = vector.load %arg13[%c6, %c0_1414] : memref<8x1024xf32, #tpu.memory_space<vmem>>, vector<2x64xf32>
    tpu.vector_store %arg13[%c6, %c0_1414], %896 {strides = array<i32>} : memref<8x1024xf32, #tpu.memory_space<vmem>>, vector<2x64xf32>,
    %c1_1415 = arith.constant 1 : index
    %c0_1416 = arith.constant 0 : index
    %898 = tpu.strided_load %arg15[%c1_1415, %c0_1416] {strides = array<i32: 2, 1>} : memref<72x64xf32, #tpu.memory_space<vmem>>, vector<2x64xf32>
    %c0_1417 = arith.constant 0 : index
    %c64_1418 = arith.constant 64 : index
    %899 = vector.load %arg13[%c0_1417, %c64_1418] : memref<8x1024xf32, #tpu.memory_space<vmem>>, vector<2x64xf32>
    tpu.vector_store %arg13[%c0_1417, %c64_1418], %898 {strides = array<i32>} : memref<8x1024xf32, #tpu.memory_space<vmem>>, vector<2x64xf32>,
    %c13_1419 = arith.constant 13 : index
    %c0_1420 = arith.constant 0 : index
    %900 = tpu.strided_load %arg15[%c13_1419, %c0_1420] {strides = array<i32: 2, 1>} : memref<72x64xf32, #tpu.memory_space<vmem>>, vector<2x64xf32>
    %c2_1421 = arith.constant 2 : index
    %c64_1422 = arith.constant 64 : index
    %901 = vector.load %arg13[%c2_1421, %c64_1422] : memref<8x1024xf32, #tpu.memory_space<vmem>>, vector<2x64xf32>
    tpu.vector_store %arg13[%c2_1421, %c64_1422], %900 {strides = array<i32>} : memref<8x1024xf32, #tpu.memory_space<vmem>>, vector<2x64xf32>,
    %c37_1423 = arith.constant 37 : index
    %c0_1424 = arith.constant 0 : index
    %902 = tpu.strided_load %arg15[%c37_1423, %c0_1424] {strides = array<i32: 2, 1>} : memref<72x64xf32, #tpu.memory_space<vmem>>, vector<2x64xf32>
    %c4_1425 = arith.constant 4 : index
    %c64_1426 = arith.constant 64 : index
    %903 = vector.load %arg13[%c4_1425, %c64_1426] : memref<8x1024xf32, #tpu.memory_space<vmem>>, vector<2x64xf32>
    tpu.vector_store %arg13[%c4_1425, %c64_1426], %902 {strides = array<i32>} : memref<8x1024xf32, #tpu.memory_space<vmem>>, vector<2x64xf32>,
    %c49_1427 = arith.constant 49 : index
    %c0_1428 = arith.constant 0 : index
    %904 = tpu.strided_load %arg15[%c49_1427, %c0_1428] {strides = array<i32: 2, 1>} : memref<72x64xf32, #tpu.memory_space<vmem>>, vector<2x64xf32>
    %c6_1429 = arith.constant 6 : index
    %c64_1430 = arith.constant 64 : index
    %905 = vector.load %arg13[%c6_1429, %c64_1430] : memref<8x1024xf32, #tpu.memory_space<vmem>>, vector<2x64xf32>
    tpu.vector_store %arg13[%c6_1429, %c64_1430], %904 {strides = array<i32>} : memref<8x1024xf32, #tpu.memory_space<vmem>>, vector<2x64xf32>,
    %c2_1431 = arith.constant 2 : index
    %c0_1432 = arith.constant 0 : index
    %906 = tpu.strided_load %arg15[%c2_1431, %c0_1432] {strides = array<i32: 2, 1>} : memref<72x64xf32, #tpu.memory_space<vmem>>, vector<2x64xf32>
    %c0_1433 = arith.constant 0 : index
    %c128_1434 = arith.constant 128 : index
    %907 = vector.load %arg13[%c0_1433, %c128_1434] : memref<8x1024xf32, #tpu.memory_space<vmem>>, vector<2x64xf32>
    tpu.vector_store %arg13[%c0_1433, %c128_1434], %906 {strides = array<i32>} : memref<8x1024xf32, #tpu.memory_space<vmem>>, vector<2x64xf32>,
    %c14 = arith.constant 14 : index
    %c0_1435 = arith.constant 0 : index
    %908 = tpu.strided_load %arg15[%c14, %c0_1435] {strides = array<i32: 2, 1>} : memref<72x64xf32, #tpu.memory_space<vmem>>, vector<2x64xf32>
    %c2_1436 = arith.constant 2 : index
    %c128_1437 = arith.constant 128 : index
    %909 = vector.load %arg13[%c2_1436, %c128_1437] : memref<8x1024xf32, #tpu.memory_space<vmem>>, vector<2x64xf32>
    tpu.vector_store %arg13[%c2_1436, %c128_1437], %908 {strides = array<i32>} : memref<8x1024xf32, #tpu.memory_space<vmem>>, vector<2x64xf32>,
    %c38_1438 = arith.constant 38 : index
    %c0_1439 = arith.constant 0 : index
    %910 = tpu.strided_load %arg15[%c38_1438, %c0_1439] {strides = array<i32: 2, 1>} : memref<72x64xf32, #tpu.memory_space<vmem>>, vector<2x64xf32>
    %c4_1440 = arith.constant 4 : index
    %c128_1441 = arith.constant 128 : index
    %911 = vector.load %arg13[%c4_1440, %c128_1441] : memref<8x1024xf32, #tpu.memory_space<vmem>>, vector<2x64xf32>
    tpu.vector_store %arg13[%c4_1440, %c128_1441], %910 {strides = array<i32>} : memref<8x1024xf32, #tpu.memory_space<vmem>>, vector<2x64xf32>,
    %c50_1442 = arith.constant 50 : index
    %c0_1443 = arith.constant 0 : index
    %912 = tpu.strided_load %arg15[%c50_1442, %c0_1443] {strides = array<i32: 2, 1>} : memref<72x64xf32, #tpu.memory_space<vmem>>, vector<2x64xf32>
    %c6_1444 = arith.constant 6 : index
    %c128_1445 = arith.constant 128 : index
    %913 = vector.load %arg13[%c6_1444, %c128_1445] : memref<8x1024xf32, #tpu.memory_space<vmem>>, vector<2x64xf32>
    tpu.vector_store %arg13[%c6_1444, %c128_1445], %912 {strides = array<i32>} : memref<8x1024xf32, #tpu.memory_space<vmem>>, vector<2x64xf32>,
    %c3_1446 = arith.constant 3 : index
    %c0_1447 = arith.constant 0 : index
    %914 = tpu.strided_load %arg15[%c3_1446, %c0_1447] {strides = array<i32: 2, 1>} : memref<72x64xf32, #tpu.memory_space<vmem>>, vector<2x64xf32>
    %c0_1448 = arith.constant 0 : index
    %c192_1449 = arith.constant 192 : index
    %915 = vector.load %arg13[%c0_1448, %c192_1449] : memref<8x1024xf32, #tpu.memory_space<vmem>>, vector<2x64xf32>
    tpu.vector_store %arg13[%c0_1448, %c192_1449], %914 {strides = array<i32>} : memref<8x1024xf32, #tpu.memory_space<vmem>>, vector<2x64xf32>,
    %c15 = arith.constant 15 : index
    %c0_1450 = arith.constant 0 : index
    %916 = tpu.strided_load %arg15[%c15, %c0_1450] {strides = array<i32: 2, 1>} : memref<72x64xf32, #tpu.memory_space<vmem>>, vector<2x64xf32>
    %c2_1451 = arith.constant 2 : index
    %c192_1452 = arith.constant 192 : index
    %917 = vector.load %arg13[%c2_1451, %c192_1452] : memref<8x1024xf32, #tpu.memory_space<vmem>>, vector<2x64xf32>
    tpu.vector_store %arg13[%c2_1451, %c192_1452], %916 {strides = array<i32>} : memref<8x1024xf32, #tpu.memory_space<vmem>>, vector<2x64xf32>,
    %c39_1453 = arith.constant 39 : index
    %c0_1454 = arith.constant 0 : index
    %918 = tpu.strided_load %arg15[%c39_1453, %c0_1454] {strides = array<i32: 2, 1>} : memref<72x64xf32, #tpu.memory_space<vmem>>, vector<2x64xf32>
    %c4_1455 = arith.constant 4 : index
    %c192_1456 = arith.constant 192 : index
    %919 = vector.load %arg13[%c4_1455, %c192_1456] : memref<8x1024xf32, #tpu.memory_space<vmem>>, vector<2x64xf32>
    tpu.vector_store %arg13[%c4_1455, %c192_1456], %918 {strides = array<i32>} : memref<8x1024xf32, #tpu.memory_space<vmem>>, vector<2x64xf32>,
    %c51_1457 = arith.constant 51 : index
    %c0_1458 = arith.constant 0 : index
    %920 = tpu.strided_load %arg15[%c51_1457, %c0_1458] {strides = array<i32: 2, 1>} : memref<72x64xf32, #tpu.memory_space<vmem>>, vector<2x64xf32>
    %c6_1459 = arith.constant 6 : index
    %c192_1460 = arith.constant 192 : index
    %921 = vector.load %arg13[%c6_1459, %c192_1460] : memref<8x1024xf32, #tpu.memory_space<vmem>>, vector<2x64xf32>
    tpu.vector_store %arg13[%c6_1459, %c192_1460], %920 {strides = array<i32>} : memref<8x1024xf32, #tpu.memory_space<vmem>>, vector<2x64xf32>,
    %c6_1461 = arith.constant 6 : index
    %c0_1462 = arith.constant 0 : index
    %922 = tpu.strided_load %arg15[%c6_1461, %c0_1462] {strides = array<i32: 2, 1>} : memref<72x64xf32, #tpu.memory_space<vmem>>, vector<2x64xf32>
    %c0_1463 = arith.constant 0 : index
    %c256_1464 = arith.constant 256 : index
    %923 = vector.load %arg13[%c0_1463, %c256_1464] : memref<8x1024xf32, #tpu.memory_space<vmem>>, vector<2x64xf32>
    tpu.vector_store %arg13[%c0_1463, %c256_1464], %922 {strides = array<i32>} : memref<8x1024xf32, #tpu.memory_space<vmem>>, vector<2x64xf32>,
    %c18_1465 = arith.constant 18 : index
    %c0_1466 = arith.constant 0 : index
    %924 = tpu.strided_load %arg15[%c18_1465, %c0_1466] {strides = array<i32: 2, 1>} : memref<72x64xf32, #tpu.memory_space<vmem>>, vector<2x64xf32>
    %c2_1467 = arith.constant 2 : index
    %c256_1468 = arith.constant 256 : index
    %925 = vector.load %arg13[%c2_1467, %c256_1468] : memref<8x1024xf32, #tpu.memory_space<vmem>>, vector<2x64xf32>
    tpu.vector_store %arg13[%c2_1467, %c256_1468], %924 {strides = array<i32>} : memref<8x1024xf32, #tpu.memory_space<vmem>>, vector<2x64xf32>,
    %c42_1469 = arith.constant 42 : index
    %c0_1470 = arith.constant 0 : index
    %926 = tpu.strided_load %arg15[%c42_1469, %c0_1470] {strides = array<i32: 2, 1>} : memref<72x64xf32, #tpu.memory_space<vmem>>, vector<2x64xf32>
    %c4_1471 = arith.constant 4 : index
    %c256_1472 = arith.constant 256 : index
    %927 = vector.load %arg13[%c4_1471, %c256_1472] : memref<8x1024xf32, #tpu.memory_space<vmem>>, vector<2x64xf32>
    tpu.vector_store %arg13[%c4_1471, %c256_1472], %926 {strides = array<i32>} : memref<8x1024xf32, #tpu.memory_space<vmem>>, vector<2x64xf32>,
    %c54_1473 = arith.constant 54 : index
    %c0_1474 = arith.constant 0 : index
    %928 = tpu.strided_load %arg15[%c54_1473, %c0_1474] {strides = array<i32: 2, 1>} : memref<72x64xf32, #tpu.memory_space<vmem>>, vector<2x64xf32>
    %c6_1475 = arith.constant 6 : index
    %c256_1476 = arith.constant 256 : index
    %929 = vector.load %arg13[%c6_1475, %c256_1476] : memref<8x1024xf32, #tpu.memory_space<vmem>>, vector<2x64xf32>
    tpu.vector_store %arg13[%c6_1475, %c256_1476], %928 {strides = array<i32>} : memref<8x1024xf32, #tpu.memory_space<vmem>>, vector<2x64xf32>,
    %c7_1477 = arith.constant 7 : index
    %c0_1478 = arith.constant 0 : index
    %930 = tpu.strided_load %arg15[%c7_1477, %c0_1478] {strides = array<i32: 2, 1>} : memref<72x64xf32, #tpu.memory_space<vmem>>, vector<2x64xf32>
    %c0_1479 = arith.constant 0 : index
    %c320_1480 = arith.constant 320 : index
    %931 = vector.load %arg13[%c0_1479, %c320_1480] : memref<8x1024xf32, #tpu.memory_space<vmem>>, vector<2x64xf32>
    tpu.vector_store %arg13[%c0_1479, %c320_1480], %930 {strides = array<i32>} : memref<8x1024xf32, #tpu.memory_space<vmem>>, vector<2x64xf32>,
    %c19_1481 = arith.constant 19 : index
    %c0_1482 = arith.constant 0 : index
    %932 = tpu.strided_load %arg15[%c19_1481, %c0_1482] {strides = array<i32: 2, 1>} : memref<72x64xf32, #tpu.memory_space<vmem>>, vector<2x64xf32>
    %c2_1483 = arith.constant 2 : index
    %c320_1484 = arith.constant 320 : index
    %933 = vector.load %arg13[%c2_1483, %c320_1484] : memref<8x1024xf32, #tpu.memory_space<vmem>>, vector<2x64xf32>
    tpu.vector_store %arg13[%c2_1483, %c320_1484], %932 {strides = array<i32>} : memref<8x1024xf32, #tpu.memory_space<vmem>>, vector<2x64xf32>,
    %c43_1485 = arith.constant 43 : index
    %c0_1486 = arith.constant 0 : index
    %934 = tpu.strided_load %arg15[%c43_1485, %c0_1486] {strides = array<i32: 2, 1>} : memref<72x64xf32, #tpu.memory_space<vmem>>, vector<2x64xf32>
    %c4_1487 = arith.constant 4 : index
    %c320_1488 = arith.constant 320 : index
    %935 = vector.load %arg13[%c4_1487, %c320_1488] : memref<8x1024xf32, #tpu.memory_space<vmem>>, vector<2x64xf32>
    tpu.vector_store %arg13[%c4_1487, %c320_1488], %934 {strides = array<i32>} : memref<8x1024xf32, #tpu.memory_space<vmem>>, vector<2x64xf32>,
    %c55_1489 = arith.constant 55 : index
    %c0_1490 = arith.constant 0 : index
    %936 = tpu.strided_load %arg15[%c55_1489, %c0_1490] {strides = array<i32: 2, 1>} : memref<72x64xf32, #tpu.memory_space<vmem>>, vector<2x64xf32>
    %c6_1491 = arith.constant 6 : index
    %c320_1492 = arith.constant 320 : index
    %937 = vector.load %arg13[%c6_1491, %c320_1492] : memref<8x1024xf32, #tpu.memory_space<vmem>>, vector<2x64xf32>
    tpu.vector_store %arg13[%c6_1491, %c320_1492], %936 {strides = array<i32>} : memref<8x1024xf32, #tpu.memory_space<vmem>>, vector<2x64xf32>,
    %c8_1493 = arith.constant 8 : index
    %c0_1494 = arith.constant 0 : index
    %938 = tpu.strided_load %arg15[%c8_1493, %c0_1494] {strides = array<i32: 2, 1>} : memref<72x64xf32, #tpu.memory_space<vmem>>, vector<2x64xf32>
    %c0_1495 = arith.constant 0 : index
    %c384_1496 = arith.constant 384 : index
    %939 = vector.load %arg13[%c0_1495, %c384_1496] : memref<8x1024xf32, #tpu.memory_space<vmem>>, vector<2x64xf32>
    tpu.vector_store %arg13[%c0_1495, %c384_1496], %938 {strides = array<i32>} : memref<8x1024xf32, #tpu.memory_space<vmem>>, vector<2x64xf32>,
    %c20_1497 = arith.constant 20 : index
    %c0_1498 = arith.constant 0 : index
    %940 = tpu.strided_load %arg15[%c20_1497, %c0_1498] {strides = array<i32: 2, 1>} : memref<72x64xf32, #tpu.memory_space<vmem>>, vector<2x64xf32>
    %c2_1499 = arith.constant 2 : index
    %c384_1500 = arith.constant 384 : index
    %941 = vector.load %arg13[%c2_1499, %c384_1500] : memref<8x1024xf32, #tpu.memory_space<vmem>>, vector<2x64xf32>
    tpu.vector_store %arg13[%c2_1499, %c384_1500], %940 {strides = array<i32>} : memref<8x1024xf32, #tpu.memory_space<vmem>>, vector<2x64xf32>,
    %c44_1501 = arith.constant 44 : index
    %c0_1502 = arith.constant 0 : index
    %942 = tpu.strided_load %arg15[%c44_1501, %c0_1502] {strides = array<i32: 2, 1>} : memref<72x64xf32, #tpu.memory_space<vmem>>, vector<2x64xf32>
    %c4_1503 = arith.constant 4 : index
    %c384_1504 = arith.constant 384 : index
    %943 = vector.load %arg13[%c4_1503, %c384_1504] : memref<8x1024xf32, #tpu.memory_space<vmem>>, vector<2x64xf32>
    tpu.vector_store %arg13[%c4_1503, %c384_1504], %942 {strides = array<i32>} : memref<8x1024xf32, #tpu.memory_space<vmem>>, vector<2x64xf32>,
    %c56_1505 = arith.constant 56 : index
    %c0_1506 = arith.constant 0 : index
    %944 = tpu.strided_load %arg15[%c56_1505, %c0_1506] {strides = array<i32: 2, 1>} : memref<72x64xf32, #tpu.memory_space<vmem>>, vector<2x64xf32>
    %c6_1507 = arith.constant 6 : index
    %c384_1508 = arith.constant 384 : index
    %945 = vector.load %arg13[%c6_1507, %c384_1508] : memref<8x1024xf32, #tpu.memory_space<vmem>>, vector<2x64xf32>
    tpu.vector_store %arg13[%c6_1507, %c384_1508], %944 {strides = array<i32>} : memref<8x1024xf32, #tpu.memory_space<vmem>>, vector<2x64xf32>,
    %c9 = arith.constant 9 : index
    %c0_1509 = arith.constant 0 : index
    %946 = tpu.strided_load %arg15[%c9, %c0_1509] {strides = array<i32: 2, 1>} : memref<72x64xf32, #tpu.memory_space<vmem>>, vector<2x64xf32>
    %c0_1510 = arith.constant 0 : index
    %c448_1511 = arith.constant 448 : index
    %947 = vector.load %arg13[%c0_1510, %c448_1511] : memref<8x1024xf32, #tpu.memory_space<vmem>>, vector<2x64xf32>
    tpu.vector_store %arg13[%c0_1510, %c448_1511], %946 {strides = array<i32>} : memref<8x1024xf32, #tpu.memory_space<vmem>>, vector<2x64xf32>,
    %c21_1512 = arith.constant 21 : index
    %c0_1513 = arith.constant 0 : index
    %948 = tpu.strided_load %arg15[%c21_1512, %c0_1513] {strides = array<i32: 2, 1>} : memref<72x64xf32, #tpu.memory_space<vmem>>, vector<2x64xf32>
    %c2_1514 = arith.constant 2 : index
    %c448_1515 = arith.constant 448 : index
    %949 = vector.load %arg13[%c2_1514, %c448_1515] : memref<8x1024xf32, #tpu.memory_space<vmem>>, vector<2x64xf32>
    tpu.vector_store %arg13[%c2_1514, %c448_1515], %948 {strides = array<i32>} : memref<8x1024xf32, #tpu.memory_space<vmem>>, vector<2x64xf32>,
    %c45 = arith.constant 45 : index
    %c0_1516 = arith.constant 0 : index
    %950 = tpu.strided_load %arg15[%c45, %c0_1516] {strides = array<i32: 2, 1>} : memref<72x64xf32, #tpu.memory_space<vmem>>, vector<2x64xf32>
    %c4_1517 = arith.constant 4 : index
    %c448_1518 = arith.constant 448 : index
    %951 = vector.load %arg13[%c4_1517, %c448_1518] : memref<8x1024xf32, #tpu.memory_space<vmem>>, vector<2x64xf32>
    tpu.vector_store %arg13[%c4_1517, %c448_1518], %950 {strides = array<i32>} : memref<8x1024xf32, #tpu.memory_space<vmem>>, vector<2x64xf32>,
    %c57_1519 = arith.constant 57 : index
    %c0_1520 = arith.constant 0 : index
    %952 = tpu.strided_load %arg15[%c57_1519, %c0_1520] {strides = array<i32: 2, 1>} : memref<72x64xf32, #tpu.memory_space<vmem>>, vector<2x64xf32>
    %c6_1521 = arith.constant 6 : index
    %c448_1522 = arith.constant 448 : index
    %953 = vector.load %arg13[%c6_1521, %c448_1522] : memref<8x1024xf32, #tpu.memory_space<vmem>>, vector<2x64xf32>
    tpu.vector_store %arg13[%c6_1521, %c448_1522], %952 {strides = array<i32>} : memref<8x1024xf32, #tpu.memory_space<vmem>>, vector<2x64xf32>,
    %c12_1523 = arith.constant 12 : index
    %c0_1524 = arith.constant 0 : index
    %954 = tpu.strided_load %arg15[%c12_1523, %c0_1524] {strides = array<i32: 2, 1>} : memref<72x64xf32, #tpu.memory_space<vmem>>, vector<2x64xf32>
    %c0_1525 = arith.constant 0 : index
    %c512 = arith.constant 512 : index
    %955 = vector.load %arg13[%c0_1525, %c512] : memref<8x1024xf32, #tpu.memory_space<vmem>>, vector<2x64xf32>
    tpu.vector_store %arg13[%c0_1525, %c512], %954 {strides = array<i32>} : memref<8x1024xf32, #tpu.memory_space<vmem>>, vector<2x64xf32>,
    %c24_1526 = arith.constant 24 : index
    %c0_1527 = arith.constant 0 : index
    %956 = tpu.strided_load %arg15[%c24_1526, %c0_1527] {strides = array<i32: 2, 1>} : memref<72x64xf32, #tpu.memory_space<vmem>>, vector<2x64xf32>
    %c2_1528 = arith.constant 2 : index
    %c512_1529 = arith.constant 512 : index
    %957 = vector.load %arg13[%c2_1528, %c512_1529] : memref<8x1024xf32, #tpu.memory_space<vmem>>, vector<2x64xf32>
    tpu.vector_store %arg13[%c2_1528, %c512_1529], %956 {strides = array<i32>} : memref<8x1024xf32, #tpu.memory_space<vmem>>, vector<2x64xf32>,
    %c48_1530 = arith.constant 48 : index
    %c0_1531 = arith.constant 0 : index
    %958 = tpu.strided_load %arg15[%c48_1530, %c0_1531] {strides = array<i32: 2, 1>} : memref<72x64xf32, #tpu.memory_space<vmem>>, vector<2x64xf32>
    %c4_1532 = arith.constant 4 : index
    %c512_1533 = arith.constant 512 : index
    %959 = vector.load %arg13[%c4_1532, %c512_1533] : memref<8x1024xf32, #tpu.memory_space<vmem>>, vector<2x64xf32>
    tpu.vector_store %arg13[%c4_1532, %c512_1533], %958 {strides = array<i32>} : memref<8x1024xf32, #tpu.memory_space<vmem>>, vector<2x64xf32>,
    %c60_1534 = arith.constant 60 : index
    %c0_1535 = arith.constant 0 : index
    %960 = tpu.strided_load %arg15[%c60_1534, %c0_1535] {strides = array<i32: 2, 1>} : memref<72x64xf32, #tpu.memory_space<vmem>>, vector<2x64xf32>
    %c6_1536 = arith.constant 6 : index
    %c512_1537 = arith.constant 512 : index
    %961 = vector.load %arg13[%c6_1536, %c512_1537] : memref<8x1024xf32, #tpu.memory_space<vmem>>, vector<2x64xf32>
    tpu.vector_store %arg13[%c6_1536, %c512_1537], %960 {strides = array<i32>} : memref<8x1024xf32, #tpu.memory_space<vmem>>, vector<2x64xf32>,
    %c13_1538 = arith.constant 13 : index
    %c0_1539 = arith.constant 0 : index
    %962 = tpu.strided_load %arg15[%c13_1538, %c0_1539] {strides = array<i32: 2, 1>} : memref<72x64xf32, #tpu.memory_space<vmem>>, vector<2x64xf32>
    %c0_1540 = arith.constant 0 : index
    %c576_1541 = arith.constant 576 : index
    %963 = vector.load %arg13[%c0_1540, %c576_1541] : memref<8x1024xf32, #tpu.memory_space<vmem>>, vector<2x64xf32>
    tpu.vector_store %arg13[%c0_1540, %c576_1541], %962 {strides = array<i32>} : memref<8x1024xf32, #tpu.memory_space<vmem>>, vector<2x64xf32>,
    %c25_1542 = arith.constant 25 : index
    %c0_1543 = arith.constant 0 : index
    %964 = tpu.strided_load %arg15[%c25_1542, %c0_1543] {strides = array<i32: 2, 1>} : memref<72x64xf32, #tpu.memory_space<vmem>>, vector<2x64xf32>
    %c2_1544 = arith.constant 2 : index
    %c576_1545 = arith.constant 576 : index
    %965 = vector.load %arg13[%c2_1544, %c576_1545] : memref<8x1024xf32, #tpu.memory_space<vmem>>, vector<2x64xf32>
    tpu.vector_store %arg13[%c2_1544, %c576_1545], %964 {strides = array<i32>} : memref<8x1024xf32, #tpu.memory_space<vmem>>, vector<2x64xf32>,
    %c49_1546 = arith.constant 49 : index
    %c0_1547 = arith.constant 0 : index
    %966 = tpu.strided_load %arg15[%c49_1546, %c0_1547] {strides = array<i32: 2, 1>} : memref<72x64xf32, #tpu.memory_space<vmem>>, vector<2x64xf32>
    %c4_1548 = arith.constant 4 : index
    %c576_1549 = arith.constant 576 : index
    %967 = vector.load %arg13[%c4_1548, %c576_1549] : memref<8x1024xf32, #tpu.memory_space<vmem>>, vector<2x64xf32>
    tpu.vector_store %arg13[%c4_1548, %c576_1549], %966 {strides = array<i32>} : memref<8x1024xf32, #tpu.memory_space<vmem>>, vector<2x64xf32>,
    %c61_1550 = arith.constant 61 : index
    %c0_1551 = arith.constant 0 : index
    %968 = tpu.strided_load %arg15[%c61_1550, %c0_1551] {strides = array<i32: 2, 1>} : memref<72x64xf32, #tpu.memory_space<vmem>>, vector<2x64xf32>
    %c6_1552 = arith.constant 6 : index
    %c576_1553 = arith.constant 576 : index
    %969 = vector.load %arg13[%c6_1552, %c576_1553] : memref<8x1024xf32, #tpu.memory_space<vmem>>, vector<2x64xf32>
    tpu.vector_store %arg13[%c6_1552, %c576_1553], %968 {strides = array<i32>} : memref<8x1024xf32, #tpu.memory_space<vmem>>, vector<2x64xf32>,
    %c14_1554 = arith.constant 14 : index
    %c0_1555 = arith.constant 0 : index
    %970 = tpu.strided_load %arg15[%c14_1554, %c0_1555] {strides = array<i32: 2, 1>} : memref<72x64xf32, #tpu.memory_space<vmem>>, vector<2x64xf32>
    %c0_1556 = arith.constant 0 : index
    %c640 = arith.constant 640 : index
    %971 = vector.load %arg13[%c0_1556, %c640] : memref<8x1024xf32, #tpu.memory_space<vmem>>, vector<2x64xf32>
    tpu.vector_store %arg13[%c0_1556, %c640], %970 {strides = array<i32>} : memref<8x1024xf32, #tpu.memory_space<vmem>>, vector<2x64xf32>,
    %c26 = arith.constant 26 : index
    %c0_1557 = arith.constant 0 : index
    %972 = tpu.strided_load %arg15[%c26, %c0_1557] {strides = array<i32: 2, 1>} : memref<72x64xf32, #tpu.memory_space<vmem>>, vector<2x64xf32>
    %c2_1558 = arith.constant 2 : index
    %c640_1559 = arith.constant 640 : index
    %973 = vector.load %arg13[%c2_1558, %c640_1559] : memref<8x1024xf32, #tpu.memory_space<vmem>>, vector<2x64xf32>
    tpu.vector_store %arg13[%c2_1558, %c640_1559], %972 {strides = array<i32>} : memref<8x1024xf32, #tpu.memory_space<vmem>>, vector<2x64xf32>,
    %c50_1560 = arith.constant 50 : index
    %c0_1561 = arith.constant 0 : index
    %974 = tpu.strided_load %arg15[%c50_1560, %c0_1561] {strides = array<i32: 2, 1>} : memref<72x64xf32, #tpu.memory_space<vmem>>, vector<2x64xf32>
    %c4_1562 = arith.constant 4 : index
    %c640_1563 = arith.constant 640 : index
    %975 = vector.load %arg13[%c4_1562, %c640_1563] : memref<8x1024xf32, #tpu.memory_space<vmem>>, vector<2x64xf32>
    tpu.vector_store %arg13[%c4_1562, %c640_1563], %974 {strides = array<i32>} : memref<8x1024xf32, #tpu.memory_space<vmem>>, vector<2x64xf32>,
    %c62_1564 = arith.constant 62 : index
    %c0_1565 = arith.constant 0 : index
    %976 = tpu.strided_load %arg15[%c62_1564, %c0_1565] {strides = array<i32: 2, 1>} : memref<72x64xf32, #tpu.memory_space<vmem>>, vector<2x64xf32>
    %c6_1566 = arith.constant 6 : index
    %c640_1567 = arith.constant 640 : index
    %977 = vector.load %arg13[%c6_1566, %c640_1567] : memref<8x1024xf32, #tpu.memory_space<vmem>>, vector<2x64xf32>
    tpu.vector_store %arg13[%c6_1566, %c640_1567], %976 {strides = array<i32>} : memref<8x1024xf32, #tpu.memory_space<vmem>>, vector<2x64xf32>,
    %c15_1568 = arith.constant 15 : index
    %c0_1569 = arith.constant 0 : index
    %978 = tpu.strided_load %arg15[%c15_1568, %c0_1569] {strides = array<i32: 2, 1>} : memref<72x64xf32, #tpu.memory_space<vmem>>, vector<2x64xf32>
    %c0_1570 = arith.constant 0 : index
    %c704 = arith.constant 704 : index
    %979 = vector.load %arg13[%c0_1570, %c704] : memref<8x1024xf32, #tpu.memory_space<vmem>>, vector<2x64xf32>
    tpu.vector_store %arg13[%c0_1570, %c704], %978 {strides = array<i32>} : memref<8x1024xf32, #tpu.memory_space<vmem>>, vector<2x64xf32>,
    %c27 = arith.constant 27 : index
    %c0_1571 = arith.constant 0 : index
    %980 = tpu.strided_load %arg15[%c27, %c0_1571] {strides = array<i32: 2, 1>} : memref<72x64xf32, #tpu.memory_space<vmem>>, vector<2x64xf32>
    %c2_1572 = arith.constant 2 : index
    %c704_1573 = arith.constant 704 : index
    %981 = vector.load %arg13[%c2_1572, %c704_1573] : memref<8x1024xf32, #tpu.memory_space<vmem>>, vector<2x64xf32>
    tpu.vector_store %arg13[%c2_1572, %c704_1573], %980 {strides = array<i32>} : memref<8x1024xf32, #tpu.memory_space<vmem>>, vector<2x64xf32>,
    %c51_1574 = arith.constant 51 : index
    %c0_1575 = arith.constant 0 : index
    %982 = tpu.strided_load %arg15[%c51_1574, %c0_1575] {strides = array<i32: 2, 1>} : memref<72x64xf32, #tpu.memory_space<vmem>>, vector<2x64xf32>
    %c4_1576 = arith.constant 4 : index
    %c704_1577 = arith.constant 704 : index
    %983 = vector.load %arg13[%c4_1576, %c704_1577] : memref<8x1024xf32, #tpu.memory_space<vmem>>, vector<2x64xf32>
    tpu.vector_store %arg13[%c4_1576, %c704_1577], %982 {strides = array<i32>} : memref<8x1024xf32, #tpu.memory_space<vmem>>, vector<2x64xf32>,
    %c63_1578 = arith.constant 63 : index
    %c0_1579 = arith.constant 0 : index
    %984 = tpu.strided_load %arg15[%c63_1578, %c0_1579] {strides = array<i32: 2, 1>} : memref<72x64xf32, #tpu.memory_space<vmem>>, vector<2x64xf32>
    %c6_1580 = arith.constant 6 : index
    %c704_1581 = arith.constant 704 : index
    %985 = vector.load %arg13[%c6_1580, %c704_1581] : memref<8x1024xf32, #tpu.memory_space<vmem>>, vector<2x64xf32>
    tpu.vector_store %arg13[%c6_1580, %c704_1581], %984 {strides = array<i32>} : memref<8x1024xf32, #tpu.memory_space<vmem>>, vector<2x64xf32>,
    %c18_1582 = arith.constant 18 : index
    %c0_1583 = arith.constant 0 : index
    %986 = tpu.strided_load %arg15[%c18_1582, %c0_1583] {strides = array<i32: 2, 1>} : memref<72x64xf32, #tpu.memory_space<vmem>>, vector<2x64xf32>
    %c0_1584 = arith.constant 0 : index
    %c768 = arith.constant 768 : index
    %987 = vector.load %arg13[%c0_1584, %c768] : memref<8x1024xf32, #tpu.memory_space<vmem>>, vector<2x64xf32>
    tpu.vector_store %arg13[%c0_1584, %c768], %986 {strides = array<i32>} : memref<8x1024xf32, #tpu.memory_space<vmem>>, vector<2x64xf32>,
    %c30_1585 = arith.constant 30 : index
    %c0_1586 = arith.constant 0 : index
    %988 = tpu.strided_load %arg15[%c30_1585, %c0_1586] {strides = array<i32: 2, 1>} : memref<72x64xf32, #tpu.memory_space<vmem>>, vector<2x64xf32>
    %c2_1587 = arith.constant 2 : index
    %c768_1588 = arith.constant 768 : index
    %989 = vector.load %arg13[%c2_1587, %c768_1588] : memref<8x1024xf32, #tpu.memory_space<vmem>>, vector<2x64xf32>
    tpu.vector_store %arg13[%c2_1587, %c768_1588], %988 {strides = array<i32>} : memref<8x1024xf32, #tpu.memory_space<vmem>>, vector<2x64xf32>,
    %c54_1589 = arith.constant 54 : index
    %c0_1590 = arith.constant 0 : index
    %990 = tpu.strided_load %arg15[%c54_1589, %c0_1590] {strides = array<i32: 2, 1>} : memref<72x64xf32, #tpu.memory_space<vmem>>, vector<2x64xf32>
    %c4_1591 = arith.constant 4 : index
    %c768_1592 = arith.constant 768 : index
    %991 = vector.load %arg13[%c4_1591, %c768_1592] : memref<8x1024xf32, #tpu.memory_space<vmem>>, vector<2x64xf32>
    tpu.vector_store %arg13[%c4_1591, %c768_1592], %990 {strides = array<i32>} : memref<8x1024xf32, #tpu.memory_space<vmem>>, vector<2x64xf32>,
    %c66 = arith.constant 66 : index
    %c0_1593 = arith.constant 0 : index
    %992 = tpu.strided_load %arg15[%c66, %c0_1593] {strides = array<i32: 2, 1>} : memref<72x64xf32, #tpu.memory_space<vmem>>, vector<2x64xf32>
    %c6_1594 = arith.constant 6 : index
    %c768_1595 = arith.constant 768 : index
    %993 = vector.load %arg13[%c6_1594, %c768_1595] : memref<8x1024xf32, #tpu.memory_space<vmem>>, vector<2x64xf32>
    tpu.vector_store %arg13[%c6_1594, %c768_1595], %992 {strides = array<i32>} : memref<8x1024xf32, #tpu.memory_space<vmem>>, vector<2x64xf32>,
    %c19_1596 = arith.constant 19 : index
    %c0_1597 = arith.constant 0 : index
    %994 = tpu.strided_load %arg15[%c19_1596, %c0_1597] {strides = array<i32: 2, 1>} : memref<72x64xf32, #tpu.memory_space<vmem>>, vector<2x64xf32>
    %c0_1598 = arith.constant 0 : index
    %c832 = arith.constant 832 : index
    %995 = vector.load %arg13[%c0_1598, %c832] : memref<8x1024xf32, #tpu.memory_space<vmem>>, vector<2x64xf32>
    tpu.vector_store %arg13[%c0_1598, %c832], %994 {strides = array<i32>} : memref<8x1024xf32, #tpu.memory_space<vmem>>, vector<2x64xf32>,
    %c31_1599 = arith.constant 31 : index
    %c0_1600 = arith.constant 0 : index
    %996 = tpu.strided_load %arg15[%c31_1599, %c0_1600] {strides = array<i32: 2, 1>} : memref<72x64xf32, #tpu.memory_space<vmem>>, vector<2x64xf32>
    %c2_1601 = arith.constant 2 : index
    %c832_1602 = arith.constant 832 : index
    %997 = vector.load %arg13[%c2_1601, %c832_1602] : memref<8x1024xf32, #tpu.memory_space<vmem>>, vector<2x64xf32>
    tpu.vector_store %arg13[%c2_1601, %c832_1602], %996 {strides = array<i32>} : memref<8x1024xf32, #tpu.memory_space<vmem>>, vector<2x64xf32>,
    %c55_1603 = arith.constant 55 : index
    %c0_1604 = arith.constant 0 : index
    %998 = tpu.strided_load %arg15[%c55_1603, %c0_1604] {strides = array<i32: 2, 1>} : memref<72x64xf32, #tpu.memory_space<vmem>>, vector<2x64xf32>
    %c4_1605 = arith.constant 4 : index
    %c832_1606 = arith.constant 832 : index
    %999 = vector.load %arg13[%c4_1605, %c832_1606] : memref<8x1024xf32, #tpu.memory_space<vmem>>, vector<2x64xf32>
    tpu.vector_store %arg13[%c4_1605, %c832_1606], %998 {strides = array<i32>} : memref<8x1024xf32, #tpu.memory_space<vmem>>, vector<2x64xf32>,
    %c67 = arith.constant 67 : index
    %c0_1607 = arith.constant 0 : index
    %1000 = tpu.strided_load %arg15[%c67, %c0_1607] {strides = array<i32: 2, 1>} : memref<72x64xf32, #tpu.memory_space<vmem>>, vector<2x64xf32>
    %c6_1608 = arith.constant 6 : index
    %c832_1609 = arith.constant 832 : index
    %1001 = vector.load %arg13[%c6_1608, %c832_1609] : memref<8x1024xf32, #tpu.memory_space<vmem>>, vector<2x64xf32>
    tpu.vector_store %arg13[%c6_1608, %c832_1609], %1000 {strides = array<i32>} : memref<8x1024xf32, #tpu.memory_space<vmem>>, vector<2x64xf32>,
    %c20_1610 = arith.constant 20 : index
    %c0_1611 = arith.constant 0 : index
    %1002 = tpu.strided_load %arg15[%c20_1610, %c0_1611] {strides = array<i32: 2, 1>} : memref<72x64xf32, #tpu.memory_space<vmem>>, vector<2x64xf32>
    %c0_1612 = arith.constant 0 : index
    %c896 = arith.constant 896 : index
    %1003 = vector.load %arg13[%c0_1612, %c896] : memref<8x1024xf32, #tpu.memory_space<vmem>>, vector<2x64xf32>
    tpu.vector_store %arg13[%c0_1612, %c896], %1002 {strides = array<i32>} : memref<8x1024xf32, #tpu.memory_space<vmem>>, vector<2x64xf32>,
    %c32_1613 = arith.constant 32 : index
    %c0_1614 = arith.constant 0 : index
    %1004 = tpu.strided_load %arg15[%c32_1613, %c0_1614] {strides = array<i32: 2, 1>} : memref<72x64xf32, #tpu.memory_space<vmem>>, vector<2x64xf32>
    %c2_1615 = arith.constant 2 : index
    %c896_1616 = arith.constant 896 : index
    %1005 = vector.load %arg13[%c2_1615, %c896_1616] : memref<8x1024xf32, #tpu.memory_space<vmem>>, vector<2x64xf32>
    tpu.vector_store %arg13[%c2_1615, %c896_1616], %1004 {strides = array<i32>} : memref<8x1024xf32, #tpu.memory_space<vmem>>, vector<2x64xf32>,
    %c56_1617 = arith.constant 56 : index
    %c0_1618 = arith.constant 0 : index
    %1006 = tpu.strided_load %arg15[%c56_1617, %c0_1618] {strides = array<i32: 2, 1>} : memref<72x64xf32, #tpu.memory_space<vmem>>, vector<2x64xf32>
    %c4_1619 = arith.constant 4 : index
    %c896_1620 = arith.constant 896 : index
    %1007 = vector.load %arg13[%c4_1619, %c896_1620] : memref<8x1024xf32, #tpu.memory_space<vmem>>, vector<2x64xf32>
    tpu.vector_store %arg13[%c4_1619, %c896_1620], %1006 {strides = array<i32>} : memref<8x1024xf32, #tpu.memory_space<vmem>>, vector<2x64xf32>,
    %c68 = arith.constant 68 : index
    %c0_1621 = arith.constant 0 : index
    %1008 = tpu.strided_load %arg15[%c68, %c0_1621] {strides = array<i32: 2, 1>} : memref<72x64xf32, #tpu.memory_space<vmem>>, vector<2x64xf32>
    %c6_1622 = arith.constant 6 : index
    %c896_1623 = arith.constant 896 : index
    %1009 = vector.load %arg13[%c6_1622, %c896_1623] : memref<8x1024xf32, #tpu.memory_space<vmem>>, vector<2x64xf32>
    tpu.vector_store %arg13[%c6_1622, %c896_1623], %1008 {strides = array<i32>} : memref<8x1024xf32, #tpu.memory_space<vmem>>, vector<2x64xf32>,
    %c21_1624 = arith.constant 21 : index
    %c0_1625 = arith.constant 0 : index
    %1010 = tpu.strided_load %arg15[%c21_1624, %c0_1625] {strides = array<i32: 2, 1>} : memref<72x64xf32, #tpu.memory_space<vmem>>, vector<2x64xf32>
    %c0_1626 = arith.constant 0 : index
    %c960 = arith.constant 960 : index
    %1011 = vector.load %arg13[%c0_1626, %c960] : memref<8x1024xf32, #tpu.memory_space<vmem>>, vector<2x64xf32>
    tpu.vector_store %arg13[%c0_1626, %c960], %1010 {strides = array<i32>} : memref<8x1024xf32, #tpu.memory_space<vmem>>, vector<2x64xf32>,
    %c33_1627 = arith.constant 33 : index
    %c0_1628 = arith.constant 0 : index
    %1012 = tpu.strided_load %arg15[%c33_1627, %c0_1628] {strides = array<i32: 2, 1>} : memref<72x64xf32, #tpu.memory_space<vmem>>, vector<2x64xf32>
    %c2_1629 = arith.constant 2 : index
    %c960_1630 = arith.constant 960 : index
    %1013 = vector.load %arg13[%c2_1629, %c960_1630] : memref<8x1024xf32, #tpu.memory_space<vmem>>, vector<2x64xf32>
    tpu.vector_store %arg13[%c2_1629, %c960_1630], %1012 {strides = array<i32>} : memref<8x1024xf32, #tpu.memory_space<vmem>>, vector<2x64xf32>,
    %c57_1631 = arith.constant 57 : index
    %c0_1632 = arith.constant 0 : index
    %1014 = tpu.strided_load %arg15[%c57_1631, %c0_1632] {strides = array<i32: 2, 1>} : memref<72x64xf32, #tpu.memory_space<vmem>>, vector<2x64xf32>
    %c4_1633 = arith.constant 4 : index
    %c960_1634 = arith.constant 960 : index
    %1015 = vector.load %arg13[%c4_1633, %c960_1634] : memref<8x1024xf32, #tpu.memory_space<vmem>>, vector<2x64xf32>
    tpu.vector_store %arg13[%c4_1633, %c960_1634], %1014 {strides = array<i32>} : memref<8x1024xf32, #tpu.memory_space<vmem>>, vector<2x64xf32>,
    %c69 = arith.constant 69 : index
    %c0_1635 = arith.constant 0 : index
    %1016 = tpu.strided_load %arg15[%c69, %c0_1635] {strides = array<i32: 2, 1>} : memref<72x64xf32, #tpu.memory_space<vmem>>, vector<2x64xf32>
    %c6_1636 = arith.constant 6 : index
    %c960_1637 = arith.constant 960 : index
    %1017 = vector.load %arg13[%c6_1636, %c960_1637] : memref<8x1024xf32, #tpu.memory_space<vmem>>, vector<2x64xf32>
    tpu.vector_store %arg13[%c6_1636, %c960_1637], %1016 {strides = array<i32>} : memref<8x1024xf32, #tpu.memory_space<vmem>>, vector<2x64xf32>,
    %c0_1638 = arith.constant 0 : index
    %c0_1639 = arith.constant 0 : index
    %1018 = vector.load %arg13[%c0_1638, %c0_1639] : memref<8x1024xf32, #tpu.memory_space<vmem>>, vector<8x1024xf32>
    %1019 = arith.truncf %1018 : vector<8x1024xf32> to vector<8x1024xbf16>
    %c0_1640 = arith.constant 0 : index
    %c0_1641 = arith.constant 0 : index
    %1020 = vector.load %arg6[%c0_1640, %c0_1641] : memref<1024x128xbf16, #tpu.memory_space<vmem>>, vector<1024x128xbf16>
    %cst_1642 = arith.constant dense<0.000000e+00> : vector<8x128xf32>
    %1021 = tpu.matmul %1019, %1020, %cst_1642 {dimension_numbers = #tpu.dot_dimension_numbers<[1], [0], [0], [1], [0, 0, 1, 1], [], []>} : vector<8x1024xbf16>, vector<1024x128xbf16>, vector<8x128xf32> -> vector<8x128xf32>
    %c0_1643 = arith.constant 0 : index
    %c0_1644 = arith.constant 0 : index
    %1022 = vector.load %arg7[%c0_1643, %c0_1644] : memref<3x128xf32, #tpu.memory_space<vmem>>, vector<1x128xf32>
    %c1_1645 = arith.constant 1 : index
    %c0_1646 = arith.constant 0 : index
    %1023 = vector.load %arg7[%c1_1645, %c0_1646] : memref<3x128xf32, #tpu.memory_space<vmem>>, vector<1x128xf32>
    %c2_1647 = arith.constant 2 : index
    %c0_1648 = arith.constant 0 : index
    %1024 = vector.load %arg7[%c2_1647, %c0_1648] : memref<3x128xf32, #tpu.memory_space<vmem>>, vector<1x128xf32>
    %1025 = vector.broadcast %1022 : vector<1x128xf32> to vector<8x128xf32>
    %1026 = arith.addf %1021, %1025 : vector<8x128xf32>
    %cst_1649 = arith.constant 0.000000e+00 : f32
    %1027 = vector.broadcast %cst_1649 : f32 to vector<8x128xf32>
    %1028 = arith.cmpf oge, %1026, %1027 : vector<8x128xf32>
    %cst_1650 = arith.constant 0.00999999977 : f32
    %1029 = vector.broadcast %cst_1650 : f32 to vector<8x128xf32>
    %1030 = arith.mulf %1029, %1026 : vector<8x128xf32>
    %1031 = arith.select %1028, %1026, %1030 : vector<8x128xi1>, vector<8x128xf32>
    %cst_1651 = arith.constant dense<0.000000e+00> : vector<128xf32>
    %1032 = vector.multi_reduction <add>, %1031, %cst_1651 [0] : vector<8x128xf32> to vector<128xf32>
    %1033 = vector.shape_cast %1032 : vector<128xf32> to vector<1x128xf32>
    %cst_1652 = arith.constant 1.250000e-01 : f32
    %1034 = vector.broadcast %cst_1652 : f32 to vector<1x128xf32>
    %1035 = arith.mulf %1033, %1034 : vector<1x128xf32>
    %1036 = vector.broadcast %1035 : vector<1x128xf32> to vector<8x128xf32>
    %1037 = arith.subf %1031, %1036 : vector<8x128xf32>
    %1038 = arith.mulf %1037, %1037 : vector<8x128xf32>
    %cst_1653 = arith.constant dense<0.000000e+00> : vector<128xf32>
    %1039 = vector.multi_reduction <add>, %1038, %cst_1653 [0] : vector<8x128xf32> to vector<128xf32>
    %1040 = vector.shape_cast %1039 : vector<128xf32> to vector<1x128xf32>
    %cst_1654 = arith.constant 1.250000e-01 : f32
    %1041 = vector.broadcast %cst_1654 : f32 to vector<1x128xf32>
    %1042 = arith.mulf %1040, %1041 : vector<1x128xf32>
    %cst_1655 = arith.constant 9.99999974E-6 : f32
    %1043 = vector.broadcast %cst_1655 : f32 to vector<1x128xf32>
    %1044 = arith.addf %1042, %1043 : vector<1x128xf32>
    %1045 = math.rsqrt %1044 : vector<1x128xf32>
    %1046 = arith.mulf %1023, %1045 : vector<1x128xf32>
    %1047 = arith.mulf %1035, %1046 : vector<1x128xf32>
    %1048 = arith.subf %1024, %1047 : vector<1x128xf32>
    %1049 = vector.broadcast %1046 : vector<1x128xf32> to vector<8x128xf32>
    %1050 = arith.mulf %1031, %1049 : vector<8x128xf32>
    %1051 = vector.broadcast %1048 : vector<1x128xf32> to vector<8x128xf32>
    %1052 = arith.addf %1050, %1051 : vector<8x128xf32>
    %1053 = arith.truncf %1052 : vector<8x128xf32> to vector<8x128xbf16>
    %c0_1656 = arith.constant 0 : index
    %c0_1657 = arith.constant 0 : index
    %1054 = vector.load %arg8[%c0_1656, %c0_1657] : memref<128x128xbf16, #tpu.memory_space<vmem>>, vector<128x128xbf16>
    %cst_1658 = arith.constant dense<0.000000e+00> : vector<8x128xf32>
    %1055 = tpu.matmul %1053, %1054, %cst_1658 {dimension_numbers = #tpu.dot_dimension_numbers<[1], [0], [0], [1], [0, 0, 1, 1], [], []>} : vector<8x128xbf16>, vector<128x128xbf16>, vector<8x128xf32> -> vector<8x128xf32>
    %c0_1659 = arith.constant 0 : index
    %c0_1660 = arith.constant 0 : index
    %1056 = vector.load %arg9[%c0_1659, %c0_1660] : memref<1x128xf32, #tpu.memory_space<vmem>>, vector<1x128xf32>
    %1057 = vector.broadcast %1056 : vector<1x128xf32> to vector<8x128xf32>
    %1058 = arith.addf %1055, %1057 : vector<8x128xf32>
    %c0_1661 = arith.constant 0 : index
    %c0_1662 = arith.constant 0 : index
    %1059 = vector.load %arg10[%c0_1661, %c0_1662] : memref<8x128xf32, #tpu.memory_space<vmem>>, vector<8x128xf32>
    tpu.vector_store %arg10[%c0_1661, %c0_1662], %1058 {strides = array<i32>} : memref<8x128xf32, #tpu.memory_space<vmem>>, vector<8x128xf32>,
    return
  }
  func.func @transform_0(%arg0: i32) -> (i32, i32) {
    %c0_i32 = arith.constant 0 : i32
    %c0_i32_0 = arith.constant 0 : i32
    %c0_i32_1 = arith.constant 0 : i32
    return %c0_i32, %c0_i32_0 : i32, i32
  }
  func.func @transform_1(%arg0: i32) -> (i32, i32) {
    %c0_i32 = arith.constant 0 : i32
    %c0_i32_0 = arith.constant 0 : i32
    %c0_i32_1 = arith.constant 0 : i32
    return %c0_i32, %c0_i32_0 : i32, i32
  }
  func.func @transform_2(%arg0: i32) -> (i32, i32) {
    %c0_i32 = arith.constant 0 : i32
    %c0_i32_0 = arith.constant 0 : i32
    %c0_i32_1 = arith.constant 0 : i32
    return %c0_i32, %c0_i32_0 : i32, i32
  }
  func.func @transform_3(%arg0: i32) -> (i32, i32) {
    %c0_i32 = arith.constant 0 : i32
    %c0_i32_0 = arith.constant 0 : i32
    %c0_i32_1 = arith.constant 0 : i32
    return %c0_i32, %c0_i32_0 : i32, i32
  }
  func.func @transform_4(%arg0: i32) -> (i32, i32) {
    %c0_i32 = arith.constant 0 : i32
    %c0_i32_0 = arith.constant 0 : i32
    %c0_i32_1 = arith.constant 0 : i32
    return %c0_i32, %c0_i32_0 : i32, i32
  }
  func.func @transform_5(%arg0: i32) -> (i32, i32) {
    %c0_i32 = arith.constant 0 : i32
    %c0_i32_0 = arith.constant 0 : i32
    %c0_i32_1 = arith.constant 0 : i32
    return %c0_i32, %c0_i32_0 : i32, i32
  }
  func.func @transform_6(%arg0: i32) -> (i32, i32) {
    %c0_i32 = arith.constant 0 : i32
    %c0_i32_0 = arith.constant 0 : i32
    %c0_i32_1 = arith.constant 0 : i32
    return %c0_i32, %c0_i32_0 : i32, i32
  }
  func.func @transform_7(%arg0: i32) -> (i32, i32) {
    %c0_i32 = arith.constant 0 : i32
    %c0_i32_0 = arith.constant 0 : i32
    %c0_i32_1 = arith.constant 0 : i32
    return %c0_i32, %c0_i32_0 : i32, i32
  }
  func.func @transform_8(%arg0: i32) -> (i32, i32) {
    %c0_i32 = arith.constant 0 : i32
    %c0_i32_0 = arith.constant 0 : i32
    %c0_i32_1 = arith.constant 0 : i32
    return %c0_i32, %c0_i32_0 : i32, i32
  }
  func.func @transform_9(%arg0: i32) -> (i32, i32) {
    %c0_i32 = arith.constant 0 : i32
    %c0_i32_0 = arith.constant 0 : i32
    %c0_i32_1 = arith.constant 0 : i32
    return %c0_i32, %c0_i32_0 : i32, i32
  }
}

</mosaic_0001>

<llo_original>
// kernel: simple_encoder2d_forward.1
$region0: #{simple_encoder2d_forward.1}
  #allocation0 [shape = 'u32[]', space=smem, size = 0x4, offset = 0x4, fixed_abs, tag = 'smem constant byte address 0x4 - core index']
  #allocation1 [shape = 'u32[144,128]{1,0:T(1,128)}', space=vmem, size = 0x12000, scoped, tag = 'internal scratch']
  #allocation2 [shape = 'f32[128,64]{1,0:T(8,128)}', space=vmem, size = 0x10000, scoped, tag = 'scratch operand']
  #allocation3 [shape = 'f32[32,512]{1,0:T(8,128)}', space=vmem, size = 0x10000, scoped, tag = 'scratch operand']
  #allocation4 [shape = 'f32[8,1024]{1,0:T(8,128)}', space=vmem, size = 0x8000, scoped, tag = 'scratch operand']
  #allocation5 [shape = 'f32[200,32]{1,0:T(8,128)}', space=vmem, size = 0x19000, scoped, tag = 'scratch operand']
  #allocation6 [shape = 'f32[72,64]{1,0:T(8,128)}', space=vmem, size = 0x9000, scoped, tag = 'scratch operand']
  %s0 = inlined_call_operand.vmem [shape: f32[648,4], index: 0, kind: input, shape index: {}]
  %s1 = inlined_call_operand.vmem [shape: bf16[64,128], index: 1, kind: input, shape index: {}]
  %s2 = inlined_call_operand.vmem [shape: f32[3,128], index: 2, kind: input, shape index: {}]
  %s3 = inlined_call_operand.vmem [shape: bf16[512,128], index: 3, kind: input, shape index: {}]
  %s4 = inlined_call_operand.vmem [shape: f32[3,128], index: 4, kind: input, shape index: {}]
  %s5 = inlined_call_operand.vmem [shape: bf16[1024,128], index: 5, kind: input, shape index: {}]
  %s6 = inlined_call_operand.vmem [shape: f32[3,128], index: 6, kind: input, shape index: {}]
  %s7 = inlined_call_operand.vmem [shape: bf16[128,128], index: 7, kind: input, shape index: {}]
  %s8 = inlined_call_operand.vmem [shape: f32[1,128], index: 8, kind: input, shape index: {}]
  %s9 = inlined_call_operand.hbm [shape: f32[8,128], index: 9, kind: output, shape index: {}]
  %s10 = sld [smem:[#allocation0]]
  $region46: #{simple_encoder2d_forward.1} parent=0
    _
  %s12 = ssub.s32 1, %s10
  %s13 = scalar_select 0, %s12, %s10
  $region1: #{simple_encoder2d_forward.1} parent=0
    #allocation7 [shape = 'u8[4096]{0}', space=vmem, size = 0x1000, scoped, tag = 'output window, operand 0, single buffered']
    #allocation8 [shape = 's32[1]{0}', space=sflag, size = 0x4, scoped, tag = 'scoped memory for simple_encoder2d_forward.1']
    %14 = vsyncpa [#allocation8], 0
    // Predicated region
    $region2: #{simple_encoder2d_forward.1} parent=1 // pred_check
      _
    $region3: #{simple_encoder2d_forward.1} parent=1 // pred_check_branch
      %16 = sbr.rel (0) target = $region5
    $region4: #{simple_encoder2d_forward.1} parent=1 // pred_region
      _
    $region5: #{simple_encoder2d_forward.1} parent=1 // pred_fallthru
      _
    // Predicated region
    $region6: #{simple_encoder2d_forward.1} parent=1 // pred_check
      _
    $region7: #{simple_encoder2d_forward.1} parent=1 // pred_check_branch
      %18 = sbr.rel (0) target = $region9
    $region8: #{simple_encoder2d_forward.1} parent=1 // pred_region
      _
    $region9: #{simple_encoder2d_forward.1} parent=1 // pred_fallthru
      _
    // Predicated region
    $region10: #{simple_encoder2d_forward.1} parent=1 // pred_check
      _
    $region11: #{simple_encoder2d_forward.1} parent=1 // pred_check_branch
      %20 = sbr.rel (0) target = $region13
    $region12: #{simple_encoder2d_forward.1} parent=1 // pred_region
      _
    $region13: #{simple_encoder2d_forward.1} parent=1 // pred_fallthru
      _
    // Predicated region
    $region14: #{simple_encoder2d_forward.1} parent=1 // pred_check
      _
    $region15: #{simple_encoder2d_forward.1} parent=1 // pred_check_branch
      %22 = sbr.rel (0) target = $region17
    $region16: #{simple_encoder2d_forward.1} parent=1 // pred_region
      _
    $region17: #{simple_encoder2d_forward.1} parent=1 // pred_fallthru
      _
    // Predicated region
    $region18: #{simple_encoder2d_forward.1} parent=1 // pred_check
      _
    $region19: #{simple_encoder2d_forward.1} parent=1 // pred_check_branch
      %24 = sbr.rel (0) target = $region21
    $region20: #{simple_encoder2d_forward.1} parent=1 // pred_region
      _
    $region21: #{simple_encoder2d_forward.1} parent=1 // pred_fallthru
      _
    // Predicated region
    $region22: #{simple_encoder2d_forward.1} parent=1 // pred_check
      _
    $region23: #{simple_encoder2d_forward.1} parent=1 // pred_check_branch
      %26 = sbr.rel (0) target = $region25
    $region24: #{simple_encoder2d_forward.1} parent=1 // pred_region
      _
    $region25: #{simple_encoder2d_forward.1} parent=1 // pred_fallthru
      _
    // Predicated region
    $region26: #{simple_encoder2d_forward.1} parent=1 // pred_check
      _
    $region27: #{simple_encoder2d_forward.1} parent=1 // pred_check_branch
      %28 = sbr.rel (0) target = $region29
    $region28: #{simple_encoder2d_forward.1} parent=1 // pred_region
      _
    $region29: #{simple_encoder2d_forward.1} parent=1 // pred_fallthru
      _
    // Predicated region
    $region30: #{simple_encoder2d_forward.1} parent=1 // pred_check
      _
    $region31: #{simple_encoder2d_forward.1} parent=1 // pred_check_branch
      %30 = sbr.rel (0) target = $region33
    $region32: #{simple_encoder2d_forward.1} parent=1 // pred_region
      _
    $region33: #{simple_encoder2d_forward.1} parent=1 // pred_fallthru
      _
    // Predicated region
    $region34: #{simple_encoder2d_forward.1} parent=1 // pred_check
      _
    $region35: #{simple_encoder2d_forward.1} parent=1 // pred_check_branch
      %32 = sbr.rel (0) target = $region37
    $region36: #{simple_encoder2d_forward.1} parent=1 // pred_region
      _
    $region37: #{simple_encoder2d_forward.1} parent=1 // pred_fallthru
      _
    %vm34 = vcmask 261120
    %35 = vst.msk [vmem:[#allocation5] sm:$0xff] %vm34, 0.0
    %36 = vst.msk [vmem:[#allocation5 + $0x8] sm:$0xff] %vm34, 0.0
    %37 = vst.msk [vmem:[#allocation5 + $0x10] sm:$0xff] %vm34, 0.0
    %38 = vst.msk [vmem:[#allocation5 + $0x18] sm:$0xff] %vm34, 0.0
    %39 = vst.msk [vmem:[#allocation5 + $0x20] sm:$0xff] %vm34, 0.0
    %40 = vst.msk [vmem:[#allocation5 + $0x28] sm:$0xff] %vm34, 0.0
    %41 = vst.msk [vmem:[#allocation5 + $0x30] sm:$0xff] %vm34, 0.0
    %42 = vst.msk [vmem:[#allocation5 + $0x38] sm:$0xff] %vm34, 0.0
    %43 = vst.msk [vmem:[#allocation5 + $0x40] sm:$0xff] %vm34, 0.0
    %44 = vst.msk [vmem:[#allocation5 + $0x48] sm:$0xff] %vm34, 0.0
    %45 = vst.msk [vmem:[#allocation5 + $0x50] sm:$0xff] %vm34, 0.0
    %46 = vst.msk [vmem:[#allocation5 + $0x58] sm:$0xff] %vm34, 0.0
    %47 = vst.msk [vmem:[#allocation5 + $0x60] sm:$0xff] %vm34, 0.0
    %48 = vst.msk [vmem:[#allocation5 + $0x68] sm:$0xff] %vm34, 0.0
    %49 = vst.msk [vmem:[#allocation5 + $0x70] sm:$0xff] %vm34, 0.0
    %50 = vst.msk [vmem:[#allocation5 + $0x78] sm:$0xff] %vm34, 0.0
    %51 = vst.msk [vmem:[#allocation5 + $0x80] sm:$0xff] %vm34, 0.0
    %52 = vst.msk [vmem:[#allocation5 + $0x88] sm:$0xff] %vm34, 0.0
    %53 = vst.msk [vmem:[#allocation5 + $0x90] sm:$0xff] %vm34, 0.0
    %54 = vst.msk [vmem:[#allocation5 + $0x98] sm:$0xff] %vm34, 0.0
    %55 = vst.msk [vmem:[#allocation5 + $0xa0] sm:$0xff] %vm34, 0.0
    %56 = vst.msk [vmem:[#allocation5 + $0xa8] sm:$0xff] %vm34, 0.0
    %57 = vst.msk [vmem:[#allocation5 + $0xb0] sm:$0xff] %vm34, 0.0
    %58 = vst.msk [vmem:[#allocation5 + $0xb8] sm:$0xff] %vm34, 0.0
    %59 = vst.msk [vmem:[#allocation5 + $0xc0] sm:$0xff] %vm34, 0.0
    %vm60 = vcmask 523264
    %61 = vst.msk [vmem:[#allocation6] sm:$0xff] %vm60, 0.0
    %62 = vst.msk [vmem:[#allocation6 + $0x8] sm:$0xff] %vm60, 0.0
    %63 = vst.msk [vmem:[#allocation6 + $0x10] sm:$0xff] %vm60, 0.0
    %64 = vst.msk [vmem:[#allocation6 + $0x18] sm:$0xff] %vm60, 0.0
    %65 = vst.msk [vmem:[#allocation6 + $0x20] sm:$0xff] %vm60, 0.0
    %66 = vst.msk [vmem:[#allocation6 + $0x28] sm:$0xff] %vm60, 0.0
    %67 = vst.msk [vmem:[#allocation6 + $0x30] sm:$0xff] %vm60, 0.0
    %68 = vst.msk [vmem:[#allocation6 + $0x38] sm:$0xff] %vm60, 0.0
    %69 = vst.msk [vmem:[#allocation6 + $0x40] sm:$0xff] %vm60, 0.0
    %v70 = vld [vmem:[%s0] ss:$2 sm:$0xff]
    %vm71 = vcmask 31744
    %72 = vst.msk [vmem:[#allocation2] sm:$0xff] %vm71, %v70
    %s73 = scalar_lea.vmem %s0, 36
    %v74 = vld [vmem:[%s73] ss:$2 sm:$0xff]
    %75 = vst.msk [vmem:[#allocation2 + $0x8] sm:$0xff] %vm71, %v74
    %s76 = scalar_lea.vmem %s0, 72
    %v77 = vld [vmem:[%s76] ss:$2 sm:$0xff]
    %78 = vst.msk [vmem:[#allocation2 + $0x10] sm:$0xff] %vm71, %v77
    %s79 = scalar_lea.vmem %s0, 108
    %v80 = vld [vmem:[%s79] ss:$2 sm:$0xff]
    %81 = vst.msk [vmem:[#allocation2 + $0x18] sm:$0xff] %vm71, %v80
    %s82 = scalar_lea.vmem %s0, 144
    %v83 = vld [vmem:[%s82] ss:$2 sm:$0xff]
    %84 = vst.msk [vmem:[#allocation2 + $0x20] sm:$0xff] %vm71, %v83
    %s85 = scalar_lea.vmem %s0, 180
    %v86 = vld [vmem:[%s85] ss:$2 sm:$0xff]
    %87 = vst.msk [vmem:[#allocation2 + $0x28] sm:$0xff] %vm71, %v86
    %s88 = scalar_lea.vmem %s0, 216
    %v89 = vld [vmem:[%s88] ss:$2 sm:$0xff]
    %90 = vst.msk [vmem:[#allocation2 + $0x30] sm:$0xff] %vm71, %v89
    %s91 = scalar_lea.vmem %s0, 252
    %v92 = vld [vmem:[%s91] ss:$2 sm:$0xff]
    %93 = vst.msk [vmem:[#allocation2 + $0x38] sm:$0xff] %vm71, %v92
    %s94 = scalar_lea.vmem %s0, 324
    %v95 = vld [vmem:[%s94] ss:$2 sm:$0xff]
    %96 = vst.msk [vmem:[#allocation2 + $0x40] sm:$0xff] %vm71, %v95
    %s97 = scalar_lea.vmem %s0, 360
    %v98 = vld [vmem:[%s97] ss:$2 sm:$0xff]
    %99 = vst.msk [vmem:[#allocation2 + $0x48] sm:$0xff] %vm71, %v98
    %s100 = scalar_lea.vmem %s0, 396
    %v101 = vld [vmem:[%s100] ss:$2 sm:$0xff]
    %102 = vst.msk [vmem:[#allocation2 + $0x50] sm:$0xff] %vm71, %v101
    %s103 = scalar_lea.vmem %s0, 432
    %v104 = vld [vmem:[%s103] ss:$2 sm:$0xff]
    %105 = vst.msk [vmem:[#allocation2 + $0x58] sm:$0xff] %vm71, %v104
    %s106 = scalar_lea.vmem %s0, 468
    %v107 = vld [vmem:[%s106] ss:$2 sm:$0xff]
    %108 = vst.msk [vmem:[#allocation2 + $0x60] sm:$0xff] %vm71, %v107
    %s109 = scalar_lea.vmem %s0, 504
    %v110 = vld [vmem:[%s109] ss:$2 sm:$0xff]
    %111 = vst.msk [vmem:[#allocation2 + $0x68] sm:$0xff] %vm71, %v110
    %s112 = scalar_lea.vmem %s0, 540
    %v113 = vld [vmem:[%s112] ss:$2 sm:$0xff]
    %114 = vst.msk [vmem:[#allocation2 + $0x70] sm:$0xff] %vm71, %v113
    %s115 = scalar_lea.vmem %s0, 576
    %v116 = vld [vmem:[%s115] ss:$2 sm:$0xff]
    %117 = vst.msk [vmem:[#allocation2 + $0x78] sm:$0xff] %vm71, %v116
    %s118 = scalar_lea.vmem %s0, 1
    %v119 = vld [vmem:[%s118] ss:$2 sm:$0xff]
    %121 = vrot.lane.b32.xlu0 %v119, 4
    %v122 = vpop.permute.xlu0 %121
    %vm124 = vcmask 64544
    %125 = vst.msk [vmem:[#allocation2] sm:$0xff] %vm124, %v122
    %s126 = scalar_lea.vmem %s0, 37
    %v127 = vld [vmem:[%s126] ss:$2 sm:$0xff]
    %129 = vrot.lane.b32.xlu0 %v127, 4
    %v130 = vpop.permute.xlu0 %129
    %132 = vst.msk [vmem:[#allocation2 + $0x8] sm:$0xff] %vm124, %v130
    %s133 = scalar_lea.vmem %s0, 73
    %v134 = vld [vmem:[%s133] ss:$2 sm:$0xff]
    %136 = vrot.lane.b32.xlu0 %v134, 4
    %v137 = vpop.permute.xlu0 %136
    %139 = vst.msk [vmem:[#allocation2 + $0x10] sm:$0xff] %vm124, %v137
    %s140 = scalar_lea.vmem %s0, 109
    %v141 = vld [vmem:[%s140] ss:$2 sm:$0xff]
    %143 = vrot.lane.b32.xlu0 %v141, 4
    %v144 = vpop.permute.xlu0 %143
    %146 = vst.msk [vmem:[#allocation2 + $0x18] sm:$0xff] %vm124, %v144
    %s147 = scalar_lea.vmem %s0, 145
    %v148 = vld [vmem:[%s147] ss:$2 sm:$0xff]
    %150 = vrot.lane.b32.xlu0 %v148, 4
    %v151 = vpop.permute.xlu0 %150
    %153 = vst.msk [vmem:[#allocation2 + $0x20] sm:$0xff] %vm124, %v151
    %s154 = scalar_lea.vmem %s0, 181
    %v155 = vld [vmem:[%s154] ss:$2 sm:$0xff]
    %157 = vrot.lane.b32.xlu0 %v155, 4
    %v158 = vpop.permute.xlu0 %157
    %160 = vst.msk [vmem:[#allocation2 + $0x28] sm:$0xff] %vm124, %v158
    %s161 = scalar_lea.vmem %s0, 217
    %v162 = vld [vmem:[%s161] ss:$2 sm:$0xff]
    %164 = vrot.lane.b32.xlu0 %v162, 4
    %v165 = vpop.permute.xlu0 %164
    %167 = vst.msk [vmem:[#allocation2 + $0x30] sm:$0xff] %vm124, %v165
    %s168 = scalar_lea.vmem %s0, 253
    %v169 = vld [vmem:[%s168] ss:$2 sm:$0xff]
    %171 = vrot.lane.b32.xlu0 %v169, 4
    %v172 = vpop.permute.xlu0 %171
    %174 = vst.msk [vmem:[#allocation2 + $0x38] sm:$0xff] %vm124, %v172
    %s175 = scalar_lea.vmem %s0, 325
    %v176 = vld [vmem:[%s175] ss:$2 sm:$0xff]
    %178 = vrot.lane.b32.xlu0 %v176, 4
    %v179 = vpop.permute.xlu0 %178
    %181 = vst.msk [vmem:[#allocation2 + $0x40] sm:$0xff] %vm124, %v179
    %s182 = scalar_lea.vmem %s0, 361
    %v183 = vld [vmem:[%s182] ss:$2 sm:$0xff]
    %185 = vrot.lane.b32.xlu0 %v183, 4
    %v186 = vpop.permute.xlu0 %185
    %188 = vst.msk [vmem:[#allocation2 + $0x48] sm:$0xff] %vm124, %v186
    %s189 = scalar_lea.vmem %s0, 397
    %v190 = vld [vmem:[%s189] ss:$2 sm:$0xff]
    %192 = vrot.lane.b32.xlu0 %v190, 4
    %v193 = vpop.permute.xlu0 %192
    %195 = vst.msk [vmem:[#allocation2 + $0x50] sm:$0xff] %vm124, %v193
    %s196 = scalar_lea.vmem %s0, 433
    %v197 = vld [vmem:[%s196] ss:$2 sm:$0xff]
    %199 = vrot.lane.b32.xlu0 %v197, 4
    %v200 = vpop.permute.xlu0 %199
    %202 = vst.msk [vmem:[#allocation2 + $0x58] sm:$0xff] %vm124, %v200
    %s203 = scalar_lea.vmem %s0, 469
    %v204 = vld [vmem:[%s203] ss:$2 sm:$0xff]
    %206 = vrot.lane.b32.xlu0 %v204, 4
    %v207 = vpop.permute.xlu0 %206
    %209 = vst.msk [vmem:[#allocation2 + $0x60] sm:$0xff] %vm124, %v207
    %s210 = scalar_lea.vmem %s0, 505
    %v211 = vld [vmem:[%s210] ss:$2 sm:$0xff]
    %213 = vrot.lane.b32.xlu0 %v211, 4
    %v214 = vpop.permute.xlu0 %213
    %216 = vst.msk [vmem:[#allocation2 + $0x68] sm:$0xff] %vm124, %v214
    %s217 = scalar_lea.vmem %s0, 541
    %v218 = vld [vmem:[%s217] ss:$2 sm:$0xff]
    %220 = vrot.lane.b32.xlu0 %v218, 4
    %v221 = vpop.permute.xlu0 %220
    %223 = vst.msk [vmem:[#allocation2 + $0x70] sm:$0xff] %vm124, %v221
    %s224 = scalar_lea.vmem %s0, 577
    %v225 = vld [vmem:[%s224] ss:$2 sm:$0xff]
    %227 = vrot.lane.b32.xlu0 %v225, 4
    %v228 = vpop.permute.xlu0 %227
    %230 = vst.msk [vmem:[#allocation2 + $0x78] sm:$0xff] %vm124, %v228
    %s231 = scalar_lea.vmem %s0, 2
    %v232 = vld [vmem:[%s231] ss:$2 sm:$0xff]
    %234 = vrot.lane.b32.xlu0 %v232, 8
    %v235 = vpop.permute.xlu0 %234
    %vm237 = vcmask 97344
    %238 = vst.msk [vmem:[#allocation2] sm:$0xff] %vm237, %v235
    %s239 = scalar_lea.vmem %s0, 38
    %v240 = vld [vmem:[%s239] ss:$2 sm:$0xff]
    %242 = vrot.lane.b32.xlu0 %v240, 8
    %v243 = vpop.permute.xlu0 %242
    %245 = vst.msk [vmem:[#allocation2 + $0x8] sm:$0xff] %vm237, %v243
    %s246 = scalar_lea.vmem %s0, 74
    %v247 = vld [vmem:[%s246] ss:$2 sm:$0xff]
    %249 = vrot.lane.b32.xlu0 %v247, 8
    %v250 = vpop.permute.xlu0 %249
    %252 = vst.msk [vmem:[#allocation2 + $0x10] sm:$0xff] %vm237, %v250
    %s253 = scalar_lea.vmem %s0, 110
    %v254 = vld [vmem:[%s253] ss:$2 sm:$0xff]
    %256 = vrot.lane.b32.xlu0 %v254, 8
    %v257 = vpop.permute.xlu0 %256
    %259 = vst.msk [vmem:[#allocation2 + $0x18] sm:$0xff] %vm237, %v257
    %s260 = scalar_lea.vmem %s0, 146
    %v261 = vld [vmem:[%s260] ss:$2 sm:$0xff]
    %263 = vrot.lane.b32.xlu0 %v261, 8
    %v264 = vpop.permute.xlu0 %263
    %266 = vst.msk [vmem:[#allocation2 + $0x20] sm:$0xff] %vm237, %v264
    %s267 = scalar_lea.vmem %s0, 182
    %v268 = vld [vmem:[%s267] ss:$2 sm:$0xff]
    %270 = vrot.lane.b32.xlu0 %v268, 8
    %v271 = vpop.permute.xlu0 %270
    %273 = vst.msk [vmem:[#allocation2 + $0x28] sm:$0xff] %vm237, %v271
    %s274 = scalar_lea.vmem %s0, 218
    %v275 = vld [vmem:[%s274] ss:$2 sm:$0xff]
    %277 = vrot.lane.b32.xlu0 %v275, 8
    %v278 = vpop.permute.xlu0 %277
    %280 = vst.msk [vmem:[#allocation2 + $0x30] sm:$0xff] %vm237, %v278
    %s281 = scalar_lea.vmem %s0, 254
    %v282 = vld [vmem:[%s281] ss:$2 sm:$0xff]
    %284 = vrot.lane.b32.xlu0 %v282, 8
    %v285 = vpop.permute.xlu0 %284
    %287 = vst.msk [vmem:[#allocation2 + $0x38] sm:$0xff] %vm237, %v285
    %s288 = scalar_lea.vmem %s0, 326
    %v289 = vld [vmem:[%s288] ss:$2 sm:$0xff]
    %291 = vrot.lane.b32.xlu0 %v289, 8
    %v292 = vpop.permute.xlu0 %291
    %294 = vst.msk [vmem:[#allocation2 + $0x40] sm:$0xff] %vm237, %v292
    %s295 = scalar_lea.vmem %s0, 362
    %v296 = vld [vmem:[%s295] ss:$2 sm:$0xff]
    %298 = vrot.lane.b32.xlu0 %v296, 8
    %v299 = vpop.permute.xlu0 %298
    %301 = vst.msk [vmem:[#allocation2 + $0x48] sm:$0xff] %vm237, %v299
    %s302 = scalar_lea.vmem %s0, 398
    %v303 = vld [vmem:[%s302] ss:$2 sm:$0xff]
    %305 = vrot.lane.b32.xlu0 %v303, 8
    %v306 = vpop.permute.xlu0 %305
    %308 = vst.msk [vmem:[#allocation2 + $0x50] sm:$0xff] %vm237, %v306
    %s309 = scalar_lea.vmem %s0, 434
    %v310 = vld [vmem:[%s309] ss:$2 sm:$0xff]
    %312 = vrot.lane.b32.xlu0 %v310, 8
    %v313 = vpop.permute.xlu0 %312
    %315 = vst.msk [vmem:[#allocation2 + $0x58] sm:$0xff] %vm237, %v313
    %s316 = scalar_lea.vmem %s0, 470
    %v317 = vld [vmem:[%s316] ss:$2 sm:$0xff]
    %319 = vrot.lane.b32.xlu0 %v317, 8
    %v320 = vpop.permute.xlu0 %319
    %322 = vst.msk [vmem:[#allocation2 + $0x60] sm:$0xff] %vm237, %v320
    %s323 = scalar_lea.vmem %s0, 506
    %v324 = vld [vmem:[%s323] ss:$2 sm:$0xff]
    %326 = vrot.lane.b32.xlu0 %v324, 8
    %v327 = vpop.permute.xlu0 %326
    %329 = vst.msk [vmem:[#allocation2 + $0x68] sm:$0xff] %vm237, %v327
    %s330 = scalar_lea.vmem %s0, 542
    %v331 = vld [vmem:[%s330] ss:$2 sm:$0xff]
    %333 = vrot.lane.b32.xlu0 %v331, 8
    %v334 = vpop.permute.xlu0 %333
    %336 = vst.msk [vmem:[#allocation2 + $0x70] sm:$0xff] %vm237, %v334
    %s337 = scalar_lea.vmem %s0, 578
    %v338 = vld [vmem:[%s337] ss:$2 sm:$0xff]
    %340 = vrot.lane.b32.xlu0 %v338, 8
    %v341 = vpop.permute.xlu0 %340
    %343 = vst.msk [vmem:[#allocation2 + $0x78] sm:$0xff] %vm237, %v341
    %s344 = scalar_lea.vmem %s0, 3
    %v345 = vld [vmem:[%s344] ss:$2 sm:$0xff]
    %347 = vrot.lane.b32.xlu0 %v345, 12
    %v348 = vpop.permute.xlu0 %347
    %vm350 = vcmask 130144
    %351 = vst.msk [vmem:[#allocation2] sm:$0xff] %vm350, %v348
    %s352 = scalar_lea.vmem %s0, 39
    %v353 = vld [vmem:[%s352] ss:$2 sm:$0xff]
    %355 = vrot.lane.b32.xlu0 %v353, 12
    %v356 = vpop.permute.xlu0 %355
    %358 = vst.msk [vmem:[#allocation2 + $0x8] sm:$0xff] %vm350, %v356
    %s359 = scalar_lea.vmem %s0, 75
    %v360 = vld [vmem:[%s359] ss:$2 sm:$0xff]
    %362 = vrot.lane.b32.xlu0 %v360, 12
    %v363 = vpop.permute.xlu0 %362
    %365 = vst.msk [vmem:[#allocation2 + $0x10] sm:$0xff] %vm350, %v363
    %s366 = scalar_lea.vmem %s0, 111
    %v367 = vld [vmem:[%s366] ss:$2 sm:$0xff]
    %369 = vrot.lane.b32.xlu0 %v367, 12
    %v370 = vpop.permute.xlu0 %369
    %372 = vst.msk [vmem:[#allocation2 + $0x18] sm:$0xff] %vm350, %v370
    %s373 = scalar_lea.vmem %s0, 147
    %v374 = vld [vmem:[%s373] ss:$2 sm:$0xff]
    %376 = vrot.lane.b32.xlu0 %v374, 12
    %v377 = vpop.permute.xlu0 %376
    %379 = vst.msk [vmem:[#allocation2 + $0x20] sm:$0xff] %vm350, %v377
    %s380 = scalar_lea.vmem %s0, 183
    %v381 = vld [vmem:[%s380] ss:$2 sm:$0xff]
    %383 = vrot.lane.b32.xlu0 %v381, 12
    %v384 = vpop.permute.xlu0 %383
    %386 = vst.msk [vmem:[#allocation2 + $0x28] sm:$0xff] %vm350, %v384
    %s387 = scalar_lea.vmem %s0, 219
    %v388 = vld [vmem:[%s387] ss:$2 sm:$0xff]
    %390 = vrot.lane.b32.xlu0 %v388, 12
    %v391 = vpop.permute.xlu0 %390
    %393 = vst.msk [vmem:[#allocation2 + $0x30] sm:$0xff] %vm350, %v391
    %s394 = scalar_lea.vmem %s0, 255
    %v395 = vld [vmem:[%s394] ss:$2 sm:$0xff]
    %397 = vrot.lane.b32.xlu0 %v395, 12
    %v398 = vpop.permute.xlu0 %397
    %400 = vst.msk [vmem:[#allocation2 + $0x38] sm:$0xff] %vm350, %v398
    %s401 = scalar_lea.vmem %s0, 327
    %v402 = vld [vmem:[%s401] ss:$2 sm:$0xff]
    %404 = vrot.lane.b32.xlu0 %v402, 12
    %v405 = vpop.permute.xlu0 %404
    %407 = vst.msk [vmem:[#allocation2 + $0x40] sm:$0xff] %vm350, %v405
    %s408 = scalar_lea.vmem %s0, 363
    %v409 = vld [vmem:[%s408] ss:$2 sm:$0xff]
    %411 = vrot.lane.b32.xlu0 %v409, 12
    %v412 = vpop.permute.xlu0 %411
    %414 = vst.msk [vmem:[#allocation2 + $0x48] sm:$0xff] %vm350, %v412
    %s415 = scalar_lea.vmem %s0, 399
    %v416 = vld [vmem:[%s415] ss:$2 sm:$0xff]
    %418 = vrot.lane.b32.xlu0 %v416, 12
    %v419 = vpop.permute.xlu0 %418
    %421 = vst.msk [vmem:[#allocation2 + $0x50] sm:$0xff] %vm350, %v419
    %s422 = scalar_lea.vmem %s0, 435
    %v423 = vld [vmem:[%s422] ss:$2 sm:$0xff]
    %425 = vrot.lane.b32.xlu0 %v423, 12
    %v426 = vpop.permute.xlu0 %425
    %428 = vst.msk [vmem:[#allocation2 + $0x58] sm:$0xff] %vm350, %v426
    %s429 = scalar_lea.vmem %s0, 471
    %v430 = vld [vmem:[%s429] ss:$2 sm:$0xff]
    %432 = vrot.lane.b32.xlu0 %v430, 12
    %v433 = vpop.permute.xlu0 %432
    %435 = vst.msk [vmem:[#allocation2 + $0x60] sm:$0xff] %vm350, %v433
    %s436 = scalar_lea.vmem %s0, 507
    %v437 = vld [vmem:[%s436] ss:$2 sm:$0xff]
    %439 = vrot.lane.b32.xlu0 %v437, 12
    %v440 = vpop.permute.xlu0 %439
    %442 = vst.msk [vmem:[#allocation2 + $0x68] sm:$0xff] %vm350, %v440
    %s443 = scalar_lea.vmem %s0, 543
    %v444 = vld [vmem:[%s443] ss:$2 sm:$0xff]
    %446 = vrot.lane.b32.xlu0 %v444, 12
    %v447 = vpop.permute.xlu0 %446
    %449 = vst.msk [vmem:[#allocation2 + $0x70] sm:$0xff] %vm350, %v447
    %s450 = scalar_lea.vmem %s0, 579
    %v451 = vld [vmem:[%s450] ss:$2 sm:$0xff]
    %453 = vrot.lane.b32.xlu0 %v451, 12
    %v454 = vpop.permute.xlu0 %453
    %456 = vst.msk [vmem:[#allocation2 + $0x78] sm:$0xff] %vm350, %v454
    %s457 = scalar_lea.vmem %s0, 18
    %v458 = vld [vmem:[%s457] ss:$2 sm:$0xff]
    %460 = vrot.lane.b32.xlu0 %v458, 16
    %v461 = vpop.permute.xlu0 %460
    %vm463 = vcmask 162944
    %464 = vst.msk [vmem:[#allocation2] sm:$0xff] %vm463, %v461
    %s465 = scalar_lea.vmem %s0, 54
    %v466 = vld [vmem:[%s465] ss:$2 sm:$0xff]
    %468 = vrot.lane.b32.xlu0 %v466, 16
    %v469 = vpop.permute.xlu0 %468
    %471 = vst.msk [vmem:[#allocation2 + $0x8] sm:$0xff] %vm463, %v469
    %s472 = scalar_lea.vmem %s0, 90
    %v473 = vld [vmem:[%s472] ss:$2 sm:$0xff]
    %475 = vrot.lane.b32.xlu0 %v473, 16
    %v476 = vpop.permute.xlu0 %475
    %478 = vst.msk [vmem:[#allocation2 + $0x10] sm:$0xff] %vm463, %v476
    %s479 = scalar_lea.vmem %s0, 126
    %v480 = vld [vmem:[%s479] ss:$2 sm:$0xff]
    %482 = vrot.lane.b32.xlu0 %v480, 16
    %v483 = vpop.permute.xlu0 %482
    %485 = vst.msk [vmem:[#allocation2 + $0x18] sm:$0xff] %vm463, %v483
    %s486 = scalar_lea.vmem %s0, 162
    %v487 = vld [vmem:[%s486] ss:$2 sm:$0xff]
    %489 = vrot.lane.b32.xlu0 %v487, 16
    %v490 = vpop.permute.xlu0 %489
    %492 = vst.msk [vmem:[#allocation2 + $0x20] sm:$0xff] %vm463, %v490
    %s493 = scalar_lea.vmem %s0, 198
    %v494 = vld [vmem:[%s493] ss:$2 sm:$0xff]
    %496 = vrot.lane.b32.xlu0 %v494, 16
    %v497 = vpop.permute.xlu0 %496
    %499 = vst.msk [vmem:[#allocation2 + $0x28] sm:$0xff] %vm463, %v497
    %s500 = scalar_lea.vmem %s0, 234
    %v501 = vld [vmem:[%s500] ss:$2 sm:$0xff]
    %503 = vrot.lane.b32.xlu0 %v501, 16
    %v504 = vpop.permute.xlu0 %503
    %506 = vst.msk [vmem:[#allocation2 + $0x30] sm:$0xff] %vm463, %v504
    %s507 = scalar_lea.vmem %s0, 270
    %v508 = vld [vmem:[%s507] ss:$2 sm:$0xff]
    %510 = vrot.lane.b32.xlu0 %v508, 16
    %v511 = vpop.permute.xlu0 %510
    %513 = vst.msk [vmem:[#allocation2 + $0x38] sm:$0xff] %vm463, %v511
    %s514 = scalar_lea.vmem %s0, 342
    %v515 = vld [vmem:[%s514] ss:$2 sm:$0xff]
    %517 = vrot.lane.b32.xlu0 %v515, 16
    %v518 = vpop.permute.xlu0 %517
    %520 = vst.msk [vmem:[#allocation2 + $0x40] sm:$0xff] %vm463, %v518
    %s521 = scalar_lea.vmem %s0, 378
    %v522 = vld [vmem:[%s521] ss:$2 sm:$0xff]
    %524 = vrot.lane.b32.xlu0 %v522, 16
    %v525 = vpop.permute.xlu0 %524
    %527 = vst.msk [vmem:[#allocation2 + $0x48] sm:$0xff] %vm463, %v525
    %s528 = scalar_lea.vmem %s0, 414
    %v529 = vld [vmem:[%s528] ss:$2 sm:$0xff]
    %531 = vrot.lane.b32.xlu0 %v529, 16
    %v532 = vpop.permute.xlu0 %531
    %534 = vst.msk [vmem:[#allocation2 + $0x50] sm:$0xff] %vm463, %v532
    %s535 = scalar_lea.vmem %s0, 450
    %v536 = vld [vmem:[%s535] ss:$2 sm:$0xff]
    %538 = vrot.lane.b32.xlu0 %v536, 16
    %v539 = vpop.permute.xlu0 %538
    %541 = vst.msk [vmem:[#allocation2 + $0x58] sm:$0xff] %vm463, %v539
    %s542 = scalar_lea.vmem %s0, 486
    %v543 = vld [vmem:[%s542] ss:$2 sm:$0xff]
    %545 = vrot.lane.b32.xlu0 %v543, 16
    %v546 = vpop.permute.xlu0 %545
    %548 = vst.msk [vmem:[#allocation2 + $0x60] sm:$0xff] %vm463, %v546
    %s549 = scalar_lea.vmem %s0, 522
    %v550 = vld [vmem:[%s549] ss:$2 sm:$0xff]
    %552 = vrot.lane.b32.xlu0 %v550, 16
    %v553 = vpop.permute.xlu0 %552
    %555 = vst.msk [vmem:[#allocation2 + $0x68] sm:$0xff] %vm463, %v553
    %s556 = scalar_lea.vmem %s0, 558
    %v557 = vld [vmem:[%s556] ss:$2 sm:$0xff]
    %559 = vrot.lane.b32.xlu0 %v557, 16
    %v560 = vpop.permute.xlu0 %559
    %562 = vst.msk [vmem:[#allocation2 + $0x70] sm:$0xff] %vm463, %v560
    %s563 = scalar_lea.vmem %s0, 594
    %v564 = vld [vmem:[%s563] ss:$2 sm:$0xff]
    %566 = vrot.lane.b32.xlu0 %v564, 16
    %v567 = vpop.permute.xlu0 %566
    %569 = vst.msk [vmem:[#allocation2 + $0x78] sm:$0xff] %vm463, %v567
    %s570 = scalar_lea.vmem %s0, 19
    %v571 = vld [vmem:[%s570] ss:$2 sm:$0xff]
    %573 = vrot.lane.b32.xlu0 %v571, 20
    %v574 = vpop.permute.xlu0 %573
    %vm576 = vcmask 195744
    %577 = vst.msk [vmem:[#allocation2] sm:$0xff] %vm576, %v574
    %s578 = scalar_lea.vmem %s0, 55
    %v579 = vld [vmem:[%s578] ss:$2 sm:$0xff]
    %581 = vrot.lane.b32.xlu0 %v579, 20
    %v582 = vpop.permute.xlu0 %581
    %584 = vst.msk [vmem:[#allocation2 + $0x8] sm:$0xff] %vm576, %v582
    %s585 = scalar_lea.vmem %s0, 91
    %v586 = vld [vmem:[%s585] ss:$2 sm:$0xff]
    %588 = vrot.lane.b32.xlu0 %v586, 20
    %v589 = vpop.permute.xlu0 %588
    %591 = vst.msk [vmem:[#allocation2 + $0x10] sm:$0xff] %vm576, %v589
    %s592 = scalar_lea.vmem %s0, 127
    %v593 = vld [vmem:[%s592] ss:$2 sm:$0xff]
    %595 = vrot.lane.b32.xlu0 %v593, 20
    %v596 = vpop.permute.xlu0 %595
    %598 = vst.msk [vmem:[#allocation2 + $0x18] sm:$0xff] %vm576, %v596
    %s599 = scalar_lea.vmem %s0, 163
    %v600 = vld [vmem:[%s599] ss:$2 sm:$0xff]
    %602 = vrot.lane.b32.xlu0 %v600, 20
    %v603 = vpop.permute.xlu0 %602
    %605 = vst.msk [vmem:[#allocation2 + $0x20] sm:$0xff] %vm576, %v603
    %s606 = scalar_lea.vmem %s0, 199
    %v607 = vld [vmem:[%s606] ss:$2 sm:$0xff]
    %609 = vrot.lane.b32.xlu0 %v607, 20
    %v610 = vpop.permute.xlu0 %609
    %612 = vst.msk [vmem:[#allocation2 + $0x28] sm:$0xff] %vm576, %v610
    %s613 = scalar_lea.vmem %s0, 235
    %v614 = vld [vmem:[%s613] ss:$2 sm:$0xff]
    %616 = vrot.lane.b32.xlu0 %v614, 20
    %v617 = vpop.permute.xlu0 %616
    %619 = vst.msk [vmem:[#allocation2 + $0x30] sm:$0xff] %vm576, %v617
    %s620 = scalar_lea.vmem %s0, 271
    %v621 = vld [vmem:[%s620] ss:$2 sm:$0xff]
    %623 = vrot.lane.b32.xlu0 %v621, 20
    %v624 = vpop.permute.xlu0 %623
    %626 = vst.msk [vmem:[#allocation2 + $0x38] sm:$0xff] %vm576, %v624
    %s627 = scalar_lea.vmem %s0, 343
    %v628 = vld [vmem:[%s627] ss:$2 sm:$0xff]
    %630 = vrot.lane.b32.xlu0 %v628, 20
    %v631 = vpop.permute.xlu0 %630
    %633 = vst.msk [vmem:[#allocation2 + $0x40] sm:$0xff] %vm576, %v631
    %s634 = scalar_lea.vmem %s0, 379
    %v635 = vld [vmem:[%s634] ss:$2 sm:$0xff]
    %637 = vrot.lane.b32.xlu0 %v635, 20
    %v638 = vpop.permute.xlu0 %637
    %640 = vst.msk [vmem:[#allocation2 + $0x48] sm:$0xff] %vm576, %v638
    %s641 = scalar_lea.vmem %s0, 415
    %v642 = vld [vmem:[%s641] ss:$2 sm:$0xff]
    %644 = vrot.lane.b32.xlu0 %v642, 20
    %v645 = vpop.permute.xlu0 %644
    %647 = vst.msk [vmem:[#allocation2 + $0x50] sm:$0xff] %vm576, %v645
    %s648 = scalar_lea.vmem %s0, 451
    %v649 = vld [vmem:[%s648] ss:$2 sm:$0xff]
    %651 = vrot.lane.b32.xlu0 %v649, 20
    %v652 = vpop.permute.xlu0 %651
    %654 = vst.msk [vmem:[#allocation2 + $0x58] sm:$0xff] %vm576, %v652
    %s655 = scalar_lea.vmem %s0, 487
    %v656 = vld [vmem:[%s655] ss:$2 sm:$0xff]
    %658 = vrot.lane.b32.xlu0 %v656, 20
    %v659 = vpop.permute.xlu0 %658
    %661 = vst.msk [vmem:[#allocation2 + $0x60] sm:$0xff] %vm576, %v659
    %s662 = scalar_lea.vmem %s0, 523
    %v663 = vld [vmem:[%s662] ss:$2 sm:$0xff]
    %665 = vrot.lane.b32.xlu0 %v663, 20
    %v666 = vpop.permute.xlu0 %665
    %668 = vst.msk [vmem:[#allocation2 + $0x68] sm:$0xff] %vm576, %v666
    %s669 = scalar_lea.vmem %s0, 559
    %v670 = vld [vmem:[%s669] ss:$2 sm:$0xff]
    %672 = vrot.lane.b32.xlu0 %v670, 20
    %v673 = vpop.permute.xlu0 %672
    %675 = vst.msk [vmem:[#allocation2 + $0x70] sm:$0xff] %vm576, %v673
    %s676 = scalar_lea.vmem %s0, 595
    %v677 = vld [vmem:[%s676] ss:$2 sm:$0xff]
    %679 = vrot.lane.b32.xlu0 %v677, 20
    %v680 = vpop.permute.xlu0 %679
    %682 = vst.msk [vmem:[#allocation2 + $0x78] sm:$0xff] %vm576, %v680
    %s683 = scalar_lea.vmem %s0, 20
    %v684 = vld [vmem:[%s683] ss:$2 sm:$0xff]
    %686 = vrot.lane.b32.xlu0 %v684, 24
    %v687 = vpop.permute.xlu0 %686
    %vm689 = vcmask 228544
    %690 = vst.msk [vmem:[#allocation2] sm:$0xff] %vm689, %v687
    %s691 = scalar_lea.vmem %s0, 56
    %v692 = vld [vmem:[%s691] ss:$2 sm:$0xff]
    %694 = vrot.lane.b32.xlu0 %v692, 24
    %v695 = vpop.permute.xlu0 %694
    %697 = vst.msk [vmem:[#allocation2 + $0x8] sm:$0xff] %vm689, %v695
    %s698 = scalar_lea.vmem %s0, 92
    %v699 = vld [vmem:[%s698] ss:$2 sm:$0xff]
    %701 = vrot.lane.b32.xlu0 %v699, 24
    %v702 = vpop.permute.xlu0 %701
    %704 = vst.msk [vmem:[#allocation2 + $0x10] sm:$0xff] %vm689, %v702
    %s705 = scalar_lea.vmem %s0, 128
    %v706 = vld [vmem:[%s705] ss:$2 sm:$0xff]
    %708 = vrot.lane.b32.xlu0 %v706, 24
    %v709 = vpop.permute.xlu0 %708
    %711 = vst.msk [vmem:[#allocation2 + $0x18] sm:$0xff] %vm689, %v709
    %s712 = scalar_lea.vmem %s0, 164
    %v713 = vld [vmem:[%s712] ss:$2 sm:$0xff]
    %715 = vrot.lane.b32.xlu0 %v713, 24
    %v716 = vpop.permute.xlu0 %715
    %718 = vst.msk [vmem:[#allocation2 + $0x20] sm:$0xff] %vm689, %v716
    %s719 = scalar_lea.vmem %s0, 200
    %v720 = vld [vmem:[%s719] ss:$2 sm:$0xff]
    %722 = vrot.lane.b32.xlu0 %v720, 24
    %v723 = vpop.permute.xlu0 %722
    %725 = vst.msk [vmem:[#allocation2 + $0x28] sm:$0xff] %vm689, %v723
    %s726 = scalar_lea.vmem %s0, 236
    %v727 = vld [vmem:[%s726] ss:$2 sm:$0xff]
    %729 = vrot.lane.b32.xlu0 %v727, 24
    %v730 = vpop.permute.xlu0 %729
    %732 = vst.msk [vmem:[#allocation2 + $0x30] sm:$0xff] %vm689, %v730
    %s733 = scalar_lea.vmem %s0, 272
    %v734 = vld [vmem:[%s733] ss:$2 sm:$0xff]
    %736 = vrot.lane.b32.xlu0 %v734, 24
    %v737 = vpop.permute.xlu0 %736
    %739 = vst.msk [vmem:[#allocation2 + $0x38] sm:$0xff] %vm689, %v737
    %s740 = scalar_lea.vmem %s0, 344
    %v741 = vld [vmem:[%s740] ss:$2 sm:$0xff]
    %743 = vrot.lane.b32.xlu0 %v741, 24
    %v744 = vpop.permute.xlu0 %743
    %746 = vst.msk [vmem:[#allocation2 + $0x40] sm:$0xff] %vm689, %v744
    %s747 = scalar_lea.vmem %s0, 380
    %v748 = vld [vmem:[%s747] ss:$2 sm:$0xff]
    %750 = vrot.lane.b32.xlu0 %v748, 24
    %v751 = vpop.permute.xlu0 %750
    %753 = vst.msk [vmem:[#allocation2 + $0x48] sm:$0xff] %vm689, %v751
    %s754 = scalar_lea.vmem %s0, 416
    %v755 = vld [vmem:[%s754] ss:$2 sm:$0xff]
    %757 = vrot.lane.b32.xlu0 %v755, 24
    %v758 = vpop.permute.xlu0 %757
    %760 = vst.msk [vmem:[#allocation2 + $0x50] sm:$0xff] %vm689, %v758
    %s761 = scalar_lea.vmem %s0, 452
    %v762 = vld [vmem:[%s761] ss:$2 sm:$0xff]
    %764 = vrot.lane.b32.xlu0 %v762, 24
    %v765 = vpop.permute.xlu0 %764
    %767 = vst.msk [vmem:[#allocation2 + $0x58] sm:$0xff] %vm689, %v765
    %s768 = scalar_lea.vmem %s0, 488
    %v769 = vld [vmem:[%s768] ss:$2 sm:$0xff]
    %771 = vrot.lane.b32.xlu0 %v769, 24
    %v772 = vpop.permute.xlu0 %771
    %774 = vst.msk [vmem:[#allocation2 + $0x60] sm:$0xff] %vm689, %v772
    %s775 = scalar_lea.vmem %s0, 524
    %v776 = vld [vmem:[%s775] ss:$2 sm:$0xff]
    %778 = vrot.lane.b32.xlu0 %v776, 24
    %v779 = vpop.permute.xlu0 %778
    %781 = vst.msk [vmem:[#allocation2 + $0x68] sm:$0xff] %vm689, %v779
    %s782 = scalar_lea.vmem %s0, 560
    %v783 = vld [vmem:[%s782] ss:$2 sm:$0xff]
    %785 = vrot.lane.b32.xlu0 %v783, 24
    %v786 = vpop.permute.xlu0 %785
    %788 = vst.msk [vmem:[#allocation2 + $0x70] sm:$0xff] %vm689, %v786
    %s789 = scalar_lea.vmem %s0, 596
    %v790 = vld [vmem:[%s789] ss:$2 sm:$0xff]
    %792 = vrot.lane.b32.xlu0 %v790, 24
    %v793 = vpop.permute.xlu0 %792
    %795 = vst.msk [vmem:[#allocation2 + $0x78] sm:$0xff] %vm689, %v793
    %s796 = scalar_lea.vmem %s0, 21
    %v797 = vld [vmem:[%s796] ss:$2 sm:$0xff]
    %799 = vrot.lane.b32.xlu0 %v797, 28
    %v800 = vpop.permute.xlu0 %799
    %vm802 = vcmask 261344
    %803 = vst.msk [vmem:[#allocation2] sm:$0xff] %vm802, %v800
    %s804 = scalar_lea.vmem %s0, 57
    %v805 = vld [vmem:[%s804] ss:$2 sm:$0xff]
    %807 = vrot.lane.b32.xlu0 %v805, 28
    %v808 = vpop.permute.xlu0 %807
    %810 = vst.msk [vmem:[#allocation2 + $0x8] sm:$0xff] %vm802, %v808
    %s811 = scalar_lea.vmem %s0, 93
    %v812 = vld [vmem:[%s811] ss:$2 sm:$0xff]
    %814 = vrot.lane.b32.xlu0 %v812, 28
    %v815 = vpop.permute.xlu0 %814
    %817 = vst.msk [vmem:[#allocation2 + $0x10] sm:$0xff] %vm802, %v815
    %s818 = scalar_lea.vmem %s0, 129
    %v819 = vld [vmem:[%s818] ss:$2 sm:$0xff]
    %821 = vrot.lane.b32.xlu0 %v819, 28
    %v822 = vpop.permute.xlu0 %821
    %824 = vst.msk [vmem:[#allocation2 + $0x18] sm:$0xff] %vm802, %v822
    %s825 = scalar_lea.vmem %s0, 165
    %v826 = vld [vmem:[%s825] ss:$2 sm:$0xff]
    %828 = vrot.lane.b32.xlu0 %v826, 28
    %v829 = vpop.permute.xlu0 %828
    %831 = vst.msk [vmem:[#allocation2 + $0x20] sm:$0xff] %vm802, %v829
    %s832 = scalar_lea.vmem %s0, 201
    %v833 = vld [vmem:[%s832] ss:$2 sm:$0xff]
    %835 = vrot.lane.b32.xlu0 %v833, 28
    %v836 = vpop.permute.xlu0 %835
    %838 = vst.msk [vmem:[#allocation2 + $0x28] sm:$0xff] %vm802, %v836
    %s839 = scalar_lea.vmem %s0, 237
    %v840 = vld [vmem:[%s839] ss:$2 sm:$0xff]
    %842 = vrot.lane.b32.xlu0 %v840, 28
    %v843 = vpop.permute.xlu0 %842
    %845 = vst.msk [vmem:[#allocation2 + $0x30] sm:$0xff] %vm802, %v843
    %s846 = scalar_lea.vmem %s0, 273
    %v847 = vld [vmem:[%s846] ss:$2 sm:$0xff]
    %849 = vrot.lane.b32.xlu0 %v847, 28
    %v850 = vpop.permute.xlu0 %849
    %852 = vst.msk [vmem:[#allocation2 + $0x38] sm:$0xff] %vm802, %v850
    %s853 = scalar_lea.vmem %s0, 345
    %v854 = vld [vmem:[%s853] ss:$2 sm:$0xff]
    %856 = vrot.lane.b32.xlu0 %v854, 28
    %v857 = vpop.permute.xlu0 %856
    %859 = vst.msk [vmem:[#allocation2 + $0x40] sm:$0xff] %vm802, %v857
    %s860 = scalar_lea.vmem %s0, 381
    %v861 = vld [vmem:[%s860] ss:$2 sm:$0xff]
    %863 = vrot.lane.b32.xlu0 %v861, 28
    %v864 = vpop.permute.xlu0 %863
    %866 = vst.msk [vmem:[#allocation2 + $0x48] sm:$0xff] %vm802, %v864
    %s867 = scalar_lea.vmem %s0, 417
    %v868 = vld [vmem:[%s867] ss:$2 sm:$0xff]
    %870 = vrot.lane.b32.xlu0 %v868, 28
    %v871 = vpop.permute.xlu0 %870
    %873 = vst.msk [vmem:[#allocation2 + $0x50] sm:$0xff] %vm802, %v871
    %s874 = scalar_lea.vmem %s0, 453
    %v875 = vld [vmem:[%s874] ss:$2 sm:$0xff]
    %877 = vrot.lane.b32.xlu0 %v875, 28
    %v878 = vpop.permute.xlu0 %877
    %880 = vst.msk [vmem:[#allocation2 + $0x58] sm:$0xff] %vm802, %v878
    %s881 = scalar_lea.vmem %s0, 489
    %v882 = vld [vmem:[%s881] ss:$2 sm:$0xff]
    %884 = vrot.lane.b32.xlu0 %v882, 28
    %v885 = vpop.permute.xlu0 %884
    %887 = vst.msk [vmem:[#allocation2 + $0x60] sm:$0xff] %vm802, %v885
    %s888 = scalar_lea.vmem %s0, 525
    %v889 = vld [vmem:[%s888] ss:$2 sm:$0xff]
    %891 = vrot.lane.b32.xlu0 %v889, 28
    %v892 = vpop.permute.xlu0 %891
    %894 = vst.msk [vmem:[#allocation2 + $0x68] sm:$0xff] %vm802, %v892
    %s895 = scalar_lea.vmem %s0, 561
    %v896 = vld [vmem:[%s895] ss:$2 sm:$0xff]
    %898 = vrot.lane.b32.xlu0 %v896, 28
    %v899 = vpop.permute.xlu0 %898
    %901 = vst.msk [vmem:[#allocation2 + $0x70] sm:$0xff] %vm802, %v899
    %s902 = scalar_lea.vmem %s0, 597
    %v903 = vld [vmem:[%s902] ss:$2 sm:$0xff]
    %905 = vrot.lane.b32.xlu0 %v903, 28
    %v906 = vpop.permute.xlu0 %905
    %908 = vst.msk [vmem:[#allocation2 + $0x78] sm:$0xff] %vm802, %v906
    %v909 = vld [vmem:[%s73] ss:$2 sm:$0xff]
    %911 = vrot.lane.b32.xlu0 %v909, 32
    %v912 = vpop.permute.xlu0 %911
    %vm914 = vcmask 294144
    %915 = vst.msk [vmem:[#allocation2] sm:$0xff] %vm914, %v912
    %v916 = vld [vmem:[%s76] ss:$2 sm:$0xff]
    %918 = vrot.lane.b32.xlu0 %v916, 32
    %v919 = vpop.permute.xlu0 %918
    %921 = vst.msk [vmem:[#allocation2 + $0x8] sm:$0xff] %vm914, %v919
    %v922 = vld [vmem:[%s79] ss:$2 sm:$0xff]
    %924 = vrot.lane.b32.xlu0 %v922, 32
    %v925 = vpop.permute.xlu0 %924
    %927 = vst.msk [vmem:[#allocation2 + $0x10] sm:$0xff] %vm914, %v925
    %v928 = vld [vmem:[%s82] ss:$2 sm:$0xff]
    %930 = vrot.lane.b32.xlu0 %v928, 32
    %v931 = vpop.permute.xlu0 %930
    %933 = vst.msk [vmem:[#allocation2 + $0x18] sm:$0xff] %vm914, %v931
    %v934 = vld [vmem:[%s85] ss:$2 sm:$0xff]
    %936 = vrot.lane.b32.xlu0 %v934, 32
    %v937 = vpop.permute.xlu0 %936
    %939 = vst.msk [vmem:[#allocation2 + $0x20] sm:$0xff] %vm914, %v937
    %v940 = vld [vmem:[%s88] ss:$2 sm:$0xff]
    %942 = vrot.lane.b32.xlu0 %v940, 32
    %v943 = vpop.permute.xlu0 %942
    %945 = vst.msk [vmem:[#allocation2 + $0x28] sm:$0xff] %vm914, %v943
    %v946 = vld [vmem:[%s91] ss:$2 sm:$0xff]
    %948 = vrot.lane.b32.xlu0 %v946, 32
    %v949 = vpop.permute.xlu0 %948
    %951 = vst.msk [vmem:[#allocation2 + $0x30] sm:$0xff] %vm914, %v949
    %s952 = scalar_lea.vmem %s0, 288
    %v953 = vld [vmem:[%s952] ss:$2 sm:$0xff]
    %955 = vrot.lane.b32.xlu0 %v953, 32
    %v956 = vpop.permute.xlu0 %955
    %958 = vst.msk [vmem:[#allocation2 + $0x38] sm:$0xff] %vm914, %v956
    %v959 = vld [vmem:[%s97] ss:$2 sm:$0xff]
    %961 = vrot.lane.b32.xlu0 %v959, 32
    %v962 = vpop.permute.xlu0 %961
    %964 = vst.msk [vmem:[#allocation2 + $0x40] sm:$0xff] %vm914, %v962
    %v965 = vld [vmem:[%s100] ss:$2 sm:$0xff]
    %967 = vrot.lane.b32.xlu0 %v965, 32
    %v968 = vpop.permute.xlu0 %967
    %970 = vst.msk [vmem:[#allocation2 + $0x48] sm:$0xff] %vm914, %v968
    %v971 = vld [vmem:[%s103] ss:$2 sm:$0xff]
    %973 = vrot.lane.b32.xlu0 %v971, 32
    %v974 = vpop.permute.xlu0 %973
    %976 = vst.msk [vmem:[#allocation2 + $0x50] sm:$0xff] %vm914, %v974
    %v977 = vld [vmem:[%s106] ss:$2 sm:$0xff]
    %979 = vrot.lane.b32.xlu0 %v977, 32
    %v980 = vpop.permute.xlu0 %979
    %982 = vst.msk [vmem:[#allocation2 + $0x58] sm:$0xff] %vm914, %v980
    %v983 = vld [vmem:[%s109] ss:$2 sm:$0xff]
    %985 = vrot.lane.b32.xlu0 %v983, 32
    %v986 = vpop.permute.xlu0 %985
    %988 = vst.msk [vmem:[#allocation2 + $0x60] sm:$0xff] %vm914, %v986
    %v989 = vld [vmem:[%s112] ss:$2 sm:$0xff]
    %991 = vrot.lane.b32.xlu0 %v989, 32
    %v992 = vpop.permute.xlu0 %991
    %994 = vst.msk [vmem:[#allocation2 + $0x68] sm:$0xff] %vm914, %v992
    %v995 = vld [vmem:[%s115] ss:$2 sm:$0xff]
    %997 = vrot.lane.b32.xlu0 %v995, 32
    %v998 = vpop.permute.xlu0 %997
    %1000 = vst.msk [vmem:[#allocation2 + $0x70] sm:$0xff] %vm914, %v998
    %s1001 = scalar_lea.vmem %s0, 612
    %v1002 = vld [vmem:[%s1001] ss:$2 sm:$0xff]
    %1004 = vrot.lane.b32.xlu0 %v1002, 32
    %v1005 = vpop.permute.xlu0 %1004
    %1007 = vst.msk [vmem:[#allocation2 + $0x78] sm:$0xff] %vm914, %v1005
    %v1008 = vld [vmem:[%s126] ss:$2 sm:$0xff]
    %1010 = vrot.lane.b32.xlu0 %v1008, 36
    %v1011 = vpop.permute.xlu0 %1010
    %vm1013 = vcmask 326944
    %1014 = vst.msk [vmem:[#allocation2] sm:$0xff] %vm1013, %v1011
    %v1015 = vld [vmem:[%s133] ss:$2 sm:$0xff]
    %1017 = vrot.lane.b32.xlu0 %v1015, 36
    %v1018 = vpop.permute.xlu0 %1017
    %1020 = vst.msk [vmem:[#allocation2 + $0x8] sm:$0xff] %vm1013, %v1018
    %v1021 = vld [vmem:[%s140] ss:$2 sm:$0xff]
    %1023 = vrot.lane.b32.xlu0 %v1021, 36
    %v1024 = vpop.permute.xlu0 %1023
    %1026 = vst.msk [vmem:[#allocation2 + $0x10] sm:$0xff] %vm1013, %v1024
    %v1027 = vld [vmem:[%s147] ss:$2 sm:$0xff]
    %1029 = vrot.lane.b32.xlu0 %v1027, 36
    %v1030 = vpop.permute.xlu0 %1029
    %1032 = vst.msk [vmem:[#allocation2 + $0x18] sm:$0xff] %vm1013, %v1030
    %v1033 = vld [vmem:[%s154] ss:$2 sm:$0xff]
    %1035 = vrot.lane.b32.xlu0 %v1033, 36
    %v1036 = vpop.permute.xlu0 %1035
    %1038 = vst.msk [vmem:[#allocation2 + $0x20] sm:$0xff] %vm1013, %v1036
    %v1039 = vld [vmem:[%s161] ss:$2 sm:$0xff]
    %1041 = vrot.lane.b32.xlu0 %v1039, 36
    %v1042 = vpop.permute.xlu0 %1041
    %1044 = vst.msk [vmem:[#allocation2 + $0x28] sm:$0xff] %vm1013, %v1042
    %v1045 = vld [vmem:[%s168] ss:$2 sm:$0xff]
    %1047 = vrot.lane.b32.xlu0 %v1045, 36
    %v1048 = vpop.permute.xlu0 %1047
    %1050 = vst.msk [vmem:[#allocation2 + $0x30] sm:$0xff] %vm1013, %v1048
    %s1051 = scalar_lea.vmem %s0, 289
    %v1052 = vld [vmem:[%s1051] ss:$2 sm:$0xff]
    %1054 = vrot.lane.b32.xlu0 %v1052, 36
    %v1055 = vpop.permute.xlu0 %1054
    %1057 = vst.msk [vmem:[#allocation2 + $0x38] sm:$0xff] %vm1013, %v1055
    %v1058 = vld [vmem:[%s182] ss:$2 sm:$0xff]
    %1060 = vrot.lane.b32.xlu0 %v1058, 36
    %v1061 = vpop.permute.xlu0 %1060
    %1063 = vst.msk [vmem:[#allocation2 + $0x40] sm:$0xff] %vm1013, %v1061
    %v1064 = vld [vmem:[%s189] ss:$2 sm:$0xff]
    %1066 = vrot.lane.b32.xlu0 %v1064, 36
    %v1067 = vpop.permute.xlu0 %1066
    %1069 = vst.msk [vmem:[#allocation2 + $0x48] sm:$0xff] %vm1013, %v1067
    %v1070 = vld [vmem:[%s196] ss:$2 sm:$0xff]
    %1072 = vrot.lane.b32.xlu0 %v1070, 36
    %v1073 = vpop.permute.xlu0 %1072
    %1075 = vst.msk [vmem:[#allocation2 + $0x50] sm:$0xff] %vm1013, %v1073
    %v1076 = vld [vmem:[%s203] ss:$2 sm:$0xff]
    %1078 = vrot.lane.b32.xlu0 %v1076, 36
    %v1079 = vpop.permute.xlu0 %1078
    %1081 = vst.msk [vmem:[#allocation2 + $0x58] sm:$0xff] %vm1013, %v1079
    %v1082 = vld [vmem:[%s210] ss:$2 sm:$0xff]
    %1084 = vrot.lane.b32.xlu0 %v1082, 36
    %v1085 = vpop.permute.xlu0 %1084
    %1087 = vst.msk [vmem:[#allocation2 + $0x60] sm:$0xff] %vm1013, %v1085
    %v1088 = vld [vmem:[%s217] ss:$2 sm:$0xff]
    %1090 = vrot.lane.b32.xlu0 %v1088, 36
    %v1091 = vpop.permute.xlu0 %1090
    %1093 = vst.msk [vmem:[#allocation2 + $0x68] sm:$0xff] %vm1013, %v1091
    %v1094 = vld [vmem:[%s224] ss:$2 sm:$0xff]
    %1096 = vrot.lane.b32.xlu0 %v1094, 36
    %v1097 = vpop.permute.xlu0 %1096
    %1099 = vst.msk [vmem:[#allocation2 + $0x70] sm:$0xff] %vm1013, %v1097
    %s1100 = scalar_lea.vmem %s0, 613
    %v1101 = vld [vmem:[%s1100] ss:$2 sm:$0xff]
    %1103 = vrot.lane.b32.xlu0 %v1101, 36
    %v1104 = vpop.permute.xlu0 %1103
    %1106 = vst.msk [vmem:[#allocation2 + $0x78] sm:$0xff] %vm1013, %v1104
    %v1107 = vld [vmem:[%s239] ss:$2 sm:$0xff]
    %1109 = vrot.lane.b32.xlu0 %v1107, 40
    %v1110 = vpop.permute.xlu0 %1109
    %vm1112 = vcmask 359744
    %1113 = vst.msk [vmem:[#allocation2] sm:$0xff] %vm1112, %v1110
    %v1114 = vld [vmem:[%s246] ss:$2 sm:$0xff]
    %1116 = vrot.lane.b32.xlu0 %v1114, 40
    %v1117 = vpop.permute.xlu0 %1116
    %1119 = vst.msk [vmem:[#allocation2 + $0x8] sm:$0xff] %vm1112, %v1117
    %v1120 = vld [vmem:[%s253] ss:$2 sm:$0xff]
    %1122 = vrot.lane.b32.xlu0 %v1120, 40
    %v1123 = vpop.permute.xlu0 %1122
    %1125 = vst.msk [vmem:[#allocation2 + $0x10] sm:$0xff] %vm1112, %v1123
    %v1126 = vld [vmem:[%s260] ss:$2 sm:$0xff]
    %1128 = vrot.lane.b32.xlu0 %v1126, 40
    %v1129 = vpop.permute.xlu0 %1128
    %1131 = vst.msk [vmem:[#allocation2 + $0x18] sm:$0xff] %vm1112, %v1129
    %v1132 = vld [vmem:[%s267] ss:$2 sm:$0xff]
    %1134 = vrot.lane.b32.xlu0 %v1132, 40
    %v1135 = vpop.permute.xlu0 %1134
    %1137 = vst.msk [vmem:[#allocation2 + $0x20] sm:$0xff] %vm1112, %v1135
    %v1138 = vld [vmem:[%s274] ss:$2 sm:$0xff]
    %1140 = vrot.lane.b32.xlu0 %v1138, 40
    %v1141 = vpop.permute.xlu0 %1140
    %1143 = vst.msk [vmem:[#allocation2 + $0x28] sm:$0xff] %vm1112, %v1141
    %v1144 = vld [vmem:[%s281] ss:$2 sm:$0xff]
    %1146 = vrot.lane.b32.xlu0 %v1144, 40
    %v1147 = vpop.permute.xlu0 %1146
    %1149 = vst.msk [vmem:[#allocation2 + $0x30] sm:$0xff] %vm1112, %v1147
    %s1150 = scalar_lea.vmem %s0, 290
    %v1151 = vld [vmem:[%s1150] ss:$2 sm:$0xff]
    %1153 = vrot.lane.b32.xlu0 %v1151, 40
    %v1154 = vpop.permute.xlu0 %1153
    %1156 = vst.msk [vmem:[#allocation2 + $0x38] sm:$0xff] %vm1112, %v1154
    %v1157 = vld [vmem:[%s295] ss:$2 sm:$0xff]
    %1159 = vrot.lane.b32.xlu0 %v1157, 40
    %v1160 = vpop.permute.xlu0 %1159
    %1162 = vst.msk [vmem:[#allocation2 + $0x40] sm:$0xff] %vm1112, %v1160
    %v1163 = vld [vmem:[%s302] ss:$2 sm:$0xff]
    %1165 = vrot.lane.b32.xlu0 %v1163, 40
    %v1166 = vpop.permute.xlu0 %1165
    %1168 = vst.msk [vmem:[#allocation2 + $0x48] sm:$0xff] %vm1112, %v1166
    %v1169 = vld [vmem:[%s309] ss:$2 sm:$0xff]
    %1171 = vrot.lane.b32.xlu0 %v1169, 40
    %v1172 = vpop.permute.xlu0 %1171
    %1174 = vst.msk [vmem:[#allocation2 + $0x50] sm:$0xff] %vm1112, %v1172
    %v1175 = vld [vmem:[%s316] ss:$2 sm:$0xff]
    %1177 = vrot.lane.b32.xlu0 %v1175, 40
    %v1178 = vpop.permute.xlu0 %1177
    %1180 = vst.msk [vmem:[#allocation2 + $0x58] sm:$0xff] %vm1112, %v1178
    %v1181 = vld [vmem:[%s323] ss:$2 sm:$0xff]
    %1183 = vrot.lane.b32.xlu0 %v1181, 40
    %v1184 = vpop.permute.xlu0 %1183
    %1186 = vst.msk [vmem:[#allocation2 + $0x60] sm:$0xff] %vm1112, %v1184
    %v1187 = vld [vmem:[%s330] ss:$2 sm:$0xff]
    %1189 = vrot.lane.b32.xlu0 %v1187, 40
    %v1190 = vpop.permute.xlu0 %1189
    %1192 = vst.msk [vmem:[#allocation2 + $0x68] sm:$0xff] %vm1112, %v1190
    %v1193 = vld [vmem:[%s337] ss:$2 sm:$0xff]
    %1195 = vrot.lane.b32.xlu0 %v1193, 40
    %v1196 = vpop.permute.xlu0 %1195
    %1198 = vst.msk [vmem:[#allocation2 + $0x70] sm:$0xff] %vm1112, %v1196
    %s1199 = scalar_lea.vmem %s0, 614
    %v1200 = vld [vmem:[%s1199] ss:$2 sm:$0xff]
    %1202 = vrot.lane.b32.xlu0 %v1200, 40
    %v1203 = vpop.permute.xlu0 %1202
    %1205 = vst.msk [vmem:[#allocation2 + $0x78] sm:$0xff] %vm1112, %v1203
    %v1206 = vld [vmem:[%s352] ss:$2 sm:$0xff]
    %1208 = vrot.lane.b32.xlu0 %v1206, 44
    %v1209 = vpop.permute.xlu0 %1208
    %vm1211 = vcmask 392544
    %1212 = vst.msk [vmem:[#allocation2] sm:$0xff] %vm1211, %v1209
    %v1213 = vld [vmem:[%s359] ss:$2 sm:$0xff]
    %1215 = vrot.lane.b32.xlu0 %v1213, 44
    %v1216 = vpop.permute.xlu0 %1215
    %1218 = vst.msk [vmem:[#allocation2 + $0x8] sm:$0xff] %vm1211, %v1216
    %v1219 = vld [vmem:[%s366] ss:$2 sm:$0xff]
    %1221 = vrot.lane.b32.xlu0 %v1219, 44
    %v1222 = vpop.permute.xlu0 %1221
    %1224 = vst.msk [vmem:[#allocation2 + $0x10] sm:$0xff] %vm1211, %v1222
    %v1225 = vld [vmem:[%s373] ss:$2 sm:$0xff]
    %1227 = vrot.lane.b32.xlu0 %v1225, 44
    %v1228 = vpop.permute.xlu0 %1227
    %1230 = vst.msk [vmem:[#allocation2 + $0x18] sm:$0xff] %vm1211, %v1228
    %v1231 = vld [vmem:[%s380] ss:$2 sm:$0xff]
    %1233 = vrot.lane.b32.xlu0 %v1231, 44
    %v1234 = vpop.permute.xlu0 %1233
    %1236 = vst.msk [vmem:[#allocation2 + $0x20] sm:$0xff] %vm1211, %v1234
    %v1237 = vld [vmem:[%s387] ss:$2 sm:$0xff]
    %1239 = vrot.lane.b32.xlu0 %v1237, 44
    %v1240 = vpop.permute.xlu0 %1239
    %1242 = vst.msk [vmem:[#allocation2 + $0x28] sm:$0xff] %vm1211, %v1240
    %v1243 = vld [vmem:[%s394] ss:$2 sm:$0xff]
    %1245 = vrot.lane.b32.xlu0 %v1243, 44
    %v1246 = vpop.permute.xlu0 %1245
    %1248 = vst.msk [vmem:[#allocation2 + $0x30] sm:$0xff] %vm1211, %v1246
    %s1249 = scalar_lea.vmem %s0, 291
    %v1250 = vld [vmem:[%s1249] ss:$2 sm:$0xff]
    %1252 = vrot.lane.b32.xlu0 %v1250, 44
    %v1253 = vpop.permute.xlu0 %1252
    %1255 = vst.msk [vmem:[#allocation2 + $0x38] sm:$0xff] %vm1211, %v1253
    %v1256 = vld [vmem:[%s408] ss:$2 sm:$0xff]
    %1258 = vrot.lane.b32.xlu0 %v1256, 44
    %v1259 = vpop.permute.xlu0 %1258
    %1261 = vst.msk [vmem:[#allocation2 + $0x40] sm:$0xff] %vm1211, %v1259
    %v1262 = vld [vmem:[%s415] ss:$2 sm:$0xff]
    %1264 = vrot.lane.b32.xlu0 %v1262, 44
    %v1265 = vpop.permute.xlu0 %1264
    %1267 = vst.msk [vmem:[#allocation2 + $0x48] sm:$0xff] %vm1211, %v1265
    %v1268 = vld [vmem:[%s422] ss:$2 sm:$0xff]
    %1270 = vrot.lane.b32.xlu0 %v1268, 44
    %v1271 = vpop.permute.xlu0 %1270
    %1273 = vst.msk [vmem:[#allocation2 + $0x50] sm:$0xff] %vm1211, %v1271
    %v1274 = vld [vmem:[%s429] ss:$2 sm:$0xff]
    %1276 = vrot.lane.b32.xlu0 %v1274, 44
    %v1277 = vpop.permute.xlu0 %1276
    %1279 = vst.msk [vmem:[#allocation2 + $0x58] sm:$0xff] %vm1211, %v1277
    %v1280 = vld [vmem:[%s436] ss:$2 sm:$0xff]
    %1282 = vrot.lane.b32.xlu0 %v1280, 44
    %v1283 = vpop.permute.xlu0 %1282
    %1285 = vst.msk [vmem:[#allocation2 + $0x60] sm:$0xff] %vm1211, %v1283
    %v1286 = vld [vmem:[%s443] ss:$2 sm:$0xff]
    %1288 = vrot.lane.b32.xlu0 %v1286, 44
    %v1289 = vpop.permute.xlu0 %1288
    %1291 = vst.msk [vmem:[#allocation2 + $0x68] sm:$0xff] %vm1211, %v1289
    %v1292 = vld [vmem:[%s450] ss:$2 sm:$0xff]
    %1294 = vrot.lane.b32.xlu0 %v1292, 44
    %v1295 = vpop.permute.xlu0 %1294
    %1297 = vst.msk [vmem:[#allocation2 + $0x70] sm:$0xff] %vm1211, %v1295
    %s1298 = scalar_lea.vmem %s0, 615
    %v1299 = vld [vmem:[%s1298] ss:$2 sm:$0xff]
    %1301 = vrot.lane.b32.xlu0 %v1299, 44
    %v1302 = vpop.permute.xlu0 %1301
    %1304 = vst.msk [vmem:[#allocation2 + $0x78] sm:$0xff] %vm1211, %v1302
    %v1305 = vld [vmem:[%s465] ss:$2 sm:$0xff]
    %1307 = vrot.lane.b32.xlu0 %v1305, 48
    %v1308 = vpop.permute.xlu0 %1307
    %vm1310 = vcmask 425344
    %1311 = vst.msk [vmem:[#allocation2] sm:$0xff] %vm1310, %v1308
    %v1312 = vld [vmem:[%s472] ss:$2 sm:$0xff]
    %1314 = vrot.lane.b32.xlu0 %v1312, 48
    %v1315 = vpop.permute.xlu0 %1314
    %1317 = vst.msk [vmem:[#allocation2 + $0x8] sm:$0xff] %vm1310, %v1315
    %v1318 = vld [vmem:[%s479] ss:$2 sm:$0xff]
    %1320 = vrot.lane.b32.xlu0 %v1318, 48
    %v1321 = vpop.permute.xlu0 %1320
    %1323 = vst.msk [vmem:[#allocation2 + $0x10] sm:$0xff] %vm1310, %v1321
    %v1324 = vld [vmem:[%s486] ss:$2 sm:$0xff]
    %1326 = vrot.lane.b32.xlu0 %v1324, 48
    %v1327 = vpop.permute.xlu0 %1326
    %1329 = vst.msk [vmem:[#allocation2 + $0x18] sm:$0xff] %vm1310, %v1327
    %v1330 = vld [vmem:[%s493] ss:$2 sm:$0xff]
    %1332 = vrot.lane.b32.xlu0 %v1330, 48
    %v1333 = vpop.permute.xlu0 %1332
    %1335 = vst.msk [vmem:[#allocation2 + $0x20] sm:$0xff] %vm1310, %v1333
    %v1336 = vld [vmem:[%s500] ss:$2 sm:$0xff]
    %1338 = vrot.lane.b32.xlu0 %v1336, 48
    %v1339 = vpop.permute.xlu0 %1338
    %1341 = vst.msk [vmem:[#allocation2 + $0x28] sm:$0xff] %vm1310, %v1339
    %v1342 = vld [vmem:[%s507] ss:$2 sm:$0xff]
    %1344 = vrot.lane.b32.xlu0 %v1342, 48
    %v1345 = vpop.permute.xlu0 %1344
    %1347 = vst.msk [vmem:[#allocation2 + $0x30] sm:$0xff] %vm1310, %v1345
    %s1348 = scalar_lea.vmem %s0, 306
    %v1349 = vld [vmem:[%s1348] ss:$2 sm:$0xff]
    %1351 = vrot.lane.b32.xlu0 %v1349, 48
    %v1352 = vpop.permute.xlu0 %1351
    %1354 = vst.msk [vmem:[#allocation2 + $0x38] sm:$0xff] %vm1310, %v1352
    %v1355 = vld [vmem:[%s521] ss:$2 sm:$0xff]
    %1357 = vrot.lane.b32.xlu0 %v1355, 48
    %v1358 = vpop.permute.xlu0 %1357
    %1360 = vst.msk [vmem:[#allocation2 + $0x40] sm:$0xff] %vm1310, %v1358
    %v1361 = vld [vmem:[%s528] ss:$2 sm:$0xff]
    %1363 = vrot.lane.b32.xlu0 %v1361, 48
    %v1364 = vpop.permute.xlu0 %1363
    %1366 = vst.msk [vmem:[#allocation2 + $0x48] sm:$0xff] %vm1310, %v1364
    %v1367 = vld [vmem:[%s535] ss:$2 sm:$0xff]
    %1369 = vrot.lane.b32.xlu0 %v1367, 48
    %v1370 = vpop.permute.xlu0 %1369
    %1372 = vst.msk [vmem:[#allocation2 + $0x50] sm:$0xff] %vm1310, %v1370
    %v1373 = vld [vmem:[%s542] ss:$2 sm:$0xff]
    %1375 = vrot.lane.b32.xlu0 %v1373, 48
    %v1376 = vpop.permute.xlu0 %1375
    %1378 = vst.msk [vmem:[#allocation2 + $0x58] sm:$0xff] %vm1310, %v1376
    %v1379 = vld [vmem:[%s549] ss:$2 sm:$0xff]
    %1381 = vrot.lane.b32.xlu0 %v1379, 48
    %v1382 = vpop.permute.xlu0 %1381
    %1384 = vst.msk [vmem:[#allocation2 + $0x60] sm:$0xff] %vm1310, %v1382
    %v1385 = vld [vmem:[%s556] ss:$2 sm:$0xff]
    %1387 = vrot.lane.b32.xlu0 %v1385, 48
    %v1388 = vpop.permute.xlu0 %1387
    %1390 = vst.msk [vmem:[#allocation2 + $0x68] sm:$0xff] %vm1310, %v1388
    %v1391 = vld [vmem:[%s563] ss:$2 sm:$0xff]
    %1393 = vrot.lane.b32.xlu0 %v1391, 48
    %v1394 = vpop.permute.xlu0 %1393
    %1396 = vst.msk [vmem:[#allocation2 + $0x70] sm:$0xff] %vm1310, %v1394
    %s1397 = scalar_lea.vmem %s0, 630
    %v1398 = vld [vmem:[%s1397] ss:$2 sm:$0xff]
    %1400 = vrot.lane.b32.xlu0 %v1398, 48
    %v1401 = vpop.permute.xlu0 %1400
    %1403 = vst.msk [vmem:[#allocation2 + $0x78] sm:$0xff] %vm1310, %v1401
    %v1404 = vld [vmem:[%s578] ss:$2 sm:$0xff]
    %1406 = vrot.lane.b32.xlu0 %v1404, 52
    %v1407 = vpop.permute.xlu0 %1406
    %vm1409 = vcmask 458144
    %1410 = vst.msk [vmem:[#allocation2] sm:$0xff] %vm1409, %v1407
    %v1411 = vld [vmem:[%s585] ss:$2 sm:$0xff]
    %1413 = vrot.lane.b32.xlu0 %v1411, 52
    %v1414 = vpop.permute.xlu0 %1413
    %1416 = vst.msk [vmem:[#allocation2 + $0x8] sm:$0xff] %vm1409, %v1414
    %v1417 = vld [vmem:[%s592] ss:$2 sm:$0xff]
    %1419 = vrot.lane.b32.xlu0 %v1417, 52
    %v1420 = vpop.permute.xlu0 %1419
    %1422 = vst.msk [vmem:[#allocation2 + $0x10] sm:$0xff] %vm1409, %v1420
    %v1423 = vld [vmem:[%s599] ss:$2 sm:$0xff]
    %1425 = vrot.lane.b32.xlu0 %v1423, 52
    %v1426 = vpop.permute.xlu0 %1425
    %1428 = vst.msk [vmem:[#allocation2 + $0x18] sm:$0xff] %vm1409, %v1426
    %v1429 = vld [vmem:[%s606] ss:$2 sm:$0xff]
    %1431 = vrot.lane.b32.xlu0 %v1429, 52
    %v1432 = vpop.permute.xlu0 %1431
    %1434 = vst.msk [vmem:[#allocation2 + $0x20] sm:$0xff] %vm1409, %v1432
    %v1435 = vld [vmem:[%s613] ss:$2 sm:$0xff]
    %1437 = vrot.lane.b32.xlu0 %v1435, 52
    %v1438 = vpop.permute.xlu0 %1437
    %1440 = vst.msk [vmem:[#allocation2 + $0x28] sm:$0xff] %vm1409, %v1438
    %v1441 = vld [vmem:[%s620] ss:$2 sm:$0xff]
    %1443 = vrot.lane.b32.xlu0 %v1441, 52
    %v1444 = vpop.permute.xlu0 %1443
    %1446 = vst.msk [vmem:[#allocation2 + $0x30] sm:$0xff] %vm1409, %v1444
    %s1447 = scalar_lea.vmem %s0, 307
    %v1448 = vld [vmem:[%s1447] ss:$2 sm:$0xff]
    %1450 = vrot.lane.b32.xlu0 %v1448, 52
    %v1451 = vpop.permute.xlu0 %1450
    %1453 = vst.msk [vmem:[#allocation2 + $0x38] sm:$0xff] %vm1409, %v1451
    %v1454 = vld [vmem:[%s634] ss:$2 sm:$0xff]
    %1456 = vrot.lane.b32.xlu0 %v1454, 52
    %v1457 = vpop.permute.xlu0 %1456
    %1459 = vst.msk [vmem:[#allocation2 + $0x40] sm:$0xff] %vm1409, %v1457
    %v1460 = vld [vmem:[%s641] ss:$2 sm:$0xff]
    %1462 = vrot.lane.b32.xlu0 %v1460, 52
    %v1463 = vpop.permute.xlu0 %1462
    %1465 = vst.msk [vmem:[#allocation2 + $0x48] sm:$0xff] %vm1409, %v1463
    %v1466 = vld [vmem:[%s648] ss:$2 sm:$0xff]
    %1468 = vrot.lane.b32.xlu0 %v1466, 52
    %v1469 = vpop.permute.xlu0 %1468
    %1471 = vst.msk [vmem:[#allocation2 + $0x50] sm:$0xff] %vm1409, %v1469
    %v1472 = vld [vmem:[%s655] ss:$2 sm:$0xff]
    %1474 = vrot.lane.b32.xlu0 %v1472, 52
    %v1475 = vpop.permute.xlu0 %1474
    %1477 = vst.msk [vmem:[#allocation2 + $0x58] sm:$0xff] %vm1409, %v1475
    %v1478 = vld [vmem:[%s662] ss:$2 sm:$0xff]
    %1480 = vrot.lane.b32.xlu0 %v1478, 52
    %v1481 = vpop.permute.xlu0 %1480
    %1483 = vst.msk [vmem:[#allocation2 + $0x60] sm:$0xff] %vm1409, %v1481
    %v1484 = vld [vmem:[%s669] ss:$2 sm:$0xff]
    %1486 = vrot.lane.b32.xlu0 %v1484, 52
    %v1487 = vpop.permute.xlu0 %1486
    %1489 = vst.msk [vmem:[#allocation2 + $0x68] sm:$0xff] %vm1409, %v1487
    %v1490 = vld [vmem:[%s676] ss:$2 sm:$0xff]
    %1492 = vrot.lane.b32.xlu0 %v1490, 52
    %v1493 = vpop.permute.xlu0 %1492
    %1495 = vst.msk [vmem:[#allocation2 + $0x70] sm:$0xff] %vm1409, %v1493
    %s1496 = scalar_lea.vmem %s0, 631
    %v1497 = vld [vmem:[%s1496] ss:$2 sm:$0xff]
    %1499 = vrot.lane.b32.xlu0 %v1497, 52
    %v1500 = vpop.permute.xlu0 %1499
    %1502 = vst.msk [vmem:[#allocation2 + $0x78] sm:$0xff] %vm1409, %v1500
    %v1503 = vld [vmem:[%s691] ss:$2 sm:$0xff]
    %1505 = vrot.lane.b32.xlu0 %v1503, 56
    %v1506 = vpop.permute.xlu0 %1505
    %vm1508 = vcmask 490944
    %1509 = vst.msk [vmem:[#allocation2] sm:$0xff] %vm1508, %v1506
    %v1510 = vld [vmem:[%s698] ss:$2 sm:$0xff]
    %1512 = vrot.lane.b32.xlu0 %v1510, 56
    %v1513 = vpop.permute.xlu0 %1512
    %1515 = vst.msk [vmem:[#allocation2 + $0x8] sm:$0xff] %vm1508, %v1513
    %v1516 = vld [vmem:[%s705] ss:$2 sm:$0xff]
    %1518 = vrot.lane.b32.xlu0 %v1516, 56
    %v1519 = vpop.permute.xlu0 %1518
    %1521 = vst.msk [vmem:[#allocation2 + $0x10] sm:$0xff] %vm1508, %v1519
    %v1522 = vld [vmem:[%s712] ss:$2 sm:$0xff]
    %1524 = vrot.lane.b32.xlu0 %v1522, 56
    %v1525 = vpop.permute.xlu0 %1524
    %1527 = vst.msk [vmem:[#allocation2 + $0x18] sm:$0xff] %vm1508, %v1525
    %v1528 = vld [vmem:[%s719] ss:$2 sm:$0xff]
    %1530 = vrot.lane.b32.xlu0 %v1528, 56
    %v1531 = vpop.permute.xlu0 %1530
    %1533 = vst.msk [vmem:[#allocation2 + $0x20] sm:$0xff] %vm1508, %v1531
    %v1534 = vld [vmem:[%s726] ss:$2 sm:$0xff]
    %1536 = vrot.lane.b32.xlu0 %v1534, 56
    %v1537 = vpop.permute.xlu0 %1536
    %1539 = vst.msk [vmem:[#allocation2 + $0x28] sm:$0xff] %vm1508, %v1537
    %v1540 = vld [vmem:[%s733] ss:$2 sm:$0xff]
    %1542 = vrot.lane.b32.xlu0 %v1540, 56
    %v1543 = vpop.permute.xlu0 %1542
    %1545 = vst.msk [vmem:[#allocation2 + $0x30] sm:$0xff] %vm1508, %v1543
    %s1546 = scalar_lea.vmem %s0, 308
    %v1547 = vld [vmem:[%s1546] ss:$2 sm:$0xff]
    %1549 = vrot.lane.b32.xlu0 %v1547, 56
    %v1550 = vpop.permute.xlu0 %1549
    %1552 = vst.msk [vmem:[#allocation2 + $0x38] sm:$0xff] %vm1508, %v1550
    %v1553 = vld [vmem:[%s747] ss:$2 sm:$0xff]
    %1555 = vrot.lane.b32.xlu0 %v1553, 56
    %v1556 = vpop.permute.xlu0 %1555
    %1558 = vst.msk [vmem:[#allocation2 + $0x40] sm:$0xff] %vm1508, %v1556
    %v1559 = vld [vmem:[%s754] ss:$2 sm:$0xff]
    %1561 = vrot.lane.b32.xlu0 %v1559, 56
    %v1562 = vpop.permute.xlu0 %1561
    %1564 = vst.msk [vmem:[#allocation2 + $0x48] sm:$0xff] %vm1508, %v1562
    %v1565 = vld [vmem:[%s761] ss:$2 sm:$0xff]
    %1567 = vrot.lane.b32.xlu0 %v1565, 56
    %v1568 = vpop.permute.xlu0 %1567
    %1570 = vst.msk [vmem:[#allocation2 + $0x50] sm:$0xff] %vm1508, %v1568
    %v1571 = vld [vmem:[%s768] ss:$2 sm:$0xff]
    %1573 = vrot.lane.b32.xlu0 %v1571, 56
    %v1574 = vpop.permute.xlu0 %1573
    %1576 = vst.msk [vmem:[#allocation2 + $0x58] sm:$0xff] %vm1508, %v1574
    %v1577 = vld [vmem:[%s775] ss:$2 sm:$0xff]
    %1579 = vrot.lane.b32.xlu0 %v1577, 56
    %v1580 = vpop.permute.xlu0 %1579
    %1582 = vst.msk [vmem:[#allocation2 + $0x60] sm:$0xff] %vm1508, %v1580
    %v1583 = vld [vmem:[%s782] ss:$2 sm:$0xff]
    %1585 = vrot.lane.b32.xlu0 %v1583, 56
    %v1586 = vpop.permute.xlu0 %1585
    %1588 = vst.msk [vmem:[#allocation2 + $0x68] sm:$0xff] %vm1508, %v1586
    %v1589 = vld [vmem:[%s789] ss:$2 sm:$0xff]
    %1591 = vrot.lane.b32.xlu0 %v1589, 56
    %v1592 = vpop.permute.xlu0 %1591
    %1594 = vst.msk [vmem:[#allocation2 + $0x70] sm:$0xff] %vm1508, %v1592
    %s1595 = scalar_lea.vmem %s0, 632
    %v1596 = vld [vmem:[%s1595] ss:$2 sm:$0xff]
    %1598 = vrot.lane.b32.xlu0 %v1596, 56
    %v1599 = vpop.permute.xlu0 %1598
    %1601 = vst.msk [vmem:[#allocation2 + $0x78] sm:$0xff] %vm1508, %v1599
    %v1602 = vld [vmem:[%s804] ss:$2 sm:$0xff]
    %1604 = vrot.lane.b32.xlu0 %v1602, 60
    %v1605 = vpop.permute.xlu0 %1604
    %vm1607 = vcmask 523744
    %1608 = vst.msk [vmem:[#allocation2] sm:$0xff] %vm1607, %v1605
    %v1609 = vld [vmem:[%s811] ss:$2 sm:$0xff]
    %1611 = vrot.lane.b32.xlu0 %v1609, 60
    %v1612 = vpop.permute.xlu0 %1611
    %1614 = vst.msk [vmem:[#allocation2 + $0x8] sm:$0xff] %vm1607, %v1612
    %v1615 = vld [vmem:[%s818] ss:$2 sm:$0xff]
    %1617 = vrot.lane.b32.xlu0 %v1615, 60
    %v1618 = vpop.permute.xlu0 %1617
    %1620 = vst.msk [vmem:[#allocation2 + $0x10] sm:$0xff] %vm1607, %v1618
    %v1621 = vld [vmem:[%s825] ss:$2 sm:$0xff]
    %1623 = vrot.lane.b32.xlu0 %v1621, 60
    %v1624 = vpop.permute.xlu0 %1623
    %1626 = vst.msk [vmem:[#allocation2 + $0x18] sm:$0xff] %vm1607, %v1624
    %v1627 = vld [vmem:[%s832] ss:$2 sm:$0xff]
    %1629 = vrot.lane.b32.xlu0 %v1627, 60
    %v1630 = vpop.permute.xlu0 %1629
    %1632 = vst.msk [vmem:[#allocation2 + $0x20] sm:$0xff] %vm1607, %v1630
    %v1633 = vld [vmem:[%s839] ss:$2 sm:$0xff]
    %1635 = vrot.lane.b32.xlu0 %v1633, 60
    %v1636 = vpop.permute.xlu0 %1635
    %1638 = vst.msk [vmem:[#allocation2 + $0x28] sm:$0xff] %vm1607, %v1636
    %v1639 = vld [vmem:[%s846] ss:$2 sm:$0xff]
    %1641 = vrot.lane.b32.xlu0 %v1639, 60
    %v1642 = vpop.permute.xlu0 %1641
    %1644 = vst.msk [vmem:[#allocation2 + $0x30] sm:$0xff] %vm1607, %v1642
    %s1645 = scalar_lea.vmem %s0, 309
    %v1646 = vld [vmem:[%s1645] ss:$2 sm:$0xff]
    %1648 = vrot.lane.b32.xlu0 %v1646, 60
    %v1649 = vpop.permute.xlu0 %1648
    %1651 = vst.msk [vmem:[#allocation2 + $0x38] sm:$0xff] %vm1607, %v1649
    %v1652 = vld [vmem:[%s860] ss:$2 sm:$0xff]
    %1654 = vrot.lane.b32.xlu0 %v1652, 60
    %v1655 = vpop.permute.xlu0 %1654
    %1657 = vst.msk [vmem:[#allocation2 + $0x40] sm:$0xff] %vm1607, %v1655
    %v1658 = vld [vmem:[%s867] ss:$2 sm:$0xff]
    %1660 = vrot.lane.b32.xlu0 %v1658, 60
    %v1661 = vpop.permute.xlu0 %1660
    %1663 = vst.msk [vmem:[#allocation2 + $0x48] sm:$0xff] %vm1607, %v1661
    %v1664 = vld [vmem:[%s874] ss:$2 sm:$0xff]
    %1666 = vrot.lane.b32.xlu0 %v1664, 60
    %v1667 = vpop.permute.xlu0 %1666
    %1669 = vst.msk [vmem:[#allocation2 + $0x50] sm:$0xff] %vm1607, %v1667
    %v1670 = vld [vmem:[%s881] ss:$2 sm:$0xff]
    %1672 = vrot.lane.b32.xlu0 %v1670, 60
    %v1673 = vpop.permute.xlu0 %1672
    %1675 = vst.msk [vmem:[#allocation2 + $0x58] sm:$0xff] %vm1607, %v1673
    %v1676 = vld [vmem:[%s888] ss:$2 sm:$0xff]
    %1678 = vrot.lane.b32.xlu0 %v1676, 60
    %v1679 = vpop.permute.xlu0 %1678
    %1681 = vst.msk [vmem:[#allocation2 + $0x60] sm:$0xff] %vm1607, %v1679
    %v1682 = vld [vmem:[%s895] ss:$2 sm:$0xff]
    %1684 = vrot.lane.b32.xlu0 %v1682, 60
    %v1685 = vpop.permute.xlu0 %1684
    %1687 = vst.msk [vmem:[#allocation2 + $0x68] sm:$0xff] %vm1607, %v1685
    %v1688 = vld [vmem:[%s902] ss:$2 sm:$0xff]
    %1690 = vrot.lane.b32.xlu0 %v1688, 60
    %v1691 = vpop.permute.xlu0 %1690
    %1693 = vst.msk [vmem:[#allocation2 + $0x70] sm:$0xff] %vm1607, %v1691
    %s1694 = scalar_lea.vmem %s0, 633
    %v1695 = vld [vmem:[%s1694] ss:$2 sm:$0xff]
    %1697 = vrot.lane.b32.xlu0 %v1695, 60
    %v1698 = vpop.permute.xlu0 %1697
    %1700 = vst.msk [vmem:[#allocation2 + $0x78] sm:$0xff] %vm1607, %v1698
    %v1701 = vld [vmem:[#allocation2] sm:$0xff]
    %v1702 = vld [vmem:[#allocation2 + $0x8] sm:$0xff]
    %v1703 = vld [vmem:[#allocation2 + $0x10] sm:$0xff]
    %v1704 = vld [vmem:[#allocation2 + $0x18] sm:$0xff]
    %v1705 = vld [vmem:[#allocation2 + $0x20] sm:$0xff]
    %v1706 = vld [vmem:[#allocation2 + $0x28] sm:$0xff]
    %v1707 = vld [vmem:[#allocation2 + $0x30] sm:$0xff]
    %v1708 = vld [vmem:[#allocation2 + $0x38] sm:$0xff]
    %v1709 = vld [vmem:[#allocation2 + $0x40] sm:$0xff]
    %v1710 = vld [vmem:[#allocation2 + $0x48] sm:$0xff]
    %v1711 = vld [vmem:[#allocation2 + $0x50] sm:$0xff]
    %v1712 = vld [vmem:[#allocation2 + $0x58] sm:$0xff]
    %v1713 = vld [vmem:[#allocation2 + $0x60] sm:$0xff]
    %v1714 = vld [vmem:[#allocation2 + $0x68] sm:$0xff]
    %v1715 = vld [vmem:[#allocation2 + $0x70] sm:$0xff]
    %v1716 = vld [vmem:[#allocation2 + $0x78] sm:$0xff]
    %v1717 = vpack.c.bf16 %v1702, %v1701
    %v1718 = vpack.c.bf16 %v1704, %v1703
    %v1719 = vpack.c.bf16 %v1706, %v1705
    %v1720 = vpack.c.bf16 %v1708, %v1707
    %v1721 = vpack.c.bf16 %v1710, %v1709
    %v1722 = vpack.c.bf16 %v1712, %v1711
    %v1723 = vpack.c.bf16 %v1714, %v1713
    %v1724 = vpack.c.bf16 %v1716, %v1715
    %v1725 = vld [vmem:[%s1] sm:$0xf]
    %v1726 = vld [vmem:[%s1 + $0x4] sm:$0xf]
    %v1727 = vld [vmem:[%s1 + $0x8] sm:$0xf]
    %v1728 = vld [vmem:[%s1 + $0xc] sm:$0xf]
    %v1729 = vld [vmem:[%s1 + $0x10] sm:$0xf]
    %v1730 = vld [vmem:[%s1 + $0x14] sm:$0xf]
    %v1731 = vld [vmem:[%s1 + $0x18] sm:$0xf]
    %v1732 = vld [vmem:[%s1 + $0x1c] sm:$0xf]
    %v1733 = vld [vmem:[%s2] sm:$0x1]
    %v1734 = vld [vmem:[%s2 + $0x1] sm:$0x1]
    %v1735 = vld [vmem:[%s2 + $0x2] sm:$0x1]
    %v1736 = vlaneseq
    %v1737 = vshrl.u32 %v1736, 7
    %v1738 = vsub.s32 0, %v1737
    %v1739 = vrot.slane %v1733, %v1738
    %v1748 = vunpack.c.l.b16 %v1725
    %v1749 = vunpack.c.l.b16 %v1726
    %v1750 = vunpack.c.l.b16 %v1727
    %v1751 = vunpack.c.l.b16 %v1728
    %v1752 = vunpack.c.l.b16 %v1729
    %v1753 = vunpack.c.l.b16 %v1730
    %v1754 = vunpack.c.l.b16 %v1731
    %v1755 = vunpack.c.l.b16 %v1732
    %v1756 = vpack.c.b16 %v1749, %v1748
    %v1757 = vpack.c.b16 %v1751, %v1750
    %v1758 = vpack.c.b16 %v1753, %v1752
    %v1759 = vpack.c.b16 %v1755, %v1754
    %v1765 = vsel %vm60, %v1717, 0
    %v1768 = vsel %vm60, %v1718, 0
    %v1771 = vsel %vm60, %v1719, 0
    %v1774 = vsel %vm60, %v1720, 0
    %v1777 = vsel %vm60, %v1721, 0
    %v1780 = vsel %vm60, %v1722, 0
    %v1783 = vsel %vm60, %v1723, 0
    %v1786 = vsel %vm60, %v1724, 0
    %1788 = vmatprep.subr.bf16.mxu0 0
    %1789 = vmatpush1.bf16.msra.mxu0 0
    %1790 = vmatprep.subr.bf16.mxu0 0
    %1791 = vmatpush1.bf16.msra.mxu0 0
    %1792 = vmatprep.subr.bf16.mxu0 0
    %1793 = vmatpush1.bf16.msra.mxu0 0
    %1794 = vmatprep.subr.bf16.mxu0 0
    %1795 = vmatpush1.bf16.msra.mxu0 0
    %1796 = vmatprep.subr.bf16.mxu0 0
    %1797 = vmatpush1.bf16.msra.mxu0 %v1759
    %1798 = vmatprep.subr.bf16.mxu0 0
    %1799 = vmatpush1.bf16.msra.mxu0 %v1758
    %1800 = vmatprep.subr.bf16.mxu0 0
    %1801 = vmatpush1.bf16.msra.mxu0 %v1757
    %1802 = vmatprep.subr.bf16.mxu0 0
    %1803 = vmatpush1.bf16.msra.mxu0 %v1756
    %1804 = vmatprep.subr.bf16.mxu0 0
    %1805 = vmatpush2.bf16.msra.mxu0 0
    %1806 = vmatprep.subr.bf16.mxu0 0
    %1807 = vmatpush2.bf16.msra.mxu0 0
    %1808 = vmatprep.subr.bf16.mxu0 0
    %1809 = vmatpush2.bf16.msra.mxu0 0
    %1810 = vmatprep.subr.bf16.mxu0 0
    %1811 = vmatpush2.bf16.msra.mxu0 0
    %1812 = vmatprep.subr.bf16.mxu0 0
    %1813 = vmatpush2.bf16.msra.mxu0 0
    %1814 = vmatprep.subr.bf16.mxu0 0
    %1815 = vmatpush2.bf16.msra.mxu0 0
    %1816 = vmatprep.subr.bf16.mxu0 0
    %1817 = vmatpush2.bf16.msra.mxu0 0
    %1818 = vmatprep.subr.bf16.mxu0 0
    %1819 = vmatpush2.bf16.msra.mxu0 0
    %1820 = vmatprep.mubr.bf16.mxu0 0
    %1821 = vmatmul.mubr.bf16.gmra.mxu0 %v1765
    %v1822 = vpop.f32.mrf.mxu0
    %v1823 = vadd.f32 %v1739, %v1822
    %v1824 = vpop.f32.mrf.mxu0
    %v1825 = vpop.f32.mrf.mxu0
    %v1826 = vadd.f32 %v1739, %v1825
    %v1827 = vpop.f32.mrf.mxu0
    %1828 = vmatprep.mubr.bf16.mxu0 0
    %1829 = vmatmul.mubr.bf16.gmra.mxu0 %v1768
    %v1830 = vpop.f32.mrf.mxu0
    %v1831 = vadd.f32 %v1739, %v1830
    %v1832 = vpop.f32.mrf.mxu0
    %v1833 = vpop.f32.mrf.mxu0
    %v1834 = vadd.f32 %v1739, %v1833
    %v1835 = vpop.f32.mrf.mxu0
    %1836 = vmatprep.mubr.bf16.mxu0 0
    %1837 = vmatmul.mubr.bf16.gmra.mxu0 %v1771
    %v1838 = vpop.f32.mrf.mxu0
    %v1839 = vadd.f32 %v1739, %v1838
    %v1840 = vpop.f32.mrf.mxu0
    %v1841 = vpop.f32.mrf.mxu0
    %v1842 = vadd.f32 %v1739, %v1841
    %v1843 = vpop.f32.mrf.mxu0
    %1844 = vmatprep.mubr.bf16.mxu0 0
    %1845 = vmatmul.mubr.bf16.gmra.mxu0 %v1774
    %v1846 = vpop.f32.mrf.mxu0
    %v1847 = vadd.f32 %v1739, %v1846
    %v1848 = vpop.f32.mrf.mxu0
    %v1849 = vpop.f32.mrf.mxu0
    %v1850 = vadd.f32 %v1739, %v1849
    %v1851 = vpop.f32.mrf.mxu0
    %1852 = vmatprep.mubr.bf16.mxu0 0
    %1853 = vmatmul.mubr.bf16.gmra.mxu0 %v1777
    %v1854 = vpop.f32.mrf.mxu0
    %v1855 = vadd.f32 %v1739, %v1854
    %v1856 = vpop.f32.mrf.mxu0
    %v1857 = vpop.f32.mrf.mxu0
    %v1858 = vadd.f32 %v1739, %v1857
    %v1859 = vpop.f32.mrf.mxu0
    %1860 = vmatprep.mubr.bf16.mxu0 0
    %1861 = vmatmul.mubr.bf16.gmra.mxu0 %v1780
    %v1862 = vpop.f32.mrf.mxu0
    %v1863 = vadd.f32 %v1739, %v1862
    %v1864 = vpop.f32.mrf.mxu0
    %v1865 = vpop.f32.mrf.mxu0
    %v1866 = vadd.f32 %v1739, %v1865
    %v1867 = vpop.f32.mrf.mxu0
    %1868 = vmatprep.mubr.bf16.mxu0 0
    %1869 = vmatmul.mubr.bf16.gmra.mxu0 %v1783
    %v1870 = vpop.f32.mrf.mxu0
    %v1871 = vadd.f32 %v1739, %v1870
    %v1872 = vpop.f32.mrf.mxu0
    %v1873 = vpop.f32.mrf.mxu0
    %v1874 = vadd.f32 %v1739, %v1873
    %v1875 = vpop.f32.mrf.mxu0
    %1876 = vmatprep.mubr.bf16.mxu0 0
    %1877 = vmatmul.mubr.bf16.gmra.mxu0 %v1786
    %v1878 = vpop.f32.mrf.mxu0
    %v1879 = vadd.f32 %v1739, %v1878
    %v1880 = vpop.f32.mrf.mxu0
    %v1881 = vpop.f32.mrf.mxu0
    %v1882 = vadd.f32 %v1739, %v1881
    %v1883 = vpop.f32.mrf.mxu0
    %1884 = vdwg.mxu0
    %vm1885 = vcmp.ge.f32.partialorder %v1823, 0.0
    %vm1886 = vcmp.ge.f32.partialorder %v1826, 0.0
    %vm1887 = vcmp.ge.f32.partialorder %v1831, 0.0
    %vm1888 = vcmp.ge.f32.partialorder %v1834, 0.0
    %vm1889 = vcmp.ge.f32.partialorder %v1839, 0.0
    %vm1890 = vcmp.ge.f32.partialorder %v1842, 0.0
    %vm1891 = vcmp.ge.f32.partialorder %v1847, 0.0
    %vm1892 = vcmp.ge.f32.partialorder %v1850, 0.0
    %vm1893 = vcmp.ge.f32.partialorder %v1855, 0.0
    %vm1894 = vcmp.ge.f32.partialorder %v1858, 0.0
    %vm1895 = vcmp.ge.f32.partialorder %v1863, 0.0
    %vm1896 = vcmp.ge.f32.partialorder %v1866, 0.0
    %vm1897 = vcmp.ge.f32.partialorder %v1871, 0.0
    %vm1898 = vcmp.ge.f32.partialorder %v1874, 0.0
    %vm1899 = vcmp.ge.f32.partialorder %v1879, 0.0
    %vm1900 = vcmp.ge.f32.partialorder %v1882, 0.0
    %v1901 = vmul.f32 %v1823, 0.01
    %v1902 = vmul.f32 %v1826, 0.01
    %v1903 = vmul.f32 %v1831, 0.01
    %v1904 = vmul.f32 %v1834, 0.01
    %v1905 = vmul.f32 %v1839, 0.01
    %v1906 = vmul.f32 %v1842, 0.01
    %v1907 = vmul.f32 %v1847, 0.01
    %v1908 = vmul.f32 %v1850, 0.01
    %v1909 = vmul.f32 %v1855, 0.01
    %v1910 = vmul.f32 %v1858, 0.01
    %v1911 = vmul.f32 %v1863, 0.01
    %v1912 = vmul.f32 %v1866, 0.01
    %v1913 = vmul.f32 %v1871, 0.01
    %v1914 = vmul.f32 %v1874, 0.01
    %v1915 = vmul.f32 %v1879, 0.01
    %v1916 = vmul.f32 %v1882, 0.01
    %v1917 = vsel %vm1885, %v1823, %v1901
    %v1918 = vsel %vm1886, %v1826, %v1902
    %v1919 = vsel %vm1887, %v1831, %v1903
    %v1920 = vsel %vm1888, %v1834, %v1904
    %v1921 = vsel %vm1889, %v1839, %v1905
    %v1922 = vsel %vm1890, %v1842, %v1906
    %v1923 = vsel %vm1891, %v1847, %v1907
    %v1924 = vsel %vm1892, %v1850, %v1908
    %v1925 = vsel %vm1893, %v1855, %v1909
    %v1926 = vsel %vm1894, %v1858, %v1910
    %v1927 = vsel %vm1895, %v1863, %v1911
    %v1928 = vsel %vm1896, %v1866, %v1912
    %v1929 = vsel %vm1897, %v1871, %v1913
    %v1930 = vsel %vm1898, %v1874, %v1914
    %v1931 = vsel %vm1899, %v1879, %v1915
    %v1932 = vsel %vm1900, %v1882, %v1916
    %v1933 = vadd.f32 %v1917, %v1918
    %v1934 = vadd.f32 %v1933, %v1919
    %v1935 = vadd.f32 %v1934, %v1920
    %v1936 = vadd.f32 %v1935, %v1921
    %v1937 = vadd.f32 %v1936, %v1922
    %v1938 = vadd.f32 %v1937, %v1923
    %v1939 = vadd.f32 %v1938, %v1924
    %v1940 = vadd.f32 %v1939, %v1925
    %v1941 = vadd.f32 %v1940, %v1926
    %v1942 = vadd.f32 %v1941, %v1927
    %v1943 = vadd.f32 %v1942, %v1928
    %v1944 = vadd.f32 %v1943, %v1929
    %v1945 = vadd.f32 %v1944, %v1930
    %v1946 = vadd.f32 %v1945, %v1931
    %v1947 = vadd.f32 %v1946, %v1932
    %v1948 = vrot.slane %v1947, 4
    %v1949 = vadd.f32 %v1947, %v1948
    %v1950 = vrot.slane %v1949, 2
    %v1951 = vadd.f32 %v1949, %v1950
    %v1952 = vrot.slane %v1951, 1
    %v1953 = vadd.f32 %v1951, %v1952
    %v1954 = vmul.f32 %v1953, 0.0078125
    %v1955 = vsub.f32 %v1917, %v1954
    %v1956 = vsub.f32 %v1918, %v1954
    %v1957 = vsub.f32 %v1919, %v1954
    %v1958 = vsub.f32 %v1920, %v1954
    %v1959 = vsub.f32 %v1921, %v1954
    %v1960 = vsub.f32 %v1922, %v1954
    %v1961 = vsub.f32 %v1923, %v1954
    %v1962 = vsub.f32 %v1924, %v1954
    %v1963 = vsub.f32 %v1925, %v1954
    %v1964 = vsub.f32 %v1926, %v1954
    %v1965 = vsub.f32 %v1927, %v1954
    %v1966 = vsub.f32 %v1928, %v1954
    %v1967 = vsub.f32 %v1929, %v1954
    %v1968 = vsub.f32 %v1930, %v1954
    %v1969 = vsub.f32 %v1931, %v1954
    %v1970 = vsub.f32 %v1932, %v1954
    %v1971 = vmul.f32 %v1955, %v1955
    %v1972 = vmul.f32 %v1956, %v1956
    %v1973 = vmul.f32 %v1957, %v1957
    %v1974 = vmul.f32 %v1958, %v1958
    %v1975 = vmul.f32 %v1959, %v1959
    %v1976 = vmul.f32 %v1960, %v1960
    %v1977 = vmul.f32 %v1961, %v1961
    %v1978 = vmul.f32 %v1962, %v1962
    %v1979 = vmul.f32 %v1963, %v1963
    %v1980 = vmul.f32 %v1964, %v1964
    %v1981 = vmul.f32 %v1965, %v1965
    %v1982 = vmul.f32 %v1966, %v1966
    %v1983 = vmul.f32 %v1967, %v1967
    %v1984 = vmul.f32 %v1968, %v1968
    %v1985 = vmul.f32 %v1969, %v1969
    %v1986 = vmul.f32 %v1970, %v1970
    %v1987 = vadd.f32 %v1971, %v1972
    %v1988 = vadd.f32 %v1987, %v1973
    %v1989 = vadd.f32 %v1988, %v1974
    %v1990 = vadd.f32 %v1989, %v1975
    %v1991 = vadd.f32 %v1990, %v1976
    %v1992 = vadd.f32 %v1991, %v1977
    %v1993 = vadd.f32 %v1992, %v1978
    %v1994 = vadd.f32 %v1993, %v1979
    %v1995 = vadd.f32 %v1994, %v1980
    %v1996 = vadd.f32 %v1995, %v1981
    %v1997 = vadd.f32 %v1996, %v1982
    %v1998 = vadd.f32 %v1997, %v1983
    %v1999 = vadd.f32 %v1998, %v1984
    %v2000 = vadd.f32 %v1999, %v1985
    %v2001 = vadd.f32 %v2000, %v1986
    %v2002 = vrot.slane %v2001, 4
    %v2003 = vadd.f32 %v2001, %v2002
    %v2004 = vrot.slane %v2003, 2
    %v2005 = vadd.f32 %v2003, %v2004
    %v2006 = vrot.slane %v2005, 1
    %v2007 = vadd.f32 %v2005, %v2006
    %v2008 = vmul.f32 %v2007, 0.0078125
    %v2009 = vadd.f32 %v2008, 1e-05
    %v2010 = vrsqrt.pop %v2009
    %v2011 = vmul.f32 %v1734, %v2010
    %v2012 = vmul.f32 %v1954, %v2011
    %v2013 = vsub.f32 %v1735, %v2012
    %v2014 = vlaneseq
    %v2015 = vshrl.u32 %v2014, 7
    %v2016 = vsub.s32 0, %v2015
    %v2017 = vrot.slane %v2011, %v2016
    %v2018 = vmul.f32 %v1917, %v2017
    %v2019 = vmul.f32 %v1918, %v2017
    %v2020 = vmul.f32 %v1919, %v2017
    %v2021 = vmul.f32 %v1920, %v2017
    %v2022 = vmul.f32 %v1921, %v2017
    %v2023 = vmul.f32 %v1922, %v2017
    %v2024 = vmul.f32 %v1923, %v2017
    %v2025 = vmul.f32 %v1924, %v2017
    %v2026 = vmul.f32 %v1925, %v2017
    %v2027 = vmul.f32 %v1926, %v2017
    %v2028 = vmul.f32 %v1927, %v2017
    %v2029 = vmul.f32 %v1928, %v2017
    %v2030 = vmul.f32 %v1929, %v2017
    %v2031 = vmul.f32 %v1930, %v2017
    %v2032 = vmul.f32 %v1931, %v2017
    %v2033 = vmul.f32 %v1932, %v2017
    %v2034 = vlaneseq
    %v2035 = vshrl.u32 %v2034, 7
    %v2036 = vsub.s32 0, %v2035
    %v2037 = vrot.slane %v2013, %v2036
    %v2038 = vadd.f32 %v2018, %v2037
    %v2039 = vadd.f32 %v2019, %v2037
    %v2040 = vadd.f32 %v2020, %v2037
    %v2041 = vadd.f32 %v2021, %v2037
    %v2042 = vadd.f32 %v2022, %v2037
    %v2043 = vadd.f32 %v2023, %v2037
    %v2044 = vadd.f32 %v2024, %v2037
    %v2045 = vadd.f32 %v2025, %v2037
    %v2046 = vadd.f32 %v2026, %v2037
    %v2047 = vadd.f32 %v2027, %v2037
    %v2048 = vadd.f32 %v2028, %v2037
    %v2049 = vadd.f32 %v2029, %v2037
    %v2050 = vadd.f32 %v2030, %v2037
    %v2051 = vadd.f32 %v2031, %v2037
    %v2052 = vadd.f32 %v2032, %v2037
    %v2053 = vadd.f32 %v2033, %v2037
    %2054 = vst.msk [vmem:[#allocation5 + $0xb] sm:$0xff] %vm34, %v2038
    %2055 = vst.msk [vmem:[#allocation5 + $0x15] sm:$0xff] %vm34, %v2039
    %2056 = vst.msk [vmem:[#allocation5 + $0x1f] sm:$0xff] %vm34, %v2040
    %2057 = vst.msk [vmem:[#allocation5 + $0x29] sm:$0xff] %vm34, %v2041
    %2058 = vst.msk [vmem:[#allocation5 + $0x33] sm:$0xff] %vm34, %v2042
    %2059 = vst.msk [vmem:[#allocation5 + $0x3d] sm:$0xff] %vm34, %v2043
    %2060 = vst.msk [vmem:[#allocation5 + $0x47] sm:$0xff] %vm34, %v2044
    %2061 = vst.msk [vmem:[#allocation5 + $0x51] sm:$0xff] %vm34, %v2045
    %2062 = vst.msk [vmem:[#allocation5 + $0x6f] sm:$0xff] %vm34, %v2046
    %2063 = vst.msk [vmem:[#allocation5 + $0x79] sm:$0xff] %vm34, %v2047
    %2064 = vst.msk [vmem:[#allocation5 + $0x83] sm:$0xff] %vm34, %v2048
    %2065 = vst.msk [vmem:[#allocation5 + $0x8d] sm:$0xff] %vm34, %v2049
    %2066 = vst.msk [vmem:[#allocation5 + $0x97] sm:$0xff] %vm34, %v2050
    %2067 = vst.msk [vmem:[#allocation5 + $0xa1] sm:$0xff] %vm34, %v2051
    %2068 = vst.msk [vmem:[#allocation5 + $0xab] sm:$0xff] %vm34, %v2052
    %2069 = vst.msk [vmem:[#allocation5 + $0xb5] sm:$0xff] %vm34, %v2053
    %v2070 = vld [vmem:[#allocation5] ss:$2 sm:$0xf]
    %vm2071 = vcmask 257024
    %2072 = vst.msk [vmem:[#allocation3] sm:$0xf] %vm2071, %v2070
    %s2073 = scalar_lea.vmem [#allocation5], 20
    %v2074 = vld [vmem:[%s2073] ss:$2 sm:$0xf]
    %v2076 = vrot.slane %v2074, 4
    %vm2078 = vcmask 261124
    %2079 = vst.msk [vmem:[#allocation3] sm:$0xf0] %vm2078, %v2076
    %s2080 = scalar_lea.vmem [#allocation5], 40
    %v2081 = vld [vmem:[%s2080] ss:$2 sm:$0xf]
    %2082 = vst.msk [vmem:[#allocation3 + $0x20] sm:$0xf] %vm2071, %v2081
    %s2083 = scalar_lea.vmem [#allocation5], 60
    %v2084 = vld [vmem:[%s2083] ss:$2 sm:$0xf]
    %v2086 = vrot.slane %v2084, 4
    %2088 = vst.msk [vmem:[#allocation3 + $0x20] sm:$0xf0] %vm2078, %v2086
    %s2089 = scalar_lea.vmem [#allocation5], 100
    %v2090 = vld [vmem:[%s2089] ss:$2 sm:$0xf]
    %2091 = vst.msk [vmem:[#allocation3 + $0x40] sm:$0xf] %vm2071, %v2090
    %s2092 = scalar_lea.vmem [#allocation5], 120
    %v2093 = vld [vmem:[%s2092] ss:$2 sm:$0xf]
    %v2095 = vrot.slane %v2093, 4
    %2097 = vst.msk [vmem:[#allocation3 + $0x40] sm:$0xf0] %vm2078, %v2095
    %s2098 = scalar_lea.vmem [#allocation5], 140
    %v2099 = vld [vmem:[%s2098] ss:$2 sm:$0xf]
    %2100 = vst.msk [vmem:[#allocation3 + $0x60] sm:$0xf] %vm2071, %v2099
    %s2101 = scalar_lea.vmem [#allocation5], 160
    %v2102 = vld [vmem:[%s2101] ss:$2 sm:$0xf]
    %v2104 = vrot.slane %v2102, 4
    %2106 = vst.msk [vmem:[#allocation3 + $0x60] sm:$0xf0] %vm2078, %v2104
    %s2107 = scalar_lea.vmem [#allocation5], 1
    %v2108 = vld [vmem:[%s2107] ss:$2 sm:$0xf]
    %2110 = vrot.lane.b32.xlu0 %v2108, 32
    %v2111 = vpop.permute.xlu0 %2110
    %vm2113 = vcmask 519424
    %2114 = vst.msk [vmem:[#allocation3] sm:$0xf] %vm2113, %v2111
    %s2115 = scalar_lea.vmem [#allocation5], 21
    %v2116 = vld [vmem:[%s2115] ss:$2 sm:$0xf]
    %v2118 = vrot.slane %v2116, 4
    %2119 = vrot.lane.b32.xlu0 %v2118, 32
    %v2120 = vpop.permute.xlu0 %2119
    %vm2122 = vcmask 523524
    %2123 = vst.msk [vmem:[#allocation3] sm:$0xf0] %vm2122, %v2120
    %s2124 = scalar_lea.vmem [#allocation5], 41
    %v2125 = vld [vmem:[%s2124] ss:$2 sm:$0xf]
    %2127 = vrot.lane.b32.xlu0 %v2125, 32
    %v2128 = vpop.permute.xlu0 %2127
    %2130 = vst.msk [vmem:[#allocation3 + $0x20] sm:$0xf] %vm2113, %v2128
    %s2131 = scalar_lea.vmem [#allocation5], 61
    %v2132 = vld [vmem:[%s2131] ss:$2 sm:$0xf]
    %v2134 = vrot.slane %v2132, 4
    %2135 = vrot.lane.b32.xlu0 %v2134, 32
    %v2136 = vpop.permute.xlu0 %2135
    %2138 = vst.msk [vmem:[#allocation3 + $0x20] sm:$0xf0] %vm2122, %v2136
    %s2139 = scalar_lea.vmem [#allocation5], 101
    %v2140 = vld [vmem:[%s2139] ss:$2 sm:$0xf]
    %2142 = vrot.lane.b32.xlu0 %v2140, 32
    %v2143 = vpop.permute.xlu0 %2142
    %2145 = vst.msk [vmem:[#allocation3 + $0x40] sm:$0xf] %vm2113, %v2143
    %s2146 = scalar_lea.vmem [#allocation5], 121
    %v2147 = vld [vmem:[%s2146] ss:$2 sm:$0xf]
    %v2149 = vrot.slane %v2147, 4
    %2150 = vrot.lane.b32.xlu0 %v2149, 32
    %v2151 = vpop.permute.xlu0 %2150
    %2153 = vst.msk [vmem:[#allocation3 + $0x40] sm:$0xf0] %vm2122, %v2151
    %s2154 = scalar_lea.vmem [#allocation5], 141
    %v2155 = vld [vmem:[%s2154] ss:$2 sm:$0xf]
    %2157 = vrot.lane.b32.xlu0 %v2155, 32
    %v2158 = vpop.permute.xlu0 %2157
    %2160 = vst.msk [vmem:[#allocation3 + $0x60] sm:$0xf] %vm2113, %v2158
    %s2161 = scalar_lea.vmem [#allocation5], 161
    %v2162 = vld [vmem:[%s2161] ss:$2 sm:$0xf]
    %v2164 = vrot.slane %v2162, 4
    %2165 = vrot.lane.b32.xlu0 %v2164, 32
    %v2166 = vpop.permute.xlu0 %2165
    %2168 = vst.msk [vmem:[#allocation3 + $0x60] sm:$0xf0] %vm2122, %v2166
    %s2169 = scalar_lea.vmem [#allocation5], 2
    %v2170 = vld [vmem:[%s2169] ss:$2 sm:$0xf]
    %2172 = vrot.lane.b32.xlu0 %v2170, 64
    %v2173 = vpop.permute.xlu0 %2172
    %vm2175 = vcmask 781824
    %2176 = vst.msk [vmem:[#allocation3] sm:$0xf] %vm2175, %v2173
    %s2177 = scalar_lea.vmem [#allocation5], 22
    %v2178 = vld [vmem:[%s2177] ss:$2 sm:$0xf]
    %v2180 = vrot.slane %v2178, 4
    %2181 = vrot.lane.b32.xlu0 %v2180, 64
    %v2182 = vpop.permute.xlu0 %2181
    %vm2184 = vcmask 785924
    %2185 = vst.msk [vmem:[#allocation3] sm:$0xf0] %vm2184, %v2182
    %s2186 = scalar_lea.vmem [#allocation5], 42
    %v2187 = vld [vmem:[%s2186] ss:$2 sm:$0xf]
    %2189 = vrot.lane.b32.xlu0 %v2187, 64
    %v2190 = vpop.permute.xlu0 %2189
    %2192 = vst.msk [vmem:[#allocation3 + $0x20] sm:$0xf] %vm2175, %v2190
    %s2193 = scalar_lea.vmem [#allocation5], 62
    %v2194 = vld [vmem:[%s2193] ss:$2 sm:$0xf]
    %v2196 = vrot.slane %v2194, 4
    %2197 = vrot.lane.b32.xlu0 %v2196, 64
    %v2198 = vpop.permute.xlu0 %2197
    %2200 = vst.msk [vmem:[#allocation3 + $0x20] sm:$0xf0] %vm2184, %v2198
    %s2201 = scalar_lea.vmem [#allocation5], 102
    %v2202 = vld [vmem:[%s2201] ss:$2 sm:$0xf]
    %2204 = vrot.lane.b32.xlu0 %v2202, 64
    %v2205 = vpop.permute.xlu0 %2204
    %2207 = vst.msk [vmem:[#allocation3 + $0x40] sm:$0xf] %vm2175, %v2205
    %s2208 = scalar_lea.vmem [#allocation5], 122
    %v2209 = vld [vmem:[%s2208] ss:$2 sm:$0xf]
    %v2211 = vrot.slane %v2209, 4
    %2212 = vrot.lane.b32.xlu0 %v2211, 64
    %v2213 = vpop.permute.xlu0 %2212
    %2215 = vst.msk [vmem:[#allocation3 + $0x40] sm:$0xf0] %vm2184, %v2213
    %s2216 = scalar_lea.vmem [#allocation5], 142
    %v2217 = vld [vmem:[%s2216] ss:$2 sm:$0xf]
    %2219 = vrot.lane.b32.xlu0 %v2217, 64
    %v2220 = vpop.permute.xlu0 %2219
    %2222 = vst.msk [vmem:[#allocation3 + $0x60] sm:$0xf] %vm2175, %v2220
    %s2223 = scalar_lea.vmem [#allocation5], 162
    %v2224 = vld [vmem:[%s2223] ss:$2 sm:$0xf]
    %v2226 = vrot.slane %v2224, 4
    %2227 = vrot.lane.b32.xlu0 %v2226, 64
    %v2228 = vpop.permute.xlu0 %2227
    %2230 = vst.msk [vmem:[#allocation3 + $0x60] sm:$0xf0] %vm2184, %v2228
    %s2231 = scalar_lea.vmem [#allocation5], 3
    %v2232 = vld [vmem:[%s2231] ss:$2 sm:$0xf]
    %2234 = vrot.lane.b32.xlu0 %v2232, 96
    %v2235 = vpop.permute.xlu0 %2234
    %vm2237 = vcmask 1044224
    %2238 = vst.msk [vmem:[#allocation3] sm:$0xf] %vm2237, %v2235
    %s2239 = scalar_lea.vmem [#allocation5], 23
    %v2240 = vld [vmem:[%s2239] ss:$2 sm:$0xf]
    %v2242 = vrot.slane %v2240, 4
    %2243 = vrot.lane.b32.xlu0 %v2242, 96
    %v2244 = vpop.permute.xlu0 %2243
    %vm2246 = vcmask 1048324
    %2247 = vst.msk [vmem:[#allocation3] sm:$0xf0] %vm2246, %v2244
    %s2248 = scalar_lea.vmem [#allocation5], 43
    %v2249 = vld [vmem:[%s2248] ss:$2 sm:$0xf]
    %2251 = vrot.lane.b32.xlu0 %v2249, 96
    %v2252 = vpop.permute.xlu0 %2251
    %2254 = vst.msk [vmem:[#allocation3 + $0x20] sm:$0xf] %vm2237, %v2252
    %s2255 = scalar_lea.vmem [#allocation5], 63
    %v2256 = vld [vmem:[%s2255] ss:$2 sm:$0xf]
    %v2258 = vrot.slane %v2256, 4
    %2259 = vrot.lane.b32.xlu0 %v2258, 96
    %v2260 = vpop.permute.xlu0 %2259
    %2262 = vst.msk [vmem:[#allocation3 + $0x20] sm:$0xf0] %vm2246, %v2260
    %s2263 = scalar_lea.vmem [#allocation5], 103
    %v2264 = vld [vmem:[%s2263] ss:$2 sm:$0xf]
    %2266 = vrot.lane.b32.xlu0 %v2264, 96
    %v2267 = vpop.permute.xlu0 %2266
    %2269 = vst.msk [vmem:[#allocation3 + $0x40] sm:$0xf] %vm2237, %v2267
    %s2270 = scalar_lea.vmem [#allocation5], 123
    %v2271 = vld [vmem:[%s2270] ss:$2 sm:$0xf]
    %v2273 = vrot.slane %v2271, 4
    %2274 = vrot.lane.b32.xlu0 %v2273, 96
    %v2275 = vpop.permute.xlu0 %2274
    %2277 = vst.msk [vmem:[#allocation3 + $0x40] sm:$0xf0] %vm2246, %v2275
    %s2278 = scalar_lea.vmem [#allocation5], 143
    %v2279 = vld [vmem:[%s2278] ss:$2 sm:$0xf]
    %2281 = vrot.lane.b32.xlu0 %v2279, 96
    %v2282 = vpop.permute.xlu0 %2281
    %2284 = vst.msk [vmem:[#allocation3 + $0x60] sm:$0xf] %vm2237, %v2282
    %s2285 = scalar_lea.vmem [#allocation5], 163
    %v2286 = vld [vmem:[%s2285] ss:$2 sm:$0xf]
    %v2288 = vrot.slane %v2286, 4
    %2289 = vrot.lane.b32.xlu0 %v2288, 96
    %v2290 = vpop.permute.xlu0 %2289
    %2292 = vst.msk [vmem:[#allocation3 + $0x60] sm:$0xf0] %vm2246, %v2290
    %s2293 = scalar_lea.vmem [#allocation5], 10
    %v2294 = vld [vmem:[%s2293] ss:$2 sm:$0xf]
    %2295 = vst.msk [vmem:[#allocation3 + $0x8] sm:$0xf] %vm2071, %v2294
    %s2296 = scalar_lea.vmem [#allocation5], 30
    %v2297 = vld [vmem:[%s2296] ss:$2 sm:$0xf]
    %v2299 = vrot.slane %v2297, 4
    %2301 = vst.msk [vmem:[#allocation3 + $0x8] sm:$0xf0] %vm2078, %v2299
    %s2302 = scalar_lea.vmem [#allocation5], 50
    %v2303 = vld [vmem:[%s2302] ss:$2 sm:$0xf]
    %2304 = vst.msk [vmem:[#allocation3 + $0x28] sm:$0xf] %vm2071, %v2303
    %s2305 = scalar_lea.vmem [#allocation5], 70
    %v2306 = vld [vmem:[%s2305] ss:$2 sm:$0xf]
    %v2308 = vrot.slane %v2306, 4
    %2310 = vst.msk [vmem:[#allocation3 + $0x28] sm:$0xf0] %vm2078, %v2308
    %s2311 = scalar_lea.vmem [#allocation5], 110
    %v2312 = vld [vmem:[%s2311] ss:$2 sm:$0xf]
    %2313 = vst.msk [vmem:[#allocation3 + $0x48] sm:$0xf] %vm2071, %v2312
    %s2314 = scalar_lea.vmem [#allocation5], 130
    %v2315 = vld [vmem:[%s2314] ss:$2 sm:$0xf]
    %v2317 = vrot.slane %v2315, 4
    %2319 = vst.msk [vmem:[#allocation3 + $0x48] sm:$0xf0] %vm2078, %v2317
    %s2320 = scalar_lea.vmem [#allocation5], 150
    %v2321 = vld [vmem:[%s2320] ss:$2 sm:$0xf]
    %2322 = vst.msk [vmem:[#allocation3 + $0x68] sm:$0xf] %vm2071, %v2321
    %s2323 = scalar_lea.vmem [#allocation5], 170
    %v2324 = vld [vmem:[%s2323] ss:$2 sm:$0xf]
    %v2326 = vrot.slane %v2324, 4
    %2328 = vst.msk [vmem:[#allocation3 + $0x68] sm:$0xf0] %vm2078, %v2326
    %s2329 = scalar_lea.vmem [#allocation5], 11
    %v2330 = vld [vmem:[%s2329] ss:$2 sm:$0xf]
    %2332 = vrot.lane.b32.xlu0 %v2330, 32
    %v2333 = vpop.permute.xlu0 %2332
    %2335 = vst.msk [vmem:[#allocation3 + $0x8] sm:$0xf] %vm2113, %v2333
    %s2336 = scalar_lea.vmem [#allocation5], 31
    %v2337 = vld [vmem:[%s2336] ss:$2 sm:$0xf]
    %v2339 = vrot.slane %v2337, 4
    %2340 = vrot.lane.b32.xlu0 %v2339, 32
    %v2341 = vpop.permute.xlu0 %2340
    %2343 = vst.msk [vmem:[#allocation3 + $0x8] sm:$0xf0] %vm2122, %v2341
    %s2344 = scalar_lea.vmem [#allocation5], 51
    %v2345 = vld [vmem:[%s2344] ss:$2 sm:$0xf]
    %2347 = vrot.lane.b32.xlu0 %v2345, 32
    %v2348 = vpop.permute.xlu0 %2347
    %2350 = vst.msk [vmem:[#allocation3 + $0x28] sm:$0xf] %vm2113, %v2348
    %s2351 = scalar_lea.vmem [#allocation5], 71
    %v2352 = vld [vmem:[%s2351] ss:$2 sm:$0xf]
    %v2354 = vrot.slane %v2352, 4
    %2355 = vrot.lane.b32.xlu0 %v2354, 32
    %v2356 = vpop.permute.xlu0 %2355
    %2358 = vst.msk [vmem:[#allocation3 + $0x28] sm:$0xf0] %vm2122, %v2356
    %s2359 = scalar_lea.vmem [#allocation5], 111
    %v2360 = vld [vmem:[%s2359] ss:$2 sm:$0xf]
    %2362 = vrot.lane.b32.xlu0 %v2360, 32
    %v2363 = vpop.permute.xlu0 %2362
    %2365 = vst.msk [vmem:[#allocation3 + $0x48] sm:$0xf] %vm2113, %v2363
    %s2366 = scalar_lea.vmem [#allocation5], 131
    %v2367 = vld [vmem:[%s2366] ss:$2 sm:$0xf]
    %v2369 = vrot.slane %v2367, 4
    %2370 = vrot.lane.b32.xlu0 %v2369, 32
    %v2371 = vpop.permute.xlu0 %2370
    %2373 = vst.msk [vmem:[#allocation3 + $0x48] sm:$0xf0] %vm2122, %v2371
    %s2374 = scalar_lea.vmem [#allocation5], 151
    %v2375 = vld [vmem:[%s2374] ss:$2 sm:$0xf]
    %2377 = vrot.lane.b32.xlu0 %v2375, 32
    %v2378 = vpop.permute.xlu0 %2377
    %2380 = vst.msk [vmem:[#allocation3 + $0x68] sm:$0xf] %vm2113, %v2378
    %s2381 = scalar_lea.vmem [#allocation5], 171
    %v2382 = vld [vmem:[%s2381] ss:$2 sm:$0xf]
    %v2384 = vrot.slane %v2382, 4
    %2385 = vrot.lane.b32.xlu0 %v2384, 32
    %v2386 = vpop.permute.xlu0 %2385
    %2388 = vst.msk [vmem:[#allocation3 + $0x68] sm:$0xf0] %vm2122, %v2386
    %s2389 = scalar_lea.vmem [#allocation5], 12
    %v2390 = vld [vmem:[%s2389] ss:$2 sm:$0xf]
    %2392 = vrot.lane.b32.xlu0 %v2390, 64
    %v2393 = vpop.permute.xlu0 %2392
    %2395 = vst.msk [vmem:[#allocation3 + $0x8] sm:$0xf] %vm2175, %v2393
    %s2396 = scalar_lea.vmem [#allocation5], 32
    %v2397 = vld [vmem:[%s2396] ss:$2 sm:$0xf]
    %v2399 = vrot.slane %v2397, 4
    %2400 = vrot.lane.b32.xlu0 %v2399, 64
    %v2401 = vpop.permute.xlu0 %2400
    %2403 = vst.msk [vmem:[#allocation3 + $0x8] sm:$0xf0] %vm2184, %v2401
    %s2404 = scalar_lea.vmem [#allocation5], 52
    %v2405 = vld [vmem:[%s2404] ss:$2 sm:$0xf]
    %2407 = vrot.lane.b32.xlu0 %v2405, 64
    %v2408 = vpop.permute.xlu0 %2407
    %2410 = vst.msk [vmem:[#allocation3 + $0x28] sm:$0xf] %vm2175, %v2408
    %s2411 = scalar_lea.vmem [#allocation5], 72
    %v2412 = vld [vmem:[%s2411] ss:$2 sm:$0xf]
    %v2414 = vrot.slane %v2412, 4
    %2415 = vrot.lane.b32.xlu0 %v2414, 64
    %v2416 = vpop.permute.xlu0 %2415
    %2418 = vst.msk [vmem:[#allocation3 + $0x28] sm:$0xf0] %vm2184, %v2416
    %s2419 = scalar_lea.vmem [#allocation5], 112
    %v2420 = vld [vmem:[%s2419] ss:$2 sm:$0xf]
    %2422 = vrot.lane.b32.xlu0 %v2420, 64
    %v2423 = vpop.permute.xlu0 %2422
    %2425 = vst.msk [vmem:[#allocation3 + $0x48] sm:$0xf] %vm2175, %v2423
    %s2426 = scalar_lea.vmem [#allocation5], 132
    %v2427 = vld [vmem:[%s2426] ss:$2 sm:$0xf]
    %v2429 = vrot.slane %v2427, 4
    %2430 = vrot.lane.b32.xlu0 %v2429, 64
    %v2431 = vpop.permute.xlu0 %2430
    %2433 = vst.msk [vmem:[#allocation3 + $0x48] sm:$0xf0] %vm2184, %v2431
    %s2434 = scalar_lea.vmem [#allocation5], 152
    %v2435 = vld [vmem:[%s2434] ss:$2 sm:$0xf]
    %2437 = vrot.lane.b32.xlu0 %v2435, 64
    %v2438 = vpop.permute.xlu0 %2437
    %2440 = vst.msk [vmem:[#allocation3 + $0x68] sm:$0xf] %vm2175, %v2438
    %s2441 = scalar_lea.vmem [#allocation5], 172
    %v2442 = vld [vmem:[%s2441] ss:$2 sm:$0xf]
    %v2444 = vrot.slane %v2442, 4
    %2445 = vrot.lane.b32.xlu0 %v2444, 64
    %v2446 = vpop.permute.xlu0 %2445
    %2448 = vst.msk [vmem:[#allocation3 + $0x68] sm:$0xf0] %vm2184, %v2446
    %s2449 = scalar_lea.vmem [#allocation5], 13
    %v2450 = vld [vmem:[%s2449] ss:$2 sm:$0xf]
    %2452 = vrot.lane.b32.xlu0 %v2450, 96
    %v2453 = vpop.permute.xlu0 %2452
    %2455 = vst.msk [vmem:[#allocation3 + $0x8] sm:$0xf] %vm2237, %v2453
    %s2456 = scalar_lea.vmem [#allocation5], 33
    %v2457 = vld [vmem:[%s2456] ss:$2 sm:$0xf]
    %v2459 = vrot.slane %v2457, 4
    %2460 = vrot.lane.b32.xlu0 %v2459, 96
    %v2461 = vpop.permute.xlu0 %2460
    %2463 = vst.msk [vmem:[#allocation3 + $0x8] sm:$0xf0] %vm2246, %v2461
    %s2464 = scalar_lea.vmem [#allocation5], 53
    %v2465 = vld [vmem:[%s2464] ss:$2 sm:$0xf]
    %2467 = vrot.lane.b32.xlu0 %v2465, 96
    %v2468 = vpop.permute.xlu0 %2467
    %2470 = vst.msk [vmem:[#allocation3 + $0x28] sm:$0xf] %vm2237, %v2468
    %s2471 = scalar_lea.vmem [#allocation5], 73
    %v2472 = vld [vmem:[%s2471] ss:$2 sm:$0xf]
    %v2474 = vrot.slane %v2472, 4
    %2475 = vrot.lane.b32.xlu0 %v2474, 96
    %v2476 = vpop.permute.xlu0 %2475
    %2478 = vst.msk [vmem:[#allocation3 + $0x28] sm:$0xf0] %vm2246, %v2476
    %s2479 = scalar_lea.vmem [#allocation5], 113
    %v2480 = vld [vmem:[%s2479] ss:$2 sm:$0xf]
    %2482 = vrot.lane.b32.xlu0 %v2480, 96
    %v2483 = vpop.permute.xlu0 %2482
    %2485 = vst.msk [vmem:[#allocation3 + $0x48] sm:$0xf] %vm2237, %v2483
    %s2486 = scalar_lea.vmem [#allocation5], 133
    %v2487 = vld [vmem:[%s2486] ss:$2 sm:$0xf]
    %v2489 = vrot.slane %v2487, 4
    %2490 = vrot.lane.b32.xlu0 %v2489, 96
    %v2491 = vpop.permute.xlu0 %2490
    %2493 = vst.msk [vmem:[#allocation3 + $0x48] sm:$0xf0] %vm2246, %v2491
    %s2494 = scalar_lea.vmem [#allocation5], 153
    %v2495 = vld [vmem:[%s2494] ss:$2 sm:$0xf]
    %2497 = vrot.lane.b32.xlu0 %v2495, 96
    %v2498 = vpop.permute.xlu0 %2497
    %2500 = vst.msk [vmem:[#allocation3 + $0x68] sm:$0xf] %vm2237, %v2498
    %s2501 = scalar_lea.vmem [#allocation5], 173
    %v2502 = vld [vmem:[%s2501] ss:$2 sm:$0xf]
    %v2504 = vrot.slane %v2502, 4
    %2505 = vrot.lane.b32.xlu0 %v2504, 96
    %v2506 = vpop.permute.xlu0 %2505
    %2508 = vst.msk [vmem:[#allocation3 + $0x68] sm:$0xf0] %vm2246, %v2506
    %v2509 = vld [vmem:[%s2073] ss:$2 sm:$0xf]
    %2510 = vst.msk [vmem:[#allocation3 + $0x10] sm:$0xf] %vm2071, %v2509
    %v2511 = vld [vmem:[%s2080] ss:$2 sm:$0xf]
    %v2513 = vrot.slane %v2511, 4
    %2515 = vst.msk [vmem:[#allocation3 + $0x10] sm:$0xf0] %vm2078, %v2513
    %v2516 = vld [vmem:[%s2083] ss:$2 sm:$0xf]
    %2517 = vst.msk [vmem:[#allocation3 + $0x30] sm:$0xf] %vm2071, %v2516
    %s2518 = scalar_lea.vmem [#allocation5], 80
    %v2519 = vld [vmem:[%s2518] ss:$2 sm:$0xf]
    %v2521 = vrot.slane %v2519, 4
    %2523 = vst.msk [vmem:[#allocation3 + $0x30] sm:$0xf0] %vm2078, %v2521
    %v2524 = vld [vmem:[%s2092] ss:$2 sm:$0xf]
    %2525 = vst.msk [vmem:[#allocation3 + $0x50] sm:$0xf] %vm2071, %v2524
    %v2526 = vld [vmem:[%s2098] ss:$2 sm:$0xf]
    %v2528 = vrot.slane %v2526, 4
    %2530 = vst.msk [vmem:[#allocation3 + $0x50] sm:$0xf0] %vm2078, %v2528
    %v2531 = vld [vmem:[%s2101] ss:$2 sm:$0xf]
    %2532 = vst.msk [vmem:[#allocation3 + $0x70] sm:$0xf] %vm2071, %v2531
    %s2533 = scalar_lea.vmem [#allocation5], 180
    %v2534 = vld [vmem:[%s2533] ss:$2 sm:$0xf]
    %v2536 = vrot.slane %v2534, 4
    %2538 = vst.msk [vmem:[#allocation3 + $0x70] sm:$0xf0] %vm2078, %v2536
    %v2539 = vld [vmem:[%s2115] ss:$2 sm:$0xf]
    %2541 = vrot.lane.b32.xlu0 %v2539, 32
    %v2542 = vpop.permute.xlu0 %2541
    %2544 = vst.msk [vmem:[#allocation3 + $0x10] sm:$0xf] %vm2113, %v2542
    %v2545 = vld [vmem:[%s2124] ss:$2 sm:$0xf]
    %v2547 = vrot.slane %v2545, 4
    %2548 = vrot.lane.b32.xlu0 %v2547, 32
    %v2549 = vpop.permute.xlu0 %2548
    %2551 = vst.msk [vmem:[#allocation3 + $0x10] sm:$0xf0] %vm2122, %v2549
    %v2552 = vld [vmem:[%s2131] ss:$2 sm:$0xf]
    %2554 = vrot.lane.b32.xlu0 %v2552, 32
    %v2555 = vpop.permute.xlu0 %2554
    %2557 = vst.msk [vmem:[#allocation3 + $0x30] sm:$0xf] %vm2113, %v2555
    %s2558 = scalar_lea.vmem [#allocation5], 81
    %v2559 = vld [vmem:[%s2558] ss:$2 sm:$0xf]
    %v2561 = vrot.slane %v2559, 4
    %2562 = vrot.lane.b32.xlu0 %v2561, 32
    %v2563 = vpop.permute.xlu0 %2562
    %2565 = vst.msk [vmem:[#allocation3 + $0x30] sm:$0xf0] %vm2122, %v2563
    %v2566 = vld [vmem:[%s2146] ss:$2 sm:$0xf]
    %2568 = vrot.lane.b32.xlu0 %v2566, 32
    %v2569 = vpop.permute.xlu0 %2568
    %2571 = vst.msk [vmem:[#allocation3 + $0x50] sm:$0xf] %vm2113, %v2569
    %v2572 = vld [vmem:[%s2154] ss:$2 sm:$0xf]
    %v2574 = vrot.slane %v2572, 4
    %2575 = vrot.lane.b32.xlu0 %v2574, 32
    %v2576 = vpop.permute.xlu0 %2575
    %2578 = vst.msk [vmem:[#allocation3 + $0x50] sm:$0xf0] %vm2122, %v2576
    %v2579 = vld [vmem:[%s2161] ss:$2 sm:$0xf]
    %2581 = vrot.lane.b32.xlu0 %v2579, 32
    %v2582 = vpop.permute.xlu0 %2581
    %2584 = vst.msk [vmem:[#allocation3 + $0x70] sm:$0xf] %vm2113, %v2582
    %s2585 = scalar_lea.vmem [#allocation5], 181
    %v2586 = vld [vmem:[%s2585] ss:$2 sm:$0xf]
    %v2588 = vrot.slane %v2586, 4
    %2589 = vrot.lane.b32.xlu0 %v2588, 32
    %v2590 = vpop.permute.xlu0 %2589
    %2592 = vst.msk [vmem:[#allocation3 + $0x70] sm:$0xf0] %vm2122, %v2590
    %v2593 = vld [vmem:[%s2177] ss:$2 sm:$0xf]
    %2595 = vrot.lane.b32.xlu0 %v2593, 64
    %v2596 = vpop.permute.xlu0 %2595
    %2598 = vst.msk [vmem:[#allocation3 + $0x10] sm:$0xf] %vm2175, %v2596
    %v2599 = vld [vmem:[%s2186] ss:$2 sm:$0xf]
    %v2601 = vrot.slane %v2599, 4
    %2602 = vrot.lane.b32.xlu0 %v2601, 64
    %v2603 = vpop.permute.xlu0 %2602
    %2605 = vst.msk [vmem:[#allocation3 + $0x10] sm:$0xf0] %vm2184, %v2603
    %v2606 = vld [vmem:[%s2193] ss:$2 sm:$0xf]
    %2608 = vrot.lane.b32.xlu0 %v2606, 64
    %v2609 = vpop.permute.xlu0 %2608
    %2611 = vst.msk [vmem:[#allocation3 + $0x30] sm:$0xf] %vm2175, %v2609
    %s2612 = scalar_lea.vmem [#allocation5], 82
    %v2613 = vld [vmem:[%s2612] ss:$2 sm:$0xf]
    %v2615 = vrot.slane %v2613, 4
    %2616 = vrot.lane.b32.xlu0 %v2615, 64
    %v2617 = vpop.permute.xlu0 %2616
    %2619 = vst.msk [vmem:[#allocation3 + $0x30] sm:$0xf0] %vm2184, %v2617
    %v2620 = vld [vmem:[%s2208] ss:$2 sm:$0xf]
    %2622 = vrot.lane.b32.xlu0 %v2620, 64
    %v2623 = vpop.permute.xlu0 %2622
    %2625 = vst.msk [vmem:[#allocation3 + $0x50] sm:$0xf] %vm2175, %v2623
    %v2626 = vld [vmem:[%s2216] ss:$2 sm:$0xf]
    %v2628 = vrot.slane %v2626, 4
    %2629 = vrot.lane.b32.xlu0 %v2628, 64
    %v2630 = vpop.permute.xlu0 %2629
    %2632 = vst.msk [vmem:[#allocation3 + $0x50] sm:$0xf0] %vm2184, %v2630
    %v2633 = vld [vmem:[%s2223] ss:$2 sm:$0xf]
    %2635 = vrot.lane.b32.xlu0 %v2633, 64
    %v2636 = vpop.permute.xlu0 %2635
    %2638 = vst.msk [vmem:[#allocation3 + $0x70] sm:$0xf] %vm2175, %v2636
    %s2639 = scalar_lea.vmem [#allocation5], 182
    %v2640 = vld [vmem:[%s2639] ss:$2 sm:$0xf]
    %v2642 = vrot.slane %v2640, 4
    %2643 = vrot.lane.b32.xlu0 %v2642, 64
    %v2644 = vpop.permute.xlu0 %2643
    %2646 = vst.msk [vmem:[#allocation3 + $0x70] sm:$0xf0] %vm2184, %v2644
    %v2647 = vld [vmem:[%s2239] ss:$2 sm:$0xf]
    %2649 = vrot.lane.b32.xlu0 %v2647, 96
    %v2650 = vpop.permute.xlu0 %2649
    %2652 = vst.msk [vmem:[#allocation3 + $0x10] sm:$0xf] %vm2237, %v2650
    %v2653 = vld [vmem:[%s2248] ss:$2 sm:$0xf]
    %v2655 = vrot.slane %v2653, 4
    %2656 = vrot.lane.b32.xlu0 %v2655, 96
    %v2657 = vpop.permute.xlu0 %2656
    %2659 = vst.msk [vmem:[#allocation3 + $0x10] sm:$0xf0] %vm2246, %v2657
    %v2660 = vld [vmem:[%s2255] ss:$2 sm:$0xf]
    %2662 = vrot.lane.b32.xlu0 %v2660, 96
    %v2663 = vpop.permute.xlu0 %2662
    %2665 = vst.msk [vmem:[#allocation3 + $0x30] sm:$0xf] %vm2237, %v2663
    %s2666 = scalar_lea.vmem [#allocation5], 83
    %v2667 = vld [vmem:[%s2666] ss:$2 sm:$0xf]
    %v2669 = vrot.slane %v2667, 4
    %2670 = vrot.lane.b32.xlu0 %v2669, 96
    %v2671 = vpop.permute.xlu0 %2670
    %2673 = vst.msk [vmem:[#allocation3 + $0x30] sm:$0xf0] %vm2246, %v2671
    %v2674 = vld [vmem:[%s2270] ss:$2 sm:$0xf]
    %2676 = vrot.lane.b32.xlu0 %v2674, 96
    %v2677 = vpop.permute.xlu0 %2676
    %2679 = vst.msk [vmem:[#allocation3 + $0x50] sm:$0xf] %vm2237, %v2677
    %v2680 = vld [vmem:[%s2278] ss:$2 sm:$0xf]
    %v2682 = vrot.slane %v2680, 4
    %2683 = vrot.lane.b32.xlu0 %v2682, 96
    %v2684 = vpop.permute.xlu0 %2683
    %2686 = vst.msk [vmem:[#allocation3 + $0x50] sm:$0xf0] %vm2246, %v2684
    %v2687 = vld [vmem:[%s2285] ss:$2 sm:$0xf]
    %2689 = vrot.lane.b32.xlu0 %v2687, 96
    %v2690 = vpop.permute.xlu0 %2689
    %2692 = vst.msk [vmem:[#allocation3 + $0x70] sm:$0xf] %vm2237, %v2690
    %s2693 = scalar_lea.vmem [#allocation5], 183
    %v2694 = vld [vmem:[%s2693] ss:$2 sm:$0xf]
    %v2696 = vrot.slane %v2694, 4
    %2697 = vrot.lane.b32.xlu0 %v2696, 96
    %v2698 = vpop.permute.xlu0 %2697
    %2700 = vst.msk [vmem:[#allocation3 + $0x70] sm:$0xf0] %vm2246, %v2698
    %v2701 = vld [vmem:[%s2296] ss:$2 sm:$0xf]
    %2702 = vst.msk [vmem:[#allocation3 + $0x18] sm:$0xf] %vm2071, %v2701
    %v2703 = vld [vmem:[%s2302] ss:$2 sm:$0xf]
    %v2705 = vrot.slane %v2703, 4
    %2707 = vst.msk [vmem:[#allocation3 + $0x18] sm:$0xf0] %vm2078, %v2705
    %v2708 = vld [vmem:[%s2305] ss:$2 sm:$0xf]
    %2709 = vst.msk [vmem:[#allocation3 + $0x38] sm:$0xf] %vm2071, %v2708
    %s2710 = scalar_lea.vmem [#allocation5], 90
    %v2711 = vld [vmem:[%s2710] ss:$2 sm:$0xf]
    %v2713 = vrot.slane %v2711, 4
    %2715 = vst.msk [vmem:[#allocation3 + $0x38] sm:$0xf0] %vm2078, %v2713
    %v2716 = vld [vmem:[%s2314] ss:$2 sm:$0xf]
    %2717 = vst.msk [vmem:[#allocation3 + $0x58] sm:$0xf] %vm2071, %v2716
    %v2718 = vld [vmem:[%s2320] ss:$2 sm:$0xf]
    %v2720 = vrot.slane %v2718, 4
    %2722 = vst.msk [vmem:[#allocation3 + $0x58] sm:$0xf0] %vm2078, %v2720
    %v2723 = vld [vmem:[%s2323] ss:$2 sm:$0xf]
    %2724 = vst.msk [vmem:[#allocation3 + $0x78] sm:$0xf] %vm2071, %v2723
    %s2725 = scalar_lea.vmem [#allocation5], 190
    %v2726 = vld [vmem:[%s2725] ss:$2 sm:$0xf]
    %v2728 = vrot.slane %v2726, 4
    %2730 = vst.msk [vmem:[#allocation3 + $0x78] sm:$0xf0] %vm2078, %v2728
    %v2731 = vld [vmem:[%s2336] ss:$2 sm:$0xf]
    %2733 = vrot.lane.b32.xlu0 %v2731, 32
    %v2734 = vpop.permute.xlu0 %2733
    %2736 = vst.msk [vmem:[#allocation3 + $0x18] sm:$0xf] %vm2113, %v2734
    %v2737 = vld [vmem:[%s2344] ss:$2 sm:$0xf]
    %v2739 = vrot.slane %v2737, 4
    %2740 = vrot.lane.b32.xlu0 %v2739, 32
    %v2741 = vpop.permute.xlu0 %2740
    %2743 = vst.msk [vmem:[#allocation3 + $0x18] sm:$0xf0] %vm2122, %v2741
    %v2744 = vld [vmem:[%s2351] ss:$2 sm:$0xf]
    %2746 = vrot.lane.b32.xlu0 %v2744, 32
    %v2747 = vpop.permute.xlu0 %2746
    %2749 = vst.msk [vmem:[#allocation3 + $0x38] sm:$0xf] %vm2113, %v2747
    %s2750 = scalar_lea.vmem [#allocation5], 91
    %v2751 = vld [vmem:[%s2750] ss:$2 sm:$0xf]
    %v2753 = vrot.slane %v2751, 4
    %2754 = vrot.lane.b32.xlu0 %v2753, 32
    %v2755 = vpop.permute.xlu0 %2754
    %2757 = vst.msk [vmem:[#allocation3 + $0x38] sm:$0xf0] %vm2122, %v2755
    %v2758 = vld [vmem:[%s2366] ss:$2 sm:$0xf]
    %2760 = vrot.lane.b32.xlu0 %v2758, 32
    %v2761 = vpop.permute.xlu0 %2760
    %2763 = vst.msk [vmem:[#allocation3 + $0x58] sm:$0xf] %vm2113, %v2761
    %v2764 = vld [vmem:[%s2374] ss:$2 sm:$0xf]
    %v2766 = vrot.slane %v2764, 4
    %2767 = vrot.lane.b32.xlu0 %v2766, 32
    %v2768 = vpop.permute.xlu0 %2767
    %2770 = vst.msk [vmem:[#allocation3 + $0x58] sm:$0xf0] %vm2122, %v2768
    %v2771 = vld [vmem:[%s2381] ss:$2 sm:$0xf]
    %2773 = vrot.lane.b32.xlu0 %v2771, 32
    %v2774 = vpop.permute.xlu0 %2773
    %2776 = vst.msk [vmem:[#allocation3 + $0x78] sm:$0xf] %vm2113, %v2774
    %s2777 = scalar_lea.vmem [#allocation5], 191
    %v2778 = vld [vmem:[%s2777] ss:$2 sm:$0xf]
    %v2780 = vrot.slane %v2778, 4
    %2781 = vrot.lane.b32.xlu0 %v2780, 32
    %v2782 = vpop.permute.xlu0 %2781
    %2784 = vst.msk [vmem:[#allocation3 + $0x78] sm:$0xf0] %vm2122, %v2782
    %v2785 = vld [vmem:[%s2396] ss:$2 sm:$0xf]
    %2787 = vrot.lane.b32.xlu0 %v2785, 64
    %v2788 = vpop.permute.xlu0 %2787
    %2790 = vst.msk [vmem:[#allocation3 + $0x18] sm:$0xf] %vm2175, %v2788
    %v2791 = vld [vmem:[%s2404] ss:$2 sm:$0xf]
    %v2793 = vrot.slane %v2791, 4
    %2794 = vrot.lane.b32.xlu0 %v2793, 64
    %v2795 = vpop.permute.xlu0 %2794
    %2797 = vst.msk [vmem:[#allocation3 + $0x18] sm:$0xf0] %vm2184, %v2795
    %v2798 = vld [vmem:[%s2411] ss:$2 sm:$0xf]
    %2800 = vrot.lane.b32.xlu0 %v2798, 64
    %v2801 = vpop.permute.xlu0 %2800
    %2803 = vst.msk [vmem:[#allocation3 + $0x38] sm:$0xf] %vm2175, %v2801
    %s2804 = scalar_lea.vmem [#allocation5], 92
    %v2805 = vld [vmem:[%s2804] ss:$2 sm:$0xf]
    %v2807 = vrot.slane %v2805, 4
    %2808 = vrot.lane.b32.xlu0 %v2807, 64
    %v2809 = vpop.permute.xlu0 %2808
    %2811 = vst.msk [vmem:[#allocation3 + $0x38] sm:$0xf0] %vm2184, %v2809
    %v2812 = vld [vmem:[%s2426] ss:$2 sm:$0xf]
    %2814 = vrot.lane.b32.xlu0 %v2812, 64
    %v2815 = vpop.permute.xlu0 %2814
    %2817 = vst.msk [vmem:[#allocation3 + $0x58] sm:$0xf] %vm2175, %v2815
    %v2818 = vld [vmem:[%s2434] ss:$2 sm:$0xf]
    %v2820 = vrot.slane %v2818, 4
    %2821 = vrot.lane.b32.xlu0 %v2820, 64
    %v2822 = vpop.permute.xlu0 %2821
    %2824 = vst.msk [vmem:[#allocation3 + $0x58] sm:$0xf0] %vm2184, %v2822
    %v2825 = vld [vmem:[%s2441] ss:$2 sm:$0xf]
    %2827 = vrot.lane.b32.xlu0 %v2825, 64
    %v2828 = vpop.permute.xlu0 %2827
    %2830 = vst.msk [vmem:[#allocation3 + $0x78] sm:$0xf] %vm2175, %v2828
    %s2831 = scalar_lea.vmem [#allocation5], 192
    %v2832 = vld [vmem:[%s2831] ss:$2 sm:$0xf]
    %v2834 = vrot.slane %v2832, 4
    %2835 = vrot.lane.b32.xlu0 %v2834, 64
    %v2836 = vpop.permute.xlu0 %2835
    %2838 = vst.msk [vmem:[#allocation3 + $0x78] sm:$0xf0] %vm2184, %v2836
    %v2839 = vld [vmem:[%s2456] ss:$2 sm:$0xf]
    %2841 = vrot.lane.b32.xlu0 %v2839, 96
    %v2842 = vpop.permute.xlu0 %2841
    %2844 = vst.msk [vmem:[#allocation3 + $0x18] sm:$0xf] %vm2237, %v2842
    %v2845 = vld [vmem:[%s2464] ss:$2 sm:$0xf]
    %v2847 = vrot.slane %v2845, 4
    %2848 = vrot.lane.b32.xlu0 %v2847, 96
    %v2849 = vpop.permute.xlu0 %2848
    %2851 = vst.msk [vmem:[#allocation3 + $0x18] sm:$0xf0] %vm2246, %v2849
    %v2852 = vld [vmem:[%s2471] ss:$2 sm:$0xf]
    %2854 = vrot.lane.b32.xlu0 %v2852, 96
    %v2855 = vpop.permute.xlu0 %2854
    %2857 = vst.msk [vmem:[#allocation3 + $0x38] sm:$0xf] %vm2237, %v2855
    %s2858 = scalar_lea.vmem [#allocation5], 93
    %v2859 = vld [vmem:[%s2858] ss:$2 sm:$0xf]
    %v2861 = vrot.slane %v2859, 4
    %2862 = vrot.lane.b32.xlu0 %v2861, 96
    %v2863 = vpop.permute.xlu0 %2862
    %2865 = vst.msk [vmem:[#allocation3 + $0x38] sm:$0xf0] %vm2246, %v2863
    %v2866 = vld [vmem:[%s2486] ss:$2 sm:$0xf]
    %2868 = vrot.lane.b32.xlu0 %v2866, 96
    %v2869 = vpop.permute.xlu0 %2868
    %2871 = vst.msk [vmem:[#allocation3 + $0x58] sm:$0xf] %vm2237, %v2869
    %v2872 = vld [vmem:[%s2494] ss:$2 sm:$0xf]
    %v2874 = vrot.slane %v2872, 4
    %2875 = vrot.lane.b32.xlu0 %v2874, 96
    %v2876 = vpop.permute.xlu0 %2875
    %2878 = vst.msk [vmem:[#allocation3 + $0x58] sm:$0xf0] %vm2246, %v2876
    %v2879 = vld [vmem:[%s2501] ss:$2 sm:$0xf]
    %2881 = vrot.lane.b32.xlu0 %v2879, 96
    %v2882 = vpop.permute.xlu0 %2881
    %2884 = vst.msk [vmem:[#allocation3 + $0x78] sm:$0xf] %vm2237, %v2882
    %s2885 = scalar_lea.vmem [#allocation5], 193
    %v2886 = vld [vmem:[%s2885] ss:$2 sm:$0xf]
    %v2888 = vrot.slane %v2886, 4
    %2889 = vrot.lane.b32.xlu0 %v2888, 96
    %v2890 = vpop.permute.xlu0 %2889
    %2892 = vst.msk [vmem:[#allocation3 + $0x78] sm:$0xf0] %vm2246, %v2890
    %v2893 = vld [vmem:[#allocation3] sm:$0xff]
    %v2894 = vld [vmem:[#allocation3 + $0x8] sm:$0xff]
    %v2895 = vld [vmem:[#allocation3 + $0x10] sm:$0xff]
    %v2896 = vld [vmem:[#allocation3 + $0x18] sm:$0xff]
    %v2897 = vld [vmem:[#allocation3 + $0x20] sm:$0xff]
    %v2898 = vld [vmem:[#allocation3 + $0x28] sm:$0xff]
    %v2899 = vld [vmem:[#allocation3 + $0x30] sm:$0xff]
    %v2900 = vld [vmem:[#allocation3 + $0x38] sm:$0xff]
    %v2901 = vld [vmem:[#allocation3 + $0x40] sm:$0xff]
    %v2902 = vld [vmem:[#allocation3 + $0x48] sm:$0xff]
    %v2903 = vld [vmem:[#allocation3 + $0x50] sm:$0xff]
    %v2904 = vld [vmem:[#allocation3 + $0x58] sm:$0xff]
    %v2905 = vld [vmem:[#allocation3 + $0x60] sm:$0xff]
    %v2906 = vld [vmem:[#allocation3 + $0x68] sm:$0xff]
    %v2907 = vld [vmem:[#allocation3 + $0x70] sm:$0xff]
    %v2908 = vld [vmem:[#allocation3 + $0x78] sm:$0xff]
    %v2909 = vpack.c.bf16 %v2897, %v2893
    %v2910 = vpack.c.bf16 %v2898, %v2894
    %v2911 = vpack.c.bf16 %v2899, %v2895
    %v2912 = vpack.c.bf16 %v2900, %v2896
    %v2913 = vpack.c.bf16 %v2905, %v2901
    %v2914 = vpack.c.bf16 %v2906, %v2902
    %v2915 = vpack.c.bf16 %v2907, %v2903
    %v2916 = vpack.c.bf16 %v2908, %v2904
    %v2917 = vld [vmem:[%s3] sm:$0xf]
    %v2918 = vld [vmem:[%s3 + $0x4] sm:$0xf]
    %v2919 = vld [vmem:[%s3 + $0x8] sm:$0xf]
    %v2920 = vld [vmem:[%s3 + $0xc] sm:$0xf]
    %v2921 = vld [vmem:[%s3 + $0x10] sm:$0xf]
    %v2922 = vld [vmem:[%s3 + $0x14] sm:$0xf]
    %v2923 = vld [vmem:[%s3 + $0x18] sm:$0xf]
    %v2924 = vld [vmem:[%s3 + $0x1c] sm:$0xf]
    %v2925 = vld [vmem:[%s3 + $0x20] sm:$0xf]
    %v2926 = vld [vmem:[%s3 + $0x24] sm:$0xf]
    %v2927 = vld [vmem:[%s3 + $0x28] sm:$0xf]
    %v2928 = vld [vmem:[%s3 + $0x2c] sm:$0xf]
    %v2929 = vld [vmem:[%s3 + $0x30] sm:$0xf]
    %v2930 = vld [vmem:[%s3 + $0x34] sm:$0xf]
    %v2931 = vld [vmem:[%s3 + $0x38] sm:$0xf]
    %v2932 = vld [vmem:[%s3 + $0x3c] sm:$0xf]
    %v2933 = vld [vmem:[%s3 + $0x40] sm:$0xf]
    %v2934 = vld [vmem:[%s3 + $0x44] sm:$0xf]
    %v2935 = vld [vmem:[%s3 + $0x48] sm:$0xf]
    %v2936 = vld [vmem:[%s3 + $0x4c] sm:$0xf]
    %v2937 = vld [vmem:[%s3 + $0x50] sm:$0xf]
    %v2938 = vld [vmem:[%s3 + $0x54] sm:$0xf]
    %v2939 = vld [vmem:[%s3 + $0x58] sm:$0xf]
    %v2940 = vld [vmem:[%s3 + $0x5c] sm:$0xf]
    %v2941 = vld [vmem:[%s3 + $0x60] sm:$0xf]
    %v2942 = vld [vmem:[%s3 + $0x64] sm:$0xf]
    %v2943 = vld [vmem:[%s3 + $0x68] sm:$0xf]
    %v2944 = vld [vmem:[%s3 + $0x6c] sm:$0xf]
    %v2945 = vld [vmem:[%s3 + $0x70] sm:$0xf]
    %v2946 = vld [vmem:[%s3 + $0x74] sm:$0xf]
    %v2947 = vld [vmem:[%s3 + $0x78] sm:$0xf]
    %v2948 = vld [vmem:[%s3 + $0x7c] sm:$0xf]
    %v2949 = vld [vmem:[%s3 + $0x80] sm:$0xf]
    %v2950 = vld [vmem:[%s3 + $0x84] sm:$0xf]
    %v2951 = vld [vmem:[%s3 + $0x88] sm:$0xf]
    %v2952 = vld [vmem:[%s3 + $0x8c] sm:$0xf]
    %v2953 = vld [vmem:[%s3 + $0x90] sm:$0xf]
    %v2954 = vld [vmem:[%s3 + $0x94] sm:$0xf]
    %v2955 = vld [vmem:[%s3 + $0x98] sm:$0xf]
    %v2956 = vld [vmem:[%s3 + $0x9c] sm:$0xf]
    %v2957 = vld [vmem:[%s3 + $0xa0] sm:$0xf]
    %v2958 = vld [vmem:[%s3 + $0xa4] sm:$0xf]
    %v2959 = vld [vmem:[%s3 + $0xa8] sm:$0xf]
    %v2960 = vld [vmem:[%s3 + $0xac] sm:$0xf]
    %v2961 = vld [vmem:[%s3 + $0xb0] sm:$0xf]
    %v2962 = vld [vmem:[%s3 + $0xb4] sm:$0xf]
    %v2963 = vld [vmem:[%s3 + $0xb8] sm:$0xf]
    %v2964 = vld [vmem:[%s3 + $0xbc] sm:$0xf]
    %v2965 = vld [vmem:[%s3 + $0xc0] sm:$0xf]
    %v2966 = vld [vmem:[%s3 + $0xc4] sm:$0xf]
    %v2967 = vld [vmem:[%s3 + $0xc8] sm:$0xf]
    %v2968 = vld [vmem:[%s3 + $0xcc] sm:$0xf]
    %v2969 = vld [vmem:[%s3 + $0xd0] sm:$0xf]
    %v2970 = vld [vmem:[%s3 + $0xd4] sm:$0xf]
    %v2971 = vld [vmem:[%s3 + $0xd8] sm:$0xf]
    %v2972 = vld [vmem:[%s3 + $0xdc] sm:$0xf]
    %v2973 = vld [vmem:[%s3 + $0xe0] sm:$0xf]
    %v2974 = vld [vmem:[%s3 + $0xe4] sm:$0xf]
    %v2975 = vld [vmem:[%s3 + $0xe8] sm:$0xf]
    %v2976 = vld [vmem:[%s3 + $0xec] sm:$0xf]
    %v2977 = vld [vmem:[%s3 + $0xf0] sm:$0xf]
    %v2978 = vld [vmem:[%s3 + $0xf4] sm:$0xf]
    %v2979 = vld [vmem:[%s3 + $0xf8] sm:$0xf]
    %v2980 = vld [vmem:[%s3 + $0xfc] sm:$0xf]
    %v2981 = vld [vmem:[%s4] sm:$0x1]
    %v2982 = vld [vmem:[%s4 + $0x1] sm:$0x1]
    %v2983 = vld [vmem:[%s4 + $0x2] sm:$0x1]
    %v2984 = vlaneseq
    %v2985 = vshrl.u32 %v2984, 7
    %v2986 = vsub.s32 0, %v2985
    %v2987 = vrot.slane %v2981, %v2986
    %v3052 = vunpack.c.l.b16 %v2917
    %v3053 = vunpack.c.l.b16 %v2918
    %v3054 = vunpack.c.l.b16 %v2919
    %v3055 = vunpack.c.l.b16 %v2920
    %v3056 = vunpack.c.l.b16 %v2921
    %v3057 = vunpack.c.l.b16 %v2922
    %v3058 = vunpack.c.l.b16 %v2923
    %v3059 = vunpack.c.l.b16 %v2924
    %v3060 = vunpack.c.l.b16 %v2925
    %v3061 = vunpack.c.l.b16 %v2926
    %v3062 = vunpack.c.l.b16 %v2927
    %v3063 = vunpack.c.l.b16 %v2928
    %v3064 = vunpack.c.l.b16 %v2929
    %v3065 = vunpack.c.l.b16 %v2930
    %v3066 = vunpack.c.l.b16 %v2931
    %v3067 = vunpack.c.l.b16 %v2932
    %v3068 = vunpack.c.l.b16 %v2933
    %v3069 = vunpack.c.l.b16 %v2934
    %v3070 = vunpack.c.l.b16 %v2935
    %v3071 = vunpack.c.l.b16 %v2936
    %v3072 = vunpack.c.l.b16 %v2937
    %v3073 = vunpack.c.l.b16 %v2938
    %v3074 = vunpack.c.l.b16 %v2939
    %v3075 = vunpack.c.l.b16 %v2940
    %v3076 = vunpack.c.l.b16 %v2941
    %v3077 = vunpack.c.l.b16 %v2942
    %v3078 = vunpack.c.l.b16 %v2943
    %v3079 = vunpack.c.l.b16 %v2944
    %v3080 = vunpack.c.l.b16 %v2945
    %v3081 = vunpack.c.l.b16 %v2946
    %v3082 = vunpack.c.l.b16 %v2947
    %v3083 = vunpack.c.l.b16 %v2948
    %v3084 = vunpack.c.l.b16 %v2949
    %v3085 = vunpack.c.l.b16 %v2950
    %v3086 = vunpack.c.l.b16 %v2951
    %v3087 = vunpack.c.l.b16 %v2952
    %v3088 = vunpack.c.l.b16 %v2953
    %v3089 = vunpack.c.l.b16 %v2954
    %v3090 = vunpack.c.l.b16 %v2955
    %v3091 = vunpack.c.l.b16 %v2956
    %v3092 = vunpack.c.l.b16 %v2957
    %v3093 = vunpack.c.l.b16 %v2958
    %v3094 = vunpack.c.l.b16 %v2959
    %v3095 = vunpack.c.l.b16 %v2960
    %v3096 = vunpack.c.l.b16 %v2961
    %v3097 = vunpack.c.l.b16 %v2962
    %v3098 = vunpack.c.l.b16 %v2963
    %v3099 = vunpack.c.l.b16 %v2964
    %v3100 = vunpack.c.l.b16 %v2965
    %v3101 = vunpack.c.l.b16 %v2966
    %v3102 = vunpack.c.l.b16 %v2967
    %v3103 = vunpack.c.l.b16 %v2968
    %v3104 = vunpack.c.l.b16 %v2969
    %v3105 = vunpack.c.l.b16 %v2970
    %v3106 = vunpack.c.l.b16 %v2971
    %v3107 = vunpack.c.l.b16 %v2972
    %v3108 = vunpack.c.l.b16 %v2973
    %v3109 = vunpack.c.l.b16 %v2974
    %v3110 = vunpack.c.l.b16 %v2975
    %v3111 = vunpack.c.l.b16 %v2976
    %v3112 = vunpack.c.l.b16 %v2977
    %v3113 = vunpack.c.l.b16 %v2978
    %v3114 = vunpack.c.l.b16 %v2979
    %v3115 = vunpack.c.l.b16 %v2980
    %v3116 = vpack.c.b16 %v3053, %v3052
    %v3117 = vpack.c.b16 %v3055, %v3054
    %v3118 = vpack.c.b16 %v3057, %v3056
    %v3119 = vpack.c.b16 %v3059, %v3058
    %v3120 = vpack.c.b16 %v3061, %v3060
    %v3121 = vpack.c.b16 %v3063, %v3062
    %v3122 = vpack.c.b16 %v3065, %v3064
    %v3123 = vpack.c.b16 %v3067, %v3066
    %v3124 = vpack.c.b16 %v3069, %v3068
    %v3125 = vpack.c.b16 %v3071, %v3070
    %v3126 = vpack.c.b16 %v3073, %v3072
    %v3127 = vpack.c.b16 %v3075, %v3074
    %v3128 = vpack.c.b16 %v3077, %v3076
    %v3129 = vpack.c.b16 %v3079, %v3078
    %v3130 = vpack.c.b16 %v3081, %v3080
    %v3131 = vpack.c.b16 %v3083, %v3082
    %v3132 = vpack.c.b16 %v3085, %v3084
    %v3133 = vpack.c.b16 %v3087, %v3086
    %v3134 = vpack.c.b16 %v3089, %v3088
    %v3135 = vpack.c.b16 %v3091, %v3090
    %v3136 = vpack.c.b16 %v3093, %v3092
    %v3137 = vpack.c.b16 %v3095, %v3094
    %v3138 = vpack.c.b16 %v3097, %v3096
    %v3139 = vpack.c.b16 %v3099, %v3098
    %v3140 = vpack.c.b16 %v3101, %v3100
    %v3141 = vpack.c.b16 %v3103, %v3102
    %v3142 = vpack.c.b16 %v3105, %v3104
    %v3143 = vpack.c.b16 %v3107, %v3106
    %v3144 = vpack.c.b16 %v3109, %v3108
    %v3145 = vpack.c.b16 %v3111, %v3110
    %v3146 = vpack.c.b16 %v3113, %v3112
    %v3147 = vpack.c.b16 %v3115, %v3114
    %3180 = vmatprep.subr.bf16.mxu0 0
    %3181 = vmatpush1.bf16.msra.mxu0 %v3123
    %3182 = vmatprep.subr.bf16.mxu0 0
    %3183 = vmatpush1.bf16.msra.mxu0 %v3122
    %3184 = vmatprep.subr.bf16.mxu0 0
    %3185 = vmatpush1.bf16.msra.mxu0 %v3121
    %3186 = vmatprep.subr.bf16.mxu0 0
    %3187 = vmatpush1.bf16.msra.mxu0 %v3120
    %3188 = vmatprep.subr.bf16.mxu0 0
    %3189 = vmatpush1.bf16.msra.mxu0 %v3119
    %3190 = vmatprep.subr.bf16.mxu0 0
    %3191 = vmatpush1.bf16.msra.mxu0 %v3118
    %3192 = vmatprep.subr.bf16.mxu0 0
    %3193 = vmatpush1.bf16.msra.mxu0 %v3117
    %3194 = vmatprep.subr.bf16.mxu0 0
    %3195 = vmatpush1.bf16.msra.mxu0 %v3116
    %3196 = vmatprep.subr.bf16.mxu0 0
    %3197 = vmatpush2.bf16.msra.mxu0 %v3131
    %3198 = vmatprep.subr.bf16.mxu0 0
    %3199 = vmatpush2.bf16.msra.mxu0 %v3130
    %3200 = vmatprep.subr.bf16.mxu0 0
    %3201 = vmatpush2.bf16.msra.mxu0 %v3129
    %3202 = vmatprep.subr.bf16.mxu0 0
    %3203 = vmatpush2.bf16.msra.mxu0 %v3128
    %3204 = vmatprep.subr.bf16.mxu0 0
    %3205 = vmatpush2.bf16.msra.mxu0 %v3127
    %3206 = vmatprep.subr.bf16.mxu0 0
    %3207 = vmatpush2.bf16.msra.mxu0 %v3126
    %3208 = vmatprep.subr.bf16.mxu0 0
    %3209 = vmatpush2.bf16.msra.mxu0 %v3125
    %3210 = vmatprep.subr.bf16.mxu0 0
    %3211 = vmatpush2.bf16.msra.mxu0 %v3124
    %3212 = vmatprep.mubr.bf16.mxu0 %v2910
    %3213 = vmatmul.mubr.bf16.gmra.mxu0 %v2909
    %v3214 = vpop.f32.mrf.mxu0
    %v3215 = vadd.f32 %v2987, %v3214
    %v3216 = vpop.f32.mrf.mxu0
    %v3217 = vpop.f32.mrf.mxu0
    %v3218 = vadd.f32 %v2987, %v3217
    %v3219 = vpop.f32.mrf.mxu0
    %3220 = vmatprep.mubr.bf16.mxu0 %v2914
    %3221 = vmatmul.mubr.bf16.gmra.mxu0 %v2913
    %v3222 = vpop.f32.mrf.mxu0
    %v3223 = vadd.f32 %v2987, %v3222
    %v3224 = vpop.f32.mrf.mxu0
    %v3225 = vpop.f32.mrf.mxu0
    %v3226 = vadd.f32 %v2987, %v3225
    %v3227 = vpop.f32.mrf.mxu0
    %3228 = vdwg.mxu0
    %3229 = vmatprep.subr.bf16.mxu0 0
    %3230 = vmatpush1.bf16.msra.mxu0 %v3139
    %3231 = vmatprep.subr.bf16.mxu0 0
    %3232 = vmatpush1.bf16.msra.mxu0 %v3138
    %3233 = vmatprep.subr.bf16.mxu0 0
    %3234 = vmatpush1.bf16.msra.mxu0 %v3137
    %3235 = vmatprep.subr.bf16.mxu0 0
    %3236 = vmatpush1.bf16.msra.mxu0 %v3136
    %3237 = vmatprep.subr.bf16.mxu0 0
    %3238 = vmatpush1.bf16.msra.mxu0 %v3135
    %3239 = vmatprep.subr.bf16.mxu0 0
    %3240 = vmatpush1.bf16.msra.mxu0 %v3134
    %3241 = vmatprep.subr.bf16.mxu0 0
    %3242 = vmatpush1.bf16.msra.mxu0 %v3133
    %3243 = vmatprep.subr.bf16.mxu0 0
    %3244 = vmatpush1.bf16.msra.mxu0 %v3132
    %3245 = vmatprep.subr.bf16.mxu0 0
    %3246 = vmatpush2.bf16.msra.mxu0 %v3147
    %3247 = vmatprep.subr.bf16.mxu0 0
    %3248 = vmatpush2.bf16.msra.mxu0 %v3146
    %3249 = vmatprep.subr.bf16.mxu0 0
    %3250 = vmatpush2.bf16.msra.mxu0 %v3145
    %3251 = vmatprep.subr.bf16.mxu0 0
    %3252 = vmatpush2.bf16.msra.mxu0 %v3144
    %3253 = vmatprep.subr.bf16.mxu0 0
    %3254 = vmatpush2.bf16.msra.mxu0 %v3143
    %3255 = vmatprep.subr.bf16.mxu0 0
    %3256 = vmatpush2.bf16.msra.mxu0 %v3142
    %3257 = vmatprep.subr.bf16.mxu0 0
    %3258 = vmatpush2.bf16.msra.mxu0 %v3141
    %3259 = vmatprep.subr.bf16.mxu0 0
    %3260 = vmatpush2.bf16.msra.mxu0 %v3140
    %3261 = vmatprep.mubr.bf16.mxu0 %v2912
    %3262 = vmatmul.mubr.bf16.gmra.mxu0 %v2911
    %v3263 = vpop.f32.mrf.mxu0
    %v3264 = vadd.f32 %v3215, %v3263
    %v3265 = vpop.f32.mrf.mxu0
    %v3266 = vpop.f32.mrf.mxu0
    %v3267 = vadd.f32 %v3218, %v3266
    %v3268 = vpop.f32.mrf.mxu0
    %3269 = vmatprep.mubr.bf16.mxu0 %v2916
    %3270 = vmatmul.mubr.bf16.gmra.mxu0 %v2915
    %v3271 = vpop.f32.mrf.mxu0
    %v3272 = vadd.f32 %v3223, %v3271
    %v3273 = vpop.f32.mrf.mxu0
    %v3274 = vpop.f32.mrf.mxu0
    %v3275 = vadd.f32 %v3226, %v3274
    %v3276 = vpop.f32.mrf.mxu0
    %3277 = vdwg.mxu0
    %vm3278 = vcmp.ge.f32.partialorder %v3264, 0.0
    %vm3279 = vcmp.ge.f32.partialorder %v3267, 0.0
    %vm3280 = vcmp.ge.f32.partialorder %v3272, 0.0
    %vm3281 = vcmp.ge.f32.partialorder %v3275, 0.0
    %v3282 = vmul.f32 %v3264, 0.01
    %v3283 = vmul.f32 %v3267, 0.01
    %v3284 = vmul.f32 %v3272, 0.01
    %v3285 = vmul.f32 %v3275, 0.01
    %v3286 = vsel %vm3278, %v3264, %v3282
    %v3287 = vsel %vm3279, %v3267, %v3283
    %v3288 = vsel %vm3280, %v3272, %v3284
    %v3289 = vsel %vm3281, %v3275, %v3285
    %v3290 = vadd.f32 %v3286, %v3287
    %v3291 = vadd.f32 %v3290, %v3288
    %v3292 = vadd.f32 %v3291, %v3289
    %v3293 = vrot.slane %v3292, 4
    %v3294 = vadd.f32 %v3292, %v3293
    %v3295 = vrot.slane %v3294, 2
    %v3296 = vadd.f32 %v3294, %v3295
    %v3297 = vrot.slane %v3296, 1
    %v3298 = vadd.f32 %v3296, %v3297
    %v3299 = vmul.f32 %v3298, 0.03125
    %v3300 = vsub.f32 %v3286, %v3299
    %v3301 = vsub.f32 %v3287, %v3299
    %v3302 = vsub.f32 %v3288, %v3299
    %v3303 = vsub.f32 %v3289, %v3299
    %v3304 = vmul.f32 %v3300, %v3300
    %v3305 = vmul.f32 %v3301, %v3301
    %v3306 = vmul.f32 %v3302, %v3302
    %v3307 = vmul.f32 %v3303, %v3303
    %v3308 = vadd.f32 %v3304, %v3305
    %v3309 = vadd.f32 %v3308, %v3306
    %v3310 = vadd.f32 %v3309, %v3307
    %v3311 = vrot.slane %v3310, 4
    %v3312 = vadd.f32 %v3310, %v3311
    %v3313 = vrot.slane %v3312, 2
    %v3314 = vadd.f32 %v3312, %v3313
    %v3315 = vrot.slane %v3314, 1
    %v3316 = vadd.f32 %v3314, %v3315
    %v3317 = vmul.f32 %v3316, 0.03125
    %v3318 = vadd.f32 %v3317, 1e-05
    %v3319 = vrsqrt.pop %v3318
    %v3320 = vmul.f32 %v2982, %v3319
    %v3321 = vmul.f32 %v3299, %v3320
    %v3322 = vsub.f32 %v2983, %v3321
    %v3323 = vlaneseq
    %v3324 = vshrl.u32 %v3323, 7
    %v3325 = vsub.s32 0, %v3324
    %v3326 = vrot.slane %v3320, %v3325
    %v3327 = vmul.f32 %v3286, %v3326
    %v3328 = vmul.f32 %v3287, %v3326
    %v3329 = vmul.f32 %v3288, %v3326
    %v3330 = vmul.f32 %v3289, %v3326
    %v3331 = vlaneseq
    %v3332 = vshrl.u32 %v3331, 7
    %v3333 = vsub.s32 0, %v3332
    %v3334 = vrot.slane %v3322, %v3333
    %v3335 = vadd.f32 %v3327, %v3334
    %v3336 = vadd.f32 %v3328, %v3334
    %v3337 = vadd.f32 %v3329, %v3334
    %v3338 = vadd.f32 %v3330, %v3334
    %vm3339 = vcmask 519168
    %3340 = vst.msk [vmem:[#allocation6 + $0x7] sm:$0xf] %vm3339, %v3335
    %vm3341 = vcmask 523268
    %3342 = vst.msk [vmem:[#allocation6 + $0x9] sm:$0xf0] %vm3341, %v3335
    %3343 = vst.msk [vmem:[#allocation6 + $0x13] sm:$0xf] %vm3339, %v3336
    %3344 = vst.msk [vmem:[#allocation6 + $0x15] sm:$0xf0] %vm3341, %v3336
    %3345 = vst.msk [vmem:[#allocation6 + $0x2b] sm:$0xf] %vm3339, %v3337
    %3346 = vst.msk [vmem:[#allocation6 + $0x2d] sm:$0xf0] %vm3341, %v3337
    %3347 = vst.msk [vmem:[#allocation6 + $0x37] sm:$0xf] %vm3339, %v3338
    %3348 = vst.msk [vmem:[#allocation6 + $0x39] sm:$0xf0] %vm3341, %v3338
    %v3349 = vld [vmem:[#allocation6] ss:$2 sm:$0x3]
    %vm3350 = vcmask 517120
    %3351 = vst.msk [vmem:[#allocation4] sm:$0x3] %vm3350, %v3349
    %s3352 = scalar_lea.vmem [#allocation6], 12
    %v3353 = vld [vmem:[%s3352] ss:$2 sm:$0x3]
    %v3355 = vrot.slane %v3353, 6
    %vm3357 = vcmask 519170
    %3358 = vst.msk [vmem:[#allocation4] sm:$0xc] %vm3357, %v3355
    %s3359 = scalar_lea.vmem [#allocation6], 36
    %v3360 = vld [vmem:[%s3359] ss:$2 sm:$0x3]
    %v3362 = vrot.slane %v3360, 4
    %vm3364 = vcmask 521220
    %3365 = vst.msk [vmem:[#allocation4] sm:$0x30] %vm3364, %v3362
    %s3366 = scalar_lea.vmem [#allocation6], 48
    %v3367 = vld [vmem:[%s3366] ss:$2 sm:$0x3]
    %v3369 = vrot.slane %v3367, 2
    %vm3371 = vcmask 523270
    %3372 = vst.msk [vmem:[#allocation4] sm:$0xc0] %vm3371, %v3369
    %s3373 = scalar_lea.vmem [#allocation6], 1
    %v3374 = vld [vmem:[%s3373] ss:$2 sm:$0x3]
    %3376 = vrot.lane.b32.xlu0 %v3374, 64
    %v3377 = vpop.permute.xlu0 %3376
    %vm3379 = vcmask 1041920
    %3380 = vst.msk [vmem:[#allocation4] sm:$0x3] %vm3379, %v3377
    %s3381 = scalar_lea.vmem [#allocation6], 13
    %v3382 = vld [vmem:[%s3381] ss:$2 sm:$0x3]
    %v3384 = vrot.slane %v3382, 6
    %3385 = vrot.lane.b32.xlu0 %v3384, 64
    %v3386 = vpop.permute.xlu0 %3385
    %vm3388 = vcmask 1043970
    %3389 = vst.msk [vmem:[#allocation4] sm:$0xc] %vm3388, %v3386
    %s3390 = scalar_lea.vmem [#allocation6], 37
    %v3391 = vld [vmem:[%s3390] ss:$2 sm:$0x3]
    %v3393 = vrot.slane %v3391, 4
    %3394 = vrot.lane.b32.xlu0 %v3393, 64
    %v3395 = vpop.permute.xlu0 %3394
    %vm3397 = vcmask 1046020
    %3398 = vst.msk [vmem:[#allocation4] sm:$0x30] %vm3397, %v3395
    %s3399 = scalar_lea.vmem [#allocation6], 49
    %v3400 = vld [vmem:[%s3399] ss:$2 sm:$0x3]
    %v3402 = vrot.slane %v3400, 2
    %3403 = vrot.lane.b32.xlu0 %v3402, 64
    %v3404 = vpop.permute.xlu0 %3403
    %vm3406 = vcmask 1048070
    %3407 = vst.msk [vmem:[#allocation4] sm:$0xc0] %vm3406, %v3404
    %s3408 = scalar_lea.vmem [#allocation6], 2
    %v3409 = vld [vmem:[%s3408] ss:$2 sm:$0x3]
    %3410 = vst.msk [vmem:[#allocation4 + $0x8] sm:$0x3] %vm3350, %v3409
    %s3411 = scalar_lea.vmem [#allocation6], 14
    %v3412 = vld [vmem:[%s3411] ss:$2 sm:$0x3]
    %v3414 = vrot.slane %v3412, 6
    %3416 = vst.msk [vmem:[#allocation4 + $0x8] sm:$0xc] %vm3357, %v3414
    %s3417 = scalar_lea.vmem [#allocation6], 38
    %v3418 = vld [vmem:[%s3417] ss:$2 sm:$0x3]
    %v3420 = vrot.slane %v3418, 4
    %3422 = vst.msk [vmem:[#allocation4 + $0x8] sm:$0x30] %vm3364, %v3420
    %s3423 = scalar_lea.vmem [#allocation6], 50
    %v3424 = vld [vmem:[%s3423] ss:$2 sm:$0x3]
    %v3426 = vrot.slane %v3424, 2
    %3428 = vst.msk [vmem:[#allocation4 + $0x8] sm:$0xc0] %vm3371, %v3426
    %s3429 = scalar_lea.vmem [#allocation6], 3
    %v3430 = vld [vmem:[%s3429] ss:$2 sm:$0x3]
    %3432 = vrot.lane.b32.xlu0 %v3430, 64
    %v3433 = vpop.permute.xlu0 %3432
    %3435 = vst.msk [vmem:[#allocation4 + $0x8] sm:$0x3] %vm3379, %v3433
    %s3436 = scalar_lea.vmem [#allocation6], 15
    %v3437 = vld [vmem:[%s3436] ss:$2 sm:$0x3]
    %v3439 = vrot.slane %v3437, 6
    %3440 = vrot.lane.b32.xlu0 %v3439, 64
    %v3441 = vpop.permute.xlu0 %3440
    %3443 = vst.msk [vmem:[#allocation4 + $0x8] sm:$0xc] %vm3388, %v3441
    %s3444 = scalar_lea.vmem [#allocation6], 39
    %v3445 = vld [vmem:[%s3444] ss:$2 sm:$0x3]
    %v3447 = vrot.slane %v3445, 4
    %3448 = vrot.lane.b32.xlu0 %v3447, 64
    %v3449 = vpop.permute.xlu0 %3448
    %3451 = vst.msk [vmem:[#allocation4 + $0x8] sm:$0x30] %vm3397, %v3449
    %s3452 = scalar_lea.vmem [#allocation6], 51
    %v3453 = vld [vmem:[%s3452] ss:$2 sm:$0x3]
    %v3455 = vrot.slane %v3453, 2
    %3456 = vrot.lane.b32.xlu0 %v3455, 64
    %v3457 = vpop.permute.xlu0 %3456
    %3459 = vst.msk [vmem:[#allocation4 + $0x8] sm:$0xc0] %vm3406, %v3457
    %s3460 = scalar_lea.vmem [#allocation6], 6
    %v3461 = vld [vmem:[%s3460] ss:$2 sm:$0x3]
    %3462 = vst.msk [vmem:[#allocation4 + $0x10] sm:$0x3] %vm3350, %v3461
    %s3463 = scalar_lea.vmem [#allocation6], 18
    %v3464 = vld [vmem:[%s3463] ss:$2 sm:$0x3]
    %v3466 = vrot.slane %v3464, 6
    %3468 = vst.msk [vmem:[#allocation4 + $0x10] sm:$0xc] %vm3357, %v3466
    %s3469 = scalar_lea.vmem [#allocation6], 42
    %v3470 = vld [vmem:[%s3469] ss:$2 sm:$0x3]
    %v3472 = vrot.slane %v3470, 4
    %3474 = vst.msk [vmem:[#allocation4 + $0x10] sm:$0x30] %vm3364, %v3472
    %s3475 = scalar_lea.vmem [#allocation6], 54
    %v3476 = vld [vmem:[%s3475] ss:$2 sm:$0x3]
    %v3478 = vrot.slane %v3476, 2
    %3480 = vst.msk [vmem:[#allocation4 + $0x10] sm:$0xc0] %vm3371, %v3478
    %s3481 = scalar_lea.vmem [#allocation6], 7
    %v3482 = vld [vmem:[%s3481] ss:$2 sm:$0x3]
    %3484 = vrot.lane.b32.xlu0 %v3482, 64
    %v3485 = vpop.permute.xlu0 %3484
    %3487 = vst.msk [vmem:[#allocation4 + $0x10] sm:$0x3] %vm3379, %v3485
    %s3488 = scalar_lea.vmem [#allocation6], 19
    %v3489 = vld [vmem:[%s3488] ss:$2 sm:$0x3]
    %v3491 = vrot.slane %v3489, 6
    %3492 = vrot.lane.b32.xlu0 %v3491, 64
    %v3493 = vpop.permute.xlu0 %3492
    %3495 = vst.msk [vmem:[#allocation4 + $0x10] sm:$0xc] %vm3388, %v3493
    %s3496 = scalar_lea.vmem [#allocation6], 43
    %v3497 = vld [vmem:[%s3496] ss:$2 sm:$0x3]
    %v3499 = vrot.slane %v3497, 4
    %3500 = vrot.lane.b32.xlu0 %v3499, 64
    %v3501 = vpop.permute.xlu0 %3500
    %3503 = vst.msk [vmem:[#allocation4 + $0x10] sm:$0x30] %vm3397, %v3501
    %s3504 = scalar_lea.vmem [#allocation6], 55
    %v3505 = vld [vmem:[%s3504] ss:$2 sm:$0x3]
    %v3507 = vrot.slane %v3505, 2
    %3508 = vrot.lane.b32.xlu0 %v3507, 64
    %v3509 = vpop.permute.xlu0 %3508
    %3511 = vst.msk [vmem:[#allocation4 + $0x10] sm:$0xc0] %vm3406, %v3509
    %s3512 = scalar_lea.vmem [#allocation6], 8
    %v3513 = vld [vmem:[%s3512] ss:$2 sm:$0x3]
    %3514 = vst.msk [vmem:[#allocation4 + $0x18] sm:$0x3] %vm3350, %v3513
    %s3515 = scalar_lea.vmem [#allocation6], 20
    %v3516 = vld [vmem:[%s3515] ss:$2 sm:$0x3]
    %v3518 = vrot.slane %v3516, 6
    %3520 = vst.msk [vmem:[#allocation4 + $0x18] sm:$0xc] %vm3357, %v3518
    %s3521 = scalar_lea.vmem [#allocation6], 44
    %v3522 = vld [vmem:[%s3521] ss:$2 sm:$0x3]
    %v3524 = vrot.slane %v3522, 4
    %3526 = vst.msk [vmem:[#allocation4 + $0x18] sm:$0x30] %vm3364, %v3524
    %s3527 = scalar_lea.vmem [#allocation6], 56
    %v3528 = vld [vmem:[%s3527] ss:$2 sm:$0x3]
    %v3530 = vrot.slane %v3528, 2
    %3532 = vst.msk [vmem:[#allocation4 + $0x18] sm:$0xc0] %vm3371, %v3530
    %s3533 = scalar_lea.vmem [#allocation6], 9
    %v3534 = vld [vmem:[%s3533] ss:$2 sm:$0x3]
    %3536 = vrot.lane.b32.xlu0 %v3534, 64
    %v3537 = vpop.permute.xlu0 %3536
    %3539 = vst.msk [vmem:[#allocation4 + $0x18] sm:$0x3] %vm3379, %v3537
    %s3540 = scalar_lea.vmem [#allocation6], 21
    %v3541 = vld [vmem:[%s3540] ss:$2 sm:$0x3]
    %v3543 = vrot.slane %v3541, 6
    %3544 = vrot.lane.b32.xlu0 %v3543, 64
    %v3545 = vpop.permute.xlu0 %3544
    %3547 = vst.msk [vmem:[#allocation4 + $0x18] sm:$0xc] %vm3388, %v3545
    %s3548 = scalar_lea.vmem [#allocation6], 45
    %v3549 = vld [vmem:[%s3548] ss:$2 sm:$0x3]
    %v3551 = vrot.slane %v3549, 4
    %3552 = vrot.lane.b32.xlu0 %v3551, 64
    %v3553 = vpop.permute.xlu0 %3552
    %3555 = vst.msk [vmem:[#allocation4 + $0x18] sm:$0x30] %vm3397, %v3553
    %s3556 = scalar_lea.vmem [#allocation6], 57
    %v3557 = vld [vmem:[%s3556] ss:$2 sm:$0x3]
    %v3559 = vrot.slane %v3557, 2
    %3560 = vrot.lane.b32.xlu0 %v3559, 64
    %v3561 = vpop.permute.xlu0 %3560
    %3563 = vst.msk [vmem:[#allocation4 + $0x18] sm:$0xc0] %vm3406, %v3561
    %v3564 = vld [vmem:[%s3352] ss:$2 sm:$0x3]
    %3565 = vst.msk [vmem:[#allocation4 + $0x20] sm:$0x3] %vm3350, %v3564
    %s3566 = scalar_lea.vmem [#allocation6], 24
    %v3567 = vld [vmem:[%s3566] ss:$2 sm:$0x3]
    %v3569 = vrot.slane %v3567, 6
    %3571 = vst.msk [vmem:[#allocation4 + $0x20] sm:$0xc] %vm3357, %v3569
    %v3572 = vld [vmem:[%s3366] ss:$2 sm:$0x3]
    %v3574 = vrot.slane %v3572, 4
    %3576 = vst.msk [vmem:[#allocation4 + $0x20] sm:$0x30] %vm3364, %v3574
    %s3577 = scalar_lea.vmem [#allocation6], 60
    %v3578 = vld [vmem:[%s3577] ss:$2 sm:$0x3]
    %v3580 = vrot.slane %v3578, 2
    %3582 = vst.msk [vmem:[#allocation4 + $0x20] sm:$0xc0] %vm3371, %v3580
    %v3583 = vld [vmem:[%s3381] ss:$2 sm:$0x3]
    %3585 = vrot.lane.b32.xlu0 %v3583, 64
    %v3586 = vpop.permute.xlu0 %3585
    %3588 = vst.msk [vmem:[#allocation4 + $0x20] sm:$0x3] %vm3379, %v3586
    %s3589 = scalar_lea.vmem [#allocation6], 25
    %v3590 = vld [vmem:[%s3589] ss:$2 sm:$0x3]
    %v3592 = vrot.slane %v3590, 6
    %3593 = vrot.lane.b32.xlu0 %v3592, 64
    %v3594 = vpop.permute.xlu0 %3593
    %3596 = vst.msk [vmem:[#allocation4 + $0x20] sm:$0xc] %vm3388, %v3594
    %v3597 = vld [vmem:[%s3399] ss:$2 sm:$0x3]
    %v3599 = vrot.slane %v3597, 4
    %3600 = vrot.lane.b32.xlu0 %v3599, 64
    %v3601 = vpop.permute.xlu0 %3600
    %3603 = vst.msk [vmem:[#allocation4 + $0x20] sm:$0x30] %vm3397, %v3601
    %s3604 = scalar_lea.vmem [#allocation6], 61
    %v3605 = vld [vmem:[%s3604] ss:$2 sm:$0x3]
    %v3607 = vrot.slane %v3605, 2
    %3608 = vrot.lane.b32.xlu0 %v3607, 64
    %v3609 = vpop.permute.xlu0 %3608
    %3611 = vst.msk [vmem:[#allocation4 + $0x20] sm:$0xc0] %vm3406, %v3609
    %v3612 = vld [vmem:[%s3411] ss:$2 sm:$0x3]
    %3613 = vst.msk [vmem:[#allocation4 + $0x28] sm:$0x3] %vm3350, %v3612
    %s3614 = scalar_lea.vmem [#allocation6], 26
    %v3615 = vld [vmem:[%s3614] ss:$2 sm:$0x3]
    %v3617 = vrot.slane %v3615, 6
    %3619 = vst.msk [vmem:[#allocation4 + $0x28] sm:$0xc] %vm3357, %v3617
    %v3620 = vld [vmem:[%s3423] ss:$2 sm:$0x3]
    %v3622 = vrot.slane %v3620, 4
    %3624 = vst.msk [vmem:[#allocation4 + $0x28] sm:$0x30] %vm3364, %v3622
    %s3625 = scalar_lea.vmem [#allocation6], 62
    %v3626 = vld [vmem:[%s3625] ss:$2 sm:$0x3]
    %v3628 = vrot.slane %v3626, 2
    %3630 = vst.msk [vmem:[#allocation4 + $0x28] sm:$0xc0] %vm3371, %v3628
    %v3631 = vld [vmem:[%s3436] ss:$2 sm:$0x3]
    %3633 = vrot.lane.b32.xlu0 %v3631, 64
    %v3634 = vpop.permute.xlu0 %3633
    %3636 = vst.msk [vmem:[#allocation4 + $0x28] sm:$0x3] %vm3379, %v3634
    %s3637 = scalar_lea.vmem [#allocation6], 27
    %v3638 = vld [vmem:[%s3637] ss:$2 sm:$0x3]
    %v3640 = vrot.slane %v3638, 6
    %3641 = vrot.lane.b32.xlu0 %v3640, 64
    %v3642 = vpop.permute.xlu0 %3641
    %3644 = vst.msk [vmem:[#allocation4 + $0x28] sm:$0xc] %vm3388, %v3642
    %v3645 = vld [vmem:[%s3452] ss:$2 sm:$0x3]
    %v3647 = vrot.slane %v3645, 4
    %3648 = vrot.lane.b32.xlu0 %v3647, 64
    %v3649 = vpop.permute.xlu0 %3648
    %3651 = vst.msk [vmem:[#allocation4 + $0x28] sm:$0x30] %vm3397, %v3649
    %s3652 = scalar_lea.vmem [#allocation6], 63
    %v3653 = vld [vmem:[%s3652] ss:$2 sm:$0x3]
    %v3655 = vrot.slane %v3653, 2
    %3656 = vrot.lane.b32.xlu0 %v3655, 64
    %v3657 = vpop.permute.xlu0 %3656
    %3659 = vst.msk [vmem:[#allocation4 + $0x28] sm:$0xc0] %vm3406, %v3657
    %v3660 = vld [vmem:[%s3463] ss:$2 sm:$0x3]
    %3661 = vst.msk [vmem:[#allocation4 + $0x30] sm:$0x3] %vm3350, %v3660
    %s3662 = scalar_lea.vmem [#allocation6], 30
    %v3663 = vld [vmem:[%s3662] ss:$2 sm:$0x3]
    %v3665 = vrot.slane %v3663, 6
    %3667 = vst.msk [vmem:[#allocation4 + $0x30] sm:$0xc] %vm3357, %v3665
    %v3668 = vld [vmem:[%s3475] ss:$2 sm:$0x3]
    %v3670 = vrot.slane %v3668, 4
    %3672 = vst.msk [vmem:[#allocation4 + $0x30] sm:$0x30] %vm3364, %v3670
    %s3673 = scalar_lea.vmem [#allocation6], 66
    %v3674 = vld [vmem:[%s3673] ss:$2 sm:$0x3]
    %v3676 = vrot.slane %v3674, 2
    %3678 = vst.msk [vmem:[#allocation4 + $0x30] sm:$0xc0] %vm3371, %v3676
    %v3679 = vld [vmem:[%s3488] ss:$2 sm:$0x3]
    %3681 = vrot.lane.b32.xlu0 %v3679, 64
    %v3682 = vpop.permute.xlu0 %3681
    %3684 = vst.msk [vmem:[#allocation4 + $0x30] sm:$0x3] %vm3379, %v3682
    %s3685 = scalar_lea.vmem [#allocation6], 31
    %v3686 = vld [vmem:[%s3685] ss:$2 sm:$0x3]
    %v3688 = vrot.slane %v3686, 6
    %3689 = vrot.lane.b32.xlu0 %v3688, 64
    %v3690 = vpop.permute.xlu0 %3689
    %3692 = vst.msk [vmem:[#allocation4 + $0x30] sm:$0xc] %vm3388, %v3690
    %v3693 = vld [vmem:[%s3504] ss:$2 sm:$0x3]
    %v3695 = vrot.slane %v3693, 4
    %3696 = vrot.lane.b32.xlu0 %v3695, 64
    %v3697 = vpop.permute.xlu0 %3696
    %3699 = vst.msk [vmem:[#allocation4 + $0x30] sm:$0x30] %vm3397, %v3697
    %s3700 = scalar_lea.vmem [#allocation6], 67
    %v3701 = vld [vmem:[%s3700] ss:$2 sm:$0x3]
    %v3703 = vrot.slane %v3701, 2
    %3704 = vrot.lane.b32.xlu0 %v3703, 64
    %v3705 = vpop.permute.xlu0 %3704
    %3707 = vst.msk [vmem:[#allocation4 + $0x30] sm:$0xc0] %vm3406, %v3705
    %v3708 = vld [vmem:[%s3515] ss:$2 sm:$0x3]
    %3709 = vst.msk [vmem:[#allocation4 + $0x38] sm:$0x3] %vm3350, %v3708
    %s3710 = scalar_lea.vmem [#allocation6], 32
    %v3711 = vld [vmem:[%s3710] ss:$2 sm:$0x3]
    %v3713 = vrot.slane %v3711, 6
    %3715 = vst.msk [vmem:[#allocation4 + $0x38] sm:$0xc] %vm3357, %v3713
    %v3716 = vld [vmem:[%s3527] ss:$2 sm:$0x3]
    %v3718 = vrot.slane %v3716, 4
    %3720 = vst.msk [vmem:[#allocation4 + $0x38] sm:$0x30] %vm3364, %v3718
    %s3721 = scalar_lea.vmem [#allocation6], 68
    %v3722 = vld [vmem:[%s3721] ss:$2 sm:$0x3]
    %v3724 = vrot.slane %v3722, 2
    %3726 = vst.msk [vmem:[#allocation4 + $0x38] sm:$0xc0] %vm3371, %v3724
    %v3727 = vld [vmem:[%s3540] ss:$2 sm:$0x3]
    %3729 = vrot.lane.b32.xlu0 %v3727, 64
    %v3730 = vpop.permute.xlu0 %3729
    %3732 = vst.msk [vmem:[#allocation4 + $0x38] sm:$0x3] %vm3379, %v3730
    %s3733 = scalar_lea.vmem [#allocation6], 33
    %v3734 = vld [vmem:[%s3733] ss:$2 sm:$0x3]
    %v3736 = vrot.slane %v3734, 6
    %3737 = vrot.lane.b32.xlu0 %v3736, 64
    %v3738 = vpop.permute.xlu0 %3737
    %3740 = vst.msk [vmem:[#allocation4 + $0x38] sm:$0xc] %vm3388, %v3738
    %v3741 = vld [vmem:[%s3556] ss:$2 sm:$0x3]
    %v3743 = vrot.slane %v3741, 4
    %3744 = vrot.lane.b32.xlu0 %v3743, 64
    %v3745 = vpop.permute.xlu0 %3744
    %3747 = vst.msk [vmem:[#allocation4 + $0x38] sm:$0x30] %vm3397, %v3745
    %s3748 = scalar_lea.vmem [#allocation6], 69
    %v3749 = vld [vmem:[%s3748] ss:$2 sm:$0x3]
    %v3751 = vrot.slane %v3749, 2
    %3752 = vrot.lane.b32.xlu0 %v3751, 64
    %v3753 = vpop.permute.xlu0 %3752
    %3755 = vst.msk [vmem:[#allocation4 + $0x38] sm:$0xc0] %vm3406, %v3753
    %v3756 = vld [vmem:[#allocation4] sm:$0xff]
    %v3757 = vld [vmem:[#allocation4 + $0x8] sm:$0xff]
    %v3758 = vld [vmem:[#allocation4 + $0x10] sm:$0xff]
    %v3759 = vld [vmem:[#allocation4 + $0x18] sm:$0xff]
    %v3760 = vld [vmem:[#allocation4 + $0x20] sm:$0xff]
    %v3761 = vld [vmem:[#allocation4 + $0x28] sm:$0xff]
    %v3762 = vld [vmem:[#allocation4 + $0x30] sm:$0xff]
    %v3763 = vld [vmem:[#allocation4 + $0x38] sm:$0xff]
    %v3764 = vpack.c.bf16 %v3756, %v3756
    %v3765 = vpack.c.bf16 %v3757, %v3757
    %v3766 = vpack.c.bf16 %v3758, %v3758
    %v3767 = vpack.c.bf16 %v3759, %v3759
    %v3768 = vpack.c.bf16 %v3760, %v3760
    %v3769 = vpack.c.bf16 %v3761, %v3761
    %v3770 = vpack.c.bf16 %v3762, %v3762
    %v3771 = vpack.c.bf16 %v3763, %v3763
    %v3772 = vld [vmem:[%s5] sm:$0xf]
    %v3773 = vld [vmem:[%s5 + $0x4] sm:$0xf]
    %v3774 = vld [vmem:[%s5 + $0x8] sm:$0xf]
    %v3775 = vld [vmem:[%s5 + $0xc] sm:$0xf]
    %v3776 = vld [vmem:[%s5 + $0x10] sm:$0xf]
    %v3777 = vld [vmem:[%s5 + $0x14] sm:$0xf]
    %v3778 = vld [vmem:[%s5 + $0x18] sm:$0xf]
    %v3779 = vld [vmem:[%s5 + $0x1c] sm:$0xf]
    %v3780 = vld [vmem:[%s5 + $0x20] sm:$0xf]
    %v3781 = vld [vmem:[%s5 + $0x24] sm:$0xf]
    %v3782 = vld [vmem:[%s5 + $0x28] sm:$0xf]
    %v3783 = vld [vmem:[%s5 + $0x2c] sm:$0xf]
    %v3784 = vld [vmem:[%s5 + $0x30] sm:$0xf]
    %v3785 = vld [vmem:[%s5 + $0x34] sm:$0xf]
    %v3786 = vld [vmem:[%s5 + $0x38] sm:$0xf]
    %v3787 = vld [vmem:[%s5 + $0x3c] sm:$0xf]
    %v3788 = vld [vmem:[%s5 + $0x40] sm:$0xf]
    %v3789 = vld [vmem:[%s5 + $0x44] sm:$0xf]
    %v3790 = vld [vmem:[%s5 + $0x48] sm:$0xf]
    %v3791 = vld [vmem:[%s5 + $0x4c] sm:$0xf]
    %v3792 = vld [vmem:[%s5 + $0x50] sm:$0xf]
    %v3793 = vld [vmem:[%s5 + $0x54] sm:$0xf]
    %v3794 = vld [vmem:[%s5 + $0x58] sm:$0xf]
    %v3795 = vld [vmem:[%s5 + $0x5c] sm:$0xf]
    %v3796 = vld [vmem:[%s5 + $0x60] sm:$0xf]
    %v3797 = vld [vmem:[%s5 + $0x64] sm:$0xf]
    %v3798 = vld [vmem:[%s5 + $0x68] sm:$0xf]
    %v3799 = vld [vmem:[%s5 + $0x6c] sm:$0xf]
    %v3800 = vld [vmem:[%s5 + $0x70] sm:$0xf]
    %v3801 = vld [vmem:[%s5 + $0x74] sm:$0xf]
    %v3802 = vld [vmem:[%s5 + $0x78] sm:$0xf]
    %v3803 = vld [vmem:[%s5 + $0x7c] sm:$0xf]
    %v3804 = vld [vmem:[%s5 + $0x80] sm:$0xf]
    %v3805 = vld [vmem:[%s5 + $0x84] sm:$0xf]
    %v3806 = vld [vmem:[%s5 + $0x88] sm:$0xf]
    %v3807 = vld [vmem:[%s5 + $0x8c] sm:$0xf]
    %v3808 = vld [vmem:[%s5 + $0x90] sm:$0xf]
    %v3809 = vld [vmem:[%s5 + $0x94] sm:$0xf]
    %v3810 = vld [vmem:[%s5 + $0x98] sm:$0xf]
    %v3811 = vld [vmem:[%s5 + $0x9c] sm:$0xf]
    %v3812 = vld [vmem:[%s5 + $0xa0] sm:$0xf]
    %v3813 = vld [vmem:[%s5 + $0xa4] sm:$0xf]
    %v3814 = vld [vmem:[%s5 + $0xa8] sm:$0xf]
    %v3815 = vld [vmem:[%s5 + $0xac] sm:$0xf]
    %v3816 = vld [vmem:[%s5 + $0xb0] sm:$0xf]
    %v3817 = vld [vmem:[%s5 + $0xb4] sm:$0xf]
    %v3818 = vld [vmem:[%s5 + $0xb8] sm:$0xf]
    %v3819 = vld [vmem:[%s5 + $0xbc] sm:$0xf]
    %v3820 = vld [vmem:[%s5 + $0xc0] sm:$0xf]
    %v3821 = vld [vmem:[%s5 + $0xc4] sm:$0xf]
    %v3822 = vld [vmem:[%s5 + $0xc8] sm:$0xf]
    %v3823 = vld [vmem:[%s5 + $0xcc] sm:$0xf]
    %v3824 = vld [vmem:[%s5 + $0xd0] sm:$0xf]
    %v3825 = vld [vmem:[%s5 + $0xd4] sm:$0xf]
    %v3826 = vld [vmem:[%s5 + $0xd8] sm:$0xf]
    %v3827 = vld [vmem:[%s5 + $0xdc] sm:$0xf]
    %v3828 = vld [vmem:[%s5 + $0xe0] sm:$0xf]
    %v3829 = vld [vmem:[%s5 + $0xe4] sm:$0xf]
    %v3830 = vld [vmem:[%s5 + $0xe8] sm:$0xf]
    %v3831 = vld [vmem:[%s5 + $0xec] sm:$0xf]
    %v3832 = vld [vmem:[%s5 + $0xf0] sm:$0xf]
    %v3833 = vld [vmem:[%s5 + $0xf4] sm:$0xf]
    %v3834 = vld [vmem:[%s5 + $0xf8] sm:$0xf]
    %v3835 = vld [vmem:[%s5 + $0xfc] sm:$0xf]
    %v3836 = vld [vmem:[%s5 + $0x100] sm:$0xf]
    %v3837 = vld [vmem:[%s5 + $0x104] sm:$0xf]
    %v3838 = vld [vmem:[%s5 + $0x108] sm:$0xf]
    %v3839 = vld [vmem:[%s5 + $0x10c] sm:$0xf]
    %v3840 = vld [vmem:[%s5 + $0x110] sm:$0xf]
    %v3841 = vld [vmem:[%s5 + $0x114] sm:$0xf]
    %v3842 = vld [vmem:[%s5 + $0x118] sm:$0xf]
    %v3843 = vld [vmem:[%s5 + $0x11c] sm:$0xf]
    %v3844 = vld [vmem:[%s5 + $0x120] sm:$0xf]
    %v3845 = vld [vmem:[%s5 + $0x124] sm:$0xf]
    %v3846 = vld [vmem:[%s5 + $0x128] sm:$0xf]
    %v3847 = vld [vmem:[%s5 + $0x12c] sm:$0xf]
    %v3848 = vld [vmem:[%s5 + $0x130] sm:$0xf]
    %v3849 = vld [vmem:[%s5 + $0x134] sm:$0xf]
    %v3850 = vld [vmem:[%s5 + $0x138] sm:$0xf]
    %v3851 = vld [vmem:[%s5 + $0x13c] sm:$0xf]
    %v3852 = vld [vmem:[%s5 + $0x140] sm:$0xf]
    %v3853 = vld [vmem:[%s5 + $0x144] sm:$0xf]
    %v3854 = vld [vmem:[%s5 + $0x148] sm:$0xf]
    %v3855 = vld [vmem:[%s5 + $0x14c] sm:$0xf]
    %v3856 = vld [vmem:[%s5 + $0x150] sm:$0xf]
    %v3857 = vld [vmem:[%s5 + $0x154] sm:$0xf]
    %v3858 = vld [vmem:[%s5 + $0x158] sm:$0xf]
    %v3859 = vld [vmem:[%s5 + $0x15c] sm:$0xf]
    %v3860 = vld [vmem:[%s5 + $0x160] sm:$0xf]
    %v3861 = vld [vmem:[%s5 + $0x164] sm:$0xf]
    %v3862 = vld [vmem:[%s5 + $0x168] sm:$0xf]
    %v3863 = vld [vmem:[%s5 + $0x16c] sm:$0xf]
    %v3864 = vld [vmem:[%s5 + $0x170] sm:$0xf]
    %v3865 = vld [vmem:[%s5 + $0x174] sm:$0xf]
    %v3866 = vld [vmem:[%s5 + $0x178] sm:$0xf]
    %v3867 = vld [vmem:[%s5 + $0x17c] sm:$0xf]
    %v3868 = vld [vmem:[%s5 + $0x180] sm:$0xf]
    %v3869 = vld [vmem:[%s5 + $0x184] sm:$0xf]
    %v3870 = vld [vmem:[%s5 + $0x188] sm:$0xf]
    %v3871 = vld [vmem:[%s5 + $0x18c] sm:$0xf]
    %v3872 = vld [vmem:[%s5 + $0x190] sm:$0xf]
    %v3873 = vld [vmem:[%s5 + $0x194] sm:$0xf]
    %v3874 = vld [vmem:[%s5 + $0x198] sm:$0xf]
    %v3875 = vld [vmem:[%s5 + $0x19c] sm:$0xf]
    %v3876 = vld [vmem:[%s5 + $0x1a0] sm:$0xf]
    %v3877 = vld [vmem:[%s5 + $0x1a4] sm:$0xf]
    %v3878 = vld [vmem:[%s5 + $0x1a8] sm:$0xf]
    %v3879 = vld [vmem:[%s5 + $0x1ac] sm:$0xf]
    %v3880 = vld [vmem:[%s5 + $0x1b0] sm:$0xf]
    %v3881 = vld [vmem:[%s5 + $0x1b4] sm:$0xf]
    %v3882 = vld [vmem:[%s5 + $0x1b8] sm:$0xf]
    %v3883 = vld [vmem:[%s5 + $0x1bc] sm:$0xf]
    %v3884 = vld [vmem:[%s5 + $0x1c0] sm:$0xf]
    %v3885 = vld [vmem:[%s5 + $0x1c4] sm:$0xf]
    %v3886 = vld [vmem:[%s5 + $0x1c8] sm:$0xf]
    %v3887 = vld [vmem:[%s5 + $0x1cc] sm:$0xf]
    %v3888 = vld [vmem:[%s5 + $0x1d0] sm:$0xf]
    %v3889 = vld [vmem:[%s5 + $0x1d4] sm:$0xf]
    %v3890 = vld [vmem:[%s5 + $0x1d8] sm:$0xf]
    %v3891 = vld [vmem:[%s5 + $0x1dc] sm:$0xf]
    %v3892 = vld [vmem:[%s5 + $0x1e0] sm:$0xf]
    %v3893 = vld [vmem:[%s5 + $0x1e4] sm:$0xf]
    %v3894 = vld [vmem:[%s5 + $0x1e8] sm:$0xf]
    %v3895 = vld [vmem:[%s5 + $0x1ec] sm:$0xf]
    %v3896 = vld [vmem:[%s5 + $0x1f0] sm:$0xf]
    %v3897 = vld [vmem:[%s5 + $0x1f4] sm:$0xf]
    %v3898 = vld [vmem:[%s5 + $0x1f8] sm:$0xf]
    %v3899 = vld [vmem:[%s5 + $0x1fc] sm:$0xf]
    %v3900 = vld [vmem:[%s6] sm:$0x1]
    %v3901 = vld [vmem:[%s6 + $0x1] sm:$0x1]
    %v3902 = vld [vmem:[%s6 + $0x2] sm:$0x1]
    %v3903 = vlaneseq
    %v3904 = vshrl.u32 %v3903, 7
    %v3905 = vsub.s32 0, %v3904
    %v3906 = vrot.slane %v3900, %v3905
    %v4035 = vunpack.c.l.b16 %v3772
    %v4036 = vunpack.c.l.b16 %v3773
    %v4037 = vunpack.c.l.b16 %v3774
    %v4038 = vunpack.c.l.b16 %v3775
    %v4039 = vunpack.c.l.b16 %v3776
    %v4040 = vunpack.c.l.b16 %v3777
    %v4041 = vunpack.c.l.b16 %v3778
    %v4042 = vunpack.c.l.b16 %v3779
    %v4043 = vunpack.c.l.b16 %v3780
    %v4044 = vunpack.c.l.b16 %v3781
    %v4045 = vunpack.c.l.b16 %v3782
    %v4046 = vunpack.c.l.b16 %v3783
    %v4047 = vunpack.c.l.b16 %v3784
    %v4048 = vunpack.c.l.b16 %v3785
    %v4049 = vunpack.c.l.b16 %v3786
    %v4050 = vunpack.c.l.b16 %v3787
    %v4051 = vunpack.c.l.b16 %v3788
    %v4052 = vunpack.c.l.b16 %v3789
    %v4053 = vunpack.c.l.b16 %v3790
    %v4054 = vunpack.c.l.b16 %v3791
    %v4055 = vunpack.c.l.b16 %v3792
    %v4056 = vunpack.c.l.b16 %v3793
    %v4057 = vunpack.c.l.b16 %v3794
    %v4058 = vunpack.c.l.b16 %v3795
    %v4059 = vunpack.c.l.b16 %v3796
    %v4060 = vunpack.c.l.b16 %v3797
    %v4061 = vunpack.c.l.b16 %v3798
    %v4062 = vunpack.c.l.b16 %v3799
    %v4063 = vunpack.c.l.b16 %v3800
    %v4064 = vunpack.c.l.b16 %v3801
    %v4065 = vunpack.c.l.b16 %v3802
    %v4066 = vunpack.c.l.b16 %v3803
    %v4067 = vunpack.c.l.b16 %v3804
    %v4068 = vunpack.c.l.b16 %v3805
    %v4069 = vunpack.c.l.b16 %v3806
    %v4070 = vunpack.c.l.b16 %v3807
    %v4071 = vunpack.c.l.b16 %v3808
    %v4072 = vunpack.c.l.b16 %v3809
    %v4073 = vunpack.c.l.b16 %v3810
    %v4074 = vunpack.c.l.b16 %v3811
    %v4075 = vunpack.c.l.b16 %v3812
    %v4076 = vunpack.c.l.b16 %v3813
    %v4077 = vunpack.c.l.b16 %v3814
    %v4078 = vunpack.c.l.b16 %v3815
    %v4079 = vunpack.c.l.b16 %v3816
    %v4080 = vunpack.c.l.b16 %v3817
    %v4081 = vunpack.c.l.b16 %v3818
    %v4082 = vunpack.c.l.b16 %v3819
    %v4083 = vunpack.c.l.b16 %v3820
    %v4084 = vunpack.c.l.b16 %v3821
    %v4085 = vunpack.c.l.b16 %v3822
    %v4086 = vunpack.c.l.b16 %v3823
    %v4087 = vunpack.c.l.b16 %v3824
    %v4088 = vunpack.c.l.b16 %v3825
    %v4089 = vunpack.c.l.b16 %v3826
    %v4090 = vunpack.c.l.b16 %v3827
    %v4091 = vunpack.c.l.b16 %v3828
    %v4092 = vunpack.c.l.b16 %v3829
    %v4093 = vunpack.c.l.b16 %v3830
    %v4094 = vunpack.c.l.b16 %v3831
    %v4095 = vunpack.c.l.b16 %v3832
    %v4096 = vunpack.c.l.b16 %v3833
    %v4097 = vunpack.c.l.b16 %v3834
    %v4098 = vunpack.c.l.b16 %v3835
    %v4099 = vunpack.c.l.b16 %v3836
    %v4100 = vunpack.c.l.b16 %v3837
    %v4101 = vunpack.c.l.b16 %v3838
    %v4102 = vunpack.c.l.b16 %v3839
    %v4103 = vunpack.c.l.b16 %v3840
    %v4104 = vunpack.c.l.b16 %v3841
    %v4105 = vunpack.c.l.b16 %v3842
    %v4106 = vunpack.c.l.b16 %v3843
    %v4107 = vunpack.c.l.b16 %v3844
    %v4108 = vunpack.c.l.b16 %v3845
    %v4109 = vunpack.c.l.b16 %v3846
    %v4110 = vunpack.c.l.b16 %v3847
    %v4111 = vunpack.c.l.b16 %v3848
    %v4112 = vunpack.c.l.b16 %v3849
    %v4113 = vunpack.c.l.b16 %v3850
    %v4114 = vunpack.c.l.b16 %v3851
    %v4115 = vunpack.c.l.b16 %v3852
    %v4116 = vunpack.c.l.b16 %v3853
    %v4117 = vunpack.c.l.b16 %v3854
    %v4118 = vunpack.c.l.b16 %v3855
    %v4119 = vunpack.c.l.b16 %v3856
    %v4120 = vunpack.c.l.b16 %v3857
    %v4121 = vunpack.c.l.b16 %v3858
    %v4122 = vunpack.c.l.b16 %v3859
    %v4123 = vunpack.c.l.b16 %v3860
    %v4124 = vunpack.c.l.b16 %v3861
    %v4125 = vunpack.c.l.b16 %v3862
    %v4126 = vunpack.c.l.b16 %v3863
    %v4127 = vunpack.c.l.b16 %v3864
    %v4128 = vunpack.c.l.b16 %v3865
    %v4129 = vunpack.c.l.b16 %v3866
    %v4130 = vunpack.c.l.b16 %v3867
    %v4131 = vunpack.c.l.b16 %v3868
    %v4132 = vunpack.c.l.b16 %v3869
    %v4133 = vunpack.c.l.b16 %v3870
    %v4134 = vunpack.c.l.b16 %v3871
    %v4135 = vunpack.c.l.b16 %v3872
    %v4136 = vunpack.c.l.b16 %v3873
    %v4137 = vunpack.c.l.b16 %v3874
    %v4138 = vunpack.c.l.b16 %v3875
    %v4139 = vunpack.c.l.b16 %v3876
    %v4140 = vunpack.c.l.b16 %v3877
    %v4141 = vunpack.c.l.b16 %v3878
    %v4142 = vunpack.c.l.b16 %v3879
    %v4143 = vunpack.c.l.b16 %v3880
    %v4144 = vunpack.c.l.b16 %v3881
    %v4145 = vunpack.c.l.b16 %v3882
    %v4146 = vunpack.c.l.b16 %v3883
    %v4147 = vunpack.c.l.b16 %v3884
    %v4148 = vunpack.c.l.b16 %v3885
    %v4149 = vunpack.c.l.b16 %v3886
    %v4150 = vunpack.c.l.b16 %v3887
    %v4151 = vunpack.c.l.b16 %v3888
    %v4152 = vunpack.c.l.b16 %v3889
    %v4153 = vunpack.c.l.b16 %v3890
    %v4154 = vunpack.c.l.b16 %v3891
    %v4155 = vunpack.c.l.b16 %v3892
    %v4156 = vunpack.c.l.b16 %v3893
    %v4157 = vunpack.c.l.b16 %v3894
    %v4158 = vunpack.c.l.b16 %v3895
    %v4159 = vunpack.c.l.b16 %v3896
    %v4160 = vunpack.c.l.b16 %v3897
    %v4161 = vunpack.c.l.b16 %v3898
    %v4162 = vunpack.c.l.b16 %v3899
    %v4163 = vpack.c.b16 %v4036, %v4035
    %v4164 = vpack.c.b16 %v4038, %v4037
    %v4165 = vpack.c.b16 %v4040, %v4039
    %v4166 = vpack.c.b16 %v4042, %v4041
    %v4167 = vpack.c.b16 %v4044, %v4043
    %v4168 = vpack.c.b16 %v4046, %v4045
    %v4169 = vpack.c.b16 %v4048, %v4047
    %v4170 = vpack.c.b16 %v4050, %v4049
    %v4171 = vpack.c.b16 %v4052, %v4051
    %v4172 = vpack.c.b16 %v4054, %v4053
    %v4173 = vpack.c.b16 %v4056, %v4055
    %v4174 = vpack.c.b16 %v4058, %v4057
    %v4175 = vpack.c.b16 %v4060, %v4059
    %v4176 = vpack.c.b16 %v4062, %v4061
    %v4177 = vpack.c.b16 %v4064, %v4063
    %v4178 = vpack.c.b16 %v4066, %v4065
    %v4179 = vpack.c.b16 %v4068, %v4067
    %v4180 = vpack.c.b16 %v4070, %v4069
    %v4181 = vpack.c.b16 %v4072, %v4071
    %v4182 = vpack.c.b16 %v4074, %v4073
    %v4183 = vpack.c.b16 %v4076, %v4075
    %v4184 = vpack.c.b16 %v4078, %v4077
    %v4185 = vpack.c.b16 %v4080, %v4079
    %v4186 = vpack.c.b16 %v4082, %v4081
    %v4187 = vpack.c.b16 %v4084, %v4083
    %v4188 = vpack.c.b16 %v4086, %v4085
    %v4189 = vpack.c.b16 %v4088, %v4087
    %v4190 = vpack.c.b16 %v4090, %v4089
    %v4191 = vpack.c.b16 %v4092, %v4091
    %v4192 = vpack.c.b16 %v4094, %v4093
    %v4193 = vpack.c.b16 %v4096, %v4095
    %v4194 = vpack.c.b16 %v4098, %v4097
    %v4195 = vpack.c.b16 %v4100, %v4099
    %v4196 = vpack.c.b16 %v4102, %v4101
    %v4197 = vpack.c.b16 %v4104, %v4103
    %v4198 = vpack.c.b16 %v4106, %v4105
    %v4199 = vpack.c.b16 %v4108, %v4107
    %v4200 = vpack.c.b16 %v4110, %v4109
    %v4201 = vpack.c.b16 %v4112, %v4111
    %v4202 = vpack.c.b16 %v4114, %v4113
    %v4203 = vpack.c.b16 %v4116, %v4115
    %v4204 = vpack.c.b16 %v4118, %v4117
    %v4205 = vpack.c.b16 %v4120, %v4119
    %v4206 = vpack.c.b16 %v4122, %v4121
    %v4207 = vpack.c.b16 %v4124, %v4123
    %v4208 = vpack.c.b16 %v4126, %v4125
    %v4209 = vpack.c.b16 %v4128, %v4127
    %v4210 = vpack.c.b16 %v4130, %v4129
    %v4211 = vpack.c.b16 %v4132, %v4131
    %v4212 = vpack.c.b16 %v4134, %v4133
    %v4213 = vpack.c.b16 %v4136, %v4135
    %v4214 = vpack.c.b16 %v4138, %v4137
    %v4215 = vpack.c.b16 %v4140, %v4139
    %v4216 = vpack.c.b16 %v4142, %v4141
    %v4217 = vpack.c.b16 %v4144, %v4143
    %v4218 = vpack.c.b16 %v4146, %v4145
    %v4219 = vpack.c.b16 %v4148, %v4147
    %v4220 = vpack.c.b16 %v4150, %v4149
    %v4221 = vpack.c.b16 %v4152, %v4151
    %v4222 = vpack.c.b16 %v4154, %v4153
    %v4223 = vpack.c.b16 %v4156, %v4155
    %v4224 = vpack.c.b16 %v4158, %v4157
    %v4225 = vpack.c.b16 %v4160, %v4159
    %v4226 = vpack.c.b16 %v4162, %v4161
    %4291 = vmatprep.subr.bf16.mxu0 0
    %4292 = vmatpush1.bf16.msra.mxu0 %v4170
    %4293 = vmatprep.subr.bf16.mxu0 0
    %4294 = vmatpush1.bf16.msra.mxu0 %v4169
    %4295 = vmatprep.subr.bf16.mxu0 0
    %4296 = vmatpush1.bf16.msra.mxu0 %v4168
    %4297 = vmatprep.subr.bf16.mxu0 0
    %4298 = vmatpush1.bf16.msra.mxu0 %v4167
    %4299 = vmatprep.subr.bf16.mxu0 0
    %4300 = vmatpush1.bf16.msra.mxu0 %v4166
    %4301 = vmatprep.subr.bf16.mxu0 0
    %4302 = vmatpush1.bf16.msra.mxu0 %v4165
    %4303 = vmatprep.subr.bf16.mxu0 0
    %4304 = vmatpush1.bf16.msra.mxu0 %v4164
    %4305 = vmatprep.subr.bf16.mxu0 0
    %4306 = vmatpush1.bf16.msra.mxu0 %v4163
    %4307 = vmatprep.subr.bf16.mxu0 0
    %4308 = vmatpush2.bf16.msra.mxu0 %v4178
    %4309 = vmatprep.subr.bf16.mxu0 0
    %4310 = vmatpush2.bf16.msra.mxu0 %v4177
    %4311 = vmatprep.subr.bf16.mxu0 0
    %4312 = vmatpush2.bf16.msra.mxu0 %v4176
    %4313 = vmatprep.subr.bf16.mxu0 0
    %4314 = vmatpush2.bf16.msra.mxu0 %v4175
    %4315 = vmatprep.subr.bf16.mxu0 0
    %4316 = vmatpush2.bf16.msra.mxu0 %v4174
    %4317 = vmatprep.subr.bf16.mxu0 0
    %4318 = vmatpush2.bf16.msra.mxu0 %v4173
    %4319 = vmatprep.subr.bf16.mxu0 0
    %4320 = vmatpush2.bf16.msra.mxu0 %v4172
    %4321 = vmatprep.subr.bf16.mxu0 0
    %4322 = vmatpush2.bf16.msra.mxu0 %v4171
    %4323 = vmatprep.mubr.bf16.mxu0 %v3765
    %4324 = vmatmul.mubr.bf16.gmra.mxu0 %v3764
    %v4325 = vpop.f32.mrf.mxu0
    %v4326 = vadd.f32 %v3906, %v4325
    %v4327 = vpop.f32.mrf.mxu0
    %v4328 = vpop.f32.mrf.mxu0
    %v4329 = vpop.f32.mrf.mxu0
    %4330 = vdwg.mxu0
    %4331 = vmatprep.subr.bf16.mxu0 0
    %4332 = vmatpush1.bf16.msra.mxu0 %v4186
    %4333 = vmatprep.subr.bf16.mxu0 0
    %4334 = vmatpush1.bf16.msra.mxu0 %v4185
    %4335 = vmatprep.subr.bf16.mxu0 0
    %4336 = vmatpush1.bf16.msra.mxu0 %v4184
    %4337 = vmatprep.subr.bf16.mxu0 0
    %4338 = vmatpush1.bf16.msra.mxu0 %v4183
    %4339 = vmatprep.subr.bf16.mxu0 0
    %4340 = vmatpush1.bf16.msra.mxu0 %v4182
    %4341 = vmatprep.subr.bf16.mxu0 0
    %4342 = vmatpush1.bf16.msra.mxu0 %v4181
    %4343 = vmatprep.subr.bf16.mxu0 0
    %4344 = vmatpush1.bf16.msra.mxu0 %v4180
    %4345 = vmatprep.subr.bf16.mxu0 0
    %4346 = vmatpush1.bf16.msra.mxu0 %v4179
    %4347 = vmatprep.subr.bf16.mxu0 0
    %4348 = vmatpush2.bf16.msra.mxu0 %v4194
    %4349 = vmatprep.subr.bf16.mxu0 0
    %4350 = vmatpush2.bf16.msra.mxu0 %v4193
    %4351 = vmatprep.subr.bf16.mxu0 0
    %4352 = vmatpush2.bf16.msra.mxu0 %v4192
    %4353 = vmatprep.subr.bf16.mxu0 0
    %4354 = vmatpush2.bf16.msra.mxu0 %v4191
    %4355 = vmatprep.subr.bf16.mxu0 0
    %4356 = vmatpush2.bf16.msra.mxu0 %v4190
    %4357 = vmatprep.subr.bf16.mxu0 0
    %4358 = vmatpush2.bf16.msra.mxu0 %v4189
    %4359 = vmatprep.subr.bf16.mxu0 0
    %4360 = vmatpush2.bf16.msra.mxu0 %v4188
    %4361 = vmatprep.subr.bf16.mxu0 0
    %4362 = vmatpush2.bf16.msra.mxu0 %v4187
    %4363 = vmatprep.mubr.bf16.mxu0 %v3767
    %4364 = vmatmul.mubr.bf16.gmra.mxu0 %v3766
    %v4365 = vpop.f32.mrf.mxu0
    %v4366 = vadd.f32 %v4326, %v4365
    %v4367 = vpop.f32.mrf.mxu0
    %v4368 = vpop.f32.mrf.mxu0
    %v4369 = vpop.f32.mrf.mxu0
    %4370 = vdwg.mxu0
    %4371 = vmatprep.subr.bf16.mxu0 0
    %4372 = vmatpush1.bf16.msra.mxu0 %v4202
    %4373 = vmatprep.subr.bf16.mxu0 0
    %4374 = vmatpush1.bf16.msra.mxu0 %v4201
    %4375 = vmatprep.subr.bf16.mxu0 0
    %4376 = vmatpush1.bf16.msra.mxu0 %v4200
    %4377 = vmatprep.subr.bf16.mxu0 0
    %4378 = vmatpush1.bf16.msra.mxu0 %v4199
    %4379 = vmatprep.subr.bf16.mxu0 0
    %4380 = vmatpush1.bf16.msra.mxu0 %v4198
    %4381 = vmatprep.subr.bf16.mxu0 0
    %4382 = vmatpush1.bf16.msra.mxu0 %v4197
    %4383 = vmatprep.subr.bf16.mxu0 0
    %4384 = vmatpush1.bf16.msra.mxu0 %v4196
    %4385 = vmatprep.subr.bf16.mxu0 0
    %4386 = vmatpush1.bf16.msra.mxu0 %v4195
    %4387 = vmatprep.subr.bf16.mxu0 0
    %4388 = vmatpush2.bf16.msra.mxu0 %v4210
    %4389 = vmatprep.subr.bf16.mxu0 0
    %4390 = vmatpush2.bf16.msra.mxu0 %v4209
    %4391 = vmatprep.subr.bf16.mxu0 0
    %4392 = vmatpush2.bf16.msra.mxu0 %v4208
    %4393 = vmatprep.subr.bf16.mxu0 0
    %4394 = vmatpush2.bf16.msra.mxu0 %v4207
    %4395 = vmatprep.subr.bf16.mxu0 0
    %4396 = vmatpush2.bf16.msra.mxu0 %v4206
    %4397 = vmatprep.subr.bf16.mxu0 0
    %4398 = vmatpush2.bf16.msra.mxu0 %v4205
    %4399 = vmatprep.subr.bf16.mxu0 0
    %4400 = vmatpush2.bf16.msra.mxu0 %v4204
    %4401 = vmatprep.subr.bf16.mxu0 0
    %4402 = vmatpush2.bf16.msra.mxu0 %v4203
    %4403 = vmatprep.mubr.bf16.mxu0 %v3769
    %4404 = vmatmul.mubr.bf16.gmra.mxu0 %v3768
    %v4405 = vpop.f32.mrf.mxu0
    %v4406 = vadd.f32 %v4366, %v4405
    %v4407 = vpop.f32.mrf.mxu0
    %v4408 = vpop.f32.mrf.mxu0
    %v4409 = vpop.f32.mrf.mxu0
    %4410 = vdwg.mxu0
    %4411 = vmatprep.subr.bf16.mxu0 0
    %4412 = vmatpush1.bf16.msra.mxu0 %v4218
    %4413 = vmatprep.subr.bf16.mxu0 0
    %4414 = vmatpush1.bf16.msra.mxu0 %v4217
    %4415 = vmatprep.subr.bf16.mxu0 0
    %4416 = vmatpush1.bf16.msra.mxu0 %v4216
    %4417 = vmatprep.subr.bf16.mxu0 0
    %4418 = vmatpush1.bf16.msra.mxu0 %v4215
    %4419 = vmatprep.subr.bf16.mxu0 0
    %4420 = vmatpush1.bf16.msra.mxu0 %v4214
    %4421 = vmatprep.subr.bf16.mxu0 0
    %4422 = vmatpush1.bf16.msra.mxu0 %v4213
    %4423 = vmatprep.subr.bf16.mxu0 0
    %4424 = vmatpush1.bf16.msra.mxu0 %v4212
    %4425 = vmatprep.subr.bf16.mxu0 0
    %4426 = vmatpush1.bf16.msra.mxu0 %v4211
    %4427 = vmatprep.subr.bf16.mxu0 0
    %4428 = vmatpush2.bf16.msra.mxu0 %v4226
    %4429 = vmatprep.subr.bf16.mxu0 0
    %4430 = vmatpush2.bf16.msra.mxu0 %v4225
    %4431 = vmatprep.subr.bf16.mxu0 0
    %4432 = vmatpush2.bf16.msra.mxu0 %v4224
    %4433 = vmatprep.subr.bf16.mxu0 0
    %4434 = vmatpush2.bf16.msra.mxu0 %v4223
    %4435 = vmatprep.subr.bf16.mxu0 0
    %4436 = vmatpush2.bf16.msra.mxu0 %v4222
    %4437 = vmatprep.subr.bf16.mxu0 0
    %4438 = vmatpush2.bf16.msra.mxu0 %v4221
    %4439 = vmatprep.subr.bf16.mxu0 0
    %4440 = vmatpush2.bf16.msra.mxu0 %v4220
    %4441 = vmatprep.subr.bf16.mxu0 0
    %4442 = vmatpush2.bf16.msra.mxu0 %v4219
    %4443 = vmatprep.mubr.bf16.mxu0 %v3771
    %4444 = vmatmul.mubr.bf16.gmra.mxu0 %v3770
    %v4445 = vpop.f32.mrf.mxu0
    %v4446 = vadd.f32 %v4406, %v4445
    %v4447 = vpop.f32.mrf.mxu0
    %v4448 = vpop.f32.mrf.mxu0
    %v4449 = vpop.f32.mrf.mxu0
    %4450 = vdwg.mxu0
    %vm4451 = vcmp.ge.f32.partialorder %v4446, 0.0
    %v4452 = vmul.f32 %v4446, 0.01
    %v4453 = vsel %vm4451, %v4446, %v4452
    %v4454 = vrot.slane %v4453, 4
    %v4455 = vadd.f32 %v4453, %v4454
    %v4456 = vrot.slane %v4455, 2
    %v4457 = vadd.f32 %v4455, %v4456
    %v4458 = vrot.slane %v4457, 1
    %v4459 = vadd.f32 %v4457, %v4458
    %v4460 = vmul.f32 %v4459, 0.125
    %v4461 = vsub.f32 %v4453, %v4460
    %v4462 = vmul.f32 %v4461, %v4461
    %v4463 = vrot.slane %v4462, 4
    %v4464 = vadd.f32 %v4462, %v4463
    %v4465 = vrot.slane %v4464, 2
    %v4466 = vadd.f32 %v4464, %v4465
    %v4467 = vrot.slane %v4466, 1
    %v4468 = vadd.f32 %v4466, %v4467
    %v4469 = vmul.f32 %v4468, 0.125
    %v4470 = vadd.f32 %v4469, 1e-05
    %v4471 = vrsqrt.pop %v4470
    %v4472 = vmul.f32 %v3901, %v4471
    %v4473 = vmul.f32 %v4460, %v4472
    %v4474 = vsub.f32 %v3902, %v4473
    %v4475 = vlaneseq
    %v4476 = vshrl.u32 %v4475, 7
    %v4477 = vsub.s32 0, %v4476
    %v4478 = vrot.slane %v4472, %v4477
    %v4479 = vmul.f32 %v4453, %v4478
    %v4480 = vlaneseq
    %v4481 = vshrl.u32 %v4480, 7
    %v4482 = vsub.s32 0, %v4481
    %v4483 = vrot.slane %v4474, %v4482
    %v4484 = vadd.f32 %v4479, %v4483
    %v4485 = vpack.c.bf16 %v4484, %v4484
    %v4486 = vld [vmem:[%s7] sm:$0xf]
    %v4487 = vld [vmem:[%s7 + $0x4] sm:$0xf]
    %v4488 = vld [vmem:[%s7 + $0x8] sm:$0xf]
    %v4489 = vld [vmem:[%s7 + $0xc] sm:$0xf]
    %v4490 = vld [vmem:[%s7 + $0x10] sm:$0xf]
    %v4491 = vld [vmem:[%s7 + $0x14] sm:$0xf]
    %v4492 = vld [vmem:[%s7 + $0x18] sm:$0xf]
    %v4493 = vld [vmem:[%s7 + $0x1c] sm:$0xf]
    %v4494 = vld [vmem:[%s7 + $0x20] sm:$0xf]
    %v4495 = vld [vmem:[%s7 + $0x24] sm:$0xf]
    %v4496 = vld [vmem:[%s7 + $0x28] sm:$0xf]
    %v4497 = vld [vmem:[%s7 + $0x2c] sm:$0xf]
    %v4498 = vld [vmem:[%s7 + $0x30] sm:$0xf]
    %v4499 = vld [vmem:[%s7 + $0x34] sm:$0xf]
    %v4500 = vld [vmem:[%s7 + $0x38] sm:$0xf]
    %v4501 = vld [vmem:[%s7 + $0x3c] sm:$0xf]
    %v4502 = vld [vmem:[%s8] sm:$0x1]
    %v4504 = vlaneseq
    %v4505 = vshrl.u32 %v4504, 7
    %v4506 = vsub.s32 0, %v4505
    %v4507 = vrot.slane %v4502, %v4506
    %v4525 = vunpack.c.l.b16 %v4486
    %v4526 = vunpack.c.l.b16 %v4487
    %v4527 = vunpack.c.l.b16 %v4488
    %v4528 = vunpack.c.l.b16 %v4489
    %v4529 = vunpack.c.l.b16 %v4490
    %v4530 = vunpack.c.l.b16 %v4491
    %v4531 = vunpack.c.l.b16 %v4492
    %v4532 = vunpack.c.l.b16 %v4493
    %v4533 = vunpack.c.l.b16 %v4494
    %v4534 = vunpack.c.l.b16 %v4495
    %v4535 = vunpack.c.l.b16 %v4496
    %v4536 = vunpack.c.l.b16 %v4497
    %v4537 = vunpack.c.l.b16 %v4498
    %v4538 = vunpack.c.l.b16 %v4499
    %v4539 = vunpack.c.l.b16 %v4500
    %v4540 = vunpack.c.l.b16 %v4501
    %v4541 = vpack.c.b16 %v4526, %v4525
    %v4542 = vpack.c.b16 %v4528, %v4527
    %v4543 = vpack.c.b16 %v4530, %v4529
    %v4544 = vpack.c.b16 %v4532, %v4531
    %v4545 = vpack.c.b16 %v4534, %v4533
    %v4546 = vpack.c.b16 %v4536, %v4535
    %v4547 = vpack.c.b16 %v4538, %v4537
    %v4548 = vpack.c.b16 %v4540, %v4539
    %4557 = vmatprep.subr.bf16.mxu0 0
    %4558 = vmatpush1.bf16.msra.mxu0 %v4548
    %4559 = vmatprep.subr.bf16.mxu0 0
    %4560 = vmatpush1.bf16.msra.mxu0 %v4547
    %4561 = vmatprep.subr.bf16.mxu0 0
    %4562 = vmatpush1.bf16.msra.mxu0 %v4546
    %4563 = vmatprep.subr.bf16.mxu0 0
    %4564 = vmatpush1.bf16.msra.mxu0 %v4545
    %4565 = vmatprep.subr.bf16.mxu0 0
    %4566 = vmatpush1.bf16.msra.mxu0 %v4544
    %4567 = vmatprep.subr.bf16.mxu0 0
    %4568 = vmatpush1.bf16.msra.mxu0 %v4543
    %4569 = vmatprep.subr.bf16.mxu0 0
    %4570 = vmatpush1.bf16.msra.mxu0 %v4542
    %4571 = vmatprep.subr.bf16.mxu0 0
    %4572 = vmatpush1.bf16.msra.mxu0 %v4541
    %4573 = vmatprep.subr.bf16.mxu0 0
    %4574 = vmatpush2.bf16.msra.mxu0 0
    %4575 = vmatprep.subr.bf16.mxu0 0
    %4576 = vmatpush2.bf16.msra.mxu0 0
    %4577 = vmatprep.subr.bf16.mxu0 0
    %4578 = vmatpush2.bf16.msra.mxu0 0
    %4579 = vmatprep.subr.bf16.mxu0 0
    %4580 = vmatpush2.bf16.msra.mxu0 0
    %4581 = vmatprep.subr.bf16.mxu0 0
    %4582 = vmatpush2.bf16.msra.mxu0 0
    %4583 = vmatprep.subr.bf16.mxu0 0
    %4584 = vmatpush2.bf16.msra.mxu0 0
    %4585 = vmatprep.subr.bf16.mxu0 0
    %4586 = vmatpush2.bf16.msra.mxu0 0
    %4587 = vmatprep.subr.bf16.mxu0 0
    %4588 = vmatpush2.bf16.msra.mxu0 0
    %4589 = vmatprep.mubr.bf16.mxu0 0
    %4590 = vmatmul.mubr.bf16.gmra.mxu0 %v4485
    %v4591 = vpop.f32.mrf.mxu0
    %v4592 = vadd.f32 %v4507, %v4591
    %v4593 = vpop.f32.mrf.mxu0
    %v4594 = vpop.f32.mrf.mxu0
    %v4595 = vpop.f32.mrf.mxu0
    %4596 = vdwg.mxu0
    %4597 = vst [vmem:[#allocation7] sm:$0xff] %v4592
    // Predicated region
    $region38: #{simple_encoder2d_forward.1} parent=1 // pred_check
      _
    $region39: #{simple_encoder2d_forward.1} parent=1 // pred_check_branch
      %4599 = sbr.rel (0) target = $region41
    $region40: #{simple_encoder2d_forward.1} parent=1 // pred_region
      %s4601 = ssub.s32 128, 128
      %4602 = vsyncadd [#allocation8], %s4601
      %s4604 = sshll.u32 [#allocation7], 4
      %s4605 = int_to_ptr.vmem [resolvable:$true] %s4604
      %4607 = dma.vmem_to_hbm [thread:$0]  %s4605, 128, %s9, [#allocation8]
    $region41: #{simple_encoder2d_forward.1} parent=1 // pred_fallthru
      _
    // Predicated region
    $region42: #{simple_encoder2d_forward.1} parent=1 // pred_check
      _
    $region43: #{simple_encoder2d_forward.1} parent=1 // pred_check_branch
      %4609 = sbr.rel (0) target = $region45
    $region44: #{simple_encoder2d_forward.1} parent=1 // pred_region
      %4610 = dma.done [#allocation8], 128
    $region45: #{simple_encoder2d_forward.1} parent=1 // pred_fallthru
      _
    %4611 = vsyncpa [#allocation8], 1

</llo_original>
